<compile_context>
chip_gen: v7x
topology: tpu7x:2x2x1
jax: 0.10.0
libtpu: 0.0.40
codegen_flags: <defaults>
</compile_context>

<pallas_src>
import numpy as np
import jax
import jax.numpy as jnp
from jax import lax
from jax.experimental import pallas as pl
from jax.experimental.pallas import tpu as pltpu

# ---- model hyper-params (small stand-ins for the original 1025x259 image) ---
CONV_CH_1 = 1
CONV_CH_2 = 1
CONV_CH_3 = 1
FEATURES = 2
POOL_K = 2
IMG_H = 33            # small, odd (mirrors 1025) to exercise floor-division pooling
IMG_W = 19            # small, odd (mirrors 259)
STARTING_NODES = CONV_CH_3 * (IMG_H // (POOL_K * POOL_K)) * (IMG_W // (POOL_K * POOL_K))
HIDDEN = 128

_HI = lax.Precision.HIGHEST


# ----------------------- host-side 0/1 pooling selectors ---------------------
def _row_select(batch, h_out, stride, n_rows, parity):
  """(B*h_out, n_rows) 0/1 matrix: picks stacked row (b*stride + 2*i + parity)."""
  m = np.zeros((batch * h_out, n_rows), np.float32)
  for b in range(batch):
    for i in range(h_out):
      m[b * h_out + i, b * stride + 2 * i + parity] = 1.0
  return m


def _col_select(w_in, w_out, parity):
  """(w_in, w_out) 0/1 matrix: picks column (2*j + parity)."""
  m = np.zeros((w_in, w_out), np.float32)
  for j in range(w_out):
    m[2 * j + parity, j] = 1.0
  return m


# --------------------------------- fused kernel ------------------------------
def _fused_kernel(
    x_ref,                                   # (B, 1, H, W) f32 VMEM
    k1_ref, k1b_ref, k2_ref, k2b_ref,        # conv weights (9,) / biases (1,) SMEM
    r1e_ref, r1o_ref, c1e_ref, c1o_ref,      # layer-1 pooling selectors, VMEM
    r2e_ref, r2o_ref, c2e_ref, c2o_ref,      # layer-2 pooling selectors, VMEM
    fc1w_ref, fc1b_ref, fc2w_ref, fc2b_ref,  # MLP weights (pre-transposed), VMEM
    o_ref,                                   # (B, FEATURES) f32 VMEM
    xp1_ref, xp2_ref, feat_ref,              # VMEM scratch
):
  bsz = x_ref.shape[0]
  h, w = x_ref.shape[2], x_ref.shape[3]
  ph1, pw1 = h // 2, w // 2
  ph2, pw2 = ph1 // 2, pw1 // 2
  s1, s2 = h + 2, ph1 + 2                  # per-image row stride in padded stacks
  n1, n2 = bsz * s1 - 2, bsz * s2 - 2      # rows of the stacked conv outputs

  # ----- layer 1: in-kernel zero pad, whole batch stacked along sublanes -----
  xp1_ref[...] = jnp.zeros_like(xp1_ref)
  for b in range(bsz):
    xp1_ref[b * s1 + 1:b * s1 + 1 + h, 1:1 + w] = x_ref[b, 0, :, :]
  xp1 = xp1_ref[...]

  # 3x3 "same" cross-correlation as 9 shifted windows (VPU), then ReLU.
  # Rows at image boundaries inside the stack are garbage but never selected
  # by the pooling matrices below.
  acc1 = jnp.zeros((n1, w), jnp.float32)
  for ka in range(3):
    for kb in range(3):
      acc1 = acc1 + k1_ref[3 * ka + kb] * xp1[ka:ka + n1, kb:kb + w]
  act1 = jnp.maximum(acc1 + k1b_ref[0], 0.0)

  # 2x2 max-pool: exact 0/1 selection matmuls (host constants) + VPU maxima.
  rows1 = jnp.maximum(
      jnp.dot(r1e_ref[...], act1, precision=_HI, preferred_element_type=jnp.float32),
      jnp.dot(r1o_ref[...], act1, precision=_HI, preferred_element_type=jnp.float32))
  p1 = jnp.maximum(
      jnp.dot(rows1, c1e_ref[...], precision=_HI, preferred_element_type=jnp.float32),
      jnp.dot(rows1, c1o_ref[...], precision=_HI, preferred_element_type=jnp.float32))
  # p1: (bsz*ph1, pw1); image b lives in rows [b*ph1, (b+1)*ph1)

  # ----- layer 2: same structure, intermediates never leave VMEM -----
  xp2_ref[...] = jnp.zeros_like(xp2_ref)
  for b in range(bsz):
    xp2_ref[b * s2 + 1:b * s2 + 1 + ph1, 1:1 + pw1] = p1[b * ph1:(b + 1) * ph1, :]
  xp2 = xp2_ref[...]

  acc2 = jnp.zeros((n2, pw1), jnp.float32)
  for ka in range(3):
    for kb in range(3):
      acc2 = acc2 + k2_ref[3 * ka + kb] * xp2[ka:ka + n2, kb:kb + pw1]
  act2 = jnp.maximum(acc2 + k2b_ref[0], 0.0)

  rows2 = jnp.maximum(
      jnp.dot(r2e_ref[...], act2, precision=_HI, preferred_element_type=jnp.float32),
      jnp.dot(r2o_ref[...], act2, precision=_HI, preferred_element_type=jnp.float32))
  p2 = jnp.maximum(
      jnp.dot(rows2, c2e_ref[...], precision=_HI, preferred_element_type=jnp.float32),
      jnp.dot(rows2, c2o_ref[...], precision=_HI, preferred_element_type=jnp.float32))
  # p2: (bsz*ph2, pw2)

  # ----- flatten (row-major, == x.view(-1, N)) into a (B, N) VMEM scratch -----
  for b in range(bsz):
    for i in range(ph2):
      feat_ref[b:b + 1, i * pw2:(i + 1) * pw2] = p2[b * ph2 + i:b * ph2 + i + 1, :]

  # ----- MLP: fc1 + ReLU + fc2, single output store -----
  hid = jnp.maximum(
      jnp.dot(feat_ref[...], fc1w_ref[...], precision=_HI,
              preferred_element_type=jnp.float32) + fc1b_ref[...], 0.0)
  o_ref[...] = jnp.dot(hid, fc2w_ref[...], precision=_HI,
                       preferred_element_type=jnp.float32) + fc2b_ref[...]


def fused_forward(x, params):
  """x: (B, 1, H, W) f32 -> (B, FEATURES): conv/relu/pool x2 + flatten + MLP."""
  bsz, c, h, w = x.shape
  assert c == 1
  ph1, pw1 = h // 2, w // 2
  ph2, pw2 = ph1 // 2, pw1 // 2
  n_feat = ph2 * pw2
  out_f = params["fc2_wt"].shape[1]

  # Compile-time 0/1 selection constants (numpy -> baked into the executable).
  r1e = _row_select(bsz, ph1, h + 2, bsz * (h + 2) - 2, 0)
  r1o = _row_select(bsz, ph1, h + 2, bsz * (h + 2) - 2, 1)
  c1e = _col_select(w, pw1, 0)
  c1o = _col_select(w, pw1, 1)
  r2e = _row_select(bsz, ph2, ph1 + 2, bsz * (ph1 + 2) - 2, 0)
  r2o = _row_select(bsz, ph2, ph1 + 2, bsz * (ph1 + 2) - 2, 1)
  c2e = _col_select(pw1, pw2, 0)
  c2o = _col_select(pw1, pw2, 1)

  vmem = pl.BlockSpec(memory_space=pltpu.MemorySpace.VMEM)
  smem = pl.BlockSpec(memory_space=pltpu.MemorySpace.SMEM)

  return pl.pallas_call(
      _fused_kernel,
      out_shape=jax.ShapeDtypeStruct((bsz, out_f), jnp.float32),
      in_specs=[vmem] + [smem] * 4 + [vmem] * 12,
      out_specs=vmem,
      scratch_shapes=[
          pltpu.VMEM((bsz * (h + 2), w + 2), jnp.float32),      # padded stack, layer 1
          pltpu.VMEM((bsz * (ph1 + 2), pw1 + 2), jnp.float32),  # padded stack, layer 2
          pltpu.VMEM((bsz, n_feat), jnp.float32),               # flattened features
      ],
  )(x.astype(jnp.float32),
    params["conv1_w"], params["conv1_b"],
    params["conv2_w"], params["conv2_b"],
    r1e, r1o, c1e, c1o, r2e, r2o, c2e, c2o,
    params["fc1_wt"], params["fc1_b"],
    params["fc2_wt"], params["fc2_b"])


def init_params(key):
  """PyTorch-style uniform(-1/sqrt(fan_in)) init, already in kernel layout:
  conv weights flattened to (9,), fc weights pre-transposed, biases as (1, N)."""
  ks = jax.random.split(key, 8)

  def uni(k, shape, fan_in):
    bound = 1.0 / float(fan_in) ** 0.5
    return jax.random.uniform(k, shape, jnp.float32, -bound, bound)

  return dict(
      conv1_w=uni(ks[0], (9,), 9),           # Conv2d(1,1,3) weight, row-major flat
      conv1_b=uni(ks[1], (1,), 9),
      conv2_w=uni(ks[2], (9,), 9),
      conv2_b=uni(ks[3], (1,), 9),
      fc1_wt=uni(ks[4], (STARTING_NODES, HIDDEN), STARTING_NODES),  # fc1 W^T
      fc1_b=uni(ks[5], (1, HIDDEN), STARTING_NODES),
      fc2_wt=uni(ks[6], (HIDDEN, FEATURES), HIDDEN),                # fc2 W^T
      fc2_b=uni(ks[7], (1, FEATURES), HIDDEN),
  )


@jax.jit
def forward(x, params):
  """x: (B, 1, H, W) NCHW, matching the PyTorch module's forward."""
  return fused_forward(x, params)


# ---------------------------- pure-JAX reference -----------------------------
def _ref_conv3x3_same(x, w9, b):
  bsz, h, wdt = x.shape
  wk = w9.reshape(3, 3)
  xp = jnp.pad(x, ((0, 0), (1, 1), (1, 1)))
  acc = jnp.zeros_like(x)
  for ka in range(3):
    for kb in range(3):
      acc = acc + wk[ka, kb] * xp[:, ka:ka + h, kb:kb + wdt]
  return acc + b[0]


def _ref_maxpool2(x):
  bsz, h, wdt = x.shape
  ho, wo = h // 2, wdt // 2
  return jnp.max(x[:, :2 * ho, :2 * wo].reshape(bsz, ho, 2, wo, 2), axis=(2, 4))


def ref_forward(x, params):
  xs = x[:, 0, :, :].astype(jnp.float32)
  h = _ref_maxpool2(jnp.maximum(
      _ref_conv3x3_same(xs, params["conv1_w"], params["conv1_b"]), 0.0))
  h = _ref_maxpool2(jnp.maximum(
      _ref_conv3x3_same(h, params["conv2_w"], params["conv2_b"]), 0.0))
  hf = h.reshape(h.shape[0], -1)                       # == x.view(-1, N)
  hh = jnp.maximum(jnp.dot(hf, params["fc1_wt"], precision=_HI) + params["fc1_b"], 0.0)
  return jnp.dot(hh, params["fc2_wt"], precision=_HI) + params["fc2_b"]


if __name__ == "__main__":
  key = jax.random.PRNGKey(0)
  kx, kp = jax.random.split(key)
  x = jax.random.normal(kx, (2, CONV_CH_1, IMG_H, IMG_W), jnp.float32)
  params = init_params(kp)

  out = jax.block_until_ready(forward(x, params))
  ref = ref_forward(x, params)

  assert out.shape == (2, FEATURES), out.shape
  if not jnp.allclose(out, ref, atol=1e-3, rtol=1e-3):
    raise AssertionError(f"mismatch: pallas={out} ref={ref}")
  print("KERNEL_OK")
</pallas_src>

<mosaic_0001>
module attributes {stable_mosaic.version = 11 : i64} {
  func.func @_fused_kernel(%arg0: memref<2x1x33x19xf32, #tpu.memory_space<vmem>>, %arg1: memref<9xf32, #tpu.memory_space<smem>>, %arg2: memref<1xf32, #tpu.memory_space<smem>>, %arg3: memref<9xf32, #tpu.memory_space<smem>>, %arg4: memref<1xf32, #tpu.memory_space<smem>>, %arg5: memref<32x68xf32, #tpu.memory_space<vmem>>, %arg6: memref<32x68xf32, #tpu.memory_space<vmem>>, %arg7: memref<19x9xf32, #tpu.memory_space<vmem>>, %arg8: memref<19x9xf32, #tpu.memory_space<vmem>>, %arg9: memref<16x34xf32, #tpu.memory_space<vmem>>, %arg10: memref<16x34xf32, #tpu.memory_space<vmem>>, %arg11: memref<9x4xf32, #tpu.memory_space<vmem>>, %arg12: memref<9x4xf32, #tpu.memory_space<vmem>>, %arg13: memref<32x128xf32, #tpu.memory_space<vmem>>, %arg14: memref<1x128xf32, #tpu.memory_space<vmem>>, %arg15: memref<128x2xf32, #tpu.memory_space<vmem>>, %arg16: memref<1x2xf32, #tpu.memory_space<vmem>>, %arg17: memref<2x2xf32, #tpu.memory_space<vmem>>, %arg18: memref<70x21xf32, #tpu.memory_space<vmem>>, %arg19: memref<36x11xf32, #tpu.memory_space<vmem>>, %arg20: memref<2x32xf32, #tpu.memory_space<vmem>>) attributes {dimension_semantics = [], scalar_prefetch = 0 : i64, scratch_operands = 3 : i64, tpu.core_type = #tpu.core_type<tc>} {
    %cst = arith.constant 0.000000e+00 : f32
    %0 = vector.broadcast %cst : f32 to vector<70x21xf32>
    %c0 = arith.constant 0 : index
    %c0_0 = arith.constant 0 : index
    %1 = vector.load %arg18[%c0, %c0_0] : memref<70x21xf32, #tpu.memory_space<vmem>>, vector<70x21xf32>
    tpu.vector_store %arg18[%c0, %c0_0], %0 {strides = array<i32>} : memref<70x21xf32, #tpu.memory_space<vmem>>, vector<70x21xf32>,
    %c0_1 = arith.constant 0 : index
    %c0_2 = arith.constant 0 : index
    %c0_3 = arith.constant 0 : index
    %c0_4 = arith.constant 0 : index
    %2 = vector.load %arg0[%c0_1, %c0_2, %c0_3, %c0_4] : memref<2x1x33x19xf32, #tpu.memory_space<vmem>>, vector<1x1x33x19xf32>
    %3 = vector.shape_cast %2 : vector<1x1x33x19xf32> to vector<33x19xf32>
    %c1 = arith.constant 1 : index
    %c1_5 = arith.constant 1 : index
    %4 = vector.load %arg18[%c1, %c1_5] : memref<70x21xf32, #tpu.memory_space<vmem>>, vector<33x19xf32>
    tpu.vector_store %arg18[%c1, %c1_5], %3 {strides = array<i32>} : memref<70x21xf32, #tpu.memory_space<vmem>>, vector<33x19xf32>,
    %c1_6 = arith.constant 1 : index
    %c0_7 = arith.constant 0 : index
    %c0_8 = arith.constant 0 : index
    %c0_9 = arith.constant 0 : index
    %5 = vector.load %arg0[%c1_6, %c0_7, %c0_8, %c0_9] : memref<2x1x33x19xf32, #tpu.memory_space<vmem>>, vector<1x1x33x19xf32>
    %6 = vector.shape_cast %5 : vector<1x1x33x19xf32> to vector<33x19xf32>
    %c36 = arith.constant 36 : index
    %c1_10 = arith.constant 1 : index
    %7 = vector.load %arg18[%c36, %c1_10] : memref<70x21xf32, #tpu.memory_space<vmem>>, vector<33x19xf32>
    tpu.vector_store %arg18[%c36, %c1_10], %6 {strides = array<i32>} : memref<70x21xf32, #tpu.memory_space<vmem>>, vector<33x19xf32>,
    %c0_11 = arith.constant 0 : index
    %c0_12 = arith.constant 0 : index
    %8 = vector.load %arg18[%c0_11, %c0_12] : memref<70x21xf32, #tpu.memory_space<vmem>>, vector<70x21xf32>
    %cst_13 = arith.constant 0.000000e+00 : f32
    %9 = vector.broadcast %cst_13 : f32 to vector<68x19xf32>
    %c0_14 = arith.constant 0 : index
    %10 = memref.load %arg1[%c0_14] : memref<9xf32, #tpu.memory_space<smem>>
    %11 = vector.extract_strided_slice %8 {offsets = [0, 0], sizes = [68, 19], strides = [1, 1]} : vector<70x21xf32> to vector<68x19xf32>
    %12 = vector.broadcast %10 : f32 to vector<68x19xf32>
    %13 = arith.mulf %12, %11 : vector<68x19xf32>
    %14 = arith.addf %9, %13 : vector<68x19xf32>
    %c1_15 = arith.constant 1 : index
    %15 = memref.load %arg1[%c1_15] : memref<9xf32, #tpu.memory_space<smem>>
    %16 = vector.extract_strided_slice %8 {offsets = [0, 1], sizes = [68, 19], strides = [1, 1]} : vector<70x21xf32> to vector<68x19xf32>
    %17 = vector.broadcast %15 : f32 to vector<68x19xf32>
    %18 = arith.mulf %17, %16 : vector<68x19xf32>
    %19 = arith.addf %14, %18 : vector<68x19xf32>
    %c2 = arith.constant 2 : index
    %20 = memref.load %arg1[%c2] : memref<9xf32, #tpu.memory_space<smem>>
    %21 = vector.extract_strided_slice %8 {offsets = [0, 2], sizes = [68, 19], strides = [1, 1]} : vector<70x21xf32> to vector<68x19xf32>
    %22 = vector.broadcast %20 : f32 to vector<68x19xf32>
    %23 = arith.mulf %22, %21 : vector<68x19xf32>
    %24 = arith.addf %19, %23 : vector<68x19xf32>
    %c3 = arith.constant 3 : index
    %25 = memref.load %arg1[%c3] : memref<9xf32, #tpu.memory_space<smem>>
    %26 = vector.extract_strided_slice %8 {offsets = [1, 0], sizes = [68, 19], strides = [1, 1]} : vector<70x21xf32> to vector<68x19xf32>
    %27 = vector.broadcast %25 : f32 to vector<68x19xf32>
    %28 = arith.mulf %27, %26 : vector<68x19xf32>
    %29 = arith.addf %24, %28 : vector<68x19xf32>
    %c4 = arith.constant 4 : index
    %30 = memref.load %arg1[%c4] : memref<9xf32, #tpu.memory_space<smem>>
    %31 = vector.extract_strided_slice %8 {offsets = [1, 1], sizes = [68, 19], strides = [1, 1]} : vector<70x21xf32> to vector<68x19xf32>
    %32 = vector.broadcast %30 : f32 to vector<68x19xf32>
    %33 = arith.mulf %32, %31 : vector<68x19xf32>
    %34 = arith.addf %29, %33 : vector<68x19xf32>
    %c5 = arith.constant 5 : index
    %35 = memref.load %arg1[%c5] : memref<9xf32, #tpu.memory_space<smem>>
    %36 = vector.extract_strided_slice %8 {offsets = [1, 2], sizes = [68, 19], strides = [1, 1]} : vector<70x21xf32> to vector<68x19xf32>
    %37 = vector.broadcast %35 : f32 to vector<68x19xf32>
    %38 = arith.mulf %37, %36 : vector<68x19xf32>
    %39 = arith.addf %34, %38 : vector<68x19xf32>
    %c6 = arith.constant 6 : index
    %40 = memref.load %arg1[%c6] : memref<9xf32, #tpu.memory_space<smem>>
    %41 = vector.extract_strided_slice %8 {offsets = [2, 0], sizes = [68, 19], strides = [1, 1]} : vector<70x21xf32> to vector<68x19xf32>
    %42 = vector.broadcast %40 : f32 to vector<68x19xf32>
    %43 = arith.mulf %42, %41 : vector<68x19xf32>
    %44 = arith.addf %39, %43 : vector<68x19xf32>
    %c7 = arith.constant 7 : index
    %45 = memref.load %arg1[%c7] : memref<9xf32, #tpu.memory_space<smem>>
    %46 = vector.extract_strided_slice %8 {offsets = [2, 1], sizes = [68, 19], strides = [1, 1]} : vector<70x21xf32> to vector<68x19xf32>
    %47 = vector.broadcast %45 : f32 to vector<68x19xf32>
    %48 = arith.mulf %47, %46 : vector<68x19xf32>
    %49 = arith.addf %44, %48 : vector<68x19xf32>
    %c8 = arith.constant 8 : index
    %50 = memref.load %arg1[%c8] : memref<9xf32, #tpu.memory_space<smem>>
    %51 = vector.extract_strided_slice %8 {offsets = [2, 2], sizes = [68, 19], strides = [1, 1]} : vector<70x21xf32> to vector<68x19xf32>
    %52 = vector.broadcast %50 : f32 to vector<68x19xf32>
    %53 = arith.mulf %52, %51 : vector<68x19xf32>
    %54 = arith.addf %49, %53 : vector<68x19xf32>
    %c0_16 = arith.constant 0 : index
    %55 = memref.load %arg2[%c0_16] : memref<1xf32, #tpu.memory_space<smem>>
    %56 = vector.broadcast %55 : f32 to vector<68x19xf32>
    %57 = arith.addf %54, %56 : vector<68x19xf32>
    %cst_17 = arith.constant 0.000000e+00 : f32
    %58 = vector.broadcast %cst_17 : f32 to vector<68x19xf32>
    %59 = arith.maximumf %57, %58 : vector<68x19xf32>
    %c0_18 = arith.constant 0 : index
    %c0_19 = arith.constant 0 : index
    %60 = vector.load %arg5[%c0_18, %c0_19] : memref<32x68xf32, #tpu.memory_space<vmem>>, vector<32x68xf32>
    %cst_20 = arith.constant dense<0.000000e+00> : vector<32x19xf32>
    %61 = tpu.matmul %60, %59, %cst_20 {dimension_numbers = #tpu.dot_dimension_numbers<[1], [0], [0], [1], [0, 0, 1, 1], [], []>, precision = #tpu.contract_precision<fp32>} : vector<32x68xf32>, vector<68x19xf32>, vector<32x19xf32> -> vector<32x19xf32>
    %c0_21 = arith.constant 0 : index
    %c0_22 = arith.constant 0 : index
    %62 = vector.load %arg6[%c0_21, %c0_22] : memref<32x68xf32, #tpu.memory_space<vmem>>, vector<32x68xf32>
    %cst_23 = arith.constant dense<0.000000e+00> : vector<32x19xf32>
    %63 = tpu.matmul %62, %59, %cst_23 {dimension_numbers = #tpu.dot_dimension_numbers<[1], [0], [0], [1], [0, 0, 1, 1], [], []>, precision = #tpu.contract_precision<fp32>} : vector<32x68xf32>, vector<68x19xf32>, vector<32x19xf32> -> vector<32x19xf32>
    %64 = arith.maximumf %61, %63 : vector<32x19xf32>
    %c0_24 = arith.constant 0 : index
    %c0_25 = arith.constant 0 : index
    %65 = vector.load %arg7[%c0_24, %c0_25] : memref<19x9xf32, #tpu.memory_space<vmem>>, vector<19x9xf32>
    %cst_26 = arith.constant dense<0.000000e+00> : vector<32x9xf32>
    %66 = tpu.matmul %64, %65, %cst_26 {dimension_numbers = #tpu.dot_dimension_numbers<[1], [0], [0], [1], [0, 0, 1, 1], [], []>, precision = #tpu.contract_precision<fp32>} : vector<32x19xf32>, vector<19x9xf32>, vector<32x9xf32> -> vector<32x9xf32>
    %c0_27 = arith.constant 0 : index
    %c0_28 = arith.constant 0 : index
    %67 = vector.load %arg8[%c0_27, %c0_28] : memref<19x9xf32, #tpu.memory_space<vmem>>, vector<19x9xf32>
    %cst_29 = arith.constant dense<0.000000e+00> : vector<32x9xf32>
    %68 = tpu.matmul %64, %67, %cst_29 {dimension_numbers = #tpu.dot_dimension_numbers<[1], [0], [0], [1], [0, 0, 1, 1], [], []>, precision = #tpu.contract_precision<fp32>} : vector<32x19xf32>, vector<19x9xf32>, vector<32x9xf32> -> vector<32x9xf32>
    %69 = arith.maximumf %66, %68 : vector<32x9xf32>
    %cst_30 = arith.constant 0.000000e+00 : f32
    %70 = vector.broadcast %cst_30 : f32 to vector<36x11xf32>
    %c0_31 = arith.constant 0 : index
    %c0_32 = arith.constant 0 : index
    %71 = vector.load %arg19[%c0_31, %c0_32] : memref<36x11xf32, #tpu.memory_space<vmem>>, vector<36x11xf32>
    tpu.vector_store %arg19[%c0_31, %c0_32], %70 {strides = array<i32>} : memref<36x11xf32, #tpu.memory_space<vmem>>, vector<36x11xf32>,
    %72 = vector.extract_strided_slice %69 {offsets = [0, 0], sizes = [16, 9], strides = [1, 1]} : vector<32x9xf32> to vector<16x9xf32>
    %c1_33 = arith.constant 1 : index
    %c1_34 = arith.constant 1 : index
    %73 = vector.load %arg19[%c1_33, %c1_34] : memref<36x11xf32, #tpu.memory_space<vmem>>, vector<16x9xf32>
    tpu.vector_store %arg19[%c1_33, %c1_34], %72 {strides = array<i32>} : memref<36x11xf32, #tpu.memory_space<vmem>>, vector<16x9xf32>,
    %74 = vector.extract_strided_slice %69 {offsets = [16, 0], sizes = [16, 9], strides = [1, 1]} : vector<32x9xf32> to vector<16x9xf32>
    %c19 = arith.constant 19 : index
    %c1_35 = arith.constant 1 : index
    %75 = vector.load %arg19[%c19, %c1_35] : memref<36x11xf32, #tpu.memory_space<vmem>>, vector<16x9xf32>
    tpu.vector_store %arg19[%c19, %c1_35], %74 {strides = array<i32>} : memref<36x11xf32, #tpu.memory_space<vmem>>, vector<16x9xf32>,
    %c0_36 = arith.constant 0 : index
    %c0_37 = arith.constant 0 : index
    %76 = vector.load %arg19[%c0_36, %c0_37] : memref<36x11xf32, #tpu.memory_space<vmem>>, vector<36x11xf32>
    %cst_38 = arith.constant 0.000000e+00 : f32
    %77 = vector.broadcast %cst_38 : f32 to vector<34x9xf32>
    %c0_39 = arith.constant 0 : index
    %78 = memref.load %arg3[%c0_39] : memref<9xf32, #tpu.memory_space<smem>>
    %79 = vector.extract_strided_slice %76 {offsets = [0, 0], sizes = [34, 9], strides = [1, 1]} : vector<36x11xf32> to vector<34x9xf32>
    %80 = vector.broadcast %78 : f32 to vector<34x9xf32>
    %81 = arith.mulf %80, %79 : vector<34x9xf32>
    %82 = arith.addf %77, %81 : vector<34x9xf32>
    %c1_40 = arith.constant 1 : index
    %83 = memref.load %arg3[%c1_40] : memref<9xf32, #tpu.memory_space<smem>>
    %84 = vector.extract_strided_slice %76 {offsets = [0, 1], sizes = [34, 9], strides = [1, 1]} : vector<36x11xf32> to vector<34x9xf32>
    %85 = vector.broadcast %83 : f32 to vector<34x9xf32>
    %86 = arith.mulf %85, %84 : vector<34x9xf32>
    %87 = arith.addf %82, %86 : vector<34x9xf32>
    %c2_41 = arith.constant 2 : index
    %88 = memref.load %arg3[%c2_41] : memref<9xf32, #tpu.memory_space<smem>>
    %89 = vector.extract_strided_slice %76 {offsets = [0, 2], sizes = [34, 9], strides = [1, 1]} : vector<36x11xf32> to vector<34x9xf32>
    %90 = vector.broadcast %88 : f32 to vector<34x9xf32>
    %91 = arith.mulf %90, %89 : vector<34x9xf32>
    %92 = arith.addf %87, %91 : vector<34x9xf32>
    %c3_42 = arith.constant 3 : index
    %93 = memref.load %arg3[%c3_42] : memref<9xf32, #tpu.memory_space<smem>>
    %94 = vector.extract_strided_slice %76 {offsets = [1, 0], sizes = [34, 9], strides = [1, 1]} : vector<36x11xf32> to vector<34x9xf32>
    %95 = vector.broadcast %93 : f32 to vector<34x9xf32>
    %96 = arith.mulf %95, %94 : vector<34x9xf32>
    %97 = arith.addf %92, %96 : vector<34x9xf32>
    %c4_43 = arith.constant 4 : index
    %98 = memref.load %arg3[%c4_43] : memref<9xf32, #tpu.memory_space<smem>>
    %99 = vector.extract_strided_slice %76 {offsets = [1, 1], sizes = [34, 9], strides = [1, 1]} : vector<36x11xf32> to vector<34x9xf32>
    %100 = vector.broadcast %98 : f32 to vector<34x9xf32>
    %101 = arith.mulf %100, %99 : vector<34x9xf32>
    %102 = arith.addf %97, %101 : vector<34x9xf32>
    %c5_44 = arith.constant 5 : index
    %103 = memref.load %arg3[%c5_44] : memref<9xf32, #tpu.memory_space<smem>>
    %104 = vector.extract_strided_slice %76 {offsets = [1, 2], sizes = [34, 9], strides = [1, 1]} : vector<36x11xf32> to vector<34x9xf32>
    %105 = vector.broadcast %103 : f32 to vector<34x9xf32>
    %106 = arith.mulf %105, %104 : vector<34x9xf32>
    %107 = arith.addf %102, %106 : vector<34x9xf32>
    %c6_45 = arith.constant 6 : index
    %108 = memref.load %arg3[%c6_45] : memref<9xf32, #tpu.memory_space<smem>>
    %109 = vector.extract_strided_slice %76 {offsets = [2, 0], sizes = [34, 9], strides = [1, 1]} : vector<36x11xf32> to vector<34x9xf32>
    %110 = vector.broadcast %108 : f32 to vector<34x9xf32>
    %111 = arith.mulf %110, %109 : vector<34x9xf32>
    %112 = arith.addf %107, %111 : vector<34x9xf32>
    %c7_46 = arith.constant 7 : index
    %113 = memref.load %arg3[%c7_46] : memref<9xf32, #tpu.memory_space<smem>>
    %114 = vector.extract_strided_slice %76 {offsets = [2, 1], sizes = [34, 9], strides = [1, 1]} : vector<36x11xf32> to vector<34x9xf32>
    %115 = vector.broadcast %113 : f32 to vector<34x9xf32>
    %116 = arith.mulf %115, %114 : vector<34x9xf32>
    %117 = arith.addf %112, %116 : vector<34x9xf32>
    %c8_47 = arith.constant 8 : index
    %118 = memref.load %arg3[%c8_47] : memref<9xf32, #tpu.memory_space<smem>>
    %119 = vector.extract_strided_slice %76 {offsets = [2, 2], sizes = [34, 9], strides = [1, 1]} : vector<36x11xf32> to vector<34x9xf32>
    %120 = vector.broadcast %118 : f32 to vector<34x9xf32>
    %121 = arith.mulf %120, %119 : vector<34x9xf32>
    %122 = arith.addf %117, %121 : vector<34x9xf32>
    %c0_48 = arith.constant 0 : index
    %123 = memref.load %arg4[%c0_48] : memref<1xf32, #tpu.memory_space<smem>>
    %124 = vector.broadcast %123 : f32 to vector<34x9xf32>
    %125 = arith.addf %122, %124 : vector<34x9xf32>
    %cst_49 = arith.constant 0.000000e+00 : f32
    %126 = vector.broadcast %cst_49 : f32 to vector<34x9xf32>
    %127 = arith.maximumf %125, %126 : vector<34x9xf32>
    %c0_50 = arith.constant 0 : index
    %c0_51 = arith.constant 0 : index
    %128 = vector.load %arg9[%c0_50, %c0_51] : memref<16x34xf32, #tpu.memory_space<vmem>>, vector<16x34xf32>
    %cst_52 = arith.constant dense<0.000000e+00> : vector<16x9xf32>
    %129 = tpu.matmul %128, %127, %cst_52 {dimension_numbers = #tpu.dot_dimension_numbers<[1], [0], [0], [1], [0, 0, 1, 1], [], []>, precision = #tpu.contract_precision<fp32>} : vector<16x34xf32>, vector<34x9xf32>, vector<16x9xf32> -> vector<16x9xf32>
    %c0_53 = arith.constant 0 : index
    %c0_54 = arith.constant 0 : index
    %130 = vector.load %arg10[%c0_53, %c0_54] : memref<16x34xf32, #tpu.memory_space<vmem>>, vector<16x34xf32>
    %cst_55 = arith.constant dense<0.000000e+00> : vector<16x9xf32>
    %131 = tpu.matmul %130, %127, %cst_55 {dimension_numbers = #tpu.dot_dimension_numbers<[1], [0], [0], [1], [0, 0, 1, 1], [], []>, precision = #tpu.contract_precision<fp32>} : vector<16x34xf32>, vector<34x9xf32>, vector<16x9xf32> -> vector<16x9xf32>
    %132 = arith.maximumf %129, %131 : vector<16x9xf32>
    %c0_56 = arith.constant 0 : index
    %c0_57 = arith.constant 0 : index
    %133 = vector.load %arg11[%c0_56, %c0_57] : memref<9x4xf32, #tpu.memory_space<vmem>>, vector<9x4xf32>
    %cst_58 = arith.constant dense<0.000000e+00> : vector<16x4xf32>
    %134 = tpu.matmul %132, %133, %cst_58 {dimension_numbers = #tpu.dot_dimension_numbers<[1], [0], [0], [1], [0, 0, 1, 1], [], []>, precision = #tpu.contract_precision<fp32>} : vector<16x9xf32>, vector<9x4xf32>, vector<16x4xf32> -> vector<16x4xf32>
    %c0_59 = arith.constant 0 : index
    %c0_60 = arith.constant 0 : index
    %135 = vector.load %arg12[%c0_59, %c0_60] : memref<9x4xf32, #tpu.memory_space<vmem>>, vector<9x4xf32>
    %cst_61 = arith.constant dense<0.000000e+00> : vector<16x4xf32>
    %136 = tpu.matmul %132, %135, %cst_61 {dimension_numbers = #tpu.dot_dimension_numbers<[1], [0], [0], [1], [0, 0, 1, 1], [], []>, precision = #tpu.contract_precision<fp32>} : vector<16x9xf32>, vector<9x4xf32>, vector<16x4xf32> -> vector<16x4xf32>
    %137 = arith.maximumf %134, %136 : vector<16x4xf32>
    %138 = vector.extract_strided_slice %137 {offsets = [0, 0], sizes = [1, 4], strides = [1, 1]} : vector<16x4xf32> to vector<1x4xf32>
    %c0_62 = arith.constant 0 : index
    %c0_63 = arith.constant 0 : index
    %139 = vector.load %arg20[%c0_62, %c0_63] : memref<2x32xf32, #tpu.memory_space<vmem>>, vector<1x4xf32>
    tpu.vector_store %arg20[%c0_62, %c0_63], %138 {strides = array<i32>} : memref<2x32xf32, #tpu.memory_space<vmem>>, vector<1x4xf32>,
    %140 = vector.extract_strided_slice %137 {offsets = [1, 0], sizes = [1, 4], strides = [1, 1]} : vector<16x4xf32> to vector<1x4xf32>
    %c0_64 = arith.constant 0 : index
    %c4_65 = arith.constant 4 : index
    %141 = vector.load %arg20[%c0_64, %c4_65] : memref<2x32xf32, #tpu.memory_space<vmem>>, vector<1x4xf32>
    tpu.vector_store %arg20[%c0_64, %c4_65], %140 {strides = array<i32>} : memref<2x32xf32, #tpu.memory_space<vmem>>, vector<1x4xf32>,
    %142 = vector.extract_strided_slice %137 {offsets = [2, 0], sizes = [1, 4], strides = [1, 1]} : vector<16x4xf32> to vector<1x4xf32>
    %c0_66 = arith.constant 0 : index
    %c8_67 = arith.constant 8 : index
    %143 = vector.load %arg20[%c0_66, %c8_67] : memref<2x32xf32, #tpu.memory_space<vmem>>, vector<1x4xf32>
    tpu.vector_store %arg20[%c0_66, %c8_67], %142 {strides = array<i32>} : memref<2x32xf32, #tpu.memory_space<vmem>>, vector<1x4xf32>,
    %144 = vector.extract_strided_slice %137 {offsets = [3, 0], sizes = [1, 4], strides = [1, 1]} : vector<16x4xf32> to vector<1x4xf32>
    %c0_68 = arith.constant 0 : index
    %c12 = arith.constant 12 : index
    %145 = vector.load %arg20[%c0_68, %c12] : memref<2x32xf32, #tpu.memory_space<vmem>>, vector<1x4xf32>
    tpu.vector_store %arg20[%c0_68, %c12], %144 {strides = array<i32>} : memref<2x32xf32, #tpu.memory_space<vmem>>, vector<1x4xf32>,
    %146 = vector.extract_strided_slice %137 {offsets = [4, 0], sizes = [1, 4], strides = [1, 1]} : vector<16x4xf32> to vector<1x4xf32>
    %c0_69 = arith.constant 0 : index
    %c16 = arith.constant 16 : index
    %147 = vector.load %arg20[%c0_69, %c16] : memref<2x32xf32, #tpu.memory_space<vmem>>, vector<1x4xf32>
    tpu.vector_store %arg20[%c0_69, %c16], %146 {strides = array<i32>} : memref<2x32xf32, #tpu.memory_space<vmem>>, vector<1x4xf32>,
    %148 = vector.extract_strided_slice %137 {offsets = [5, 0], sizes = [1, 4], strides = [1, 1]} : vector<16x4xf32> to vector<1x4xf32>
    %c0_70 = arith.constant 0 : index
    %c20 = arith.constant 20 : index
    %149 = vector.load %arg20[%c0_70, %c20] : memref<2x32xf32, #tpu.memory_space<vmem>>, vector<1x4xf32>
    tpu.vector_store %arg20[%c0_70, %c20], %148 {strides = array<i32>} : memref<2x32xf32, #tpu.memory_space<vmem>>, vector<1x4xf32>,
    %150 = vector.extract_strided_slice %137 {offsets = [6, 0], sizes = [1, 4], strides = [1, 1]} : vector<16x4xf32> to vector<1x4xf32>
    %c0_71 = arith.constant 0 : index
    %c24 = arith.constant 24 : index
    %151 = vector.load %arg20[%c0_71, %c24] : memref<2x32xf32, #tpu.memory_space<vmem>>, vector<1x4xf32>
    tpu.vector_store %arg20[%c0_71, %c24], %150 {strides = array<i32>} : memref<2x32xf32, #tpu.memory_space<vmem>>, vector<1x4xf32>,
    %152 = vector.extract_strided_slice %137 {offsets = [7, 0], sizes = [1, 4], strides = [1, 1]} : vector<16x4xf32> to vector<1x4xf32>
    %c0_72 = arith.constant 0 : index
    %c28 = arith.constant 28 : index
    %153 = vector.load %arg20[%c0_72, %c28] : memref<2x32xf32, #tpu.memory_space<vmem>>, vector<1x4xf32>
    tpu.vector_store %arg20[%c0_72, %c28], %152 {strides = array<i32>} : memref<2x32xf32, #tpu.memory_space<vmem>>, vector<1x4xf32>,
    %154 = vector.extract_strided_slice %137 {offsets = [8, 0], sizes = [1, 4], strides = [1, 1]} : vector<16x4xf32> to vector<1x4xf32>
    %c1_73 = arith.constant 1 : index
    %c0_74 = arith.constant 0 : index
    %155 = vector.load %arg20[%c1_73, %c0_74] : memref<2x32xf32, #tpu.memory_space<vmem>>, vector<1x4xf32>
    tpu.vector_store %arg20[%c1_73, %c0_74], %154 {strides = array<i32>} : memref<2x32xf32, #tpu.memory_space<vmem>>, vector<1x4xf32>,
    %156 = vector.extract_strided_slice %137 {offsets = [9, 0], sizes = [1, 4], strides = [1, 1]} : vector<16x4xf32> to vector<1x4xf32>
    %c1_75 = arith.constant 1 : index
    %c4_76 = arith.constant 4 : index
    %157 = vector.load %arg20[%c1_75, %c4_76] : memref<2x32xf32, #tpu.memory_space<vmem>>, vector<1x4xf32>
    tpu.vector_store %arg20[%c1_75, %c4_76], %156 {strides = array<i32>} : memref<2x32xf32, #tpu.memory_space<vmem>>, vector<1x4xf32>,
    %158 = vector.extract_strided_slice %137 {offsets = [10, 0], sizes = [1, 4], strides = [1, 1]} : vector<16x4xf32> to vector<1x4xf32>
    %c1_77 = arith.constant 1 : index
    %c8_78 = arith.constant 8 : index
    %159 = vector.load %arg20[%c1_77, %c8_78] : memref<2x32xf32, #tpu.memory_space<vmem>>, vector<1x4xf32>
    tpu.vector_store %arg20[%c1_77, %c8_78], %158 {strides = array<i32>} : memref<2x32xf32, #tpu.memory_space<vmem>>, vector<1x4xf32>,
    %160 = vector.extract_strided_slice %137 {offsets = [11, 0], sizes = [1, 4], strides = [1, 1]} : vector<16x4xf32> to vector<1x4xf32>
    %c1_79 = arith.constant 1 : index
    %c12_80 = arith.constant 12 : index
    %161 = vector.load %arg20[%c1_79, %c12_80] : memref<2x32xf32, #tpu.memory_space<vmem>>, vector<1x4xf32>
    tpu.vector_store %arg20[%c1_79, %c12_80], %160 {strides = array<i32>} : memref<2x32xf32, #tpu.memory_space<vmem>>, vector<1x4xf32>,
    %162 = vector.extract_strided_slice %137 {offsets = [12, 0], sizes = [1, 4], strides = [1, 1]} : vector<16x4xf32> to vector<1x4xf32>
    %c1_81 = arith.constant 1 : index
    %c16_82 = arith.constant 16 : index
    %163 = vector.load %arg20[%c1_81, %c16_82] : memref<2x32xf32, #tpu.memory_space<vmem>>, vector<1x4xf32>
    tpu.vector_store %arg20[%c1_81, %c16_82], %162 {strides = array<i32>} : memref<2x32xf32, #tpu.memory_space<vmem>>, vector<1x4xf32>,
    %164 = vector.extract_strided_slice %137 {offsets = [13, 0], sizes = [1, 4], strides = [1, 1]} : vector<16x4xf32> to vector<1x4xf32>
    %c1_83 = arith.constant 1 : index
    %c20_84 = arith.constant 20 : index
    %165 = vector.load %arg20[%c1_83, %c20_84] : memref<2x32xf32, #tpu.memory_space<vmem>>, vector<1x4xf32>
    tpu.vector_store %arg20[%c1_83, %c20_84], %164 {strides = array<i32>} : memref<2x32xf32, #tpu.memory_space<vmem>>, vector<1x4xf32>,
    %166 = vector.extract_strided_slice %137 {offsets = [14, 0], sizes = [1, 4], strides = [1, 1]} : vector<16x4xf32> to vector<1x4xf32>
    %c1_85 = arith.constant 1 : index
    %c24_86 = arith.constant 24 : index
    %167 = vector.load %arg20[%c1_85, %c24_86] : memref<2x32xf32, #tpu.memory_space<vmem>>, vector<1x4xf32>
    tpu.vector_store %arg20[%c1_85, %c24_86], %166 {strides = array<i32>} : memref<2x32xf32, #tpu.memory_space<vmem>>, vector<1x4xf32>,
    %168 = vector.extract_strided_slice %137 {offsets = [15, 0], sizes = [1, 4], strides = [1, 1]} : vector<16x4xf32> to vector<1x4xf32>
    %c1_87 = arith.constant 1 : index
    %c28_88 = arith.constant 28 : index
    %169 = vector.load %arg20[%c1_87, %c28_88] : memref<2x32xf32, #tpu.memory_space<vmem>>, vector<1x4xf32>
    tpu.vector_store %arg20[%c1_87, %c28_88], %168 {strides = array<i32>} : memref<2x32xf32, #tpu.memory_space<vmem>>, vector<1x4xf32>,
    %c0_89 = arith.constant 0 : index
    %c0_90 = arith.constant 0 : index
    %170 = vector.load %arg20[%c0_89, %c0_90] : memref<2x32xf32, #tpu.memory_space<vmem>>, vector<2x32xf32>
    %c0_91 = arith.constant 0 : index
    %c0_92 = arith.constant 0 : index
    %171 = vector.load %arg13[%c0_91, %c0_92] : memref<32x128xf32, #tpu.memory_space<vmem>>, vector<32x128xf32>
    %cst_93 = arith.constant dense<0.000000e+00> : vector<2x128xf32>
    %172 = tpu.matmul %170, %171, %cst_93 {dimension_numbers = #tpu.dot_dimension_numbers<[1], [0], [0], [1], [0, 0, 1, 1], [], []>, precision = #tpu.contract_precision<fp32>} : vector<2x32xf32>, vector<32x128xf32>, vector<2x128xf32> -> vector<2x128xf32>
    %c0_94 = arith.constant 0 : index
    %c0_95 = arith.constant 0 : index
    %173 = vector.load %arg14[%c0_94, %c0_95] : memref<1x128xf32, #tpu.memory_space<vmem>>, vector<1x128xf32>
    %174 = vector.broadcast %173 : vector<1x128xf32> to vector<2x128xf32>
    %175 = arith.addf %172, %174 : vector<2x128xf32>
    %cst_96 = arith.constant 0.000000e+00 : f32
    %176 = vector.broadcast %cst_96 : f32 to vector<2x128xf32>
    %177 = arith.maximumf %175, %176 : vector<2x128xf32>
    %c0_97 = arith.constant 0 : index
    %c0_98 = arith.constant 0 : index
    %178 = vector.load %arg15[%c0_97, %c0_98] : memref<128x2xf32, #tpu.memory_space<vmem>>, vector<128x2xf32>
    %cst_99 = arith.constant dense<0.000000e+00> : vector<2x2xf32>
    %179 = tpu.matmul %177, %178, %cst_99 {dimension_numbers = #tpu.dot_dimension_numbers<[1], [0], [0], [1], [0, 0, 1, 1], [], []>, precision = #tpu.contract_precision<fp32>} : vector<2x128xf32>, vector<128x2xf32>, vector<2x2xf32> -> vector<2x2xf32>
    %c0_100 = arith.constant 0 : index
    %c0_101 = arith.constant 0 : index
    %180 = vector.load %arg16[%c0_100, %c0_101] : memref<1x2xf32, #tpu.memory_space<vmem>>, vector<1x2xf32>
    %181 = vector.broadcast %180 : vector<1x2xf32> to vector<2x2xf32>
    %182 = arith.addf %179, %181 : vector<2x2xf32>
    %c0_102 = arith.constant 0 : index
    %c0_103 = arith.constant 0 : index
    %183 = vector.load %arg17[%c0_102, %c0_103] : memref<2x2xf32, #tpu.memory_space<vmem>>, vector<2x2xf32>
    tpu.vector_store %arg17[%c0_102, %c0_103], %182 {strides = array<i32>} : memref<2x2xf32, #tpu.memory_space<vmem>>, vector<2x2xf32>,
    return
  }
}

</mosaic_0001>

<llo_original>
// kernel: forward.1
$region0: #{forward.1}
  #allocation0 [shape = 'u32[]', space=smem, size = 0x4, offset = 0x4, fixed_abs, tag = 'smem constant byte address 0x4 - core index']
  #allocation1 [shape = 'u32[144,128]{1,0:T(1,128)}', space=vmem, size = 0x12000, scoped, tag = 'internal scratch']
  #allocation2 [shape = 'f32[70,21]{1,0:T(8,128)}', space=vmem, size = 0x9000, scoped, tag = 'scratch operand']
  #allocation3 [shape = 'f32[36,11]{1,0:T(8,128)}', space=vmem, size = 0x5000, scoped, tag = 'scratch operand']
  #allocation4 [shape = 'f32[2,32]{1,0:T(2,128)}', space=vmem, size = 0x400, scoped, tag = 'scratch operand']
  #allocation5 [shape = 'f32[1]{0:T(128)S(6)}', space=smem, size = 0x200, scoped, tag = 'scoped memory for forward.1']
  #allocation6 [shape = 'f32[1]{0:T(128)S(6)}', space=smem, size = 0x200, scoped, tag = 'scoped memory for forward.1']
  %s0 = inlined_call_operand.vmem [shape: f32[2,1,33,19], index: 0, kind: input, shape index: {}]
  %s1 = inlined_call_operand.vmem [shape: f32[9], index: 1, kind: input, shape index: {}]
  %s2 = inlined_call_operand.<no memory space> [shape: f32[1], index: 2, kind: input, shape index: {}]
  %s3 = inlined_call_operand.vmem [shape: f32[9], index: 3, kind: input, shape index: {}]
  %s4 = inlined_call_operand.<no memory space> [shape: f32[1], index: 4, kind: input, shape index: {}]
  %s5 = inlined_call_operand.vmem [shape: f32[32,68], index: 5, kind: input, shape index: {}]
  %s6 = inlined_call_operand.vmem [shape: f32[32,68], index: 6, kind: input, shape index: {}]
  %s7 = inlined_call_operand.vmem [shape: f32[19,9], index: 7, kind: input, shape index: {}]
  %s8 = inlined_call_operand.vmem [shape: f32[19,9], index: 8, kind: input, shape index: {}]
  %s9 = inlined_call_operand.vmem [shape: f32[16,34], index: 9, kind: input, shape index: {}]
  %s10 = inlined_call_operand.vmem [shape: f32[16,34], index: 10, kind: input, shape index: {}]
  %s11 = inlined_call_operand.vmem [shape: f32[9,4], index: 11, kind: input, shape index: {}]
  %s12 = inlined_call_operand.vmem [shape: f32[9,4], index: 12, kind: input, shape index: {}]
  %s13 = inlined_call_operand.vmem [shape: f32[32,128], index: 13, kind: input, shape index: {}]
  %s14 = inlined_call_operand.vmem [shape: f32[1,128], index: 14, kind: input, shape index: {}]
  %s15 = inlined_call_operand.vmem [shape: f32[128,2], index: 15, kind: input, shape index: {}]
  %s16 = inlined_call_operand.vmem [shape: f32[1,2], index: 16, kind: input, shape index: {}]
  %s17 = inlined_call_operand.hbm [shape: f32[2,2], index: 17, kind: output, shape index: {}]
  %s18 = sld [smem:[#allocation0]]
  $region86: #{forward.1} parent=0
    _
  %s20 = ssub.s32 1, %s18
  %s21 = scalar_select 0, %s20, %s18
  %22 = sst [smem:[#allocation5]] %s2
  %23 = sst [smem:[#allocation6]] %s4
  $region1: #{forward.1} parent=0
    #allocation7 [shape = 'u8[512]{0}', space=smem, size = 0x200, scoped, tag = 'input window, operand 1, single buffered']
    #allocation8 [shape = 's32[1]{0}', space=sflag, size = 0x4, scoped, tag = 'scoped memory for forward.1']
    #allocation9 [shape = 's32[1]{0}', space=sflag, size = 0x4, scoped, tag = 'scoped memory for forward.1']
    #allocation10 [shape = 'u8[512]{0}', space=smem, size = 0x200, scoped, tag = 'input window, operand 3, single buffered']
    #allocation11 [shape = 's32[1]{0}', space=sflag, size = 0x4, scoped, tag = 'scoped memory for forward.1']
    #allocation12 [shape = 'u8[1024]{0}', space=vmem, size = 0x400, scoped, tag = 'output window, operand 0, single buffered']
    %24 = vsyncpa [#allocation9], 0
    %25 = vsyncpa [#allocation11], 0
    %26 = vsyncpa [#allocation8], 0
    // Predicated region
    $region2: #{forward.1} parent=1 // pred_check
      _
    $region3: #{forward.1} parent=1 // pred_check_branch
      %28 = sbr.rel (0) target = $region5
    $region4: #{forward.1} parent=1 // pred_region
      _
    $region5: #{forward.1} parent=1 // pred_fallthru
      _
    // Predicated region
    $region6: #{forward.1} parent=1 // pred_check
      _
    $region7: #{forward.1} parent=1 // pred_check_branch
      %30 = sbr.rel (0) target = $region9
    $region8: #{forward.1} parent=1 // pred_region
      %s32 = ssub.s32 16, 16
      %33 = vsyncadd [#allocation9], %s32
      %s35 = sshll.u32 %s1, 4
      %s36 = int_to_ptr.vmem [resolvable:$true] %s35
      %38 = dma.vmem_to_smem %s36, 16, [#allocation7], [#allocation9]
    $region9: #{forward.1} parent=1 // pred_fallthru
      _
    // Predicated region
    $region10: #{forward.1} parent=1 // pred_check
      _
    $region11: #{forward.1} parent=1 // pred_check_branch
      %40 = sbr.rel (0) target = $region13
    $region12: #{forward.1} parent=1 // pred_region
      _
    $region13: #{forward.1} parent=1 // pred_fallthru
      _
    // Predicated region
    $region14: #{forward.1} parent=1 // pred_check
      _
    $region15: #{forward.1} parent=1 // pred_check_branch
      %42 = sbr.rel (0) target = $region17
    $region16: #{forward.1} parent=1 // pred_region
      %s44 = ssub.s32 16, 16
      %45 = vsyncadd [#allocation11], %s44
      %s47 = sshll.u32 %s3, 4
      %s48 = int_to_ptr.vmem [resolvable:$true] %s47
      %50 = dma.vmem_to_smem %s48, 16, [#allocation10], [#allocation11]
    $region17: #{forward.1} parent=1 // pred_fallthru
      _
    // Predicated region
    $region18: #{forward.1} parent=1 // pred_check
      _
    $region19: #{forward.1} parent=1 // pred_check_branch
      %52 = sbr.rel (0) target = $region21
    $region20: #{forward.1} parent=1 // pred_region
      _
    $region21: #{forward.1} parent=1 // pred_fallthru
      _
    // Predicated region
    $region22: #{forward.1} parent=1 // pred_check
      _
    $region23: #{forward.1} parent=1 // pred_check_branch
      %54 = sbr.rel (0) target = $region25
    $region24: #{forward.1} parent=1 // pred_region
      _
    $region25: #{forward.1} parent=1 // pred_fallthru
      _
    // Predicated region
    $region26: #{forward.1} parent=1 // pred_check
      _
    $region27: #{forward.1} parent=1 // pred_check_branch
      %56 = sbr.rel (0) target = $region29
    $region28: #{forward.1} parent=1 // pred_region
      _
    $region29: #{forward.1} parent=1 // pred_fallthru
      _
    // Predicated region
    $region30: #{forward.1} parent=1 // pred_check
      _
    $region31: #{forward.1} parent=1 // pred_check_branch
      %58 = sbr.rel (0) target = $region33
    $region32: #{forward.1} parent=1 // pred_region
      _
    $region33: #{forward.1} parent=1 // pred_fallthru
      _
    // Predicated region
    $region34: #{forward.1} parent=1 // pred_check
      _
    $region35: #{forward.1} parent=1 // pred_check_branch
      %60 = sbr.rel (0) target = $region37
    $region36: #{forward.1} parent=1 // pred_region
      _
    $region37: #{forward.1} parent=1 // pred_fallthru
      _
    // Predicated region
    $region38: #{forward.1} parent=1 // pred_check
      _
    $region39: #{forward.1} parent=1 // pred_check_branch
      %62 = sbr.rel (0) target = $region41
    $region40: #{forward.1} parent=1 // pred_region
      _
    $region41: #{forward.1} parent=1 // pred_fallthru
      _
    // Predicated region
    $region42: #{forward.1} parent=1 // pred_check
      _
    $region43: #{forward.1} parent=1 // pred_check_branch
      %64 = sbr.rel (0) target = $region45
    $region44: #{forward.1} parent=1 // pred_region
      _
    $region45: #{forward.1} parent=1 // pred_fallthru
      _
    // Predicated region
    $region46: #{forward.1} parent=1 // pred_check
      _
    $region47: #{forward.1} parent=1 // pred_check_branch
      %66 = sbr.rel (0) target = $region49
    $region48: #{forward.1} parent=1 // pred_region
      _
    $region49: #{forward.1} parent=1 // pred_fallthru
      _
    // Predicated region
    $region50: #{forward.1} parent=1 // pred_check
      _
    $region51: #{forward.1} parent=1 // pred_check_branch
      %68 = sbr.rel (0) target = $region53
    $region52: #{forward.1} parent=1 // pred_region
      _
    $region53: #{forward.1} parent=1 // pred_fallthru
      _
    // Predicated region
    $region54: #{forward.1} parent=1 // pred_check
      _
    $region55: #{forward.1} parent=1 // pred_check_branch
      %70 = sbr.rel (0) target = $region57
    $region56: #{forward.1} parent=1 // pred_region
      _
    $region57: #{forward.1} parent=1 // pred_fallthru
      _
    // Predicated region
    $region58: #{forward.1} parent=1 // pred_check
      _
    $region59: #{forward.1} parent=1 // pred_check_branch
      %72 = sbr.rel (0) target = $region61
    $region60: #{forward.1} parent=1 // pred_region
      _
    $region61: #{forward.1} parent=1 // pred_fallthru
      _
    // Predicated region
    $region62: #{forward.1} parent=1 // pred_check
      _
    $region63: #{forward.1} parent=1 // pred_check_branch
      %74 = sbr.rel (0) target = $region65
    $region64: #{forward.1} parent=1 // pred_region
      _
    $region65: #{forward.1} parent=1 // pred_fallthru
      _
    // Predicated region
    $region66: #{forward.1} parent=1 // pred_check
      _
    $region67: #{forward.1} parent=1 // pred_check_branch
      %76 = sbr.rel (0) target = $region69
    $region68: #{forward.1} parent=1 // pred_region
      _
    $region69: #{forward.1} parent=1 // pred_fallthru
      _
    // Predicated region
    $region70: #{forward.1} parent=1 // pred_check
      _
    $region71: #{forward.1} parent=1 // pred_check_branch
      %78 = sbr.rel (0) target = $region73
    $region72: #{forward.1} parent=1 // pred_region
      %79 = dma.done [#allocation9], 16
    $region73: #{forward.1} parent=1 // pred_fallthru
      _
    // Predicated region
    $region74: #{forward.1} parent=1 // pred_check
      _
    $region75: #{forward.1} parent=1 // pred_check_branch
      %81 = sbr.rel (0) target = $region77
    $region76: #{forward.1} parent=1 // pred_region
      %82 = dma.done [#allocation11], 16
    $region77: #{forward.1} parent=1 // pred_fallthru
      _
    %83 = sfence
    %vm84 = vcmask 171008
    %85 = vst.msk [vmem:[#allocation2] sm:$0xff] %vm84, 0.0
    %86 = vst.msk [vmem:[#allocation2 + $0x8] sm:$0xff] %vm84, 0.0
    %87 = vst.msk [vmem:[#allocation2 + $0x10] sm:$0xff] %vm84, 0.0
    %88 = vst.msk [vmem:[#allocation2 + $0x18] sm:$0xff] %vm84, 0.0
    %89 = vst.msk [vmem:[#allocation2 + $0x20] sm:$0xff] %vm84, 0.0
    %90 = vst.msk [vmem:[#allocation2 + $0x28] sm:$0xff] %vm84, 0.0
    %91 = vst.msk [vmem:[#allocation2 + $0x30] sm:$0xff] %vm84, 0.0
    %92 = vst.msk [vmem:[#allocation2 + $0x38] sm:$0xff] %vm84, 0.0
    %vm93 = vcmask 168960
    %94 = vst.msk [vmem:[#allocation2 + $0x40] sm:$0x3f] %vm93, 0.0
    %v95 = vld [vmem:[%s0] sm:$0xff]
    %v96 = vld [vmem:[%s0 + $0x8] sm:$0xff]
    %v97 = vld [vmem:[%s0 + $0x10] sm:$0xff]
    %v98 = vld [vmem:[%s0 + $0x18] sm:$0xff]
    %v99 = vld [vmem:[%s0 + $0x20] sm:$0x1]
    %105 = vrot.lane.b32.xlu0 %v95, 1
    %v106 = vpop.permute.xlu0 %105
    %107 = vrot.lane.b32.xlu0 %v96, 1
    %v108 = vpop.permute.xlu0 %107
    %109 = vrot.lane.b32.xlu0 %v97, 1
    %v110 = vpop.permute.xlu0 %109
    %111 = vrot.lane.b32.xlu0 %v98, 1
    %v112 = vpop.permute.xlu0 %111
    %113 = vrot.lane.b32.xlu0 %v99, 1
    %v114 = vpop.permute.xlu0 %113
    %vm120 = vcmask 162824
    %121 = vst.msk [vmem:[#allocation2 + $0x1] sm:$0xff] %vm120, %v106
    %122 = vst.msk [vmem:[#allocation2 + $0x9] sm:$0xff] %vm120, %v108
    %123 = vst.msk [vmem:[#allocation2 + $0x11] sm:$0xff] %vm120, %v110
    %124 = vst.msk [vmem:[#allocation2 + $0x19] sm:$0xff] %vm120, %v112
    %vm125 = vcmask 155656
    %126 = vst.msk [vmem:[#allocation2 + $0x21] sm:$0x1] %vm125, %v114
    %s127 = scalar_lea.vmem %s0, 40
    %v128 = vld [vmem:[%s127] sm:$0xff]
    %v129 = vld [vmem:[%s127 + $0x8] sm:$0xff]
    %v130 = vld [vmem:[%s127 + $0x10] sm:$0xff]
    %v131 = vld [vmem:[%s127 + $0x18] sm:$0xff]
    %v132 = vld [vmem:[%s127 + $0x20] sm:$0x1]
    %138 = vrot.lane.b32.xlu0 %v128, 1
    %v139 = vpop.permute.xlu0 %138
    %140 = vrot.lane.b32.xlu0 %v129, 1
    %v141 = vpop.permute.xlu0 %140
    %142 = vrot.lane.b32.xlu0 %v130, 1
    %v143 = vpop.permute.xlu0 %142
    %144 = vrot.lane.b32.xlu0 %v131, 1
    %v145 = vpop.permute.xlu0 %144
    %146 = vrot.lane.b32.xlu0 %v132, 1
    %v147 = vpop.permute.xlu0 %146
    %153 = vst.msk [vmem:[#allocation2 + $0x24] sm:$0xff] %vm120, %v139
    %154 = vst.msk [vmem:[#allocation2 + $0x2c] sm:$0xff] %vm120, %v141
    %155 = vst.msk [vmem:[#allocation2 + $0x34] sm:$0xff] %vm120, %v143
    %156 = vst.msk [vmem:[#allocation2 + $0x3c] sm:$0xff] %vm120, %v145
    %157 = vst.msk [vmem:[#allocation2 + $0x44] sm:$0x1] %vm125, %v147
    %v158 = vld [vmem:[#allocation2] sm:$0xff]
    %v159 = vld [vmem:[#allocation2 + $0x8] sm:$0xff]
    %v160 = vld [vmem:[#allocation2 + $0x10] sm:$0xff]
    %v161 = vld [vmem:[#allocation2 + $0x18] sm:$0xff]
    %v162 = vld [vmem:[#allocation2 + $0x20] sm:$0xff]
    %v163 = vld [vmem:[#allocation2 + $0x28] sm:$0xff]
    %v164 = vld [vmem:[#allocation2 + $0x30] sm:$0xff]
    %v165 = vld [vmem:[#allocation2 + $0x38] sm:$0xff]
    %v166 = vld [vmem:[#allocation2 + $0x40] sm:$0x3f]
    %s167 = sld [smem:[#allocation7]]
    %v168 = vstv %s167
    %v169 = vmul.f32 %v168, %v158
    %v170 = vmul.f32 %v168, %v159
    %v171 = vmul.f32 %v168, %v160
    %v172 = vmul.f32 %v168, %v161
    %v173 = vmul.f32 %v168, %v162
    %v174 = vmul.f32 %v168, %v163
    %v175 = vmul.f32 %v168, %v164
    %v176 = vmul.f32 %v168, %v165
    %v177 = vmul.f32 %v168, %v166
    %v178 = vadd.f32 %v169, 0.0
    %v179 = vadd.f32 %v170, 0.0
    %v180 = vadd.f32 %v171, 0.0
    %v181 = vadd.f32 %v172, 0.0
    %v182 = vadd.f32 %v173, 0.0
    %v183 = vadd.f32 %v174, 0.0
    %v184 = vadd.f32 %v175, 0.0
    %v185 = vadd.f32 %v176, 0.0
    %v186 = vadd.f32 %v177, 0.0
    %s187 = sld [smem:[#allocation7 + $0x1]]
    %v188 = vstv %s187
    %v189 = vmul.f32 %v188, %v158
    %v190 = vmul.f32 %v188, %v159
    %v191 = vmul.f32 %v188, %v160
    %v192 = vmul.f32 %v188, %v161
    %v193 = vmul.f32 %v188, %v162
    %v194 = vmul.f32 %v188, %v163
    %v195 = vmul.f32 %v188, %v164
    %v196 = vmul.f32 %v188, %v165
    %v197 = vmul.f32 %v188, %v166
    %207 = vrot.lane.b32.xlu0 %v189, 127
    %v208 = vpop.permute.xlu0 %207
    %209 = vrot.lane.b32.xlu0 %v190, 127
    %v210 = vpop.permute.xlu0 %209
    %211 = vrot.lane.b32.xlu0 %v191, 127
    %v212 = vpop.permute.xlu0 %211
    %213 = vrot.lane.b32.xlu0 %v192, 127
    %v214 = vpop.permute.xlu0 %213
    %215 = vrot.lane.b32.xlu0 %v193, 127
    %v216 = vpop.permute.xlu0 %215
    %217 = vrot.lane.b32.xlu0 %v194, 127
    %v218 = vpop.permute.xlu0 %217
    %219 = vrot.lane.b32.xlu0 %v195, 127
    %v220 = vpop.permute.xlu0 %219
    %221 = vrot.lane.b32.xlu0 %v196, 127
    %v222 = vpop.permute.xlu0 %221
    %223 = vrot.lane.b32.xlu0 %v197, 127
    %v224 = vpop.permute.xlu0 %223
    %v234 = vadd.f32 %v178, %v208
    %v235 = vadd.f32 %v179, %v210
    %v236 = vadd.f32 %v180, %v212
    %v237 = vadd.f32 %v181, %v214
    %v238 = vadd.f32 %v182, %v216
    %v239 = vadd.f32 %v183, %v218
    %v240 = vadd.f32 %v184, %v220
    %v241 = vadd.f32 %v185, %v222
    %v242 = vadd.f32 %v186, %v224
    %s243 = sld [smem:[#allocation7 + $0x2]]
    %v244 = vstv %s243
    %v245 = vmul.f32 %v244, %v158
    %v246 = vmul.f32 %v244, %v159
    %v247 = vmul.f32 %v244, %v160
    %v248 = vmul.f32 %v244, %v161
    %v249 = vmul.f32 %v244, %v162
    %v250 = vmul.f32 %v244, %v163
    %v251 = vmul.f32 %v244, %v164
    %v252 = vmul.f32 %v244, %v165
    %v253 = vmul.f32 %v244, %v166
    %263 = vrot.lane.b32.xlu0 %v245, 126
    %v264 = vpop.permute.xlu0 %263
    %265 = vrot.lane.b32.xlu0 %v246, 126
    %v266 = vpop.permute.xlu0 %265
    %267 = vrot.lane.b32.xlu0 %v247, 126
    %v268 = vpop.permute.xlu0 %267
    %269 = vrot.lane.b32.xlu0 %v248, 126
    %v270 = vpop.permute.xlu0 %269
    %271 = vrot.lane.b32.xlu0 %v249, 126
    %v272 = vpop.permute.xlu0 %271
    %273 = vrot.lane.b32.xlu0 %v250, 126
    %v274 = vpop.permute.xlu0 %273
    %275 = vrot.lane.b32.xlu0 %v251, 126
    %v276 = vpop.permute.xlu0 %275
    %277 = vrot.lane.b32.xlu0 %v252, 126
    %v278 = vpop.permute.xlu0 %277
    %279 = vrot.lane.b32.xlu0 %v253, 126
    %v280 = vpop.permute.xlu0 %279
    %v290 = vadd.f32 %v234, %v264
    %v291 = vadd.f32 %v235, %v266
    %v292 = vadd.f32 %v236, %v268
    %v293 = vadd.f32 %v237, %v270
    %v294 = vadd.f32 %v238, %v272
    %v295 = vadd.f32 %v239, %v274
    %v296 = vadd.f32 %v240, %v276
    %v297 = vadd.f32 %v241, %v278
    %v298 = vadd.f32 %v242, %v280
    %s299 = sld [smem:[#allocation7 + $0x3]]
    %v300 = vstv %s299
    %v301 = vmul.f32 %v300, %v158
    %v302 = vmul.f32 %v300, %v159
    %v303 = vmul.f32 %v300, %v160
    %v304 = vmul.f32 %v300, %v161
    %v305 = vmul.f32 %v300, %v162
    %v306 = vmul.f32 %v300, %v163
    %v307 = vmul.f32 %v300, %v164
    %v308 = vmul.f32 %v300, %v165
    %v309 = vmul.f32 %v300, %v166
    %vm319 = vcmask 1046528
    %v320 = vrot.slane %v301, 1
    %v321 = vrot.slane %v302, 1
    %v322 = vsel %vm319, %v320, %v321
    %v323 = vrot.slane %v303, 1
    %v324 = vsel %vm319, %v321, %v323
    %v325 = vrot.slane %v304, 1
    %v326 = vsel %vm319, %v323, %v325
    %v327 = vrot.slane %v305, 1
    %v328 = vsel %vm319, %v325, %v327
    %v329 = vrot.slane %v306, 1
    %v330 = vsel %vm319, %v327, %v329
    %v331 = vrot.slane %v307, 1
    %v332 = vsel %vm319, %v329, %v331
    %v333 = vrot.slane %v308, 1
    %v334 = vsel %vm319, %v331, %v333
    %v335 = vrot.slane %v309, 1
    %v336 = vsel %vm319, %v333, %v335
    %v346 = vadd.f32 %v290, %v322
    %v347 = vadd.f32 %v291, %v324
    %v348 = vadd.f32 %v292, %v326
    %v349 = vadd.f32 %v293, %v328
    %v350 = vadd.f32 %v294, %v330
    %v351 = vadd.f32 %v295, %v332
    %v352 = vadd.f32 %v296, %v334
    %v353 = vadd.f32 %v297, %v336
    %v354 = vadd.f32 %v298, %v335
    %s355 = sld [smem:[#allocation7 + $0x4]]
    %v356 = vstv %s355
    %v357 = vmul.f32 %v356, %v158
    %v358 = vmul.f32 %v356, %v159
    %v359 = vmul.f32 %v356, %v160
    %v360 = vmul.f32 %v356, %v161
    %v361 = vmul.f32 %v356, %v162
    %v362 = vmul.f32 %v356, %v163
    %v363 = vmul.f32 %v356, %v164
    %v364 = vmul.f32 %v356, %v165
    %v365 = vmul.f32 %v356, %v166
    %v375 = vrot.slane %v357, 1
    %v376 = vrot.slane %v358, 1
    %v377 = vsel %vm319, %v375, %v376
    %v378 = vrot.slane %v359, 1
    %v379 = vsel %vm319, %v376, %v378
    %v380 = vrot.slane %v360, 1
    %v381 = vsel %vm319, %v378, %v380
    %v382 = vrot.slane %v361, 1
    %v383 = vsel %vm319, %v380, %v382
    %v384 = vrot.slane %v362, 1
    %v385 = vsel %vm319, %v382, %v384
    %v386 = vrot.slane %v363, 1
    %v387 = vsel %vm319, %v384, %v386
    %v388 = vrot.slane %v364, 1
    %v389 = vsel %vm319, %v386, %v388
    %v390 = vrot.slane %v365, 1
    %v391 = vsel %vm319, %v388, %v390
    %392 = vrot.lane.b32.xlu0 %v377, 127
    %v393 = vpop.permute.xlu0 %392
    %394 = vrot.lane.b32.xlu0 %v379, 127
    %v395 = vpop.permute.xlu0 %394
    %396 = vrot.lane.b32.xlu0 %v381, 127
    %v397 = vpop.permute.xlu0 %396
    %398 = vrot.lane.b32.xlu0 %v383, 127
    %v399 = vpop.permute.xlu0 %398
    %400 = vrot.lane.b32.xlu0 %v385, 127
    %v401 = vpop.permute.xlu0 %400
    %402 = vrot.lane.b32.xlu0 %v387, 127
    %v403 = vpop.permute.xlu0 %402
    %404 = vrot.lane.b32.xlu0 %v389, 127
    %v405 = vpop.permute.xlu0 %404
    %406 = vrot.lane.b32.xlu0 %v391, 127
    %v407 = vpop.permute.xlu0 %406
    %408 = vrot.lane.b32.xlu0 %v390, 127
    %v409 = vpop.permute.xlu0 %408
    %v419 = vadd.f32 %v346, %v393
    %v420 = vadd.f32 %v347, %v395
    %v421 = vadd.f32 %v348, %v397
    %v422 = vadd.f32 %v349, %v399
    %v423 = vadd.f32 %v350, %v401
    %v424 = vadd.f32 %v351, %v403
    %v425 = vadd.f32 %v352, %v405
    %v426 = vadd.f32 %v353, %v407
    %v427 = vadd.f32 %v354, %v409
    %s428 = sld [smem:[#allocation7 + $0x5]]
    %v429 = vstv %s428
    %v430 = vmul.f32 %v429, %v158
    %v431 = vmul.f32 %v429, %v159
    %v432 = vmul.f32 %v429, %v160
    %v433 = vmul.f32 %v429, %v161
    %v434 = vmul.f32 %v429, %v162
    %v435 = vmul.f32 %v429, %v163
    %v436 = vmul.f32 %v429, %v164
    %v437 = vmul.f32 %v429, %v165
    %v438 = vmul.f32 %v429, %v166
    %v448 = vrot.slane %v430, 1
    %v449 = vrot.slane %v431, 1
    %v450 = vsel %vm319, %v448, %v449
    %v451 = vrot.slane %v432, 1
    %v452 = vsel %vm319, %v449, %v451
    %v453 = vrot.slane %v433, 1
    %v454 = vsel %vm319, %v451, %v453
    %v455 = vrot.slane %v434, 1
    %v456 = vsel %vm319, %v453, %v455
    %v457 = vrot.slane %v435, 1
    %v458 = vsel %vm319, %v455, %v457
    %v459 = vrot.slane %v436, 1
    %v460 = vsel %vm319, %v457, %v459
    %v461 = vrot.slane %v437, 1
    %v462 = vsel %vm319, %v459, %v461
    %v463 = vrot.slane %v438, 1
    %v464 = vsel %vm319, %v461, %v463
    %465 = vrot.lane.b32.xlu0 %v450, 126
    %v466 = vpop.permute.xlu0 %465
    %467 = vrot.lane.b32.xlu0 %v452, 126
    %v468 = vpop.permute.xlu0 %467
    %469 = vrot.lane.b32.xlu0 %v454, 126
    %v470 = vpop.permute.xlu0 %469
    %471 = vrot.lane.b32.xlu0 %v456, 126
    %v472 = vpop.permute.xlu0 %471
    %473 = vrot.lane.b32.xlu0 %v458, 126
    %v474 = vpop.permute.xlu0 %473
    %475 = vrot.lane.b32.xlu0 %v460, 126
    %v476 = vpop.permute.xlu0 %475
    %477 = vrot.lane.b32.xlu0 %v462, 126
    %v478 = vpop.permute.xlu0 %477
    %479 = vrot.lane.b32.xlu0 %v464, 126
    %v480 = vpop.permute.xlu0 %479
    %481 = vrot.lane.b32.xlu0 %v463, 126
    %v482 = vpop.permute.xlu0 %481
    %v492 = vadd.f32 %v419, %v466
    %v493 = vadd.f32 %v420, %v468
    %v494 = vadd.f32 %v421, %v470
    %v495 = vadd.f32 %v422, %v472
    %v496 = vadd.f32 %v423, %v474
    %v497 = vadd.f32 %v424, %v476
    %v498 = vadd.f32 %v425, %v478
    %v499 = vadd.f32 %v426, %v480
    %v500 = vadd.f32 %v427, %v482
    %s501 = sld [smem:[#allocation7 + $0x6]]
    %v502 = vstv %s501
    %v503 = vmul.f32 %v502, %v158
    %v504 = vmul.f32 %v502, %v159
    %v505 = vmul.f32 %v502, %v160
    %v506 = vmul.f32 %v502, %v161
    %v507 = vmul.f32 %v502, %v162
    %v508 = vmul.f32 %v502, %v163
    %v509 = vmul.f32 %v502, %v164
    %v510 = vmul.f32 %v502, %v165
    %v511 = vmul.f32 %v502, %v166
    %vm521 = vcmask 1045504
    %v522 = vrot.slane %v503, 2
    %v523 = vrot.slane %v504, 2
    %v524 = vsel %vm521, %v522, %v523
    %v525 = vrot.slane %v505, 2
    %v526 = vsel %vm521, %v523, %v525
    %v527 = vrot.slane %v506, 2
    %v528 = vsel %vm521, %v525, %v527
    %v529 = vrot.slane %v507, 2
    %v530 = vsel %vm521, %v527, %v529
    %v531 = vrot.slane %v508, 2
    %v532 = vsel %vm521, %v529, %v531
    %v533 = vrot.slane %v509, 2
    %v534 = vsel %vm521, %v531, %v533
    %v535 = vrot.slane %v510, 2
    %v536 = vsel %vm521, %v533, %v535
    %v537 = vrot.slane %v511, 2
    %v538 = vsel %vm521, %v535, %v537
    %v548 = vadd.f32 %v492, %v524
    %v549 = vadd.f32 %v493, %v526
    %v550 = vadd.f32 %v494, %v528
    %v551 = vadd.f32 %v495, %v530
    %v552 = vadd.f32 %v496, %v532
    %v553 = vadd.f32 %v497, %v534
    %v554 = vadd.f32 %v498, %v536
    %v555 = vadd.f32 %v499, %v538
    %v556 = vadd.f32 %v500, %v537
    %s557 = sld [smem:[#allocation7 + $0x7]]
    %v558 = vstv %s557
    %v559 = vmul.f32 %v558, %v158
    %v560 = vmul.f32 %v558, %v159
    %v561 = vmul.f32 %v558, %v160
    %v562 = vmul.f32 %v558, %v161
    %v563 = vmul.f32 %v558, %v162
    %v564 = vmul.f32 %v558, %v163
    %v565 = vmul.f32 %v558, %v164
    %v566 = vmul.f32 %v558, %v165
    %v567 = vmul.f32 %v558, %v166
    %v577 = vrot.slane %v559, 2
    %v578 = vrot.slane %v560, 2
    %v579 = vsel %vm521, %v577, %v578
    %v580 = vrot.slane %v561, 2
    %v581 = vsel %vm521, %v578, %v580
    %v582 = vrot.slane %v562, 2
    %v583 = vsel %vm521, %v580, %v582
    %v584 = vrot.slane %v563, 2
    %v585 = vsel %vm521, %v582, %v584
    %v586 = vrot.slane %v564, 2
    %v587 = vsel %vm521, %v584, %v586
    %v588 = vrot.slane %v565, 2
    %v589 = vsel %vm521, %v586, %v588
    %v590 = vrot.slane %v566, 2
    %v591 = vsel %vm521, %v588, %v590
    %v592 = vrot.slane %v567, 2
    %v593 = vsel %vm521, %v590, %v592
    %594 = vrot.lane.b32.xlu0 %v579, 127
    %v595 = vpop.permute.xlu0 %594
    %596 = vrot.lane.b32.xlu0 %v581, 127
    %v597 = vpop.permute.xlu0 %596
    %598 = vrot.lane.b32.xlu0 %v583, 127
    %v599 = vpop.permute.xlu0 %598
    %600 = vrot.lane.b32.xlu0 %v585, 127
    %v601 = vpop.permute.xlu0 %600
    %602 = vrot.lane.b32.xlu0 %v587, 127
    %v603 = vpop.permute.xlu0 %602
    %604 = vrot.lane.b32.xlu0 %v589, 127
    %v605 = vpop.permute.xlu0 %604
    %606 = vrot.lane.b32.xlu0 %v591, 127
    %v607 = vpop.permute.xlu0 %606
    %608 = vrot.lane.b32.xlu0 %v593, 127
    %v609 = vpop.permute.xlu0 %608
    %610 = vrot.lane.b32.xlu0 %v592, 127
    %v611 = vpop.permute.xlu0 %610
    %v621 = vadd.f32 %v548, %v595
    %v622 = vadd.f32 %v549, %v597
    %v623 = vadd.f32 %v550, %v599
    %v624 = vadd.f32 %v551, %v601
    %v625 = vadd.f32 %v552, %v603
    %v626 = vadd.f32 %v553, %v605
    %v627 = vadd.f32 %v554, %v607
    %v628 = vadd.f32 %v555, %v609
    %v629 = vadd.f32 %v556, %v611
    %s630 = sld [smem:[#allocation7 + $0x8]]
    %v631 = vstv %s630
    %v632 = vmul.f32 %v631, %v158
    %v633 = vmul.f32 %v631, %v159
    %v634 = vmul.f32 %v631, %v160
    %v635 = vmul.f32 %v631, %v161
    %v636 = vmul.f32 %v631, %v162
    %v637 = vmul.f32 %v631, %v163
    %v638 = vmul.f32 %v631, %v164
    %v639 = vmul.f32 %v631, %v165
    %v640 = vmul.f32 %v631, %v166
    %v650 = vrot.slane %v632, 2
    %v651 = vrot.slane %v633, 2
    %v652 = vsel %vm521, %v650, %v651
    %v653 = vrot.slane %v634, 2
    %v654 = vsel %vm521, %v651, %v653
    %v655 = vrot.slane %v635, 2
    %v656 = vsel %vm521, %v653, %v655
    %v657 = vrot.slane %v636, 2
    %v658 = vsel %vm521, %v655, %v657
    %v659 = vrot.slane %v637, 2
    %v660 = vsel %vm521, %v657, %v659
    %v661 = vrot.slane %v638, 2
    %v662 = vsel %vm521, %v659, %v661
    %v663 = vrot.slane %v639, 2
    %v664 = vsel %vm521, %v661, %v663
    %v665 = vrot.slane %v640, 2
    %v666 = vsel %vm521, %v663, %v665
    %667 = vrot.lane.b32.xlu0 %v652, 126
    %v668 = vpop.permute.xlu0 %667
    %669 = vrot.lane.b32.xlu0 %v654, 126
    %v670 = vpop.permute.xlu0 %669
    %671 = vrot.lane.b32.xlu0 %v656, 126
    %v672 = vpop.permute.xlu0 %671
    %673 = vrot.lane.b32.xlu0 %v658, 126
    %v674 = vpop.permute.xlu0 %673
    %675 = vrot.lane.b32.xlu0 %v660, 126
    %v676 = vpop.permute.xlu0 %675
    %677 = vrot.lane.b32.xlu0 %v662, 126
    %v678 = vpop.permute.xlu0 %677
    %679 = vrot.lane.b32.xlu0 %v664, 126
    %v680 = vpop.permute.xlu0 %679
    %681 = vrot.lane.b32.xlu0 %v666, 126
    %v682 = vpop.permute.xlu0 %681
    %683 = vrot.lane.b32.xlu0 %v665, 126
    %v684 = vpop.permute.xlu0 %683
    %v694 = vadd.f32 %v621, %v668
    %v695 = vadd.f32 %v622, %v670
    %v696 = vadd.f32 %v623, %v672
    %v697 = vadd.f32 %v624, %v674
    %v698 = vadd.f32 %v625, %v676
    %v699 = vadd.f32 %v626, %v678
    %v700 = vadd.f32 %v627, %v680
    %v701 = vadd.f32 %v628, %v682
    %v702 = vadd.f32 %v629, %v684
    %s703 = sld [smem:[#allocation5]]
    %v704 = vstv %s703
    %v705 = vadd.f32 %v694, %v704
    %v706 = vadd.f32 %v695, %v704
    %v707 = vadd.f32 %v696, %v704
    %v708 = vadd.f32 %v697, %v704
    %v709 = vadd.f32 %v698, %v704
    %v710 = vadd.f32 %v699, %v704
    %v711 = vadd.f32 %v700, %v704
    %v712 = vadd.f32 %v701, %v704
    %v713 = vadd.f32 %v702, %v704
    %v714 = vmax.f32 %v705, 0.0
    %v715 = vmax.f32 %v706, 0.0
    %v716 = vmax.f32 %v707, 0.0
    %v717 = vmax.f32 %v708, 0.0
    %v718 = vmax.f32 %v709, 0.0
    %v719 = vmax.f32 %v710, 0.0
    %v720 = vmax.f32 %v711, 0.0
    %v721 = vmax.f32 %v712, 0.0
    %v722 = vmax.f32 %v713, 0.0
    %v723 = vld [vmem:[%s5] sm:$0xff]
    %v724 = vld [vmem:[%s5 + $0x8] sm:$0xff]
    %v725 = vld [vmem:[%s5 + $0x10] sm:$0xff]
    %v726 = vld [vmem:[%s5 + $0x18] sm:$0xff]
    %vm727 = vcmask 556032
    %v729 = vsel %vm727, %v723, 0
    %v732 = vsel %vm727, %v724, 0
    %v735 = vsel %vm727, %v725, 0
    %v738 = vsel %vm727, %v726, 0
    %vm740 = vcmask 1043456
    %v742 = vsel %vm740, %v722, 0
    %744 = vmatprep.subr.mxu0 0.0
    %v745 = vand.u32 %v714, 4294901760
    %746 = vmatpush1.msra.mxu0 %v745
    %747 = vmatprep.subr.mxu0 0.0
    %v748 = vand.u32 %v715, 4294901760
    %749 = vmatpush1.msra.mxu0 %v748
    %750 = vmatprep.subr.mxu0 0.0
    %v751 = vand.u32 %v716, 4294901760
    %752 = vmatpush1.msra.mxu0 %v751
    %753 = vmatprep.subr.mxu0 0.0
    %v754 = vand.u32 %v717, 4294901760
    %755 = vmatpush1.msra.mxu0 %v754
    %756 = vmatprep.subr.mxu0 0.0
    %v757 = vand.u32 %v718, 4294901760
    %758 = vmatpush1.msra.mxu0 %v757
    %759 = vmatprep.subr.mxu0 0.0
    %v760 = vand.u32 %v719, 4294901760
    %761 = vmatpush1.msra.mxu0 %v760
    %762 = vmatprep.subr.mxu0 0.0
    %v763 = vand.u32 %v720, 4294901760
    %764 = vmatpush1.msra.mxu0 %v763
    %765 = vmatprep.subr.mxu0 0.0
    %v766 = vand.u32 %v721, 4294901760
    %767 = vmatpush1.msra.mxu0 %v766
    %768 = vmatprep.subr.mxu0 0.0
    %v769 = vand.u32 %v742, 4294901760
    %770 = vmatpush1.msra.mxu0 %v769
    %771 = vmatprep.subr.mxu0 0.0
    %772 = vmatpush1.msra.mxu0 0.0
    %773 = vmatprep.subr.mxu0 0.0
    %774 = vmatpush1.msra.mxu0 0.0
    %775 = vmatprep.subr.mxu0 0.0
    %776 = vmatpush1.msra.mxu0 0.0
    %777 = vmatprep.subr.mxu0 0.0
    %778 = vmatpush1.msra.mxu0 0.0
    %779 = vmatprep.subr.mxu0 0.0
    %780 = vmatpush1.msra.mxu0 0.0
    %781 = vmatprep.subr.mxu0 0.0
    %782 = vmatpush1.msra.mxu0 0.0
    %783 = vmatprep.subr.mxu0 0.0
    %784 = vmatpush1.msra.mxu0 0.0
    %785 = vmatprep.subr.mxu0 0.0
    %786 = vmatpush1.msra.mxu0 0.0
    %787 = vmatprep.subr.mxu0 0.0
    %788 = vmatpush1.msra.mxu0 0.0
    %789 = vmatprep.subr.mxu0 0.0
    %790 = vmatpush1.msra.mxu0 0.0
    %791 = vmatprep.subr.mxu0 0.0
    %792 = vmatpush1.msra.mxu0 0.0
    %793 = vmatprep.subr.mxu0 0.0
    %794 = vmatpush1.msra.mxu0 0.0
    %795 = vmatprep.subr.mxu0 0.0
    %796 = vmatpush1.msra.mxu0 0.0
    %797 = vmatprep.subr.mxu0 0.0
    %798 = vmatpush1.msra.mxu0 0.0
    %799 = vmatprep.subr.mxu0 0.0
    %800 = vmatpush1.msra.mxu0 0.0
    %801 = vmatprep.subr.mxu0 0.0
    %802 = vmatpush1.msra.mxu0 0.0
    %803 = vmatprep.subr.mxu0 0.0
    %804 = vmatpush1.msra.mxu0 0.0
    %805 = vmatprep.subr.mxu0 0.0
    %806 = vmatpush1.msra.mxu0 0.0
    %807 = vmatprep.subr.mxu0 0.0
    %808 = vmatpush1.msra.mxu0 0.0
    %809 = vmatprep.subr.mxu0 0.0
    %810 = vmatpush1.msra.mxu0 0.0
    %811 = vmatprep.subr.mxu0 0.0
    %812 = vmatpush1.msra.mxu0 0.0
    %813 = vmatprep.subr.mxu0 0.0
    %814 = vmatpush1.msra.mxu0 0.0
    %815 = vmatprep.subr.mxu0 0.0
    %816 = vmatpush1.msra.mxu0 0.0
    %817 = vmatprep.mubr.f32.mxu0 0.0
    %v818 = vand.u32 %v729, 4294901760
    %v819 = vsub.f32 %v729, %v818
    %v820 = vand.u32 %v819, 4294901760
    %v821 = vsub.f32 %v819, %v820
    %v822 = vand.u32 %v821, 4294901760
    %823 = vmatmul.mubr.f32.gmra.mrb[0].mxu0 %v822
    %v824 = vpop.f32.mrb[0].mxu0
    %v825 = vadd.f32 0.0, %v824
    %v826 = vpop.f32.mrb[0].mxu0
    %827 = vmatprep.mubr.f32.mxu0 0.0
    %v828 = vand.u32 %v732, 4294901760
    %v829 = vsub.f32 %v732, %v828
    %v830 = vand.u32 %v829, 4294901760
    %v831 = vsub.f32 %v829, %v830
    %v832 = vand.u32 %v831, 4294901760
    %833 = vmatmul.mubr.f32.gmra.mrb[0].mxu0 %v832
    %v834 = vpop.f32.mrb[0].mxu0
    %v835 = vadd.f32 0.0, %v834
    %v836 = vpop.f32.mrb[0].mxu0
    %837 = vmatprep.mubr.f32.mxu0 0.0
    %v838 = vand.u32 %v735, 4294901760
    %v839 = vsub.f32 %v735, %v838
    %v840 = vand.u32 %v839, 4294901760
    %v841 = vsub.f32 %v839, %v840
    %v842 = vand.u32 %v841, 4294901760
    %843 = vmatmul.mubr.f32.gmra.mrb[0].mxu0 %v842
    %v844 = vpop.f32.mrb[0].mxu0
    %v845 = vadd.f32 0.0, %v844
    %v846 = vpop.f32.mrb[0].mxu0
    %847 = vmatprep.mubr.f32.mxu0 0.0
    %v848 = vand.u32 %v738, 4294901760
    %v849 = vsub.f32 %v738, %v848
    %v850 = vand.u32 %v849, 4294901760
    %v851 = vsub.f32 %v849, %v850
    %v852 = vand.u32 %v851, 4294901760
    %853 = vmatmul.mubr.f32.gmra.mrb[0].mxu0 %v852
    %v854 = vpop.f32.mrb[0].mxu0
    %v855 = vadd.f32 0.0, %v854
    %v856 = vpop.f32.mrb[0].mxu0
    %857 = vdwg.mxu0
    %858 = vmatprep.subr.mxu0 0.0
    %v859 = vand.u32 %v714, 4294901760
    %v860 = vsub.f32 %v714, %v859
    %v861 = vand.u32 %v860, 4294901760
    %v862 = vsub.f32 %v860, %v861
    %v863 = vand.u32 %v862, 4294901760
    %864 = vmatpush1.msra.mxu0 %v863
    %865 = vmatprep.subr.mxu0 0.0
    %v866 = vand.u32 %v715, 4294901760
    %v867 = vsub.f32 %v715, %v866
    %v868 = vand.u32 %v867, 4294901760
    %v869 = vsub.f32 %v867, %v868
    %v870 = vand.u32 %v869, 4294901760
    %871 = vmatpush1.msra.mxu0 %v870
    %872 = vmatprep.subr.mxu0 0.0
    %v873 = vand.u32 %v716, 4294901760
    %v874 = vsub.f32 %v716, %v873
    %v875 = vand.u32 %v874, 4294901760
    %v876 = vsub.f32 %v874, %v875
    %v877 = vand.u32 %v876, 4294901760
    %878 = vmatpush1.msra.mxu0 %v877
    %879 = vmatprep.subr.mxu0 0.0
    %v880 = vand.u32 %v717, 4294901760
    %v881 = vsub.f32 %v717, %v880
    %v882 = vand.u32 %v881, 4294901760
    %v883 = vsub.f32 %v881, %v882
    %v884 = vand.u32 %v883, 4294901760
    %885 = vmatpush1.msra.mxu0 %v884
    %886 = vmatprep.subr.mxu0 0.0
    %v887 = vand.u32 %v718, 4294901760
    %v888 = vsub.f32 %v718, %v887
    %v889 = vand.u32 %v888, 4294901760
    %v890 = vsub.f32 %v888, %v889
    %v891 = vand.u32 %v890, 4294901760
    %892 = vmatpush1.msra.mxu0 %v891
    %893 = vmatprep.subr.mxu0 0.0
    %v894 = vand.u32 %v719, 4294901760
    %v895 = vsub.f32 %v719, %v894
    %v896 = vand.u32 %v895, 4294901760
    %v897 = vsub.f32 %v895, %v896
    %v898 = vand.u32 %v897, 4294901760
    %899 = vmatpush1.msra.mxu0 %v898
    %900 = vmatprep.subr.mxu0 0.0
    %v901 = vand.u32 %v720, 4294901760
    %v902 = vsub.f32 %v720, %v901
    %v903 = vand.u32 %v902, 4294901760
    %v904 = vsub.f32 %v902, %v903
    %v905 = vand.u32 %v904, 4294901760
    %906 = vmatpush1.msra.mxu0 %v905
    %907 = vmatprep.subr.mxu0 0.0
    %v908 = vand.u32 %v721, 4294901760
    %v909 = vsub.f32 %v721, %v908
    %v910 = vand.u32 %v909, 4294901760
    %v911 = vsub.f32 %v909, %v910
    %v912 = vand.u32 %v911, 4294901760
    %913 = vmatpush1.msra.mxu0 %v912
    %914 = vmatprep.subr.mxu0 0.0
    %v915 = vand.u32 %v742, 4294901760
    %v916 = vsub.f32 %v742, %v915
    %v917 = vand.u32 %v916, 4294901760
    %v918 = vsub.f32 %v916, %v917
    %v919 = vand.u32 %v918, 4294901760
    %920 = vmatpush1.msra.mxu0 %v919
    %921 = vmatprep.subr.mxu0 0.0
    %922 = vmatpush1.msra.mxu0 0.0
    %923 = vmatprep.subr.mxu0 0.0
    %924 = vmatpush1.msra.mxu0 0.0
    %925 = vmatprep.subr.mxu0 0.0
    %926 = vmatpush1.msra.mxu0 0.0
    %927 = vmatprep.subr.mxu0 0.0
    %928 = vmatpush1.msra.mxu0 0.0
    %929 = vmatprep.subr.mxu0 0.0
    %930 = vmatpush1.msra.mxu0 0.0
    %931 = vmatprep.subr.mxu0 0.0
    %932 = vmatpush1.msra.mxu0 0.0
    %933 = vmatprep.subr.mxu0 0.0
    %934 = vmatpush1.msra.mxu0 0.0
    %935 = vmatprep.subr.mxu0 0.0
    %936 = vmatpush1.msra.mxu0 0.0
    %937 = vmatprep.subr.mxu0 0.0
    %938 = vmatpush1.msra.mxu0 0.0
    %939 = vmatprep.subr.mxu0 0.0
    %940 = vmatpush1.msra.mxu0 0.0
    %941 = vmatprep.subr.mxu0 0.0
    %942 = vmatpush1.msra.mxu0 0.0
    %943 = vmatprep.subr.mxu0 0.0
    %944 = vmatpush1.msra.mxu0 0.0
    %945 = vmatprep.subr.mxu0 0.0
    %946 = vmatpush1.msra.mxu0 0.0
    %947 = vmatprep.subr.mxu0 0.0
    %948 = vmatpush1.msra.mxu0 0.0
    %949 = vmatprep.subr.mxu0 0.0
    %950 = vmatpush1.msra.mxu0 0.0
    %951 = vmatprep.subr.mxu0 0.0
    %952 = vmatpush1.msra.mxu0 0.0
    %953 = vmatprep.subr.mxu0 0.0
    %954 = vmatpush1.msra.mxu0 0.0
    %955 = vmatprep.subr.mxu0 0.0
    %956 = vmatpush1.msra.mxu0 0.0
    %957 = vmatprep.subr.mxu0 0.0
    %958 = vmatpush1.msra.mxu0 0.0
    %959 = vmatprep.subr.mxu0 0.0
    %960 = vmatpush1.msra.mxu0 0.0
    %961 = vmatprep.subr.mxu0 0.0
    %962 = vmatpush1.msra.mxu0 0.0
    %963 = vmatprep.subr.mxu0 0.0
    %964 = vmatpush1.msra.mxu0 0.0
    %965 = vmatprep.subr.mxu0 0.0
    %966 = vmatpush1.msra.mxu0 0.0
    %967 = vmatprep.mubr.f32.mxu0 0.0
    %v968 = vand.u32 %v729, 4294901760
    %969 = vmatmul.mubr.f32.gmra.mrb[0].mxu0 %v968
    %v970 = vpop.f32.mrb[0].mxu0
    %v971 = vadd.f32 %v825, %v970
    %v972 = vpop.f32.mrb[0].mxu0
    %973 = vmatprep.mubr.f32.mxu0 0.0
    %v974 = vand.u32 %v732, 4294901760
    %975 = vmatmul.mubr.f32.gmra.mrb[0].mxu0 %v974
    %v976 = vpop.f32.mrb[0].mxu0
    %v977 = vadd.f32 %v835, %v976
    %v978 = vpop.f32.mrb[0].mxu0
    %979 = vmatprep.mubr.f32.mxu0 0.0
    %v980 = vand.u32 %v735, 4294901760
    %981 = vmatmul.mubr.f32.gmra.mrb[0].mxu0 %v980
    %v982 = vpop.f32.mrb[0].mxu0
    %v983 = vadd.f32 %v845, %v982
    %v984 = vpop.f32.mrb[0].mxu0
    %985 = vmatprep.mubr.f32.mxu0 0.0
    %v986 = vand.u32 %v738, 4294901760
    %987 = vmatmul.mubr.f32.gmra.mrb[0].mxu0 %v986
    %v988 = vpop.f32.mrb[0].mxu0
    %v989 = vadd.f32 %v855, %v988
    %v990 = vpop.f32.mrb[0].mxu0
    %991 = vdwg.mxu0
    %992 = vmatprep.subr.mxu0 0.0
    %v993 = vand.u32 %v714, 4294901760
    %v994 = vsub.f32 %v714, %v993
    %995 = vmatpush1.msra.mxu0 %v994
    %996 = vmatprep.subr.mxu0 0.0
    %v997 = vand.u32 %v715, 4294901760
    %v998 = vsub.f32 %v715, %v997
    %999 = vmatpush1.msra.mxu0 %v998
    %1000 = vmatprep.subr.mxu0 0.0
    %v1001 = vand.u32 %v716, 4294901760
    %v1002 = vsub.f32 %v716, %v1001
    %1003 = vmatpush1.msra.mxu0 %v1002
    %1004 = vmatprep.subr.mxu0 0.0
    %v1005 = vand.u32 %v717, 4294901760
    %v1006 = vsub.f32 %v717, %v1005
    %1007 = vmatpush1.msra.mxu0 %v1006
    %1008 = vmatprep.subr.mxu0 0.0
    %v1009 = vand.u32 %v718, 4294901760
    %v1010 = vsub.f32 %v718, %v1009
    %1011 = vmatpush1.msra.mxu0 %v1010
    %1012 = vmatprep.subr.mxu0 0.0
    %v1013 = vand.u32 %v719, 4294901760
    %v1014 = vsub.f32 %v719, %v1013
    %1015 = vmatpush1.msra.mxu0 %v1014
    %1016 = vmatprep.subr.mxu0 0.0
    %v1017 = vand.u32 %v720, 4294901760
    %v1018 = vsub.f32 %v720, %v1017
    %1019 = vmatpush1.msra.mxu0 %v1018
    %1020 = vmatprep.subr.mxu0 0.0
    %v1021 = vand.u32 %v721, 4294901760
    %v1022 = vsub.f32 %v721, %v1021
    %1023 = vmatpush1.msra.mxu0 %v1022
    %1024 = vmatprep.subr.mxu0 0.0
    %v1025 = vand.u32 %v742, 4294901760
    %v1026 = vsub.f32 %v742, %v1025
    %1027 = vmatpush1.msra.mxu0 %v1026
    %1028 = vmatprep.subr.mxu0 0.0
    %1029 = vmatpush1.msra.mxu0 0.0
    %1030 = vmatprep.subr.mxu0 0.0
    %1031 = vmatpush1.msra.mxu0 0.0
    %1032 = vmatprep.subr.mxu0 0.0
    %1033 = vmatpush1.msra.mxu0 0.0
    %1034 = vmatprep.subr.mxu0 0.0
    %1035 = vmatpush1.msra.mxu0 0.0
    %1036 = vmatprep.subr.mxu0 0.0
    %1037 = vmatpush1.msra.mxu0 0.0
    %1038 = vmatprep.subr.mxu0 0.0
    %1039 = vmatpush1.msra.mxu0 0.0
    %1040 = vmatprep.subr.mxu0 0.0
    %1041 = vmatpush1.msra.mxu0 0.0
    %1042 = vmatprep.subr.mxu0 0.0
    %1043 = vmatpush1.msra.mxu0 0.0
    %1044 = vmatprep.subr.mxu0 0.0
    %1045 = vmatpush1.msra.mxu0 0.0
    %1046 = vmatprep.subr.mxu0 0.0
    %1047 = vmatpush1.msra.mxu0 0.0
    %1048 = vmatprep.subr.mxu0 0.0
    %1049 = vmatpush1.msra.mxu0 0.0
    %1050 = vmatprep.subr.mxu0 0.0
    %1051 = vmatpush1.msra.mxu0 0.0
    %1052 = vmatprep.subr.mxu0 0.0
    %1053 = vmatpush1.msra.mxu0 0.0
    %1054 = vmatprep.subr.mxu0 0.0
    %1055 = vmatpush1.msra.mxu0 0.0
    %1056 = vmatprep.subr.mxu0 0.0
    %1057 = vmatpush1.msra.mxu0 0.0
    %1058 = vmatprep.subr.mxu0 0.0
    %1059 = vmatpush1.msra.mxu0 0.0
    %1060 = vmatprep.subr.mxu0 0.0
    %1061 = vmatpush1.msra.mxu0 0.0
    %1062 = vmatprep.subr.mxu0 0.0
    %1063 = vmatpush1.msra.mxu0 0.0
    %1064 = vmatprep.subr.mxu0 0.0
    %1065 = vmatpush1.msra.mxu0 0.0
    %1066 = vmatprep.subr.mxu0 0.0
    %1067 = vmatpush1.msra.mxu0 0.0
    %1068 = vmatprep.subr.mxu0 0.0
    %1069 = vmatpush1.msra.mxu0 0.0
    %1070 = vmatprep.subr.mxu0 0.0
    %1071 = vmatpush1.msra.mxu0 0.0
    %1072 = vmatprep.subr.mxu0 0.0
    %1073 = vmatpush1.msra.mxu0 0.0
    %1074 = vmatprep.mubr.f32.mxu0 0.0
    %v1075 = vand.u32 %v729, 4294901760
    %v1076 = vsub.f32 %v729, %v1075
    %1077 = vmatmul.mubr.f32.gmra.mrb[0].mxu0 %v1076
    %v1078 = vpop.f32.mrb[0].mxu0
    %v1079 = vadd.f32 %v971, %v1078
    %v1080 = vpop.f32.mrb[0].mxu0
    %1081 = vmatprep.mubr.f32.mxu0 0.0
    %v1082 = vand.u32 %v732, 4294901760
    %v1083 = vsub.f32 %v732, %v1082
    %1084 = vmatmul.mubr.f32.gmra.mrb[0].mxu0 %v1083
    %v1085 = vpop.f32.mrb[0].mxu0
    %v1086 = vadd.f32 %v977, %v1085
    %v1087 = vpop.f32.mrb[0].mxu0
    %1088 = vmatprep.mubr.f32.mxu0 0.0
    %v1089 = vand.u32 %v735, 4294901760
    %v1090 = vsub.f32 %v735, %v1089
    %1091 = vmatmul.mubr.f32.gmra.mrb[0].mxu0 %v1090
    %v1092 = vpop.f32.mrb[0].mxu0
    %v1093 = vadd.f32 %v983, %v1092
    %v1094 = vpop.f32.mrb[0].mxu0
    %1095 = vmatprep.mubr.f32.mxu0 0.0
    %v1096 = vand.u32 %v738, 4294901760
    %v1097 = vsub.f32 %v738, %v1096
    %1098 = vmatmul.mubr.f32.gmra.mrb[0].mxu0 %v1097
    %v1099 = vpop.f32.mrb[0].mxu0
    %v1100 = vadd.f32 %v989, %v1099
    %v1101 = vpop.f32.mrb[0].mxu0
    %1102 = vdwg.mxu0
    %1103 = vmatprep.subr.mxu0 0.0
    %v1104 = vand.u32 %v714, 4294901760
    %1105 = vmatpush1.msra.mxu0 %v1104
    %1106 = vmatprep.subr.mxu0 0.0
    %v1107 = vand.u32 %v715, 4294901760
    %1108 = vmatpush1.msra.mxu0 %v1107
    %1109 = vmatprep.subr.mxu0 0.0
    %v1110 = vand.u32 %v716, 4294901760
    %1111 = vmatpush1.msra.mxu0 %v1110
    %1112 = vmatprep.subr.mxu0 0.0
    %v1113 = vand.u32 %v717, 4294901760
    %1114 = vmatpush1.msra.mxu0 %v1113
    %1115 = vmatprep.subr.mxu0 0.0
    %v1116 = vand.u32 %v718, 4294901760
    %1117 = vmatpush1.msra.mxu0 %v1116
    %1118 = vmatprep.subr.mxu0 0.0
    %v1119 = vand.u32 %v719, 4294901760
    %1120 = vmatpush1.msra.mxu0 %v1119
    %1121 = vmatprep.subr.mxu0 0.0
    %v1122 = vand.u32 %v720, 4294901760
    %1123 = vmatpush1.msra.mxu0 %v1122
    %1124 = vmatprep.subr.mxu0 0.0
    %v1125 = vand.u32 %v721, 4294901760
    %1126 = vmatpush1.msra.mxu0 %v1125
    %1127 = vmatprep.subr.mxu0 0.0
    %v1128 = vand.u32 %v742, 4294901760
    %1129 = vmatpush1.msra.mxu0 %v1128
    %1130 = vmatprep.subr.mxu0 0.0
    %1131 = vmatpush1.msra.mxu0 0.0
    %1132 = vmatprep.subr.mxu0 0.0
    %1133 = vmatpush1.msra.mxu0 0.0
    %1134 = vmatprep.subr.mxu0 0.0
    %1135 = vmatpush1.msra.mxu0 0.0
    %1136 = vmatprep.subr.mxu0 0.0
    %1137 = vmatpush1.msra.mxu0 0.0
    %1138 = vmatprep.subr.mxu0 0.0
    %1139 = vmatpush1.msra.mxu0 0.0
    %1140 = vmatprep.subr.mxu0 0.0
    %1141 = vmatpush1.msra.mxu0 0.0
    %1142 = vmatprep.subr.mxu0 0.0
    %1143 = vmatpush1.msra.mxu0 0.0
    %1144 = vmatprep.subr.mxu0 0.0
    %1145 = vmatpush1.msra.mxu0 0.0
    %1146 = vmatprep.subr.mxu0 0.0
    %1147 = vmatpush1.msra.mxu0 0.0
    %1148 = vmatprep.subr.mxu0 0.0
    %1149 = vmatpush1.msra.mxu0 0.0
    %1150 = vmatprep.subr.mxu0 0.0
    %1151 = vmatpush1.msra.mxu0 0.0
    %1152 = vmatprep.subr.mxu0 0.0
    %1153 = vmatpush1.msra.mxu0 0.0
    %1154 = vmatprep.subr.mxu0 0.0
    %1155 = vmatpush1.msra.mxu0 0.0
    %1156 = vmatprep.subr.mxu0 0.0
    %1157 = vmatpush1.msra.mxu0 0.0
    %1158 = vmatprep.subr.mxu0 0.0
    %1159 = vmatpush1.msra.mxu0 0.0
    %1160 = vmatprep.subr.mxu0 0.0
    %1161 = vmatpush1.msra.mxu0 0.0
    %1162 = vmatprep.subr.mxu0 0.0
    %1163 = vmatpush1.msra.mxu0 0.0
    %1164 = vmatprep.subr.mxu0 0.0
    %1165 = vmatpush1.msra.mxu0 0.0
    %1166 = vmatprep.subr.mxu0 0.0
    %1167 = vmatpush1.msra.mxu0 0.0
    %1168 = vmatprep.subr.mxu0 0.0
    %1169 = vmatpush1.msra.mxu0 0.0
    %1170 = vmatprep.subr.mxu0 0.0
    %1171 = vmatpush1.msra.mxu0 0.0
    %1172 = vmatprep.subr.mxu0 0.0
    %1173 = vmatpush1.msra.mxu0 0.0
    %1174 = vmatprep.subr.mxu0 0.0
    %1175 = vmatpush1.msra.mxu0 0.0
    %1176 = vmatprep.mubr.f32.mxu0 0.0
    %v1177 = vand.u32 %v729, 4294901760
    %v1178 = vsub.f32 %v729, %v1177
    %v1179 = vand.u32 %v1178, 4294901760
    %1180 = vmatmul.mubr.f32.gmra.mrb[0].mxu0 %v1179
    %v1181 = vpop.f32.mrb[0].mxu0
    %v1182 = vadd.f32 %v1079, %v1181
    %v1183 = vpop.f32.mrb[0].mxu0
    %1184 = vmatprep.mubr.f32.mxu0 0.0
    %v1185 = vand.u32 %v732, 4294901760
    %v1186 = vsub.f32 %v732, %v1185
    %v1187 = vand.u32 %v1186, 4294901760
    %1188 = vmatmul.mubr.f32.gmra.mrb[0].mxu0 %v1187
    %v1189 = vpop.f32.mrb[0].mxu0
    %v1190 = vadd.f32 %v1086, %v1189
    %v1191 = vpop.f32.mrb[0].mxu0
    %1192 = vmatprep.mubr.f32.mxu0 0.0
    %v1193 = vand.u32 %v735, 4294901760
    %v1194 = vsub.f32 %v735, %v1193
    %v1195 = vand.u32 %v1194, 4294901760
    %1196 = vmatmul.mubr.f32.gmra.mrb[0].mxu0 %v1195
    %v1197 = vpop.f32.mrb[0].mxu0
    %v1198 = vadd.f32 %v1093, %v1197
    %v1199 = vpop.f32.mrb[0].mxu0
    %1200 = vmatprep.mubr.f32.mxu0 0.0
    %v1201 = vand.u32 %v738, 4294901760
    %v1202 = vsub.f32 %v738, %v1201
    %v1203 = vand.u32 %v1202, 4294901760
    %1204 = vmatmul.mubr.f32.gmra.mrb[0].mxu0 %v1203
    %v1205 = vpop.f32.mrb[0].mxu0
    %v1206 = vadd.f32 %v1100, %v1205
    %v1207 = vpop.f32.mrb[0].mxu0
    %1208 = vdwg.mxu0
    %1209 = vmatprep.subr.mxu0 0.0
    %v1210 = vand.u32 %v714, 4294901760
    %v1211 = vsub.f32 %v714, %v1210
    %v1212 = vand.u32 %v1211, 4294901760
    %1213 = vmatpush1.msra.mxu0 %v1212
    %1214 = vmatprep.subr.mxu0 0.0
    %v1215 = vand.u32 %v715, 4294901760
    %v1216 = vsub.f32 %v715, %v1215
    %v1217 = vand.u32 %v1216, 4294901760
    %1218 = vmatpush1.msra.mxu0 %v1217
    %1219 = vmatprep.subr.mxu0 0.0
    %v1220 = vand.u32 %v716, 4294901760
    %v1221 = vsub.f32 %v716, %v1220
    %v1222 = vand.u32 %v1221, 4294901760
    %1223 = vmatpush1.msra.mxu0 %v1222
    %1224 = vmatprep.subr.mxu0 0.0
    %v1225 = vand.u32 %v717, 4294901760
    %v1226 = vsub.f32 %v717, %v1225
    %v1227 = vand.u32 %v1226, 4294901760
    %1228 = vmatpush1.msra.mxu0 %v1227
    %1229 = vmatprep.subr.mxu0 0.0
    %v1230 = vand.u32 %v718, 4294901760
    %v1231 = vsub.f32 %v718, %v1230
    %v1232 = vand.u32 %v1231, 4294901760
    %1233 = vmatpush1.msra.mxu0 %v1232
    %1234 = vmatprep.subr.mxu0 0.0
    %v1235 = vand.u32 %v719, 4294901760
    %v1236 = vsub.f32 %v719, %v1235
    %v1237 = vand.u32 %v1236, 4294901760
    %1238 = vmatpush1.msra.mxu0 %v1237
    %1239 = vmatprep.subr.mxu0 0.0
    %v1240 = vand.u32 %v720, 4294901760
    %v1241 = vsub.f32 %v720, %v1240
    %v1242 = vand.u32 %v1241, 4294901760
    %1243 = vmatpush1.msra.mxu0 %v1242
    %1244 = vmatprep.subr.mxu0 0.0
    %v1245 = vand.u32 %v721, 4294901760
    %v1246 = vsub.f32 %v721, %v1245
    %v1247 = vand.u32 %v1246, 4294901760
    %1248 = vmatpush1.msra.mxu0 %v1247
    %1249 = vmatprep.subr.mxu0 0.0
    %v1250 = vand.u32 %v742, 4294901760
    %v1251 = vsub.f32 %v742, %v1250
    %v1252 = vand.u32 %v1251, 4294901760
    %1253 = vmatpush1.msra.mxu0 %v1252
    %1254 = vmatprep.subr.mxu0 0.0
    %1255 = vmatpush1.msra.mxu0 0.0
    %1256 = vmatprep.subr.mxu0 0.0
    %1257 = vmatpush1.msra.mxu0 0.0
    %1258 = vmatprep.subr.mxu0 0.0
    %1259 = vmatpush1.msra.mxu0 0.0
    %1260 = vmatprep.subr.mxu0 0.0
    %1261 = vmatpush1.msra.mxu0 0.0
    %1262 = vmatprep.subr.mxu0 0.0
    %1263 = vmatpush1.msra.mxu0 0.0
    %1264 = vmatprep.subr.mxu0 0.0
    %1265 = vmatpush1.msra.mxu0 0.0
    %1266 = vmatprep.subr.mxu0 0.0
    %1267 = vmatpush1.msra.mxu0 0.0
    %1268 = vmatprep.subr.mxu0 0.0
    %1269 = vmatpush1.msra.mxu0 0.0
    %1270 = vmatprep.subr.mxu0 0.0
    %1271 = vmatpush1.msra.mxu0 0.0
    %1272 = vmatprep.subr.mxu0 0.0
    %1273 = vmatpush1.msra.mxu0 0.0
    %1274 = vmatprep.subr.mxu0 0.0
    %1275 = vmatpush1.msra.mxu0 0.0
    %1276 = vmatprep.subr.mxu0 0.0
    %1277 = vmatpush1.msra.mxu0 0.0
    %1278 = vmatprep.subr.mxu0 0.0
    %1279 = vmatpush1.msra.mxu0 0.0
    %1280 = vmatprep.subr.mxu0 0.0
    %1281 = vmatpush1.msra.mxu0 0.0
    %1282 = vmatprep.subr.mxu0 0.0
    %1283 = vmatpush1.msra.mxu0 0.0
    %1284 = vmatprep.subr.mxu0 0.0
    %1285 = vmatpush1.msra.mxu0 0.0
    %1286 = vmatprep.subr.mxu0 0.0
    %1287 = vmatpush1.msra.mxu0 0.0
    %1288 = vmatprep.subr.mxu0 0.0
    %1289 = vmatpush1.msra.mxu0 0.0
    %1290 = vmatprep.subr.mxu0 0.0
    %1291 = vmatpush1.msra.mxu0 0.0
    %1292 = vmatprep.subr.mxu0 0.0
    %1293 = vmatpush1.msra.mxu0 0.0
    %1294 = vmatprep.subr.mxu0 0.0
    %1295 = vmatpush1.msra.mxu0 0.0
    %1296 = vmatprep.subr.mxu0 0.0
    %1297 = vmatpush1.msra.mxu0 0.0
    %1298 = vmatprep.subr.mxu0 0.0
    %1299 = vmatpush1.msra.mxu0 0.0
    %1300 = vmatprep.mubr.f32.mxu0 0.0
    %v1301 = vand.u32 %v729, 4294901760
    %1302 = vmatmul.mubr.f32.gmra.mrb[0].mxu0 %v1301
    %v1303 = vpop.f32.mrb[0].mxu0
    %v1304 = vadd.f32 %v1182, %v1303
    %v1305 = vpop.f32.mrb[0].mxu0
    %1306 = vmatprep.mubr.f32.mxu0 0.0
    %v1307 = vand.u32 %v732, 4294901760
    %1308 = vmatmul.mubr.f32.gmra.mrb[0].mxu0 %v1307
    %v1309 = vpop.f32.mrb[0].mxu0
    %v1310 = vadd.f32 %v1190, %v1309
    %v1311 = vpop.f32.mrb[0].mxu0
    %1312 = vmatprep.mubr.f32.mxu0 0.0
    %v1313 = vand.u32 %v735, 4294901760
    %1314 = vmatmul.mubr.f32.gmra.mrb[0].mxu0 %v1313
    %v1315 = vpop.f32.mrb[0].mxu0
    %v1316 = vadd.f32 %v1198, %v1315
    %v1317 = vpop.f32.mrb[0].mxu0
    %1318 = vmatprep.mubr.f32.mxu0 0.0
    %v1319 = vand.u32 %v738, 4294901760
    %1320 = vmatmul.mubr.f32.gmra.mrb[0].mxu0 %v1319
    %v1321 = vpop.f32.mrb[0].mxu0
    %v1322 = vadd.f32 %v1206, %v1321
    %v1323 = vpop.f32.mrb[0].mxu0
    %1324 = vdwg.mxu0
    %1325 = vmatprep.subr.mxu0 0.0
    %v1326 = vand.u32 %v714, 4294901760
    %1327 = vmatpush1.msra.mxu0 %v1326
    %1328 = vmatprep.subr.mxu0 0.0
    %v1329 = vand.u32 %v715, 4294901760
    %1330 = vmatpush1.msra.mxu0 %v1329
    %1331 = vmatprep.subr.mxu0 0.0
    %v1332 = vand.u32 %v716, 4294901760
    %1333 = vmatpush1.msra.mxu0 %v1332
    %1334 = vmatprep.subr.mxu0 0.0
    %v1335 = vand.u32 %v717, 4294901760
    %1336 = vmatpush1.msra.mxu0 %v1335
    %1337 = vmatprep.subr.mxu0 0.0
    %v1338 = vand.u32 %v718, 4294901760
    %1339 = vmatpush1.msra.mxu0 %v1338
    %1340 = vmatprep.subr.mxu0 0.0
    %v1341 = vand.u32 %v719, 4294901760
    %1342 = vmatpush1.msra.mxu0 %v1341
    %1343 = vmatprep.subr.mxu0 0.0
    %v1344 = vand.u32 %v720, 4294901760
    %1345 = vmatpush1.msra.mxu0 %v1344
    %1346 = vmatprep.subr.mxu0 0.0
    %v1347 = vand.u32 %v721, 4294901760
    %1348 = vmatpush1.msra.mxu0 %v1347
    %1349 = vmatprep.subr.mxu0 0.0
    %v1350 = vand.u32 %v742, 4294901760
    %1351 = vmatpush1.msra.mxu0 %v1350
    %1352 = vmatprep.subr.mxu0 0.0
    %1353 = vmatpush1.msra.mxu0 0.0
    %1354 = vmatprep.subr.mxu0 0.0
    %1355 = vmatpush1.msra.mxu0 0.0
    %1356 = vmatprep.subr.mxu0 0.0
    %1357 = vmatpush1.msra.mxu0 0.0
    %1358 = vmatprep.subr.mxu0 0.0
    %1359 = vmatpush1.msra.mxu0 0.0
    %1360 = vmatprep.subr.mxu0 0.0
    %1361 = vmatpush1.msra.mxu0 0.0
    %1362 = vmatprep.subr.mxu0 0.0
    %1363 = vmatpush1.msra.mxu0 0.0
    %1364 = vmatprep.subr.mxu0 0.0
    %1365 = vmatpush1.msra.mxu0 0.0
    %1366 = vmatprep.subr.mxu0 0.0
    %1367 = vmatpush1.msra.mxu0 0.0
    %1368 = vmatprep.subr.mxu0 0.0
    %1369 = vmatpush1.msra.mxu0 0.0
    %1370 = vmatprep.subr.mxu0 0.0
    %1371 = vmatpush1.msra.mxu0 0.0
    %1372 = vmatprep.subr.mxu0 0.0
    %1373 = vmatpush1.msra.mxu0 0.0
    %1374 = vmatprep.subr.mxu0 0.0
    %1375 = vmatpush1.msra.mxu0 0.0
    %1376 = vmatprep.subr.mxu0 0.0
    %1377 = vmatpush1.msra.mxu0 0.0
    %1378 = vmatprep.subr.mxu0 0.0
    %1379 = vmatpush1.msra.mxu0 0.0
    %1380 = vmatprep.subr.mxu0 0.0
    %1381 = vmatpush1.msra.mxu0 0.0
    %1382 = vmatprep.subr.mxu0 0.0
    %1383 = vmatpush1.msra.mxu0 0.0
    %1384 = vmatprep.subr.mxu0 0.0
    %1385 = vmatpush1.msra.mxu0 0.0
    %1386 = vmatprep.subr.mxu0 0.0
    %1387 = vmatpush1.msra.mxu0 0.0
    %1388 = vmatprep.subr.mxu0 0.0
    %1389 = vmatpush1.msra.mxu0 0.0
    %1390 = vmatprep.subr.mxu0 0.0
    %1391 = vmatpush1.msra.mxu0 0.0
    %1392 = vmatprep.subr.mxu0 0.0
    %1393 = vmatpush1.msra.mxu0 0.0
    %1394 = vmatprep.subr.mxu0 0.0
    %1395 = vmatpush1.msra.mxu0 0.0
    %1396 = vmatprep.subr.mxu0 0.0
    %1397 = vmatpush1.msra.mxu0 0.0
    %1398 = vmatprep.mubr.f32.mxu0 0.0
    %v1399 = vand.u32 %v729, 4294901760
    %1400 = vmatmul.mubr.f32.gmra.mrb[0].mxu0 %v1399
    %v1401 = vpop.f32.mrb[0].mxu0
    %v1402 = vadd.f32 %v1304, %v1401
    %v1403 = vpop.f32.mrb[0].mxu0
    %1404 = vmatprep.mubr.f32.mxu0 0.0
    %v1405 = vand.u32 %v732, 4294901760
    %1406 = vmatmul.mubr.f32.gmra.mrb[0].mxu0 %v1405
    %v1407 = vpop.f32.mrb[0].mxu0
    %v1408 = vadd.f32 %v1310, %v1407
    %v1409 = vpop.f32.mrb[0].mxu0
    %1410 = vmatprep.mubr.f32.mxu0 0.0
    %v1411 = vand.u32 %v735, 4294901760
    %1412 = vmatmul.mubr.f32.gmra.mrb[0].mxu0 %v1411
    %v1413 = vpop.f32.mrb[0].mxu0
    %v1414 = vadd.f32 %v1316, %v1413
    %v1415 = vpop.f32.mrb[0].mxu0
    %1416 = vmatprep.mubr.f32.mxu0 0.0
    %v1417 = vand.u32 %v738, 4294901760
    %1418 = vmatmul.mubr.f32.gmra.mrb[0].mxu0 %v1417
    %v1419 = vpop.f32.mrb[0].mxu0
    %v1420 = vadd.f32 %v1322, %v1419
    %v1421 = vpop.f32.mrb[0].mxu0
    %1422 = vdwg.mxu0
    %v1423 = vld [vmem:[%s6] sm:$0xff]
    %v1424 = vld [vmem:[%s6 + $0x8] sm:$0xff]
    %v1425 = vld [vmem:[%s6 + $0x10] sm:$0xff]
    %v1426 = vld [vmem:[%s6 + $0x18] sm:$0xff]
    %v1428 = vsel %vm727, %v1423, 0
    %v1431 = vsel %vm727, %v1424, 0
    %v1434 = vsel %vm727, %v1425, 0
    %v1437 = vsel %vm727, %v1426, 0
    %1439 = vmatprep.subr.mxu0 0.0
    %v1440 = vand.u32 %v714, 4294901760
    %1441 = vmatpush1.msra.mxu0 %v1440
    %1442 = vmatprep.subr.mxu0 0.0
    %v1443 = vand.u32 %v715, 4294901760
    %1444 = vmatpush1.msra.mxu0 %v1443
    %1445 = vmatprep.subr.mxu0 0.0
    %v1446 = vand.u32 %v716, 4294901760
    %1447 = vmatpush1.msra.mxu0 %v1446
    %1448 = vmatprep.subr.mxu0 0.0
    %v1449 = vand.u32 %v717, 4294901760
    %1450 = vmatpush1.msra.mxu0 %v1449
    %1451 = vmatprep.subr.mxu0 0.0
    %v1452 = vand.u32 %v718, 4294901760
    %1453 = vmatpush1.msra.mxu0 %v1452
    %1454 = vmatprep.subr.mxu0 0.0
    %v1455 = vand.u32 %v719, 4294901760
    %1456 = vmatpush1.msra.mxu0 %v1455
    %1457 = vmatprep.subr.mxu0 0.0
    %v1458 = vand.u32 %v720, 4294901760
    %1459 = vmatpush1.msra.mxu0 %v1458
    %1460 = vmatprep.subr.mxu0 0.0
    %v1461 = vand.u32 %v721, 4294901760
    %1462 = vmatpush1.msra.mxu0 %v1461
    %1463 = vmatprep.subr.mxu0 0.0
    %v1464 = vand.u32 %v742, 4294901760
    %1465 = vmatpush1.msra.mxu0 %v1464
    %1466 = vmatprep.subr.mxu0 0.0
    %1467 = vmatpush1.msra.mxu0 0.0
    %1468 = vmatprep.subr.mxu0 0.0
    %1469 = vmatpush1.msra.mxu0 0.0
    %1470 = vmatprep.subr.mxu0 0.0
    %1471 = vmatpush1.msra.mxu0 0.0
    %1472 = vmatprep.subr.mxu0 0.0
    %1473 = vmatpush1.msra.mxu0 0.0
    %1474 = vmatprep.subr.mxu0 0.0
    %1475 = vmatpush1.msra.mxu0 0.0
    %1476 = vmatprep.subr.mxu0 0.0
    %1477 = vmatpush1.msra.mxu0 0.0
    %1478 = vmatprep.subr.mxu0 0.0
    %1479 = vmatpush1.msra.mxu0 0.0
    %1480 = vmatprep.subr.mxu0 0.0
    %1481 = vmatpush1.msra.mxu0 0.0
    %1482 = vmatprep.subr.mxu0 0.0
    %1483 = vmatpush1.msra.mxu0 0.0
    %1484 = vmatprep.subr.mxu0 0.0
    %1485 = vmatpush1.msra.mxu0 0.0
    %1486 = vmatprep.subr.mxu0 0.0
    %1487 = vmatpush1.msra.mxu0 0.0
    %1488 = vmatprep.subr.mxu0 0.0
    %1489 = vmatpush1.msra.mxu0 0.0
    %1490 = vmatprep.subr.mxu0 0.0
    %1491 = vmatpush1.msra.mxu0 0.0
    %1492 = vmatprep.subr.mxu0 0.0
    %1493 = vmatpush1.msra.mxu0 0.0
    %1494 = vmatprep.subr.mxu0 0.0
    %1495 = vmatpush1.msra.mxu0 0.0
    %1496 = vmatprep.subr.mxu0 0.0
    %1497 = vmatpush1.msra.mxu0 0.0
    %1498 = vmatprep.subr.mxu0 0.0
    %1499 = vmatpush1.msra.mxu0 0.0
    %1500 = vmatprep.subr.mxu0 0.0
    %1501 = vmatpush1.msra.mxu0 0.0
    %1502 = vmatprep.subr.mxu0 0.0
    %1503 = vmatpush1.msra.mxu0 0.0
    %1504 = vmatprep.subr.mxu0 0.0
    %1505 = vmatpush1.msra.mxu0 0.0
    %1506 = vmatprep.subr.mxu0 0.0
    %1507 = vmatpush1.msra.mxu0 0.0
    %1508 = vmatprep.subr.mxu0 0.0
    %1509 = vmatpush1.msra.mxu0 0.0
    %1510 = vmatprep.subr.mxu0 0.0
    %1511 = vmatpush1.msra.mxu0 0.0
    %1512 = vmatprep.mubr.f32.mxu0 0.0
    %v1513 = vand.u32 %v1428, 4294901760
    %v1514 = vsub.f32 %v1428, %v1513
    %v1515 = vand.u32 %v1514, 4294901760
    %v1516 = vsub.f32 %v1514, %v1515
    %v1517 = vand.u32 %v1516, 4294901760
    %1518 = vmatmul.mubr.f32.gmra.mrb[0].mxu0 %v1517
    %v1519 = vpop.f32.mrb[0].mxu0
    %v1520 = vadd.f32 0.0, %v1519
    %v1521 = vpop.f32.mrb[0].mxu0
    %1522 = vmatprep.mubr.f32.mxu0 0.0
    %v1523 = vand.u32 %v1431, 4294901760
    %v1524 = vsub.f32 %v1431, %v1523
    %v1525 = vand.u32 %v1524, 4294901760
    %v1526 = vsub.f32 %v1524, %v1525
    %v1527 = vand.u32 %v1526, 4294901760
    %1528 = vmatmul.mubr.f32.gmra.mrb[0].mxu0 %v1527
    %v1529 = vpop.f32.mrb[0].mxu0
    %v1530 = vadd.f32 0.0, %v1529
    %v1531 = vpop.f32.mrb[0].mxu0
    %1532 = vmatprep.mubr.f32.mxu0 0.0
    %v1533 = vand.u32 %v1434, 4294901760
    %v1534 = vsub.f32 %v1434, %v1533
    %v1535 = vand.u32 %v1534, 4294901760
    %v1536 = vsub.f32 %v1534, %v1535
    %v1537 = vand.u32 %v1536, 4294901760
    %1538 = vmatmul.mubr.f32.gmra.mrb[0].mxu0 %v1537
    %v1539 = vpop.f32.mrb[0].mxu0
    %v1540 = vadd.f32 0.0, %v1539
    %v1541 = vpop.f32.mrb[0].mxu0
    %1542 = vmatprep.mubr.f32.mxu0 0.0
    %v1543 = vand.u32 %v1437, 4294901760
    %v1544 = vsub.f32 %v1437, %v1543
    %v1545 = vand.u32 %v1544, 4294901760
    %v1546 = vsub.f32 %v1544, %v1545
    %v1547 = vand.u32 %v1546, 4294901760
    %1548 = vmatmul.mubr.f32.gmra.mrb[0].mxu0 %v1547
    %v1549 = vpop.f32.mrb[0].mxu0
    %v1550 = vadd.f32 0.0, %v1549
    %v1551 = vpop.f32.mrb[0].mxu0
    %1552 = vdwg.mxu0
    %1553 = vmatprep.subr.mxu0 0.0
    %v1554 = vand.u32 %v714, 4294901760
    %v1555 = vsub.f32 %v714, %v1554
    %v1556 = vand.u32 %v1555, 4294901760
    %v1557 = vsub.f32 %v1555, %v1556
    %v1558 = vand.u32 %v1557, 4294901760
    %1559 = vmatpush1.msra.mxu0 %v1558
    %1560 = vmatprep.subr.mxu0 0.0
    %v1561 = vand.u32 %v715, 4294901760
    %v1562 = vsub.f32 %v715, %v1561
    %v1563 = vand.u32 %v1562, 4294901760
    %v1564 = vsub.f32 %v1562, %v1563
    %v1565 = vand.u32 %v1564, 4294901760
    %1566 = vmatpush1.msra.mxu0 %v1565
    %1567 = vmatprep.subr.mxu0 0.0
    %v1568 = vand.u32 %v716, 4294901760
    %v1569 = vsub.f32 %v716, %v1568
    %v1570 = vand.u32 %v1569, 4294901760
    %v1571 = vsub.f32 %v1569, %v1570
    %v1572 = vand.u32 %v1571, 4294901760
    %1573 = vmatpush1.msra.mxu0 %v1572
    %1574 = vmatprep.subr.mxu0 0.0
    %v1575 = vand.u32 %v717, 4294901760
    %v1576 = vsub.f32 %v717, %v1575
    %v1577 = vand.u32 %v1576, 4294901760
    %v1578 = vsub.f32 %v1576, %v1577
    %v1579 = vand.u32 %v1578, 4294901760
    %1580 = vmatpush1.msra.mxu0 %v1579
    %1581 = vmatprep.subr.mxu0 0.0
    %v1582 = vand.u32 %v718, 4294901760
    %v1583 = vsub.f32 %v718, %v1582
    %v1584 = vand.u32 %v1583, 4294901760
    %v1585 = vsub.f32 %v1583, %v1584
    %v1586 = vand.u32 %v1585, 4294901760
    %1587 = vmatpush1.msra.mxu0 %v1586
    %1588 = vmatprep.subr.mxu0 0.0
    %v1589 = vand.u32 %v719, 4294901760
    %v1590 = vsub.f32 %v719, %v1589
    %v1591 = vand.u32 %v1590, 4294901760
    %v1592 = vsub.f32 %v1590, %v1591
    %v1593 = vand.u32 %v1592, 4294901760
    %1594 = vmatpush1.msra.mxu0 %v1593
    %1595 = vmatprep.subr.mxu0 0.0
    %v1596 = vand.u32 %v720, 4294901760
    %v1597 = vsub.f32 %v720, %v1596
    %v1598 = vand.u32 %v1597, 4294901760
    %v1599 = vsub.f32 %v1597, %v1598
    %v1600 = vand.u32 %v1599, 4294901760
    %1601 = vmatpush1.msra.mxu0 %v1600
    %1602 = vmatprep.subr.mxu0 0.0
    %v1603 = vand.u32 %v721, 4294901760
    %v1604 = vsub.f32 %v721, %v1603
    %v1605 = vand.u32 %v1604, 4294901760
    %v1606 = vsub.f32 %v1604, %v1605
    %v1607 = vand.u32 %v1606, 4294901760
    %1608 = vmatpush1.msra.mxu0 %v1607
    %1609 = vmatprep.subr.mxu0 0.0
    %v1610 = vand.u32 %v742, 4294901760
    %v1611 = vsub.f32 %v742, %v1610
    %v1612 = vand.u32 %v1611, 4294901760
    %v1613 = vsub.f32 %v1611, %v1612
    %v1614 = vand.u32 %v1613, 4294901760
    %1615 = vmatpush1.msra.mxu0 %v1614
    %1616 = vmatprep.subr.mxu0 0.0
    %1617 = vmatpush1.msra.mxu0 0.0
    %1618 = vmatprep.subr.mxu0 0.0
    %1619 = vmatpush1.msra.mxu0 0.0
    %1620 = vmatprep.subr.mxu0 0.0
    %1621 = vmatpush1.msra.mxu0 0.0
    %1622 = vmatprep.subr.mxu0 0.0
    %1623 = vmatpush1.msra.mxu0 0.0
    %1624 = vmatprep.subr.mxu0 0.0
    %1625 = vmatpush1.msra.mxu0 0.0
    %1626 = vmatprep.subr.mxu0 0.0
    %1627 = vmatpush1.msra.mxu0 0.0
    %1628 = vmatprep.subr.mxu0 0.0
    %1629 = vmatpush1.msra.mxu0 0.0
    %1630 = vmatprep.subr.mxu0 0.0
    %1631 = vmatpush1.msra.mxu0 0.0
    %1632 = vmatprep.subr.mxu0 0.0
    %1633 = vmatpush1.msra.mxu0 0.0
    %1634 = vmatprep.subr.mxu0 0.0
    %1635 = vmatpush1.msra.mxu0 0.0
    %1636 = vmatprep.subr.mxu0 0.0
    %1637 = vmatpush1.msra.mxu0 0.0
    %1638 = vmatprep.subr.mxu0 0.0
    %1639 = vmatpush1.msra.mxu0 0.0
    %1640 = vmatprep.subr.mxu0 0.0
    %1641 = vmatpush1.msra.mxu0 0.0
    %1642 = vmatprep.subr.mxu0 0.0
    %1643 = vmatpush1.msra.mxu0 0.0
    %1644 = vmatprep.subr.mxu0 0.0
    %1645 = vmatpush1.msra.mxu0 0.0
    %1646 = vmatprep.subr.mxu0 0.0
    %1647 = vmatpush1.msra.mxu0 0.0
    %1648 = vmatprep.subr.mxu0 0.0
    %1649 = vmatpush1.msra.mxu0 0.0
    %1650 = vmatprep.subr.mxu0 0.0
    %1651 = vmatpush1.msra.mxu0 0.0
    %1652 = vmatprep.subr.mxu0 0.0
    %1653 = vmatpush1.msra.mxu0 0.0
    %1654 = vmatprep.subr.mxu0 0.0
    %1655 = vmatpush1.msra.mxu0 0.0
    %1656 = vmatprep.subr.mxu0 0.0
    %1657 = vmatpush1.msra.mxu0 0.0
    %1658 = vmatprep.subr.mxu0 0.0
    %1659 = vmatpush1.msra.mxu0 0.0
    %1660 = vmatprep.subr.mxu0 0.0
    %1661 = vmatpush1.msra.mxu0 0.0
    %1662 = vmatprep.mubr.f32.mxu0 0.0
    %v1663 = vand.u32 %v1428, 4294901760
    %1664 = vmatmul.mubr.f32.gmra.mrb[0].mxu0 %v1663
    %v1665 = vpop.f32.mrb[0].mxu0
    %v1666 = vadd.f32 %v1520, %v1665
    %v1667 = vpop.f32.mrb[0].mxu0
    %1668 = vmatprep.mubr.f32.mxu0 0.0
    %v1669 = vand.u32 %v1431, 4294901760
    %1670 = vmatmul.mubr.f32.gmra.mrb[0].mxu0 %v1669
    %v1671 = vpop.f32.mrb[0].mxu0
    %v1672 = vadd.f32 %v1530, %v1671
    %v1673 = vpop.f32.mrb[0].mxu0
    %1674 = vmatprep.mubr.f32.mxu0 0.0
    %v1675 = vand.u32 %v1434, 4294901760
    %1676 = vmatmul.mubr.f32.gmra.mrb[0].mxu0 %v1675
    %v1677 = vpop.f32.mrb[0].mxu0
    %v1678 = vadd.f32 %v1540, %v1677
    %v1679 = vpop.f32.mrb[0].mxu0
    %1680 = vmatprep.mubr.f32.mxu0 0.0
    %v1681 = vand.u32 %v1437, 4294901760
    %1682 = vmatmul.mubr.f32.gmra.mrb[0].mxu0 %v1681
    %v1683 = vpop.f32.mrb[0].mxu0
    %v1684 = vadd.f32 %v1550, %v1683
    %v1685 = vpop.f32.mrb[0].mxu0
    %1686 = vdwg.mxu0
    %1687 = vmatprep.subr.mxu0 0.0
    %v1688 = vand.u32 %v714, 4294901760
    %v1689 = vsub.f32 %v714, %v1688
    %1690 = vmatpush1.msra.mxu0 %v1689
    %1691 = vmatprep.subr.mxu0 0.0
    %v1692 = vand.u32 %v715, 4294901760
    %v1693 = vsub.f32 %v715, %v1692
    %1694 = vmatpush1.msra.mxu0 %v1693
    %1695 = vmatprep.subr.mxu0 0.0
    %v1696 = vand.u32 %v716, 4294901760
    %v1697 = vsub.f32 %v716, %v1696
    %1698 = vmatpush1.msra.mxu0 %v1697
    %1699 = vmatprep.subr.mxu0 0.0
    %v1700 = vand.u32 %v717, 4294901760
    %v1701 = vsub.f32 %v717, %v1700
    %1702 = vmatpush1.msra.mxu0 %v1701
    %1703 = vmatprep.subr.mxu0 0.0
    %v1704 = vand.u32 %v718, 4294901760
    %v1705 = vsub.f32 %v718, %v1704
    %1706 = vmatpush1.msra.mxu0 %v1705
    %1707 = vmatprep.subr.mxu0 0.0
    %v1708 = vand.u32 %v719, 4294901760
    %v1709 = vsub.f32 %v719, %v1708
    %1710 = vmatpush1.msra.mxu0 %v1709
    %1711 = vmatprep.subr.mxu0 0.0
    %v1712 = vand.u32 %v720, 4294901760
    %v1713 = vsub.f32 %v720, %v1712
    %1714 = vmatpush1.msra.mxu0 %v1713
    %1715 = vmatprep.subr.mxu0 0.0
    %v1716 = vand.u32 %v721, 4294901760
    %v1717 = vsub.f32 %v721, %v1716
    %1718 = vmatpush1.msra.mxu0 %v1717
    %1719 = vmatprep.subr.mxu0 0.0
    %v1720 = vand.u32 %v742, 4294901760
    %v1721 = vsub.f32 %v742, %v1720
    %1722 = vmatpush1.msra.mxu0 %v1721
    %1723 = vmatprep.subr.mxu0 0.0
    %1724 = vmatpush1.msra.mxu0 0.0
    %1725 = vmatprep.subr.mxu0 0.0
    %1726 = vmatpush1.msra.mxu0 0.0
    %1727 = vmatprep.subr.mxu0 0.0
    %1728 = vmatpush1.msra.mxu0 0.0
    %1729 = vmatprep.subr.mxu0 0.0
    %1730 = vmatpush1.msra.mxu0 0.0
    %1731 = vmatprep.subr.mxu0 0.0
    %1732 = vmatpush1.msra.mxu0 0.0
    %1733 = vmatprep.subr.mxu0 0.0
    %1734 = vmatpush1.msra.mxu0 0.0
    %1735 = vmatprep.subr.mxu0 0.0
    %1736 = vmatpush1.msra.mxu0 0.0
    %1737 = vmatprep.subr.mxu0 0.0
    %1738 = vmatpush1.msra.mxu0 0.0
    %1739 = vmatprep.subr.mxu0 0.0
    %1740 = vmatpush1.msra.mxu0 0.0
    %1741 = vmatprep.subr.mxu0 0.0
    %1742 = vmatpush1.msra.mxu0 0.0
    %1743 = vmatprep.subr.mxu0 0.0
    %1744 = vmatpush1.msra.mxu0 0.0
    %1745 = vmatprep.subr.mxu0 0.0
    %1746 = vmatpush1.msra.mxu0 0.0
    %1747 = vmatprep.subr.mxu0 0.0
    %1748 = vmatpush1.msra.mxu0 0.0
    %1749 = vmatprep.subr.mxu0 0.0
    %1750 = vmatpush1.msra.mxu0 0.0
    %1751 = vmatprep.subr.mxu0 0.0
    %1752 = vmatpush1.msra.mxu0 0.0
    %1753 = vmatprep.subr.mxu0 0.0
    %1754 = vmatpush1.msra.mxu0 0.0
    %1755 = vmatprep.subr.mxu0 0.0
    %1756 = vmatpush1.msra.mxu0 0.0
    %1757 = vmatprep.subr.mxu0 0.0
    %1758 = vmatpush1.msra.mxu0 0.0
    %1759 = vmatprep.subr.mxu0 0.0
    %1760 = vmatpush1.msra.mxu0 0.0
    %1761 = vmatprep.subr.mxu0 0.0
    %1762 = vmatpush1.msra.mxu0 0.0
    %1763 = vmatprep.subr.mxu0 0.0
    %1764 = vmatpush1.msra.mxu0 0.0
    %1765 = vmatprep.subr.mxu0 0.0
    %1766 = vmatpush1.msra.mxu0 0.0
    %1767 = vmatprep.subr.mxu0 0.0
    %1768 = vmatpush1.msra.mxu0 0.0
    %1769 = vmatprep.mubr.f32.mxu0 0.0
    %v1770 = vand.u32 %v1428, 4294901760
    %v1771 = vsub.f32 %v1428, %v1770
    %1772 = vmatmul.mubr.f32.gmra.mrb[0].mxu0 %v1771
    %v1773 = vpop.f32.mrb[0].mxu0
    %v1774 = vadd.f32 %v1666, %v1773
    %v1775 = vpop.f32.mrb[0].mxu0
    %1776 = vmatprep.mubr.f32.mxu0 0.0
    %v1777 = vand.u32 %v1431, 4294901760
    %v1778 = vsub.f32 %v1431, %v1777
    %1779 = vmatmul.mubr.f32.gmra.mrb[0].mxu0 %v1778
    %v1780 = vpop.f32.mrb[0].mxu0
    %v1781 = vadd.f32 %v1672, %v1780
    %v1782 = vpop.f32.mrb[0].mxu0
    %1783 = vmatprep.mubr.f32.mxu0 0.0
    %v1784 = vand.u32 %v1434, 4294901760
    %v1785 = vsub.f32 %v1434, %v1784
    %1786 = vmatmul.mubr.f32.gmra.mrb[0].mxu0 %v1785
    %v1787 = vpop.f32.mrb[0].mxu0
    %v1788 = vadd.f32 %v1678, %v1787
    %v1789 = vpop.f32.mrb[0].mxu0
    %1790 = vmatprep.mubr.f32.mxu0 0.0
    %v1791 = vand.u32 %v1437, 4294901760
    %v1792 = vsub.f32 %v1437, %v1791
    %1793 = vmatmul.mubr.f32.gmra.mrb[0].mxu0 %v1792
    %v1794 = vpop.f32.mrb[0].mxu0
    %v1795 = vadd.f32 %v1684, %v1794
    %v1796 = vpop.f32.mrb[0].mxu0
    %1797 = vdwg.mxu0
    %1798 = vmatprep.subr.mxu0 0.0
    %v1799 = vand.u32 %v714, 4294901760
    %1800 = vmatpush1.msra.mxu0 %v1799
    %1801 = vmatprep.subr.mxu0 0.0
    %v1802 = vand.u32 %v715, 4294901760
    %1803 = vmatpush1.msra.mxu0 %v1802
    %1804 = vmatprep.subr.mxu0 0.0
    %v1805 = vand.u32 %v716, 4294901760
    %1806 = vmatpush1.msra.mxu0 %v1805
    %1807 = vmatprep.subr.mxu0 0.0
    %v1808 = vand.u32 %v717, 4294901760
    %1809 = vmatpush1.msra.mxu0 %v1808
    %1810 = vmatprep.subr.mxu0 0.0
    %v1811 = vand.u32 %v718, 4294901760
    %1812 = vmatpush1.msra.mxu0 %v1811
    %1813 = vmatprep.subr.mxu0 0.0
    %v1814 = vand.u32 %v719, 4294901760
    %1815 = vmatpush1.msra.mxu0 %v1814
    %1816 = vmatprep.subr.mxu0 0.0
    %v1817 = vand.u32 %v720, 4294901760
    %1818 = vmatpush1.msra.mxu0 %v1817
    %1819 = vmatprep.subr.mxu0 0.0
    %v1820 = vand.u32 %v721, 4294901760
    %1821 = vmatpush1.msra.mxu0 %v1820
    %1822 = vmatprep.subr.mxu0 0.0
    %v1823 = vand.u32 %v742, 4294901760
    %1824 = vmatpush1.msra.mxu0 %v1823
    %1825 = vmatprep.subr.mxu0 0.0
    %1826 = vmatpush1.msra.mxu0 0.0
    %1827 = vmatprep.subr.mxu0 0.0
    %1828 = vmatpush1.msra.mxu0 0.0
    %1829 = vmatprep.subr.mxu0 0.0
    %1830 = vmatpush1.msra.mxu0 0.0
    %1831 = vmatprep.subr.mxu0 0.0
    %1832 = vmatpush1.msra.mxu0 0.0
    %1833 = vmatprep.subr.mxu0 0.0
    %1834 = vmatpush1.msra.mxu0 0.0
    %1835 = vmatprep.subr.mxu0 0.0
    %1836 = vmatpush1.msra.mxu0 0.0
    %1837 = vmatprep.subr.mxu0 0.0
    %1838 = vmatpush1.msra.mxu0 0.0
    %1839 = vmatprep.subr.mxu0 0.0
    %1840 = vmatpush1.msra.mxu0 0.0
    %1841 = vmatprep.subr.mxu0 0.0
    %1842 = vmatpush1.msra.mxu0 0.0
    %1843 = vmatprep.subr.mxu0 0.0
    %1844 = vmatpush1.msra.mxu0 0.0
    %1845 = vmatprep.subr.mxu0 0.0
    %1846 = vmatpush1.msra.mxu0 0.0
    %1847 = vmatprep.subr.mxu0 0.0
    %1848 = vmatpush1.msra.mxu0 0.0
    %1849 = vmatprep.subr.mxu0 0.0
    %1850 = vmatpush1.msra.mxu0 0.0
    %1851 = vmatprep.subr.mxu0 0.0
    %1852 = vmatpush1.msra.mxu0 0.0
    %1853 = vmatprep.subr.mxu0 0.0
    %1854 = vmatpush1.msra.mxu0 0.0
    %1855 = vmatprep.subr.mxu0 0.0
    %1856 = vmatpush1.msra.mxu0 0.0
    %1857 = vmatprep.subr.mxu0 0.0
    %1858 = vmatpush1.msra.mxu0 0.0
    %1859 = vmatprep.subr.mxu0 0.0
    %1860 = vmatpush1.msra.mxu0 0.0
    %1861 = vmatprep.subr.mxu0 0.0
    %1862 = vmatpush1.msra.mxu0 0.0
    %1863 = vmatprep.subr.mxu0 0.0
    %1864 = vmatpush1.msra.mxu0 0.0
    %1865 = vmatprep.subr.mxu0 0.0
    %1866 = vmatpush1.msra.mxu0 0.0
    %1867 = vmatprep.subr.mxu0 0.0
    %1868 = vmatpush1.msra.mxu0 0.0
    %1869 = vmatprep.subr.mxu0 0.0
    %1870 = vmatpush1.msra.mxu0 0.0
    %1871 = vmatprep.mubr.f32.mxu0 0.0
    %v1872 = vand.u32 %v1428, 4294901760
    %v1873 = vsub.f32 %v1428, %v1872
    %v1874 = vand.u32 %v1873, 4294901760
    %1875 = vmatmul.mubr.f32.gmra.mrb[0].mxu0 %v1874
    %v1876 = vpop.f32.mrb[0].mxu0
    %v1877 = vadd.f32 %v1774, %v1876
    %v1878 = vpop.f32.mrb[0].mxu0
    %1879 = vmatprep.mubr.f32.mxu0 0.0
    %v1880 = vand.u32 %v1431, 4294901760
    %v1881 = vsub.f32 %v1431, %v1880
    %v1882 = vand.u32 %v1881, 4294901760
    %1883 = vmatmul.mubr.f32.gmra.mrb[0].mxu0 %v1882
    %v1884 = vpop.f32.mrb[0].mxu0
    %v1885 = vadd.f32 %v1781, %v1884
    %v1886 = vpop.f32.mrb[0].mxu0
    %1887 = vmatprep.mubr.f32.mxu0 0.0
    %v1888 = vand.u32 %v1434, 4294901760
    %v1889 = vsub.f32 %v1434, %v1888
    %v1890 = vand.u32 %v1889, 4294901760
    %1891 = vmatmul.mubr.f32.gmra.mrb[0].mxu0 %v1890
    %v1892 = vpop.f32.mrb[0].mxu0
    %v1893 = vadd.f32 %v1788, %v1892
    %v1894 = vpop.f32.mrb[0].mxu0
    %1895 = vmatprep.mubr.f32.mxu0 0.0
    %v1896 = vand.u32 %v1437, 4294901760
    %v1897 = vsub.f32 %v1437, %v1896
    %v1898 = vand.u32 %v1897, 4294901760
    %1899 = vmatmul.mubr.f32.gmra.mrb[0].mxu0 %v1898
    %v1900 = vpop.f32.mrb[0].mxu0
    %v1901 = vadd.f32 %v1795, %v1900
    %v1902 = vpop.f32.mrb[0].mxu0
    %1903 = vdwg.mxu0
    %1904 = vmatprep.subr.mxu0 0.0
    %v1905 = vand.u32 %v714, 4294901760
    %v1906 = vsub.f32 %v714, %v1905
    %v1907 = vand.u32 %v1906, 4294901760
    %1908 = vmatpush1.msra.mxu0 %v1907
    %1909 = vmatprep.subr.mxu0 0.0
    %v1910 = vand.u32 %v715, 4294901760
    %v1911 = vsub.f32 %v715, %v1910
    %v1912 = vand.u32 %v1911, 4294901760
    %1913 = vmatpush1.msra.mxu0 %v1912
    %1914 = vmatprep.subr.mxu0 0.0
    %v1915 = vand.u32 %v716, 4294901760
    %v1916 = vsub.f32 %v716, %v1915
    %v1917 = vand.u32 %v1916, 4294901760
    %1918 = vmatpush1.msra.mxu0 %v1917
    %1919 = vmatprep.subr.mxu0 0.0
    %v1920 = vand.u32 %v717, 4294901760
    %v1921 = vsub.f32 %v717, %v1920
    %v1922 = vand.u32 %v1921, 4294901760
    %1923 = vmatpush1.msra.mxu0 %v1922
    %1924 = vmatprep.subr.mxu0 0.0
    %v1925 = vand.u32 %v718, 4294901760
    %v1926 = vsub.f32 %v718, %v1925
    %v1927 = vand.u32 %v1926, 4294901760
    %1928 = vmatpush1.msra.mxu0 %v1927
    %1929 = vmatprep.subr.mxu0 0.0
    %v1930 = vand.u32 %v719, 4294901760
    %v1931 = vsub.f32 %v719, %v1930
    %v1932 = vand.u32 %v1931, 4294901760
    %1933 = vmatpush1.msra.mxu0 %v1932
    %1934 = vmatprep.subr.mxu0 0.0
    %v1935 = vand.u32 %v720, 4294901760
    %v1936 = vsub.f32 %v720, %v1935
    %v1937 = vand.u32 %v1936, 4294901760
    %1938 = vmatpush1.msra.mxu0 %v1937
    %1939 = vmatprep.subr.mxu0 0.0
    %v1940 = vand.u32 %v721, 4294901760
    %v1941 = vsub.f32 %v721, %v1940
    %v1942 = vand.u32 %v1941, 4294901760
    %1943 = vmatpush1.msra.mxu0 %v1942
    %1944 = vmatprep.subr.mxu0 0.0
    %v1945 = vand.u32 %v742, 4294901760
    %v1946 = vsub.f32 %v742, %v1945
    %v1947 = vand.u32 %v1946, 4294901760
    %1948 = vmatpush1.msra.mxu0 %v1947
    %1949 = vmatprep.subr.mxu0 0.0
    %1950 = vmatpush1.msra.mxu0 0.0
    %1951 = vmatprep.subr.mxu0 0.0
    %1952 = vmatpush1.msra.mxu0 0.0
    %1953 = vmatprep.subr.mxu0 0.0
    %1954 = vmatpush1.msra.mxu0 0.0
    %1955 = vmatprep.subr.mxu0 0.0
    %1956 = vmatpush1.msra.mxu0 0.0
    %1957 = vmatprep.subr.mxu0 0.0
    %1958 = vmatpush1.msra.mxu0 0.0
    %1959 = vmatprep.subr.mxu0 0.0
    %1960 = vmatpush1.msra.mxu0 0.0
    %1961 = vmatprep.subr.mxu0 0.0
    %1962 = vmatpush1.msra.mxu0 0.0
    %1963 = vmatprep.subr.mxu0 0.0
    %1964 = vmatpush1.msra.mxu0 0.0
    %1965 = vmatprep.subr.mxu0 0.0
    %1966 = vmatpush1.msra.mxu0 0.0
    %1967 = vmatprep.subr.mxu0 0.0
    %1968 = vmatpush1.msra.mxu0 0.0
    %1969 = vmatprep.subr.mxu0 0.0
    %1970 = vmatpush1.msra.mxu0 0.0
    %1971 = vmatprep.subr.mxu0 0.0
    %1972 = vmatpush1.msra.mxu0 0.0
    %1973 = vmatprep.subr.mxu0 0.0
    %1974 = vmatpush1.msra.mxu0 0.0
    %1975 = vmatprep.subr.mxu0 0.0
    %1976 = vmatpush1.msra.mxu0 0.0
    %1977 = vmatprep.subr.mxu0 0.0
    %1978 = vmatpush1.msra.mxu0 0.0
    %1979 = vmatprep.subr.mxu0 0.0
    %1980 = vmatpush1.msra.mxu0 0.0
    %1981 = vmatprep.subr.mxu0 0.0
    %1982 = vmatpush1.msra.mxu0 0.0
    %1983 = vmatprep.subr.mxu0 0.0
    %1984 = vmatpush1.msra.mxu0 0.0
    %1985 = vmatprep.subr.mxu0 0.0
    %1986 = vmatpush1.msra.mxu0 0.0
    %1987 = vmatprep.subr.mxu0 0.0
    %1988 = vmatpush1.msra.mxu0 0.0
    %1989 = vmatprep.subr.mxu0 0.0
    %1990 = vmatpush1.msra.mxu0 0.0
    %1991 = vmatprep.subr.mxu0 0.0
    %1992 = vmatpush1.msra.mxu0 0.0
    %1993 = vmatprep.subr.mxu0 0.0
    %1994 = vmatpush1.msra.mxu0 0.0
    %1995 = vmatprep.mubr.f32.mxu0 0.0
    %v1996 = vand.u32 %v1428, 4294901760
    %1997 = vmatmul.mubr.f32.gmra.mrb[0].mxu0 %v1996
    %v1998 = vpop.f32.mrb[0].mxu0
    %v1999 = vadd.f32 %v1877, %v1998
    %v2000 = vpop.f32.mrb[0].mxu0
    %2001 = vmatprep.mubr.f32.mxu0 0.0
    %v2002 = vand.u32 %v1431, 4294901760
    %2003 = vmatmul.mubr.f32.gmra.mrb[0].mxu0 %v2002
    %v2004 = vpop.f32.mrb[0].mxu0
    %v2005 = vadd.f32 %v1885, %v2004
    %v2006 = vpop.f32.mrb[0].mxu0
    %2007 = vmatprep.mubr.f32.mxu0 0.0
    %v2008 = vand.u32 %v1434, 4294901760
    %2009 = vmatmul.mubr.f32.gmra.mrb[0].mxu0 %v2008
    %v2010 = vpop.f32.mrb[0].mxu0
    %v2011 = vadd.f32 %v1893, %v2010
    %v2012 = vpop.f32.mrb[0].mxu0
    %2013 = vmatprep.mubr.f32.mxu0 0.0
    %v2014 = vand.u32 %v1437, 4294901760
    %2015 = vmatmul.mubr.f32.gmra.mrb[0].mxu0 %v2014
    %v2016 = vpop.f32.mrb[0].mxu0
    %v2017 = vadd.f32 %v1901, %v2016
    %v2018 = vpop.f32.mrb[0].mxu0
    %2019 = vdwg.mxu0
    %2020 = vmatprep.subr.mxu0 0.0
    %v2021 = vand.u32 %v714, 4294901760
    %2022 = vmatpush1.msra.mxu0 %v2021
    %2023 = vmatprep.subr.mxu0 0.0
    %v2024 = vand.u32 %v715, 4294901760
    %2025 = vmatpush1.msra.mxu0 %v2024
    %2026 = vmatprep.subr.mxu0 0.0
    %v2027 = vand.u32 %v716, 4294901760
    %2028 = vmatpush1.msra.mxu0 %v2027
    %2029 = vmatprep.subr.mxu0 0.0
    %v2030 = vand.u32 %v717, 4294901760
    %2031 = vmatpush1.msra.mxu0 %v2030
    %2032 = vmatprep.subr.mxu0 0.0
    %v2033 = vand.u32 %v718, 4294901760
    %2034 = vmatpush1.msra.mxu0 %v2033
    %2035 = vmatprep.subr.mxu0 0.0
    %v2036 = vand.u32 %v719, 4294901760
    %2037 = vmatpush1.msra.mxu0 %v2036
    %2038 = vmatprep.subr.mxu0 0.0
    %v2039 = vand.u32 %v720, 4294901760
    %2040 = vmatpush1.msra.mxu0 %v2039
    %2041 = vmatprep.subr.mxu0 0.0
    %v2042 = vand.u32 %v721, 4294901760
    %2043 = vmatpush1.msra.mxu0 %v2042
    %2044 = vmatprep.subr.mxu0 0.0
    %v2045 = vand.u32 %v742, 4294901760
    %2046 = vmatpush1.msra.mxu0 %v2045
    %2047 = vmatprep.subr.mxu0 0.0
    %2048 = vmatpush1.msra.mxu0 0.0
    %2049 = vmatprep.subr.mxu0 0.0
    %2050 = vmatpush1.msra.mxu0 0.0
    %2051 = vmatprep.subr.mxu0 0.0
    %2052 = vmatpush1.msra.mxu0 0.0
    %2053 = vmatprep.subr.mxu0 0.0
    %2054 = vmatpush1.msra.mxu0 0.0
    %2055 = vmatprep.subr.mxu0 0.0
    %2056 = vmatpush1.msra.mxu0 0.0
    %2057 = vmatprep.subr.mxu0 0.0
    %2058 = vmatpush1.msra.mxu0 0.0
    %2059 = vmatprep.subr.mxu0 0.0
    %2060 = vmatpush1.msra.mxu0 0.0
    %2061 = vmatprep.subr.mxu0 0.0
    %2062 = vmatpush1.msra.mxu0 0.0
    %2063 = vmatprep.subr.mxu0 0.0
    %2064 = vmatpush1.msra.mxu0 0.0
    %2065 = vmatprep.subr.mxu0 0.0
    %2066 = vmatpush1.msra.mxu0 0.0
    %2067 = vmatprep.subr.mxu0 0.0
    %2068 = vmatpush1.msra.mxu0 0.0
    %2069 = vmatprep.subr.mxu0 0.0
    %2070 = vmatpush1.msra.mxu0 0.0
    %2071 = vmatprep.subr.mxu0 0.0
    %2072 = vmatpush1.msra.mxu0 0.0
    %2073 = vmatprep.subr.mxu0 0.0
    %2074 = vmatpush1.msra.mxu0 0.0
    %2075 = vmatprep.subr.mxu0 0.0
    %2076 = vmatpush1.msra.mxu0 0.0
    %2077 = vmatprep.subr.mxu0 0.0
    %2078 = vmatpush1.msra.mxu0 0.0
    %2079 = vmatprep.subr.mxu0 0.0
    %2080 = vmatpush1.msra.mxu0 0.0
    %2081 = vmatprep.subr.mxu0 0.0
    %2082 = vmatpush1.msra.mxu0 0.0
    %2083 = vmatprep.subr.mxu0 0.0
    %2084 = vmatpush1.msra.mxu0 0.0
    %2085 = vmatprep.subr.mxu0 0.0
    %2086 = vmatpush1.msra.mxu0 0.0
    %2087 = vmatprep.subr.mxu0 0.0
    %2088 = vmatpush1.msra.mxu0 0.0
    %2089 = vmatprep.subr.mxu0 0.0
    %2090 = vmatpush1.msra.mxu0 0.0
    %2091 = vmatprep.subr.mxu0 0.0
    %2092 = vmatpush1.msra.mxu0 0.0
    %2093 = vmatprep.mubr.f32.mxu0 0.0
    %v2094 = vand.u32 %v1428, 4294901760
    %2095 = vmatmul.mubr.f32.gmra.mrb[0].mxu0 %v2094
    %v2096 = vpop.f32.mrb[0].mxu0
    %v2097 = vadd.f32 %v1999, %v2096
    %v2098 = vpop.f32.mrb[0].mxu0
    %2099 = vmatprep.mubr.f32.mxu0 0.0
    %v2100 = vand.u32 %v1431, 4294901760
    %2101 = vmatmul.mubr.f32.gmra.mrb[0].mxu0 %v2100
    %v2102 = vpop.f32.mrb[0].mxu0
    %v2103 = vadd.f32 %v2005, %v2102
    %v2104 = vpop.f32.mrb[0].mxu0
    %2105 = vmatprep.mubr.f32.mxu0 0.0
    %v2106 = vand.u32 %v1434, 4294901760
    %2107 = vmatmul.mubr.f32.gmra.mrb[0].mxu0 %v2106
    %v2108 = vpop.f32.mrb[0].mxu0
    %v2109 = vadd.f32 %v2011, %v2108
    %v2110 = vpop.f32.mrb[0].mxu0
    %2111 = vmatprep.mubr.f32.mxu0 0.0
    %v2112 = vand.u32 %v1437, 4294901760
    %2113 = vmatmul.mubr.f32.gmra.mrb[0].mxu0 %v2112
    %v2114 = vpop.f32.mrb[0].mxu0
    %v2115 = vadd.f32 %v2017, %v2114
    %v2116 = vpop.f32.mrb[0].mxu0
    %2117 = vdwg.mxu0
    %v2118 = vmax.f32 %v1402, %v2097
    %v2119 = vmax.f32 %v1408, %v2103
    %v2120 = vmax.f32 %v1414, %v2109
    %v2121 = vmax.f32 %v1420, %v2115
    %v2122 = vld [vmem:[%s7] sm:$0xff]
    %v2123 = vld [vmem:[%s7 + $0x8] sm:$0xff]
    %v2124 = vld [vmem:[%s7 + $0x10] sm:$0x7]
    %vm2125 = vcmask 154624
    %v2127 = vsel %vm2125, %v2118, 0
    %v2130 = vsel %vm2125, %v2119, 0
    %v2133 = vsel %vm2125, %v2120, 0
    %v2136 = vsel %vm2125, %v2121, 0
    %vm2138 = vcmask 1042432
    %v2140 = vsel %vm2138, %v2124, 0
    %2142 = vmatprep.subr.mxu0 0.0
    %v2143 = vand.u32 %v2122, 4294901760
    %2144 = vmatpush1.msra.mxu0 %v2143
    %2145 = vmatprep.subr.mxu0 0.0
    %v2146 = vand.u32 %v2123, 4294901760
    %2147 = vmatpush1.msra.mxu0 %v2146
    %2148 = vmatprep.subr.mxu0 0.0
    %v2149 = vand.u32 %v2140, 4294901760
    %2150 = vmatpush1.msra.mxu0 %v2149
    %2151 = vmatprep.subr.mxu0 0.0
    %2152 = vmatpush1.msra.mxu0 0.0
    %2153 = vmatprep.subr.mxu0 0.0
    %2154 = vmatpush1.msra.mxu0 0.0
    %2155 = vmatprep.subr.mxu0 0.0
    %2156 = vmatpush1.msra.mxu0 0.0
    %2157 = vmatprep.subr.mxu0 0.0
    %2158 = vmatpush1.msra.mxu0 0.0
    %2159 = vmatprep.subr.mxu0 0.0
    %2160 = vmatpush1.msra.mxu0 0.0
    %2161 = vmatprep.subr.mxu0 0.0
    %2162 = vmatpush1.msra.mxu0 0.0
    %2163 = vmatprep.subr.mxu0 0.0
    %2164 = vmatpush1.msra.mxu0 0.0
    %2165 = vmatprep.subr.mxu0 0.0
    %2166 = vmatpush1.msra.mxu0 0.0
    %2167 = vmatprep.subr.mxu0 0.0
    %2168 = vmatpush1.msra.mxu0 0.0
    %2169 = vmatprep.subr.mxu0 0.0
    %2170 = vmatpush1.msra.mxu0 0.0
    %2171 = vmatprep.subr.mxu0 0.0
    %2172 = vmatpush1.msra.mxu0 0.0
    %2173 = vmatprep.subr.mxu0 0.0
    %2174 = vmatpush1.msra.mxu0 0.0
    %2175 = vmatprep.subr.mxu0 0.0
    %2176 = vmatpush1.msra.mxu0 0.0
    %2177 = vmatprep.subr.mxu0 0.0
    %2178 = vmatpush1.msra.mxu0 0.0
    %2179 = vmatprep.subr.mxu0 0.0
    %2180 = vmatpush1.msra.mxu0 0.0
    %2181 = vmatprep.subr.mxu0 0.0
    %2182 = vmatpush1.msra.mxu0 0.0
    %2183 = vmatprep.subr.mxu0 0.0
    %2184 = vmatpush1.msra.mxu0 0.0
    %2185 = vmatprep.subr.mxu0 0.0
    %2186 = vmatpush1.msra.mxu0 0.0
    %2187 = vmatprep.subr.mxu0 0.0
    %2188 = vmatpush1.msra.mxu0 0.0
    %2189 = vmatprep.subr.mxu0 0.0
    %2190 = vmatpush1.msra.mxu0 0.0
    %2191 = vmatprep.subr.mxu0 0.0
    %2192 = vmatpush1.msra.mxu0 0.0
    %2193 = vmatprep.subr.mxu0 0.0
    %2194 = vmatpush1.msra.mxu0 0.0
    %2195 = vmatprep.subr.mxu0 0.0
    %2196 = vmatpush1.msra.mxu0 0.0
    %2197 = vmatprep.subr.mxu0 0.0
    %2198 = vmatpush1.msra.mxu0 0.0
    %2199 = vmatprep.subr.mxu0 0.0
    %2200 = vmatpush1.msra.mxu0 0.0
    %2201 = vmatprep.subr.mxu0 0.0
    %2202 = vmatpush1.msra.mxu0 0.0
    %2203 = vmatprep.subr.mxu0 0.0
    %2204 = vmatpush1.msra.mxu0 0.0
    %2205 = vmatprep.subr.mxu0 0.0
    %2206 = vmatpush1.msra.mxu0 0.0
    %2207 = vmatprep.subr.mxu0 0.0
    %2208 = vmatpush1.msra.mxu0 0.0
    %2209 = vmatprep.mubr.f32.mxu0 0.0
    %v2210 = vand.u32 %v2127, 4294901760
    %v2211 = vsub.f32 %v2127, %v2210
    %v2212 = vand.u32 %v2211, 4294901760
    %v2213 = vsub.f32 %v2211, %v2212
    %v2214 = vand.u32 %v2213, 4294901760
    %2215 = vmatmul.mubr.f32.gmra.mrb[0].mxu0 %v2214
    %v2216 = vpop.f32.mrb[0].mxu0
    %v2217 = vadd.f32 0.0, %v2216
    %v2218 = vpop.f32.mrb[0].mxu0
    %2219 = vmatprep.mubr.f32.mxu0 0.0
    %v2220 = vand.u32 %v2130, 4294901760
    %v2221 = vsub.f32 %v2130, %v2220
    %v2222 = vand.u32 %v2221, 4294901760
    %v2223 = vsub.f32 %v2221, %v2222
    %v2224 = vand.u32 %v2223, 4294901760
    %2225 = vmatmul.mubr.f32.gmra.mrb[0].mxu0 %v2224
    %v2226 = vpop.f32.mrb[0].mxu0
    %v2227 = vadd.f32 0.0, %v2226
    %v2228 = vpop.f32.mrb[0].mxu0
    %2229 = vmatprep.mubr.f32.mxu0 0.0
    %v2230 = vand.u32 %v2133, 4294901760
    %v2231 = vsub.f32 %v2133, %v2230
    %v2232 = vand.u32 %v2231, 4294901760
    %v2233 = vsub.f32 %v2231, %v2232
    %v2234 = vand.u32 %v2233, 4294901760
    %2235 = vmatmul.mubr.f32.gmra.mrb[0].mxu0 %v2234
    %v2236 = vpop.f32.mrb[0].mxu0
    %v2237 = vadd.f32 0.0, %v2236
    %v2238 = vpop.f32.mrb[0].mxu0
    %2239 = vmatprep.mubr.f32.mxu0 0.0
    %v2240 = vand.u32 %v2136, 4294901760
    %v2241 = vsub.f32 %v2136, %v2240
    %v2242 = vand.u32 %v2241, 4294901760
    %v2243 = vsub.f32 %v2241, %v2242
    %v2244 = vand.u32 %v2243, 4294901760
    %2245 = vmatmul.mubr.f32.gmra.mrb[0].mxu0 %v2244
    %v2246 = vpop.f32.mrb[0].mxu0
    %v2247 = vadd.f32 0.0, %v2246
    %v2248 = vpop.f32.mrb[0].mxu0
    %2249 = vdwg.mxu0
    %2250 = vmatprep.subr.mxu0 0.0
    %v2251 = vand.u32 %v2122, 4294901760
    %v2252 = vsub.f32 %v2122, %v2251
    %v2253 = vand.u32 %v2252, 4294901760
    %v2254 = vsub.f32 %v2252, %v2253
    %v2255 = vand.u32 %v2254, 4294901760
    %2256 = vmatpush1.msra.mxu0 %v2255
    %2257 = vmatprep.subr.mxu0 0.0
    %v2258 = vand.u32 %v2123, 4294901760
    %v2259 = vsub.f32 %v2123, %v2258
    %v2260 = vand.u32 %v2259, 4294901760
    %v2261 = vsub.f32 %v2259, %v2260
    %v2262 = vand.u32 %v2261, 4294901760
    %2263 = vmatpush1.msra.mxu0 %v2262
    %2264 = vmatprep.subr.mxu0 0.0
    %v2265 = vand.u32 %v2140, 4294901760
    %v2266 = vsub.f32 %v2140, %v2265
    %v2267 = vand.u32 %v2266, 4294901760
    %v2268 = vsub.f32 %v2266, %v2267
    %v2269 = vand.u32 %v2268, 4294901760
    %2270 = vmatpush1.msra.mxu0 %v2269
    %2271 = vmatprep.subr.mxu0 0.0
    %2272 = vmatpush1.msra.mxu0 0.0
    %2273 = vmatprep.subr.mxu0 0.0
    %2274 = vmatpush1.msra.mxu0 0.0
    %2275 = vmatprep.subr.mxu0 0.0
    %2276 = vmatpush1.msra.mxu0 0.0
    %2277 = vmatprep.subr.mxu0 0.0
    %2278 = vmatpush1.msra.mxu0 0.0
    %2279 = vmatprep.subr.mxu0 0.0
    %2280 = vmatpush1.msra.mxu0 0.0
    %2281 = vmatprep.subr.mxu0 0.0
    %2282 = vmatpush1.msra.mxu0 0.0
    %2283 = vmatprep.subr.mxu0 0.0
    %2284 = vmatpush1.msra.mxu0 0.0
    %2285 = vmatprep.subr.mxu0 0.0
    %2286 = vmatpush1.msra.mxu0 0.0
    %2287 = vmatprep.subr.mxu0 0.0
    %2288 = vmatpush1.msra.mxu0 0.0
    %2289 = vmatprep.subr.mxu0 0.0
    %2290 = vmatpush1.msra.mxu0 0.0
    %2291 = vmatprep.subr.mxu0 0.0
    %2292 = vmatpush1.msra.mxu0 0.0
    %2293 = vmatprep.subr.mxu0 0.0
    %2294 = vmatpush1.msra.mxu0 0.0
    %2295 = vmatprep.subr.mxu0 0.0
    %2296 = vmatpush1.msra.mxu0 0.0
    %2297 = vmatprep.subr.mxu0 0.0
    %2298 = vmatpush1.msra.mxu0 0.0
    %2299 = vmatprep.subr.mxu0 0.0
    %2300 = vmatpush1.msra.mxu0 0.0
    %2301 = vmatprep.subr.mxu0 0.0
    %2302 = vmatpush1.msra.mxu0 0.0
    %2303 = vmatprep.subr.mxu0 0.0
    %2304 = vmatpush1.msra.mxu0 0.0
    %2305 = vmatprep.subr.mxu0 0.0
    %2306 = vmatpush1.msra.mxu0 0.0
    %2307 = vmatprep.subr.mxu0 0.0
    %2308 = vmatpush1.msra.mxu0 0.0
    %2309 = vmatprep.subr.mxu0 0.0
    %2310 = vmatpush1.msra.mxu0 0.0
    %2311 = vmatprep.subr.mxu0 0.0
    %2312 = vmatpush1.msra.mxu0 0.0
    %2313 = vmatprep.subr.mxu0 0.0
    %2314 = vmatpush1.msra.mxu0 0.0
    %2315 = vmatprep.subr.mxu0 0.0
    %2316 = vmatpush1.msra.mxu0 0.0
    %2317 = vmatprep.subr.mxu0 0.0
    %2318 = vmatpush1.msra.mxu0 0.0
    %2319 = vmatprep.subr.mxu0 0.0
    %2320 = vmatpush1.msra.mxu0 0.0
    %2321 = vmatprep.subr.mxu0 0.0
    %2322 = vmatpush1.msra.mxu0 0.0
    %2323 = vmatprep.subr.mxu0 0.0
    %2324 = vmatpush1.msra.mxu0 0.0
    %2325 = vmatprep.subr.mxu0 0.0
    %2326 = vmatpush1.msra.mxu0 0.0
    %2327 = vmatprep.subr.mxu0 0.0
    %2328 = vmatpush1.msra.mxu0 0.0
    %2329 = vmatprep.mubr.f32.mxu0 0.0
    %v2330 = vand.u32 %v2127, 4294901760
    %2331 = vmatmul.mubr.f32.gmra.mrb[0].mxu0 %v2330
    %v2332 = vpop.f32.mrb[0].mxu0
    %v2333 = vadd.f32 %v2217, %v2332
    %v2334 = vpop.f32.mrb[0].mxu0
    %2335 = vmatprep.mubr.f32.mxu0 0.0
    %v2336 = vand.u32 %v2130, 4294901760
    %2337 = vmatmul.mubr.f32.gmra.mrb[0].mxu0 %v2336
    %v2338 = vpop.f32.mrb[0].mxu0
    %v2339 = vadd.f32 %v2227, %v2338
    %v2340 = vpop.f32.mrb[0].mxu0
    %2341 = vmatprep.mubr.f32.mxu0 0.0
    %v2342 = vand.u32 %v2133, 4294901760
    %2343 = vmatmul.mubr.f32.gmra.mrb[0].mxu0 %v2342
    %v2344 = vpop.f32.mrb[0].mxu0
    %v2345 = vadd.f32 %v2237, %v2344
    %v2346 = vpop.f32.mrb[0].mxu0
    %2347 = vmatprep.mubr.f32.mxu0 0.0
    %v2348 = vand.u32 %v2136, 4294901760
    %2349 = vmatmul.mubr.f32.gmra.mrb[0].mxu0 %v2348
    %v2350 = vpop.f32.mrb[0].mxu0
    %v2351 = vadd.f32 %v2247, %v2350
    %v2352 = vpop.f32.mrb[0].mxu0
    %2353 = vdwg.mxu0
    %2354 = vmatprep.subr.mxu0 0.0
    %v2355 = vand.u32 %v2122, 4294901760
    %v2356 = vsub.f32 %v2122, %v2355
    %2357 = vmatpush1.msra.mxu0 %v2356
    %2358 = vmatprep.subr.mxu0 0.0
    %v2359 = vand.u32 %v2123, 4294901760
    %v2360 = vsub.f32 %v2123, %v2359
    %2361 = vmatpush1.msra.mxu0 %v2360
    %2362 = vmatprep.subr.mxu0 0.0
    %v2363 = vand.u32 %v2140, 4294901760
    %v2364 = vsub.f32 %v2140, %v2363
    %2365 = vmatpush1.msra.mxu0 %v2364
    %2366 = vmatprep.subr.mxu0 0.0
    %2367 = vmatpush1.msra.mxu0 0.0
    %2368 = vmatprep.subr.mxu0 0.0
    %2369 = vmatpush1.msra.mxu0 0.0
    %2370 = vmatprep.subr.mxu0 0.0
    %2371 = vmatpush1.msra.mxu0 0.0
    %2372 = vmatprep.subr.mxu0 0.0
    %2373 = vmatpush1.msra.mxu0 0.0
    %2374 = vmatprep.subr.mxu0 0.0
    %2375 = vmatpush1.msra.mxu0 0.0
    %2376 = vmatprep.subr.mxu0 0.0
    %2377 = vmatpush1.msra.mxu0 0.0
    %2378 = vmatprep.subr.mxu0 0.0
    %2379 = vmatpush1.msra.mxu0 0.0
    %2380 = vmatprep.subr.mxu0 0.0
    %2381 = vmatpush1.msra.mxu0 0.0
    %2382 = vmatprep.subr.mxu0 0.0
    %2383 = vmatpush1.msra.mxu0 0.0
    %2384 = vmatprep.subr.mxu0 0.0
    %2385 = vmatpush1.msra.mxu0 0.0
    %2386 = vmatprep.subr.mxu0 0.0
    %2387 = vmatpush1.msra.mxu0 0.0
    %2388 = vmatprep.subr.mxu0 0.0
    %2389 = vmatpush1.msra.mxu0 0.0
    %2390 = vmatprep.subr.mxu0 0.0
    %2391 = vmatpush1.msra.mxu0 0.0
    %2392 = vmatprep.subr.mxu0 0.0
    %2393 = vmatpush1.msra.mxu0 0.0
    %2394 = vmatprep.subr.mxu0 0.0
    %2395 = vmatpush1.msra.mxu0 0.0
    %2396 = vmatprep.subr.mxu0 0.0
    %2397 = vmatpush1.msra.mxu0 0.0
    %2398 = vmatprep.subr.mxu0 0.0
    %2399 = vmatpush1.msra.mxu0 0.0
    %2400 = vmatprep.subr.mxu0 0.0
    %2401 = vmatpush1.msra.mxu0 0.0
    %2402 = vmatprep.subr.mxu0 0.0
    %2403 = vmatpush1.msra.mxu0 0.0
    %2404 = vmatprep.subr.mxu0 0.0
    %2405 = vmatpush1.msra.mxu0 0.0
    %2406 = vmatprep.subr.mxu0 0.0
    %2407 = vmatpush1.msra.mxu0 0.0
    %2408 = vmatprep.subr.mxu0 0.0
    %2409 = vmatpush1.msra.mxu0 0.0
    %2410 = vmatprep.subr.mxu0 0.0
    %2411 = vmatpush1.msra.mxu0 0.0
    %2412 = vmatprep.subr.mxu0 0.0
    %2413 = vmatpush1.msra.mxu0 0.0
    %2414 = vmatprep.subr.mxu0 0.0
    %2415 = vmatpush1.msra.mxu0 0.0
    %2416 = vmatprep.subr.mxu0 0.0
    %2417 = vmatpush1.msra.mxu0 0.0
    %2418 = vmatprep.subr.mxu0 0.0
    %2419 = vmatpush1.msra.mxu0 0.0
    %2420 = vmatprep.subr.mxu0 0.0
    %2421 = vmatpush1.msra.mxu0 0.0
    %2422 = vmatprep.subr.mxu0 0.0
    %2423 = vmatpush1.msra.mxu0 0.0
    %2424 = vmatprep.mubr.f32.mxu0 0.0
    %v2425 = vand.u32 %v2127, 4294901760
    %v2426 = vsub.f32 %v2127, %v2425
    %2427 = vmatmul.mubr.f32.gmra.mrb[0].mxu0 %v2426
    %v2428 = vpop.f32.mrb[0].mxu0
    %v2429 = vadd.f32 %v2333, %v2428
    %v2430 = vpop.f32.mrb[0].mxu0
    %2431 = vmatprep.mubr.f32.mxu0 0.0
    %v2432 = vand.u32 %v2130, 4294901760
    %v2433 = vsub.f32 %v2130, %v2432
    %2434 = vmatmul.mubr.f32.gmra.mrb[0].mxu0 %v2433
    %v2435 = vpop.f32.mrb[0].mxu0
    %v2436 = vadd.f32 %v2339, %v2435
    %v2437 = vpop.f32.mrb[0].mxu0
    %2438 = vmatprep.mubr.f32.mxu0 0.0
    %v2439 = vand.u32 %v2133, 4294901760
    %v2440 = vsub.f32 %v2133, %v2439
    %2441 = vmatmul.mubr.f32.gmra.mrb[0].mxu0 %v2440
    %v2442 = vpop.f32.mrb[0].mxu0
    %v2443 = vadd.f32 %v2345, %v2442
    %v2444 = vpop.f32.mrb[0].mxu0
    %2445 = vmatprep.mubr.f32.mxu0 0.0
    %v2446 = vand.u32 %v2136, 4294901760
    %v2447 = vsub.f32 %v2136, %v2446
    %2448 = vmatmul.mubr.f32.gmra.mrb[0].mxu0 %v2447
    %v2449 = vpop.f32.mrb[0].mxu0
    %v2450 = vadd.f32 %v2351, %v2449
    %v2451 = vpop.f32.mrb[0].mxu0
    %2452 = vdwg.mxu0
    %2453 = vmatprep.subr.mxu0 0.0
    %v2454 = vand.u32 %v2122, 4294901760
    %2455 = vmatpush1.msra.mxu0 %v2454
    %2456 = vmatprep.subr.mxu0 0.0
    %v2457 = vand.u32 %v2123, 4294901760
    %2458 = vmatpush1.msra.mxu0 %v2457
    %2459 = vmatprep.subr.mxu0 0.0
    %v2460 = vand.u32 %v2140, 4294901760
    %2461 = vmatpush1.msra.mxu0 %v2460
    %2462 = vmatprep.subr.mxu0 0.0
    %2463 = vmatpush1.msra.mxu0 0.0
    %2464 = vmatprep.subr.mxu0 0.0
    %2465 = vmatpush1.msra.mxu0 0.0
    %2466 = vmatprep.subr.mxu0 0.0
    %2467 = vmatpush1.msra.mxu0 0.0
    %2468 = vmatprep.subr.mxu0 0.0
    %2469 = vmatpush1.msra.mxu0 0.0
    %2470 = vmatprep.subr.mxu0 0.0
    %2471 = vmatpush1.msra.mxu0 0.0
    %2472 = vmatprep.subr.mxu0 0.0
    %2473 = vmatpush1.msra.mxu0 0.0
    %2474 = vmatprep.subr.mxu0 0.0
    %2475 = vmatpush1.msra.mxu0 0.0
    %2476 = vmatprep.subr.mxu0 0.0
    %2477 = vmatpush1.msra.mxu0 0.0
    %2478 = vmatprep.subr.mxu0 0.0
    %2479 = vmatpush1.msra.mxu0 0.0
    %2480 = vmatprep.subr.mxu0 0.0
    %2481 = vmatpush1.msra.mxu0 0.0
    %2482 = vmatprep.subr.mxu0 0.0
    %2483 = vmatpush1.msra.mxu0 0.0
    %2484 = vmatprep.subr.mxu0 0.0
    %2485 = vmatpush1.msra.mxu0 0.0
    %2486 = vmatprep.subr.mxu0 0.0
    %2487 = vmatpush1.msra.mxu0 0.0
    %2488 = vmatprep.subr.mxu0 0.0
    %2489 = vmatpush1.msra.mxu0 0.0
    %2490 = vmatprep.subr.mxu0 0.0
    %2491 = vmatpush1.msra.mxu0 0.0
    %2492 = vmatprep.subr.mxu0 0.0
    %2493 = vmatpush1.msra.mxu0 0.0
    %2494 = vmatprep.subr.mxu0 0.0
    %2495 = vmatpush1.msra.mxu0 0.0
    %2496 = vmatprep.subr.mxu0 0.0
    %2497 = vmatpush1.msra.mxu0 0.0
    %2498 = vmatprep.subr.mxu0 0.0
    %2499 = vmatpush1.msra.mxu0 0.0
    %2500 = vmatprep.subr.mxu0 0.0
    %2501 = vmatpush1.msra.mxu0 0.0
    %2502 = vmatprep.subr.mxu0 0.0
    %2503 = vmatpush1.msra.mxu0 0.0
    %2504 = vmatprep.subr.mxu0 0.0
    %2505 = vmatpush1.msra.mxu0 0.0
    %2506 = vmatprep.subr.mxu0 0.0
    %2507 = vmatpush1.msra.mxu0 0.0
    %2508 = vmatprep.subr.mxu0 0.0
    %2509 = vmatpush1.msra.mxu0 0.0
    %2510 = vmatprep.subr.mxu0 0.0
    %2511 = vmatpush1.msra.mxu0 0.0
    %2512 = vmatprep.subr.mxu0 0.0
    %2513 = vmatpush1.msra.mxu0 0.0
    %2514 = vmatprep.subr.mxu0 0.0
    %2515 = vmatpush1.msra.mxu0 0.0
    %2516 = vmatprep.subr.mxu0 0.0
    %2517 = vmatpush1.msra.mxu0 0.0
    %2518 = vmatprep.subr.mxu0 0.0
    %2519 = vmatpush1.msra.mxu0 0.0
    %2520 = vmatprep.mubr.f32.mxu0 0.0
    %v2521 = vand.u32 %v2127, 4294901760
    %v2522 = vsub.f32 %v2127, %v2521
    %v2523 = vand.u32 %v2522, 4294901760
    %2524 = vmatmul.mubr.f32.gmra.mrb[0].mxu0 %v2523
    %v2525 = vpop.f32.mrb[0].mxu0
    %v2526 = vadd.f32 %v2429, %v2525
    %v2527 = vpop.f32.mrb[0].mxu0
    %2528 = vmatprep.mubr.f32.mxu0 0.0
    %v2529 = vand.u32 %v2130, 4294901760
    %v2530 = vsub.f32 %v2130, %v2529
    %v2531 = vand.u32 %v2530, 4294901760
    %2532 = vmatmul.mubr.f32.gmra.mrb[0].mxu0 %v2531
    %v2533 = vpop.f32.mrb[0].mxu0
    %v2534 = vadd.f32 %v2436, %v2533
    %v2535 = vpop.f32.mrb[0].mxu0
    %2536 = vmatprep.mubr.f32.mxu0 0.0
    %v2537 = vand.u32 %v2133, 4294901760
    %v2538 = vsub.f32 %v2133, %v2537
    %v2539 = vand.u32 %v2538, 4294901760
    %2540 = vmatmul.mubr.f32.gmra.mrb[0].mxu0 %v2539
    %v2541 = vpop.f32.mrb[0].mxu0
    %v2542 = vadd.f32 %v2443, %v2541
    %v2543 = vpop.f32.mrb[0].mxu0
    %2544 = vmatprep.mubr.f32.mxu0 0.0
    %v2545 = vand.u32 %v2136, 4294901760
    %v2546 = vsub.f32 %v2136, %v2545
    %v2547 = vand.u32 %v2546, 4294901760
    %2548 = vmatmul.mubr.f32.gmra.mrb[0].mxu0 %v2547
    %v2549 = vpop.f32.mrb[0].mxu0
    %v2550 = vadd.f32 %v2450, %v2549
    %v2551 = vpop.f32.mrb[0].mxu0
    %2552 = vdwg.mxu0
    %2553 = vmatprep.subr.mxu0 0.0
    %v2554 = vand.u32 %v2122, 4294901760
    %v2555 = vsub.f32 %v2122, %v2554
    %v2556 = vand.u32 %v2555, 4294901760
    %2557 = vmatpush1.msra.mxu0 %v2556
    %2558 = vmatprep.subr.mxu0 0.0
    %v2559 = vand.u32 %v2123, 4294901760
    %v2560 = vsub.f32 %v2123, %v2559
    %v2561 = vand.u32 %v2560, 4294901760
    %2562 = vmatpush1.msra.mxu0 %v2561
    %2563 = vmatprep.subr.mxu0 0.0
    %v2564 = vand.u32 %v2140, 4294901760
    %v2565 = vsub.f32 %v2140, %v2564
    %v2566 = vand.u32 %v2565, 4294901760
    %2567 = vmatpush1.msra.mxu0 %v2566
    %2568 = vmatprep.subr.mxu0 0.0
    %2569 = vmatpush1.msra.mxu0 0.0
    %2570 = vmatprep.subr.mxu0 0.0
    %2571 = vmatpush1.msra.mxu0 0.0
    %2572 = vmatprep.subr.mxu0 0.0
    %2573 = vmatpush1.msra.mxu0 0.0
    %2574 = vmatprep.subr.mxu0 0.0
    %2575 = vmatpush1.msra.mxu0 0.0
    %2576 = vmatprep.subr.mxu0 0.0
    %2577 = vmatpush1.msra.mxu0 0.0
    %2578 = vmatprep.subr.mxu0 0.0
    %2579 = vmatpush1.msra.mxu0 0.0
    %2580 = vmatprep.subr.mxu0 0.0
    %2581 = vmatpush1.msra.mxu0 0.0
    %2582 = vmatprep.subr.mxu0 0.0
    %2583 = vmatpush1.msra.mxu0 0.0
    %2584 = vmatprep.subr.mxu0 0.0
    %2585 = vmatpush1.msra.mxu0 0.0
    %2586 = vmatprep.subr.mxu0 0.0
    %2587 = vmatpush1.msra.mxu0 0.0
    %2588 = vmatprep.subr.mxu0 0.0
    %2589 = vmatpush1.msra.mxu0 0.0
    %2590 = vmatprep.subr.mxu0 0.0
    %2591 = vmatpush1.msra.mxu0 0.0
    %2592 = vmatprep.subr.mxu0 0.0
    %2593 = vmatpush1.msra.mxu0 0.0
    %2594 = vmatprep.subr.mxu0 0.0
    %2595 = vmatpush1.msra.mxu0 0.0
    %2596 = vmatprep.subr.mxu0 0.0
    %2597 = vmatpush1.msra.mxu0 0.0
    %2598 = vmatprep.subr.mxu0 0.0
    %2599 = vmatpush1.msra.mxu0 0.0
    %2600 = vmatprep.subr.mxu0 0.0
    %2601 = vmatpush1.msra.mxu0 0.0
    %2602 = vmatprep.subr.mxu0 0.0
    %2603 = vmatpush1.msra.mxu0 0.0
    %2604 = vmatprep.subr.mxu0 0.0
    %2605 = vmatpush1.msra.mxu0 0.0
    %2606 = vmatprep.subr.mxu0 0.0
    %2607 = vmatpush1.msra.mxu0 0.0
    %2608 = vmatprep.subr.mxu0 0.0
    %2609 = vmatpush1.msra.mxu0 0.0
    %2610 = vmatprep.subr.mxu0 0.0
    %2611 = vmatpush1.msra.mxu0 0.0
    %2612 = vmatprep.subr.mxu0 0.0
    %2613 = vmatpush1.msra.mxu0 0.0
    %2614 = vmatprep.subr.mxu0 0.0
    %2615 = vmatpush1.msra.mxu0 0.0
    %2616 = vmatprep.subr.mxu0 0.0
    %2617 = vmatpush1.msra.mxu0 0.0
    %2618 = vmatprep.subr.mxu0 0.0
    %2619 = vmatpush1.msra.mxu0 0.0
    %2620 = vmatprep.subr.mxu0 0.0
    %2621 = vmatpush1.msra.mxu0 0.0
    %2622 = vmatprep.subr.mxu0 0.0
    %2623 = vmatpush1.msra.mxu0 0.0
    %2624 = vmatprep.subr.mxu0 0.0
    %2625 = vmatpush1.msra.mxu0 0.0
    %2626 = vmatprep.mubr.f32.mxu0 0.0
    %v2627 = vand.u32 %v2127, 4294901760
    %2628 = vmatmul.mubr.f32.gmra.mrb[0].mxu0 %v2627
    %v2629 = vpop.f32.mrb[0].mxu0
    %v2630 = vadd.f32 %v2526, %v2629
    %v2631 = vpop.f32.mrb[0].mxu0
    %2632 = vmatprep.mubr.f32.mxu0 0.0
    %v2633 = vand.u32 %v2130, 4294901760
    %2634 = vmatmul.mubr.f32.gmra.mrb[0].mxu0 %v2633
    %v2635 = vpop.f32.mrb[0].mxu0
    %v2636 = vadd.f32 %v2534, %v2635
    %v2637 = vpop.f32.mrb[0].mxu0
    %2638 = vmatprep.mubr.f32.mxu0 0.0
    %v2639 = vand.u32 %v2133, 4294901760
    %2640 = vmatmul.mubr.f32.gmra.mrb[0].mxu0 %v2639
    %v2641 = vpop.f32.mrb[0].mxu0
    %v2642 = vadd.f32 %v2542, %v2641
    %v2643 = vpop.f32.mrb[0].mxu0
    %2644 = vmatprep.mubr.f32.mxu0 0.0
    %v2645 = vand.u32 %v2136, 4294901760
    %2646 = vmatmul.mubr.f32.gmra.mrb[0].mxu0 %v2645
    %v2647 = vpop.f32.mrb[0].mxu0
    %v2648 = vadd.f32 %v2550, %v2647
    %v2649 = vpop.f32.mrb[0].mxu0
    %2650 = vdwg.mxu0
    %2651 = vmatprep.subr.mxu0 0.0
    %v2652 = vand.u32 %v2122, 4294901760
    %2653 = vmatpush1.msra.mxu0 %v2652
    %2654 = vmatprep.subr.mxu0 0.0
    %v2655 = vand.u32 %v2123, 4294901760
    %2656 = vmatpush1.msra.mxu0 %v2655
    %2657 = vmatprep.subr.mxu0 0.0
    %v2658 = vand.u32 %v2140, 4294901760
    %2659 = vmatpush1.msra.mxu0 %v2658
    %2660 = vmatprep.subr.mxu0 0.0
    %2661 = vmatpush1.msra.mxu0 0.0
    %2662 = vmatprep.subr.mxu0 0.0
    %2663 = vmatpush1.msra.mxu0 0.0
    %2664 = vmatprep.subr.mxu0 0.0
    %2665 = vmatpush1.msra.mxu0 0.0
    %2666 = vmatprep.subr.mxu0 0.0
    %2667 = vmatpush1.msra.mxu0 0.0
    %2668 = vmatprep.subr.mxu0 0.0
    %2669 = vmatpush1.msra.mxu0 0.0
    %2670 = vmatprep.subr.mxu0 0.0
    %2671 = vmatpush1.msra.mxu0 0.0
    %2672 = vmatprep.subr.mxu0 0.0
    %2673 = vmatpush1.msra.mxu0 0.0
    %2674 = vmatprep.subr.mxu0 0.0
    %2675 = vmatpush1.msra.mxu0 0.0
    %2676 = vmatprep.subr.mxu0 0.0
    %2677 = vmatpush1.msra.mxu0 0.0
    %2678 = vmatprep.subr.mxu0 0.0
    %2679 = vmatpush1.msra.mxu0 0.0
    %2680 = vmatprep.subr.mxu0 0.0
    %2681 = vmatpush1.msra.mxu0 0.0
    %2682 = vmatprep.subr.mxu0 0.0
    %2683 = vmatpush1.msra.mxu0 0.0
    %2684 = vmatprep.subr.mxu0 0.0
    %2685 = vmatpush1.msra.mxu0 0.0
    %2686 = vmatprep.subr.mxu0 0.0
    %2687 = vmatpush1.msra.mxu0 0.0
    %2688 = vmatprep.subr.mxu0 0.0
    %2689 = vmatpush1.msra.mxu0 0.0
    %2690 = vmatprep.subr.mxu0 0.0
    %2691 = vmatpush1.msra.mxu0 0.0
    %2692 = vmatprep.subr.mxu0 0.0
    %2693 = vmatpush1.msra.mxu0 0.0
    %2694 = vmatprep.subr.mxu0 0.0
    %2695 = vmatpush1.msra.mxu0 0.0
    %2696 = vmatprep.subr.mxu0 0.0
    %2697 = vmatpush1.msra.mxu0 0.0
    %2698 = vmatprep.subr.mxu0 0.0
    %2699 = vmatpush1.msra.mxu0 0.0
    %2700 = vmatprep.subr.mxu0 0.0
    %2701 = vmatpush1.msra.mxu0 0.0
    %2702 = vmatprep.subr.mxu0 0.0
    %2703 = vmatpush1.msra.mxu0 0.0
    %2704 = vmatprep.subr.mxu0 0.0
    %2705 = vmatpush1.msra.mxu0 0.0
    %2706 = vmatprep.subr.mxu0 0.0
    %2707 = vmatpush1.msra.mxu0 0.0
    %2708 = vmatprep.subr.mxu0 0.0
    %2709 = vmatpush1.msra.mxu0 0.0
    %2710 = vmatprep.subr.mxu0 0.0
    %2711 = vmatpush1.msra.mxu0 0.0
    %2712 = vmatprep.subr.mxu0 0.0
    %2713 = vmatpush1.msra.mxu0 0.0
    %2714 = vmatprep.subr.mxu0 0.0
    %2715 = vmatpush1.msra.mxu0 0.0
    %2716 = vmatprep.subr.mxu0 0.0
    %2717 = vmatpush1.msra.mxu0 0.0
    %2718 = vmatprep.mubr.f32.mxu0 0.0
    %v2719 = vand.u32 %v2127, 4294901760
    %2720 = vmatmul.mubr.f32.gmra.mrb[0].mxu0 %v2719
    %v2721 = vpop.f32.mrb[0].mxu0
    %v2722 = vadd.f32 %v2630, %v2721
    %v2723 = vpop.f32.mrb[0].mxu0
    %2724 = vmatprep.mubr.f32.mxu0 0.0
    %v2725 = vand.u32 %v2130, 4294901760
    %2726 = vmatmul.mubr.f32.gmra.mrb[0].mxu0 %v2725
    %v2727 = vpop.f32.mrb[0].mxu0
    %v2728 = vadd.f32 %v2636, %v2727
    %v2729 = vpop.f32.mrb[0].mxu0
    %2730 = vmatprep.mubr.f32.mxu0 0.0
    %v2731 = vand.u32 %v2133, 4294901760
    %2732 = vmatmul.mubr.f32.gmra.mrb[0].mxu0 %v2731
    %v2733 = vpop.f32.mrb[0].mxu0
    %v2734 = vadd.f32 %v2642, %v2733
    %v2735 = vpop.f32.mrb[0].mxu0
    %2736 = vmatprep.mubr.f32.mxu0 0.0
    %v2737 = vand.u32 %v2136, 4294901760
    %2738 = vmatmul.mubr.f32.gmra.mrb[0].mxu0 %v2737
    %v2739 = vpop.f32.mrb[0].mxu0
    %v2740 = vadd.f32 %v2648, %v2739
    %v2741 = vpop.f32.mrb[0].mxu0
    %2742 = vdwg.mxu0
    %v2743 = vld [vmem:[%s8] sm:$0xff]
    %v2744 = vld [vmem:[%s8 + $0x8] sm:$0xff]
    %v2745 = vld [vmem:[%s8 + $0x10] sm:$0x7]
    %v2747 = vsel %vm2138, %v2745, 0
    %2749 = vmatprep.subr.mxu0 0.0
    %v2750 = vand.u32 %v2743, 4294901760
    %2751 = vmatpush1.msra.mxu0 %v2750
    %2752 = vmatprep.subr.mxu0 0.0
    %v2753 = vand.u32 %v2744, 4294901760
    %2754 = vmatpush1.msra.mxu0 %v2753
    %2755 = vmatprep.subr.mxu0 0.0
    %v2756 = vand.u32 %v2747, 4294901760
    %2757 = vmatpush1.msra.mxu0 %v2756
    %2758 = vmatprep.subr.mxu0 0.0
    %2759 = vmatpush1.msra.mxu0 0.0
    %2760 = vmatprep.subr.mxu0 0.0
    %2761 = vmatpush1.msra.mxu0 0.0
    %2762 = vmatprep.subr.mxu0 0.0
    %2763 = vmatpush1.msra.mxu0 0.0
    %2764 = vmatprep.subr.mxu0 0.0
    %2765 = vmatpush1.msra.mxu0 0.0
    %2766 = vmatprep.subr.mxu0 0.0
    %2767 = vmatpush1.msra.mxu0 0.0
    %2768 = vmatprep.subr.mxu0 0.0
    %2769 = vmatpush1.msra.mxu0 0.0
    %2770 = vmatprep.subr.mxu0 0.0
    %2771 = vmatpush1.msra.mxu0 0.0
    %2772 = vmatprep.subr.mxu0 0.0
    %2773 = vmatpush1.msra.mxu0 0.0
    %2774 = vmatprep.subr.mxu0 0.0
    %2775 = vmatpush1.msra.mxu0 0.0
    %2776 = vmatprep.subr.mxu0 0.0
    %2777 = vmatpush1.msra.mxu0 0.0
    %2778 = vmatprep.subr.mxu0 0.0
    %2779 = vmatpush1.msra.mxu0 0.0
    %2780 = vmatprep.subr.mxu0 0.0
    %2781 = vmatpush1.msra.mxu0 0.0
    %2782 = vmatprep.subr.mxu0 0.0
    %2783 = vmatpush1.msra.mxu0 0.0
    %2784 = vmatprep.subr.mxu0 0.0
    %2785 = vmatpush1.msra.mxu0 0.0
    %2786 = vmatprep.subr.mxu0 0.0
    %2787 = vmatpush1.msra.mxu0 0.0
    %2788 = vmatprep.subr.mxu0 0.0
    %2789 = vmatpush1.msra.mxu0 0.0
    %2790 = vmatprep.subr.mxu0 0.0
    %2791 = vmatpush1.msra.mxu0 0.0
    %2792 = vmatprep.subr.mxu0 0.0
    %2793 = vmatpush1.msra.mxu0 0.0
    %2794 = vmatprep.subr.mxu0 0.0
    %2795 = vmatpush1.msra.mxu0 0.0
    %2796 = vmatprep.subr.mxu0 0.0
    %2797 = vmatpush1.msra.mxu0 0.0
    %2798 = vmatprep.subr.mxu0 0.0
    %2799 = vmatpush1.msra.mxu0 0.0
    %2800 = vmatprep.subr.mxu0 0.0
    %2801 = vmatpush1.msra.mxu0 0.0
    %2802 = vmatprep.subr.mxu0 0.0
    %2803 = vmatpush1.msra.mxu0 0.0
    %2804 = vmatprep.subr.mxu0 0.0
    %2805 = vmatpush1.msra.mxu0 0.0
    %2806 = vmatprep.subr.mxu0 0.0
    %2807 = vmatpush1.msra.mxu0 0.0
    %2808 = vmatprep.subr.mxu0 0.0
    %2809 = vmatpush1.msra.mxu0 0.0
    %2810 = vmatprep.subr.mxu0 0.0
    %2811 = vmatpush1.msra.mxu0 0.0
    %2812 = vmatprep.subr.mxu0 0.0
    %2813 = vmatpush1.msra.mxu0 0.0
    %2814 = vmatprep.subr.mxu0 0.0
    %2815 = vmatpush1.msra.mxu0 0.0
    %2816 = vmatprep.mubr.f32.mxu0 0.0
    %v2817 = vand.u32 %v2127, 4294901760
    %v2818 = vsub.f32 %v2127, %v2817
    %v2819 = vand.u32 %v2818, 4294901760
    %v2820 = vsub.f32 %v2818, %v2819
    %v2821 = vand.u32 %v2820, 4294901760
    %2822 = vmatmul.mubr.f32.gmra.mrb[0].mxu0 %v2821
    %v2823 = vpop.f32.mrb[0].mxu0
    %v2824 = vadd.f32 0.0, %v2823
    %v2825 = vpop.f32.mrb[0].mxu0
    %2826 = vmatprep.mubr.f32.mxu0 0.0
    %v2827 = vand.u32 %v2130, 4294901760
    %v2828 = vsub.f32 %v2130, %v2827
    %v2829 = vand.u32 %v2828, 4294901760
    %v2830 = vsub.f32 %v2828, %v2829
    %v2831 = vand.u32 %v2830, 4294901760
    %2832 = vmatmul.mubr.f32.gmra.mrb[0].mxu0 %v2831
    %v2833 = vpop.f32.mrb[0].mxu0
    %v2834 = vadd.f32 0.0, %v2833
    %v2835 = vpop.f32.mrb[0].mxu0
    %2836 = vmatprep.mubr.f32.mxu0 0.0
    %v2837 = vand.u32 %v2133, 4294901760
    %v2838 = vsub.f32 %v2133, %v2837
    %v2839 = vand.u32 %v2838, 4294901760
    %v2840 = vsub.f32 %v2838, %v2839
    %v2841 = vand.u32 %v2840, 4294901760
    %2842 = vmatmul.mubr.f32.gmra.mrb[0].mxu0 %v2841
    %v2843 = vpop.f32.mrb[0].mxu0
    %v2844 = vadd.f32 0.0, %v2843
    %v2845 = vpop.f32.mrb[0].mxu0
    %2846 = vmatprep.mubr.f32.mxu0 0.0
    %v2847 = vand.u32 %v2136, 4294901760
    %v2848 = vsub.f32 %v2136, %v2847
    %v2849 = vand.u32 %v2848, 4294901760
    %v2850 = vsub.f32 %v2848, %v2849
    %v2851 = vand.u32 %v2850, 4294901760
    %2852 = vmatmul.mubr.f32.gmra.mrb[0].mxu0 %v2851
    %v2853 = vpop.f32.mrb[0].mxu0
    %v2854 = vadd.f32 0.0, %v2853
    %v2855 = vpop.f32.mrb[0].mxu0
    %2856 = vdwg.mxu0
    %2857 = vmatprep.subr.mxu0 0.0
    %v2858 = vand.u32 %v2743, 4294901760
    %v2859 = vsub.f32 %v2743, %v2858
    %v2860 = vand.u32 %v2859, 4294901760
    %v2861 = vsub.f32 %v2859, %v2860
    %v2862 = vand.u32 %v2861, 4294901760
    %2863 = vmatpush1.msra.mxu0 %v2862
    %2864 = vmatprep.subr.mxu0 0.0
    %v2865 = vand.u32 %v2744, 4294901760
    %v2866 = vsub.f32 %v2744, %v2865
    %v2867 = vand.u32 %v2866, 4294901760
    %v2868 = vsub.f32 %v2866, %v2867
    %v2869 = vand.u32 %v2868, 4294901760
    %2870 = vmatpush1.msra.mxu0 %v2869
    %2871 = vmatprep.subr.mxu0 0.0
    %v2872 = vand.u32 %v2747, 4294901760
    %v2873 = vsub.f32 %v2747, %v2872
    %v2874 = vand.u32 %v2873, 4294901760
    %v2875 = vsub.f32 %v2873, %v2874
    %v2876 = vand.u32 %v2875, 4294901760
    %2877 = vmatpush1.msra.mxu0 %v2876
    %2878 = vmatprep.subr.mxu0 0.0
    %2879 = vmatpush1.msra.mxu0 0.0
    %2880 = vmatprep.subr.mxu0 0.0
    %2881 = vmatpush1.msra.mxu0 0.0
    %2882 = vmatprep.subr.mxu0 0.0
    %2883 = vmatpush1.msra.mxu0 0.0
    %2884 = vmatprep.subr.mxu0 0.0
    %2885 = vmatpush1.msra.mxu0 0.0
    %2886 = vmatprep.subr.mxu0 0.0
    %2887 = vmatpush1.msra.mxu0 0.0
    %2888 = vmatprep.subr.mxu0 0.0
    %2889 = vmatpush1.msra.mxu0 0.0
    %2890 = vmatprep.subr.mxu0 0.0
    %2891 = vmatpush1.msra.mxu0 0.0
    %2892 = vmatprep.subr.mxu0 0.0
    %2893 = vmatpush1.msra.mxu0 0.0
    %2894 = vmatprep.subr.mxu0 0.0
    %2895 = vmatpush1.msra.mxu0 0.0
    %2896 = vmatprep.subr.mxu0 0.0
    %2897 = vmatpush1.msra.mxu0 0.0
    %2898 = vmatprep.subr.mxu0 0.0
    %2899 = vmatpush1.msra.mxu0 0.0
    %2900 = vmatprep.subr.mxu0 0.0
    %2901 = vmatpush1.msra.mxu0 0.0
    %2902 = vmatprep.subr.mxu0 0.0
    %2903 = vmatpush1.msra.mxu0 0.0
    %2904 = vmatprep.subr.mxu0 0.0
    %2905 = vmatpush1.msra.mxu0 0.0
    %2906 = vmatprep.subr.mxu0 0.0
    %2907 = vmatpush1.msra.mxu0 0.0
    %2908 = vmatprep.subr.mxu0 0.0
    %2909 = vmatpush1.msra.mxu0 0.0
    %2910 = vmatprep.subr.mxu0 0.0
    %2911 = vmatpush1.msra.mxu0 0.0
    %2912 = vmatprep.subr.mxu0 0.0
    %2913 = vmatpush1.msra.mxu0 0.0
    %2914 = vmatprep.subr.mxu0 0.0
    %2915 = vmatpush1.msra.mxu0 0.0
    %2916 = vmatprep.subr.mxu0 0.0
    %2917 = vmatpush1.msra.mxu0 0.0
    %2918 = vmatprep.subr.mxu0 0.0
    %2919 = vmatpush1.msra.mxu0 0.0
    %2920 = vmatprep.subr.mxu0 0.0
    %2921 = vmatpush1.msra.mxu0 0.0
    %2922 = vmatprep.subr.mxu0 0.0
    %2923 = vmatpush1.msra.mxu0 0.0
    %2924 = vmatprep.subr.mxu0 0.0
    %2925 = vmatpush1.msra.mxu0 0.0
    %2926 = vmatprep.subr.mxu0 0.0
    %2927 = vmatpush1.msra.mxu0 0.0
    %2928 = vmatprep.subr.mxu0 0.0
    %2929 = vmatpush1.msra.mxu0 0.0
    %2930 = vmatprep.subr.mxu0 0.0
    %2931 = vmatpush1.msra.mxu0 0.0
    %2932 = vmatprep.subr.mxu0 0.0
    %2933 = vmatpush1.msra.mxu0 0.0
    %2934 = vmatprep.subr.mxu0 0.0
    %2935 = vmatpush1.msra.mxu0 0.0
    %2936 = vmatprep.mubr.f32.mxu0 0.0
    %v2937 = vand.u32 %v2127, 4294901760
    %2938 = vmatmul.mubr.f32.gmra.mrb[0].mxu0 %v2937
    %v2939 = vpop.f32.mrb[0].mxu0
    %v2940 = vadd.f32 %v2824, %v2939
    %v2941 = vpop.f32.mrb[0].mxu0
    %2942 = vmatprep.mubr.f32.mxu0 0.0
    %v2943 = vand.u32 %v2130, 4294901760
    %2944 = vmatmul.mubr.f32.gmra.mrb[0].mxu0 %v2943
    %v2945 = vpop.f32.mrb[0].mxu0
    %v2946 = vadd.f32 %v2834, %v2945
    %v2947 = vpop.f32.mrb[0].mxu0
    %2948 = vmatprep.mubr.f32.mxu0 0.0
    %v2949 = vand.u32 %v2133, 4294901760
    %2950 = vmatmul.mubr.f32.gmra.mrb[0].mxu0 %v2949
    %v2951 = vpop.f32.mrb[0].mxu0
    %v2952 = vadd.f32 %v2844, %v2951
    %v2953 = vpop.f32.mrb[0].mxu0
    %2954 = vmatprep.mubr.f32.mxu0 0.0
    %v2955 = vand.u32 %v2136, 4294901760
    %2956 = vmatmul.mubr.f32.gmra.mrb[0].mxu0 %v2955
    %v2957 = vpop.f32.mrb[0].mxu0
    %v2958 = vadd.f32 %v2854, %v2957
    %v2959 = vpop.f32.mrb[0].mxu0
    %2960 = vdwg.mxu0
    %2961 = vmatprep.subr.mxu0 0.0
    %v2962 = vand.u32 %v2743, 4294901760
    %v2963 = vsub.f32 %v2743, %v2962
    %2964 = vmatpush1.msra.mxu0 %v2963
    %2965 = vmatprep.subr.mxu0 0.0
    %v2966 = vand.u32 %v2744, 4294901760
    %v2967 = vsub.f32 %v2744, %v2966
    %2968 = vmatpush1.msra.mxu0 %v2967
    %2969 = vmatprep.subr.mxu0 0.0
    %v2970 = vand.u32 %v2747, 4294901760
    %v2971 = vsub.f32 %v2747, %v2970
    %2972 = vmatpush1.msra.mxu0 %v2971
    %2973 = vmatprep.subr.mxu0 0.0
    %2974 = vmatpush1.msra.mxu0 0.0
    %2975 = vmatprep.subr.mxu0 0.0
    %2976 = vmatpush1.msra.mxu0 0.0
    %2977 = vmatprep.subr.mxu0 0.0
    %2978 = vmatpush1.msra.mxu0 0.0
    %2979 = vmatprep.subr.mxu0 0.0
    %2980 = vmatpush1.msra.mxu0 0.0
    %2981 = vmatprep.subr.mxu0 0.0
    %2982 = vmatpush1.msra.mxu0 0.0
    %2983 = vmatprep.subr.mxu0 0.0
    %2984 = vmatpush1.msra.mxu0 0.0
    %2985 = vmatprep.subr.mxu0 0.0
    %2986 = vmatpush1.msra.mxu0 0.0
    %2987 = vmatprep.subr.mxu0 0.0
    %2988 = vmatpush1.msra.mxu0 0.0
    %2989 = vmatprep.subr.mxu0 0.0
    %2990 = vmatpush1.msra.mxu0 0.0
    %2991 = vmatprep.subr.mxu0 0.0
    %2992 = vmatpush1.msra.mxu0 0.0
    %2993 = vmatprep.subr.mxu0 0.0
    %2994 = vmatpush1.msra.mxu0 0.0
    %2995 = vmatprep.subr.mxu0 0.0
    %2996 = vmatpush1.msra.mxu0 0.0
    %2997 = vmatprep.subr.mxu0 0.0
    %2998 = vmatpush1.msra.mxu0 0.0
    %2999 = vmatprep.subr.mxu0 0.0
    %3000 = vmatpush1.msra.mxu0 0.0
    %3001 = vmatprep.subr.mxu0 0.0
    %3002 = vmatpush1.msra.mxu0 0.0
    %3003 = vmatprep.subr.mxu0 0.0
    %3004 = vmatpush1.msra.mxu0 0.0
    %3005 = vmatprep.subr.mxu0 0.0
    %3006 = vmatpush1.msra.mxu0 0.0
    %3007 = vmatprep.subr.mxu0 0.0
    %3008 = vmatpush1.msra.mxu0 0.0
    %3009 = vmatprep.subr.mxu0 0.0
    %3010 = vmatpush1.msra.mxu0 0.0
    %3011 = vmatprep.subr.mxu0 0.0
    %3012 = vmatpush1.msra.mxu0 0.0
    %3013 = vmatprep.subr.mxu0 0.0
    %3014 = vmatpush1.msra.mxu0 0.0
    %3015 = vmatprep.subr.mxu0 0.0
    %3016 = vmatpush1.msra.mxu0 0.0
    %3017 = vmatprep.subr.mxu0 0.0
    %3018 = vmatpush1.msra.mxu0 0.0
    %3019 = vmatprep.subr.mxu0 0.0
    %3020 = vmatpush1.msra.mxu0 0.0
    %3021 = vmatprep.subr.mxu0 0.0
    %3022 = vmatpush1.msra.mxu0 0.0
    %3023 = vmatprep.subr.mxu0 0.0
    %3024 = vmatpush1.msra.mxu0 0.0
    %3025 = vmatprep.subr.mxu0 0.0
    %3026 = vmatpush1.msra.mxu0 0.0
    %3027 = vmatprep.subr.mxu0 0.0
    %3028 = vmatpush1.msra.mxu0 0.0
    %3029 = vmatprep.subr.mxu0 0.0
    %3030 = vmatpush1.msra.mxu0 0.0
    %3031 = vmatprep.mubr.f32.mxu0 0.0
    %v3032 = vand.u32 %v2127, 4294901760
    %v3033 = vsub.f32 %v2127, %v3032
    %3034 = vmatmul.mubr.f32.gmra.mrb[0].mxu0 %v3033
    %v3035 = vpop.f32.mrb[0].mxu0
    %v3036 = vadd.f32 %v2940, %v3035
    %v3037 = vpop.f32.mrb[0].mxu0
    %3038 = vmatprep.mubr.f32.mxu0 0.0
    %v3039 = vand.u32 %v2130, 4294901760
    %v3040 = vsub.f32 %v2130, %v3039
    %3041 = vmatmul.mubr.f32.gmra.mrb[0].mxu0 %v3040
    %v3042 = vpop.f32.mrb[0].mxu0
    %v3043 = vadd.f32 %v2946, %v3042
    %v3044 = vpop.f32.mrb[0].mxu0
    %3045 = vmatprep.mubr.f32.mxu0 0.0
    %v3046 = vand.u32 %v2133, 4294901760
    %v3047 = vsub.f32 %v2133, %v3046
    %3048 = vmatmul.mubr.f32.gmra.mrb[0].mxu0 %v3047
    %v3049 = vpop.f32.mrb[0].mxu0
    %v3050 = vadd.f32 %v2952, %v3049
    %v3051 = vpop.f32.mrb[0].mxu0
    %3052 = vmatprep.mubr.f32.mxu0 0.0
    %v3053 = vand.u32 %v2136, 4294901760
    %v3054 = vsub.f32 %v2136, %v3053
    %3055 = vmatmul.mubr.f32.gmra.mrb[0].mxu0 %v3054
    %v3056 = vpop.f32.mrb[0].mxu0
    %v3057 = vadd.f32 %v2958, %v3056
    %v3058 = vpop.f32.mrb[0].mxu0
    %3059 = vdwg.mxu0
    %3060 = vmatprep.subr.mxu0 0.0
    %v3061 = vand.u32 %v2743, 4294901760
    %3062 = vmatpush1.msra.mxu0 %v3061
    %3063 = vmatprep.subr.mxu0 0.0
    %v3064 = vand.u32 %v2744, 4294901760
    %3065 = vmatpush1.msra.mxu0 %v3064
    %3066 = vmatprep.subr.mxu0 0.0
    %v3067 = vand.u32 %v2747, 4294901760
    %3068 = vmatpush1.msra.mxu0 %v3067
    %3069 = vmatprep.subr.mxu0 0.0
    %3070 = vmatpush1.msra.mxu0 0.0
    %3071 = vmatprep.subr.mxu0 0.0
    %3072 = vmatpush1.msra.mxu0 0.0
    %3073 = vmatprep.subr.mxu0 0.0
    %3074 = vmatpush1.msra.mxu0 0.0
    %3075 = vmatprep.subr.mxu0 0.0
    %3076 = vmatpush1.msra.mxu0 0.0
    %3077 = vmatprep.subr.mxu0 0.0
    %3078 = vmatpush1.msra.mxu0 0.0
    %3079 = vmatprep.subr.mxu0 0.0
    %3080 = vmatpush1.msra.mxu0 0.0
    %3081 = vmatprep.subr.mxu0 0.0
    %3082 = vmatpush1.msra.mxu0 0.0
    %3083 = vmatprep.subr.mxu0 0.0
    %3084 = vmatpush1.msra.mxu0 0.0
    %3085 = vmatprep.subr.mxu0 0.0
    %3086 = vmatpush1.msra.mxu0 0.0
    %3087 = vmatprep.subr.mxu0 0.0
    %3088 = vmatpush1.msra.mxu0 0.0
    %3089 = vmatprep.subr.mxu0 0.0
    %3090 = vmatpush1.msra.mxu0 0.0
    %3091 = vmatprep.subr.mxu0 0.0
    %3092 = vmatpush1.msra.mxu0 0.0
    %3093 = vmatprep.subr.mxu0 0.0
    %3094 = vmatpush1.msra.mxu0 0.0
    %3095 = vmatprep.subr.mxu0 0.0
    %3096 = vmatpush1.msra.mxu0 0.0
    %3097 = vmatprep.subr.mxu0 0.0
    %3098 = vmatpush1.msra.mxu0 0.0
    %3099 = vmatprep.subr.mxu0 0.0
    %3100 = vmatpush1.msra.mxu0 0.0
    %3101 = vmatprep.subr.mxu0 0.0
    %3102 = vmatpush1.msra.mxu0 0.0
    %3103 = vmatprep.subr.mxu0 0.0
    %3104 = vmatpush1.msra.mxu0 0.0
    %3105 = vmatprep.subr.mxu0 0.0
    %3106 = vmatpush1.msra.mxu0 0.0
    %3107 = vmatprep.subr.mxu0 0.0
    %3108 = vmatpush1.msra.mxu0 0.0
    %3109 = vmatprep.subr.mxu0 0.0
    %3110 = vmatpush1.msra.mxu0 0.0
    %3111 = vmatprep.subr.mxu0 0.0
    %3112 = vmatpush1.msra.mxu0 0.0
    %3113 = vmatprep.subr.mxu0 0.0
    %3114 = vmatpush1.msra.mxu0 0.0
    %3115 = vmatprep.subr.mxu0 0.0
    %3116 = vmatpush1.msra.mxu0 0.0
    %3117 = vmatprep.subr.mxu0 0.0
    %3118 = vmatpush1.msra.mxu0 0.0
    %3119 = vmatprep.subr.mxu0 0.0
    %3120 = vmatpush1.msra.mxu0 0.0
    %3121 = vmatprep.subr.mxu0 0.0
    %3122 = vmatpush1.msra.mxu0 0.0
    %3123 = vmatprep.subr.mxu0 0.0
    %3124 = vmatpush1.msra.mxu0 0.0
    %3125 = vmatprep.subr.mxu0 0.0
    %3126 = vmatpush1.msra.mxu0 0.0
    %3127 = vmatprep.mubr.f32.mxu0 0.0
    %v3128 = vand.u32 %v2127, 4294901760
    %v3129 = vsub.f32 %v2127, %v3128
    %v3130 = vand.u32 %v3129, 4294901760
    %3131 = vmatmul.mubr.f32.gmra.mrb[0].mxu0 %v3130
    %v3132 = vpop.f32.mrb[0].mxu0
    %v3133 = vadd.f32 %v3036, %v3132
    %v3134 = vpop.f32.mrb[0].mxu0
    %3135 = vmatprep.mubr.f32.mxu0 0.0
    %v3136 = vand.u32 %v2130, 4294901760
    %v3137 = vsub.f32 %v2130, %v3136
    %v3138 = vand.u32 %v3137, 4294901760
    %3139 = vmatmul.mubr.f32.gmra.mrb[0].mxu0 %v3138
    %v3140 = vpop.f32.mrb[0].mxu0
    %v3141 = vadd.f32 %v3043, %v3140
    %v3142 = vpop.f32.mrb[0].mxu0
    %3143 = vmatprep.mubr.f32.mxu0 0.0
    %v3144 = vand.u32 %v2133, 4294901760
    %v3145 = vsub.f32 %v2133, %v3144
    %v3146 = vand.u32 %v3145, 4294901760
    %3147 = vmatmul.mubr.f32.gmra.mrb[0].mxu0 %v3146
    %v3148 = vpop.f32.mrb[0].mxu0
    %v3149 = vadd.f32 %v3050, %v3148
    %v3150 = vpop.f32.mrb[0].mxu0
    %3151 = vmatprep.mubr.f32.mxu0 0.0
    %v3152 = vand.u32 %v2136, 4294901760
    %v3153 = vsub.f32 %v2136, %v3152
    %v3154 = vand.u32 %v3153, 4294901760
    %3155 = vmatmul.mubr.f32.gmra.mrb[0].mxu0 %v3154
    %v3156 = vpop.f32.mrb[0].mxu0
    %v3157 = vadd.f32 %v3057, %v3156
    %v3158 = vpop.f32.mrb[0].mxu0
    %3159 = vdwg.mxu0
    %3160 = vmatprep.subr.mxu0 0.0
    %v3161 = vand.u32 %v2743, 4294901760
    %v3162 = vsub.f32 %v2743, %v3161
    %v3163 = vand.u32 %v3162, 4294901760
    %3164 = vmatpush1.msra.mxu0 %v3163
    %3165 = vmatprep.subr.mxu0 0.0
    %v3166 = vand.u32 %v2744, 4294901760
    %v3167 = vsub.f32 %v2744, %v3166
    %v3168 = vand.u32 %v3167, 4294901760
    %3169 = vmatpush1.msra.mxu0 %v3168
    %3170 = vmatprep.subr.mxu0 0.0
    %v3171 = vand.u32 %v2747, 4294901760
    %v3172 = vsub.f32 %v2747, %v3171
    %v3173 = vand.u32 %v3172, 4294901760
    %3174 = vmatpush1.msra.mxu0 %v3173
    %3175 = vmatprep.subr.mxu0 0.0
    %3176 = vmatpush1.msra.mxu0 0.0
    %3177 = vmatprep.subr.mxu0 0.0
    %3178 = vmatpush1.msra.mxu0 0.0
    %3179 = vmatprep.subr.mxu0 0.0
    %3180 = vmatpush1.msra.mxu0 0.0
    %3181 = vmatprep.subr.mxu0 0.0
    %3182 = vmatpush1.msra.mxu0 0.0
    %3183 = vmatprep.subr.mxu0 0.0
    %3184 = vmatpush1.msra.mxu0 0.0
    %3185 = vmatprep.subr.mxu0 0.0
    %3186 = vmatpush1.msra.mxu0 0.0
    %3187 = vmatprep.subr.mxu0 0.0
    %3188 = vmatpush1.msra.mxu0 0.0
    %3189 = vmatprep.subr.mxu0 0.0
    %3190 = vmatpush1.msra.mxu0 0.0
    %3191 = vmatprep.subr.mxu0 0.0
    %3192 = vmatpush1.msra.mxu0 0.0
    %3193 = vmatprep.subr.mxu0 0.0
    %3194 = vmatpush1.msra.mxu0 0.0
    %3195 = vmatprep.subr.mxu0 0.0
    %3196 = vmatpush1.msra.mxu0 0.0
    %3197 = vmatprep.subr.mxu0 0.0
    %3198 = vmatpush1.msra.mxu0 0.0
    %3199 = vmatprep.subr.mxu0 0.0
    %3200 = vmatpush1.msra.mxu0 0.0
    %3201 = vmatprep.subr.mxu0 0.0
    %3202 = vmatpush1.msra.mxu0 0.0
    %3203 = vmatprep.subr.mxu0 0.0
    %3204 = vmatpush1.msra.mxu0 0.0
    %3205 = vmatprep.subr.mxu0 0.0
    %3206 = vmatpush1.msra.mxu0 0.0
    %3207 = vmatprep.subr.mxu0 0.0
    %3208 = vmatpush1.msra.mxu0 0.0
    %3209 = vmatprep.subr.mxu0 0.0
    %3210 = vmatpush1.msra.mxu0 0.0
    %3211 = vmatprep.subr.mxu0 0.0
    %3212 = vmatpush1.msra.mxu0 0.0
    %3213 = vmatprep.subr.mxu0 0.0
    %3214 = vmatpush1.msra.mxu0 0.0
    %3215 = vmatprep.subr.mxu0 0.0
    %3216 = vmatpush1.msra.mxu0 0.0
    %3217 = vmatprep.subr.mxu0 0.0
    %3218 = vmatpush1.msra.mxu0 0.0
    %3219 = vmatprep.subr.mxu0 0.0
    %3220 = vmatpush1.msra.mxu0 0.0
    %3221 = vmatprep.subr.mxu0 0.0
    %3222 = vmatpush1.msra.mxu0 0.0
    %3223 = vmatprep.subr.mxu0 0.0
    %3224 = vmatpush1.msra.mxu0 0.0
    %3225 = vmatprep.subr.mxu0 0.0
    %3226 = vmatpush1.msra.mxu0 0.0
    %3227 = vmatprep.subr.mxu0 0.0
    %3228 = vmatpush1.msra.mxu0 0.0
    %3229 = vmatprep.subr.mxu0 0.0
    %3230 = vmatpush1.msra.mxu0 0.0
    %3231 = vmatprep.subr.mxu0 0.0
    %3232 = vmatpush1.msra.mxu0 0.0
    %3233 = vmatprep.mubr.f32.mxu0 0.0
    %v3234 = vand.u32 %v2127, 4294901760
    %3235 = vmatmul.mubr.f32.gmra.mrb[0].mxu0 %v3234
    %v3236 = vpop.f32.mrb[0].mxu0
    %v3237 = vadd.f32 %v3133, %v3236
    %v3238 = vpop.f32.mrb[0].mxu0
    %3239 = vmatprep.mubr.f32.mxu0 0.0
    %v3240 = vand.u32 %v2130, 4294901760
    %3241 = vmatmul.mubr.f32.gmra.mrb[0].mxu0 %v3240
    %v3242 = vpop.f32.mrb[0].mxu0
    %v3243 = vadd.f32 %v3141, %v3242
    %v3244 = vpop.f32.mrb[0].mxu0
    %3245 = vmatprep.mubr.f32.mxu0 0.0
    %v3246 = vand.u32 %v2133, 4294901760
    %3247 = vmatmul.mubr.f32.gmra.mrb[0].mxu0 %v3246
    %v3248 = vpop.f32.mrb[0].mxu0
    %v3249 = vadd.f32 %v3149, %v3248
    %v3250 = vpop.f32.mrb[0].mxu0
    %3251 = vmatprep.mubr.f32.mxu0 0.0
    %v3252 = vand.u32 %v2136, 4294901760
    %3253 = vmatmul.mubr.f32.gmra.mrb[0].mxu0 %v3252
    %v3254 = vpop.f32.mrb[0].mxu0
    %v3255 = vadd.f32 %v3157, %v3254
    %v3256 = vpop.f32.mrb[0].mxu0
    %3257 = vdwg.mxu0
    %3258 = vmatprep.subr.mxu0 0.0
    %v3259 = vand.u32 %v2743, 4294901760
    %3260 = vmatpush1.msra.mxu0 %v3259
    %3261 = vmatprep.subr.mxu0 0.0
    %v3262 = vand.u32 %v2744, 4294901760
    %3263 = vmatpush1.msra.mxu0 %v3262
    %3264 = vmatprep.subr.mxu0 0.0
    %v3265 = vand.u32 %v2747, 4294901760
    %3266 = vmatpush1.msra.mxu0 %v3265
    %3267 = vmatprep.subr.mxu0 0.0
    %3268 = vmatpush1.msra.mxu0 0.0
    %3269 = vmatprep.subr.mxu0 0.0
    %3270 = vmatpush1.msra.mxu0 0.0
    %3271 = vmatprep.subr.mxu0 0.0
    %3272 = vmatpush1.msra.mxu0 0.0
    %3273 = vmatprep.subr.mxu0 0.0
    %3274 = vmatpush1.msra.mxu0 0.0
    %3275 = vmatprep.subr.mxu0 0.0
    %3276 = vmatpush1.msra.mxu0 0.0
    %3277 = vmatprep.subr.mxu0 0.0
    %3278 = vmatpush1.msra.mxu0 0.0
    %3279 = vmatprep.subr.mxu0 0.0
    %3280 = vmatpush1.msra.mxu0 0.0
    %3281 = vmatprep.subr.mxu0 0.0
    %3282 = vmatpush1.msra.mxu0 0.0
    %3283 = vmatprep.subr.mxu0 0.0
    %3284 = vmatpush1.msra.mxu0 0.0
    %3285 = vmatprep.subr.mxu0 0.0
    %3286 = vmatpush1.msra.mxu0 0.0
    %3287 = vmatprep.subr.mxu0 0.0
    %3288 = vmatpush1.msra.mxu0 0.0
    %3289 = vmatprep.subr.mxu0 0.0
    %3290 = vmatpush1.msra.mxu0 0.0
    %3291 = vmatprep.subr.mxu0 0.0
    %3292 = vmatpush1.msra.mxu0 0.0
    %3293 = vmatprep.subr.mxu0 0.0
    %3294 = vmatpush1.msra.mxu0 0.0
    %3295 = vmatprep.subr.mxu0 0.0
    %3296 = vmatpush1.msra.mxu0 0.0
    %3297 = vmatprep.subr.mxu0 0.0
    %3298 = vmatpush1.msra.mxu0 0.0
    %3299 = vmatprep.subr.mxu0 0.0
    %3300 = vmatpush1.msra.mxu0 0.0
    %3301 = vmatprep.subr.mxu0 0.0
    %3302 = vmatpush1.msra.mxu0 0.0
    %3303 = vmatprep.subr.mxu0 0.0
    %3304 = vmatpush1.msra.mxu0 0.0
    %3305 = vmatprep.subr.mxu0 0.0
    %3306 = vmatpush1.msra.mxu0 0.0
    %3307 = vmatprep.subr.mxu0 0.0
    %3308 = vmatpush1.msra.mxu0 0.0
    %3309 = vmatprep.subr.mxu0 0.0
    %3310 = vmatpush1.msra.mxu0 0.0
    %3311 = vmatprep.subr.mxu0 0.0
    %3312 = vmatpush1.msra.mxu0 0.0
    %3313 = vmatprep.subr.mxu0 0.0
    %3314 = vmatpush1.msra.mxu0 0.0
    %3315 = vmatprep.subr.mxu0 0.0
    %3316 = vmatpush1.msra.mxu0 0.0
    %3317 = vmatprep.subr.mxu0 0.0
    %3318 = vmatpush1.msra.mxu0 0.0
    %3319 = vmatprep.subr.mxu0 0.0
    %3320 = vmatpush1.msra.mxu0 0.0
    %3321 = vmatprep.subr.mxu0 0.0
    %3322 = vmatpush1.msra.mxu0 0.0
    %3323 = vmatprep.subr.mxu0 0.0
    %3324 = vmatpush1.msra.mxu0 0.0
    %3325 = vmatprep.mubr.f32.mxu0 0.0
    %v3326 = vand.u32 %v2127, 4294901760
    %3327 = vmatmul.mubr.f32.gmra.mrb[0].mxu0 %v3326
    %v3328 = vpop.f32.mrb[0].mxu0
    %v3329 = vadd.f32 %v3237, %v3328
    %v3330 = vpop.f32.mrb[0].mxu0
    %3331 = vmatprep.mubr.f32.mxu0 0.0
    %v3332 = vand.u32 %v2130, 4294901760
    %3333 = vmatmul.mubr.f32.gmra.mrb[0].mxu0 %v3332
    %v3334 = vpop.f32.mrb[0].mxu0
    %v3335 = vadd.f32 %v3243, %v3334
    %v3336 = vpop.f32.mrb[0].mxu0
    %3337 = vmatprep.mubr.f32.mxu0 0.0
    %v3338 = vand.u32 %v2133, 4294901760
    %3339 = vmatmul.mubr.f32.gmra.mrb[0].mxu0 %v3338
    %v3340 = vpop.f32.mrb[0].mxu0
    %v3341 = vadd.f32 %v3249, %v3340
    %v3342 = vpop.f32.mrb[0].mxu0
    %3343 = vmatprep.mubr.f32.mxu0 0.0
    %v3344 = vand.u32 %v2136, 4294901760
    %3345 = vmatmul.mubr.f32.gmra.mrb[0].mxu0 %v3344
    %v3346 = vpop.f32.mrb[0].mxu0
    %v3347 = vadd.f32 %v3255, %v3346
    %v3348 = vpop.f32.mrb[0].mxu0
    %3349 = vdwg.mxu0
    %v3350 = vmax.f32 %v2722, %v3329
    %v3351 = vmax.f32 %v2728, %v3335
    %v3352 = vmax.f32 %v2734, %v3341
    %v3353 = vmax.f32 %v2740, %v3347
    %vm3354 = vcmask 89088
    %3355 = vst.msk [vmem:[#allocation3] sm:$0xff] %vm3354, 0.0
    %3356 = vst.msk [vmem:[#allocation3 + $0x8] sm:$0xff] %vm3354, 0.0
    %3357 = vst.msk [vmem:[#allocation3 + $0x10] sm:$0xff] %vm3354, 0.0
    %3358 = vst.msk [vmem:[#allocation3 + $0x18] sm:$0xff] %vm3354, 0.0
    %vm3359 = vcmask 84992
    %3360 = vst.msk [vmem:[#allocation3 + $0x20] sm:$0xf] %vm3359, 0.0
    %3363 = vrot.lane.b32.xlu0 %v3350, 1
    %v3364 = vpop.permute.xlu0 %3363
    %3365 = vrot.lane.b32.xlu0 %v3351, 1
    %v3366 = vpop.permute.xlu0 %3365
    %vm3369 = vcmask 80904
    %3370 = vst.msk [vmem:[#allocation3 + $0x1] sm:$0xff] %vm3369, %v3364
    %3371 = vst.msk [vmem:[#allocation3 + $0x9] sm:$0xff] %vm3369, %v3366
    %3374 = vrot.lane.b32.xlu0 %v3352, 1
    %v3375 = vpop.permute.xlu0 %3374
    %3376 = vrot.lane.b32.xlu0 %v3353, 1
    %v3377 = vpop.permute.xlu0 %3376
    %3380 = vst.msk [vmem:[#allocation3 + $0x13] sm:$0xff] %vm3369, %v3375
    %3381 = vst.msk [vmem:[#allocation3 + $0x1b] sm:$0xff] %vm3369, %v3377
    %v3382 = vld [vmem:[#allocation3] sm:$0xff]
    %v3383 = vld [vmem:[#allocation3 + $0x8] sm:$0xff]
    %v3384 = vld [vmem:[#allocation3 + $0x10] sm:$0xff]
    %v3385 = vld [vmem:[#allocation3 + $0x18] sm:$0xff]
    %v3386 = vld [vmem:[#allocation3 + $0x20] sm:$0xf]
    %s3387 = sld [smem:[#allocation10]]
    %v3388 = vstv %s3387
    %v3389 = vmul.f32 %v3388, %v3382
    %v3390 = vmul.f32 %v3388, %v3383
    %v3391 = vmul.f32 %v3388, %v3384
    %v3392 = vmul.f32 %v3388, %v3385
    %v3393 = vmul.f32 %v3388, %v3386
    %v3394 = vadd.f32 %v3389, 0.0
    %v3395 = vadd.f32 %v3390, 0.0
    %v3396 = vadd.f32 %v3391, 0.0
    %v3397 = vadd.f32 %v3392, 0.0
    %v3398 = vadd.f32 %v3393, 0.0
    %s3399 = sld [smem:[#allocation10 + $0x1]]
    %v3400 = vstv %s3399
    %v3401 = vmul.f32 %v3400, %v3382
    %v3402 = vmul.f32 %v3400, %v3383
    %v3403 = vmul.f32 %v3400, %v3384
    %v3404 = vmul.f32 %v3400, %v3385
    %v3405 = vmul.f32 %v3400, %v3386
    %3411 = vrot.lane.b32.xlu0 %v3401, 127
    %v3412 = vpop.permute.xlu0 %3411
    %3413 = vrot.lane.b32.xlu0 %v3402, 127
    %v3414 = vpop.permute.xlu0 %3413
    %3415 = vrot.lane.b32.xlu0 %v3403, 127
    %v3416 = vpop.permute.xlu0 %3415
    %3417 = vrot.lane.b32.xlu0 %v3404, 127
    %v3418 = vpop.permute.xlu0 %3417
    %3419 = vrot.lane.b32.xlu0 %v3405, 127
    %v3420 = vpop.permute.xlu0 %3419
    %v3426 = vadd.f32 %v3394, %v3412
    %v3427 = vadd.f32 %v3395, %v3414
    %v3428 = vadd.f32 %v3396, %v3416
    %v3429 = vadd.f32 %v3397, %v3418
    %v3430 = vadd.f32 %v3398, %v3420
    %s3431 = sld [smem:[#allocation10 + $0x2]]
    %v3432 = vstv %s3431
    %v3433 = vmul.f32 %v3432, %v3382
    %v3434 = vmul.f32 %v3432, %v3383
    %v3435 = vmul.f32 %v3432, %v3384
    %v3436 = vmul.f32 %v3432, %v3385
    %v3437 = vmul.f32 %v3432, %v3386
    %3443 = vrot.lane.b32.xlu0 %v3433, 126
    %v3444 = vpop.permute.xlu0 %3443
    %3445 = vrot.lane.b32.xlu0 %v3434, 126
    %v3446 = vpop.permute.xlu0 %3445
    %3447 = vrot.lane.b32.xlu0 %v3435, 126
    %v3448 = vpop.permute.xlu0 %3447
    %3449 = vrot.lane.b32.xlu0 %v3436, 126
    %v3450 = vpop.permute.xlu0 %3449
    %3451 = vrot.lane.b32.xlu0 %v3437, 126
    %v3452 = vpop.permute.xlu0 %3451
    %v3458 = vadd.f32 %v3426, %v3444
    %v3459 = vadd.f32 %v3427, %v3446
    %v3460 = vadd.f32 %v3428, %v3448
    %v3461 = vadd.f32 %v3429, %v3450
    %v3462 = vadd.f32 %v3430, %v3452
    %s3463 = sld [smem:[#allocation10 + $0x3]]
    %v3464 = vstv %s3463
    %v3465 = vmul.f32 %v3464, %v3382
    %v3466 = vmul.f32 %v3464, %v3383
    %v3467 = vmul.f32 %v3464, %v3384
    %v3468 = vmul.f32 %v3464, %v3385
    %v3469 = vmul.f32 %v3464, %v3386
    %v3475 = vrot.slane %v3465, 1
    %v3476 = vrot.slane %v3466, 1
    %v3477 = vsel %vm319, %v3475, %v3476
    %v3478 = vrot.slane %v3467, 1
    %v3479 = vsel %vm319, %v3476, %v3478
    %v3480 = vrot.slane %v3468, 1
    %v3481 = vsel %vm319, %v3478, %v3480
    %v3482 = vrot.slane %v3469, 1
    %v3483 = vsel %vm319, %v3480, %v3482
    %v3489 = vadd.f32 %v3458, %v3477
    %v3490 = vadd.f32 %v3459, %v3479
    %v3491 = vadd.f32 %v3460, %v3481
    %v3492 = vadd.f32 %v3461, %v3483
    %v3493 = vadd.f32 %v3462, %v3482
    %s3494 = sld [smem:[#allocation10 + $0x4]]
    %v3495 = vstv %s3494
    %v3496 = vmul.f32 %v3495, %v3382
    %v3497 = vmul.f32 %v3495, %v3383
    %v3498 = vmul.f32 %v3495, %v3384
    %v3499 = vmul.f32 %v3495, %v3385
    %v3500 = vmul.f32 %v3495, %v3386
    %v3506 = vrot.slane %v3496, 1
    %v3507 = vrot.slane %v3497, 1
    %v3508 = vsel %vm319, %v3506, %v3507
    %v3509 = vrot.slane %v3498, 1
    %v3510 = vsel %vm319, %v3507, %v3509
    %v3511 = vrot.slane %v3499, 1
    %v3512 = vsel %vm319, %v3509, %v3511
    %v3513 = vrot.slane %v3500, 1
    %v3514 = vsel %vm319, %v3511, %v3513
    %3515 = vrot.lane.b32.xlu0 %v3508, 127
    %v3516 = vpop.permute.xlu0 %3515
    %3517 = vrot.lane.b32.xlu0 %v3510, 127
    %v3518 = vpop.permute.xlu0 %3517
    %3519 = vrot.lane.b32.xlu0 %v3512, 127
    %v3520 = vpop.permute.xlu0 %3519
    %3521 = vrot.lane.b32.xlu0 %v3514, 127
    %v3522 = vpop.permute.xlu0 %3521
    %3523 = vrot.lane.b32.xlu0 %v3513, 127
    %v3524 = vpop.permute.xlu0 %3523
    %v3530 = vadd.f32 %v3489, %v3516
    %v3531 = vadd.f32 %v3490, %v3518
    %v3532 = vadd.f32 %v3491, %v3520
    %v3533 = vadd.f32 %v3492, %v3522
    %v3534 = vadd.f32 %v3493, %v3524
    %s3535 = sld [smem:[#allocation10 + $0x5]]
    %v3536 = vstv %s3535
    %v3537 = vmul.f32 %v3536, %v3382
    %v3538 = vmul.f32 %v3536, %v3383
    %v3539 = vmul.f32 %v3536, %v3384
    %v3540 = vmul.f32 %v3536, %v3385
    %v3541 = vmul.f32 %v3536, %v3386
    %v3547 = vrot.slane %v3537, 1
    %v3548 = vrot.slane %v3538, 1
    %v3549 = vsel %vm319, %v3547, %v3548
    %v3550 = vrot.slane %v3539, 1
    %v3551 = vsel %vm319, %v3548, %v3550
    %v3552 = vrot.slane %v3540, 1
    %v3553 = vsel %vm319, %v3550, %v3552
    %v3554 = vrot.slane %v3541, 1
    %v3555 = vsel %vm319, %v3552, %v3554
    %3556 = vrot.lane.b32.xlu0 %v3549, 126
    %v3557 = vpop.permute.xlu0 %3556
    %3558 = vrot.lane.b32.xlu0 %v3551, 126
    %v3559 = vpop.permute.xlu0 %3558
    %3560 = vrot.lane.b32.xlu0 %v3553, 126
    %v3561 = vpop.permute.xlu0 %3560
    %3562 = vrot.lane.b32.xlu0 %v3555, 126
    %v3563 = vpop.permute.xlu0 %3562
    %3564 = vrot.lane.b32.xlu0 %v3554, 126
    %v3565 = vpop.permute.xlu0 %3564
    %v3571 = vadd.f32 %v3530, %v3557
    %v3572 = vadd.f32 %v3531, %v3559
    %v3573 = vadd.f32 %v3532, %v3561
    %v3574 = vadd.f32 %v3533, %v3563
    %v3575 = vadd.f32 %v3534, %v3565
    %s3576 = sld [smem:[#allocation10 + $0x6]]
    %v3577 = vstv %s3576
    %v3578 = vmul.f32 %v3577, %v3382
    %v3579 = vmul.f32 %v3577, %v3383
    %v3580 = vmul.f32 %v3577, %v3384
    %v3581 = vmul.f32 %v3577, %v3385
    %v3582 = vmul.f32 %v3577, %v3386
    %v3588 = vrot.slane %v3578, 2
    %v3589 = vrot.slane %v3579, 2
    %v3590 = vsel %vm521, %v3588, %v3589
    %v3591 = vrot.slane %v3580, 2
    %v3592 = vsel %vm521, %v3589, %v3591
    %v3593 = vrot.slane %v3581, 2
    %v3594 = vsel %vm521, %v3591, %v3593
    %v3595 = vrot.slane %v3582, 2
    %v3596 = vsel %vm521, %v3593, %v3595
    %v3602 = vadd.f32 %v3571, %v3590
    %v3603 = vadd.f32 %v3572, %v3592
    %v3604 = vadd.f32 %v3573, %v3594
    %v3605 = vadd.f32 %v3574, %v3596
    %v3606 = vadd.f32 %v3575, %v3595
    %s3607 = sld [smem:[#allocation10 + $0x7]]
    %v3608 = vstv %s3607
    %v3609 = vmul.f32 %v3608, %v3382
    %v3610 = vmul.f32 %v3608, %v3383
    %v3611 = vmul.f32 %v3608, %v3384
    %v3612 = vmul.f32 %v3608, %v3385
    %v3613 = vmul.f32 %v3608, %v3386
    %v3619 = vrot.slane %v3609, 2
    %v3620 = vrot.slane %v3610, 2
    %v3621 = vsel %vm521, %v3619, %v3620
    %v3622 = vrot.slane %v3611, 2
    %v3623 = vsel %vm521, %v3620, %v3622
    %v3624 = vrot.slane %v3612, 2
    %v3625 = vsel %vm521, %v3622, %v3624
    %v3626 = vrot.slane %v3613, 2
    %v3627 = vsel %vm521, %v3624, %v3626
    %3628 = vrot.lane.b32.xlu0 %v3621, 127
    %v3629 = vpop.permute.xlu0 %3628
    %3630 = vrot.lane.b32.xlu0 %v3623, 127
    %v3631 = vpop.permute.xlu0 %3630
    %3632 = vrot.lane.b32.xlu0 %v3625, 127
    %v3633 = vpop.permute.xlu0 %3632
    %3634 = vrot.lane.b32.xlu0 %v3627, 127
    %v3635 = vpop.permute.xlu0 %3634
    %3636 = vrot.lane.b32.xlu0 %v3626, 127
    %v3637 = vpop.permute.xlu0 %3636
    %v3643 = vadd.f32 %v3602, %v3629
    %v3644 = vadd.f32 %v3603, %v3631
    %v3645 = vadd.f32 %v3604, %v3633
    %v3646 = vadd.f32 %v3605, %v3635
    %v3647 = vadd.f32 %v3606, %v3637
    %s3648 = sld [smem:[#allocation10 + $0x8]]
    %v3649 = vstv %s3648
    %v3650 = vmul.f32 %v3649, %v3382
    %v3651 = vmul.f32 %v3649, %v3383
    %v3652 = vmul.f32 %v3649, %v3384
    %v3653 = vmul.f32 %v3649, %v3385
    %v3654 = vmul.f32 %v3649, %v3386
    %v3660 = vrot.slane %v3650, 2
    %v3661 = vrot.slane %v3651, 2
    %v3662 = vsel %vm521, %v3660, %v3661
    %v3663 = vrot.slane %v3652, 2
    %v3664 = vsel %vm521, %v3661, %v3663
    %v3665 = vrot.slane %v3653, 2
    %v3666 = vsel %vm521, %v3663, %v3665
    %v3667 = vrot.slane %v3654, 2
    %v3668 = vsel %vm521, %v3665, %v3667
    %3669 = vrot.lane.b32.xlu0 %v3662, 126
    %v3670 = vpop.permute.xlu0 %3669
    %3671 = vrot.lane.b32.xlu0 %v3664, 126
    %v3672 = vpop.permute.xlu0 %3671
    %3673 = vrot.lane.b32.xlu0 %v3666, 126
    %v3674 = vpop.permute.xlu0 %3673
    %3675 = vrot.lane.b32.xlu0 %v3668, 126
    %v3676 = vpop.permute.xlu0 %3675
    %3677 = vrot.lane.b32.xlu0 %v3667, 126
    %v3678 = vpop.permute.xlu0 %3677
    %v3684 = vadd.f32 %v3643, %v3670
    %v3685 = vadd.f32 %v3644, %v3672
    %v3686 = vadd.f32 %v3645, %v3674
    %v3687 = vadd.f32 %v3646, %v3676
    %v3688 = vadd.f32 %v3647, %v3678
    %s3689 = sld [smem:[#allocation6]]
    %v3690 = vstv %s3689
    %v3691 = vadd.f32 %v3684, %v3690
    %v3692 = vadd.f32 %v3685, %v3690
    %v3693 = vadd.f32 %v3686, %v3690
    %v3694 = vadd.f32 %v3687, %v3690
    %v3695 = vadd.f32 %v3688, %v3690
    %v3696 = vmax.f32 %v3691, 0.0
    %v3697 = vmax.f32 %v3692, 0.0
    %v3698 = vmax.f32 %v3693, 0.0
    %v3699 = vmax.f32 %v3694, 0.0
    %v3700 = vmax.f32 %v3695, 0.0
    %v3701 = vld [vmem:[%s9] sm:$0xff]
    %v3702 = vld [vmem:[%s9 + $0x8] sm:$0xff]
    %vm3703 = vcmask 277504
    %v3705 = vsel %vm3703, %v3701, 0
    %v3708 = vsel %vm3703, %v3702, 0
    %vm3710 = vcmask 1041408
    %v3712 = vsel %vm3710, %v3700, 0
    %3714 = vmatprep.subr.mxu0 0.0
    %v3715 = vand.u32 %v3696, 4294901760
    %3716 = vmatpush1.msra.mxu0 %v3715
    %3717 = vmatprep.subr.mxu0 0.0
    %v3718 = vand.u32 %v3697, 4294901760
    %3719 = vmatpush1.msra.mxu0 %v3718
    %3720 = vmatprep.subr.mxu0 0.0
    %v3721 = vand.u32 %v3698, 4294901760
    %3722 = vmatpush1.msra.mxu0 %v3721
    %3723 = vmatprep.subr.mxu0 0.0
    %v3724 = vand.u32 %v3699, 4294901760
    %3725 = vmatpush1.msra.mxu0 %v3724
    %3726 = vmatprep.subr.mxu0 0.0
    %v3727 = vand.u32 %v3712, 4294901760
    %3728 = vmatpush1.msra.mxu0 %v3727
    %3729 = vmatprep.subr.mxu0 0.0
    %3730 = vmatpush1.msra.mxu0 0.0
    %3731 = vmatprep.subr.mxu0 0.0
    %3732 = vmatpush1.msra.mxu0 0.0
    %3733 = vmatprep.subr.mxu0 0.0
    %3734 = vmatpush1.msra.mxu0 0.0
    %3735 = vmatprep.subr.mxu0 0.0
    %3736 = vmatpush1.msra.mxu0 0.0
    %3737 = vmatprep.subr.mxu0 0.0
    %3738 = vmatpush1.msra.mxu0 0.0
    %3739 = vmatprep.subr.mxu0 0.0
    %3740 = vmatpush1.msra.mxu0 0.0
    %3741 = vmatprep.subr.mxu0 0.0
    %3742 = vmatpush1.msra.mxu0 0.0
    %3743 = vmatprep.subr.mxu0 0.0
    %3744 = vmatpush1.msra.mxu0 0.0
    %3745 = vmatprep.subr.mxu0 0.0
    %3746 = vmatpush1.msra.mxu0 0.0
    %3747 = vmatprep.subr.mxu0 0.0
    %3748 = vmatpush1.msra.mxu0 0.0
    %3749 = vmatprep.subr.mxu0 0.0
    %3750 = vmatpush1.msra.mxu0 0.0
    %3751 = vmatprep.subr.mxu0 0.0
    %3752 = vmatpush1.msra.mxu0 0.0
    %3753 = vmatprep.subr.mxu0 0.0
    %3754 = vmatpush1.msra.mxu0 0.0
    %3755 = vmatprep.subr.mxu0 0.0
    %3756 = vmatpush1.msra.mxu0 0.0
    %3757 = vmatprep.subr.mxu0 0.0
    %3758 = vmatpush1.msra.mxu0 0.0
    %3759 = vmatprep.subr.mxu0 0.0
    %3760 = vmatpush1.msra.mxu0 0.0
    %3761 = vmatprep.subr.mxu0 0.0
    %3762 = vmatpush1.msra.mxu0 0.0
    %3763 = vmatprep.subr.mxu0 0.0
    %3764 = vmatpush1.msra.mxu0 0.0
    %3765 = vmatprep.subr.mxu0 0.0
    %3766 = vmatpush1.msra.mxu0 0.0
    %3767 = vmatprep.subr.mxu0 0.0
    %3768 = vmatpush1.msra.mxu0 0.0
    %3769 = vmatprep.subr.mxu0 0.0
    %3770 = vmatpush1.msra.mxu0 0.0
    %3771 = vmatprep.subr.mxu0 0.0
    %3772 = vmatpush1.msra.mxu0 0.0
    %3773 = vmatprep.subr.mxu0 0.0
    %3774 = vmatpush1.msra.mxu0 0.0
    %3775 = vmatprep.subr.mxu0 0.0
    %3776 = vmatpush1.msra.mxu0 0.0
    %3777 = vmatprep.subr.mxu0 0.0
    %3778 = vmatpush1.msra.mxu0 0.0
    %3779 = vmatprep.subr.mxu0 0.0
    %3780 = vmatpush1.msra.mxu0 0.0
    %3781 = vmatprep.subr.mxu0 0.0
    %3782 = vmatpush1.msra.mxu0 0.0
    %3783 = vmatprep.mubr.f32.mxu0 0.0
    %v3784 = vand.u32 %v3705, 4294901760
    %v3785 = vsub.f32 %v3705, %v3784
    %v3786 = vand.u32 %v3785, 4294901760
    %v3787 = vsub.f32 %v3785, %v3786
    %v3788 = vand.u32 %v3787, 4294901760
    %3789 = vmatmul.mubr.f32.gmra.mrb[0].mxu0 %v3788
    %v3790 = vpop.f32.mrb[0].mxu0
    %v3791 = vadd.f32 0.0, %v3790
    %v3792 = vpop.f32.mrb[0].mxu0
    %3793 = vmatprep.mubr.f32.mxu0 0.0
    %v3794 = vand.u32 %v3708, 4294901760
    %v3795 = vsub.f32 %v3708, %v3794
    %v3796 = vand.u32 %v3795, 4294901760
    %v3797 = vsub.f32 %v3795, %v3796
    %v3798 = vand.u32 %v3797, 4294901760
    %3799 = vmatmul.mubr.f32.gmra.mrb[0].mxu0 %v3798
    %v3800 = vpop.f32.mrb[0].mxu0
    %v3801 = vadd.f32 0.0, %v3800
    %v3802 = vpop.f32.mrb[0].mxu0
    %3803 = vdwg.mxu0
    %3804 = vmatprep.subr.mxu0 0.0
    %v3805 = vand.u32 %v3696, 4294901760
    %v3806 = vsub.f32 %v3696, %v3805
    %v3807 = vand.u32 %v3806, 4294901760
    %v3808 = vsub.f32 %v3806, %v3807
    %v3809 = vand.u32 %v3808, 4294901760
    %3810 = vmatpush1.msra.mxu0 %v3809
    %3811 = vmatprep.subr.mxu0 0.0
    %v3812 = vand.u32 %v3697, 4294901760
    %v3813 = vsub.f32 %v3697, %v3812
    %v3814 = vand.u32 %v3813, 4294901760
    %v3815 = vsub.f32 %v3813, %v3814
    %v3816 = vand.u32 %v3815, 4294901760
    %3817 = vmatpush1.msra.mxu0 %v3816
    %3818 = vmatprep.subr.mxu0 0.0
    %v3819 = vand.u32 %v3698, 4294901760
    %v3820 = vsub.f32 %v3698, %v3819
    %v3821 = vand.u32 %v3820, 4294901760
    %v3822 = vsub.f32 %v3820, %v3821
    %v3823 = vand.u32 %v3822, 4294901760
    %3824 = vmatpush1.msra.mxu0 %v3823
    %3825 = vmatprep.subr.mxu0 0.0
    %v3826 = vand.u32 %v3699, 4294901760
    %v3827 = vsub.f32 %v3699, %v3826
    %v3828 = vand.u32 %v3827, 4294901760
    %v3829 = vsub.f32 %v3827, %v3828
    %v3830 = vand.u32 %v3829, 4294901760
    %3831 = vmatpush1.msra.mxu0 %v3830
    %3832 = vmatprep.subr.mxu0 0.0
    %v3833 = vand.u32 %v3712, 4294901760
    %v3834 = vsub.f32 %v3712, %v3833
    %v3835 = vand.u32 %v3834, 4294901760
    %v3836 = vsub.f32 %v3834, %v3835
    %v3837 = vand.u32 %v3836, 4294901760
    %3838 = vmatpush1.msra.mxu0 %v3837
    %3839 = vmatprep.subr.mxu0 0.0
    %3840 = vmatpush1.msra.mxu0 0.0
    %3841 = vmatprep.subr.mxu0 0.0
    %3842 = vmatpush1.msra.mxu0 0.0
    %3843 = vmatprep.subr.mxu0 0.0
    %3844 = vmatpush1.msra.mxu0 0.0
    %3845 = vmatprep.subr.mxu0 0.0
    %3846 = vmatpush1.msra.mxu0 0.0
    %3847 = vmatprep.subr.mxu0 0.0
    %3848 = vmatpush1.msra.mxu0 0.0
    %3849 = vmatprep.subr.mxu0 0.0
    %3850 = vmatpush1.msra.mxu0 0.0
    %3851 = vmatprep.subr.mxu0 0.0
    %3852 = vmatpush1.msra.mxu0 0.0
    %3853 = vmatprep.subr.mxu0 0.0
    %3854 = vmatpush1.msra.mxu0 0.0
    %3855 = vmatprep.subr.mxu0 0.0
    %3856 = vmatpush1.msra.mxu0 0.0
    %3857 = vmatprep.subr.mxu0 0.0
    %3858 = vmatpush1.msra.mxu0 0.0
    %3859 = vmatprep.subr.mxu0 0.0
    %3860 = vmatpush1.msra.mxu0 0.0
    %3861 = vmatprep.subr.mxu0 0.0
    %3862 = vmatpush1.msra.mxu0 0.0
    %3863 = vmatprep.subr.mxu0 0.0
    %3864 = vmatpush1.msra.mxu0 0.0
    %3865 = vmatprep.subr.mxu0 0.0
    %3866 = vmatpush1.msra.mxu0 0.0
    %3867 = vmatprep.subr.mxu0 0.0
    %3868 = vmatpush1.msra.mxu0 0.0
    %3869 = vmatprep.subr.mxu0 0.0
    %3870 = vmatpush1.msra.mxu0 0.0
    %3871 = vmatprep.subr.mxu0 0.0
    %3872 = vmatpush1.msra.mxu0 0.0
    %3873 = vmatprep.subr.mxu0 0.0
    %3874 = vmatpush1.msra.mxu0 0.0
    %3875 = vmatprep.subr.mxu0 0.0
    %3876 = vmatpush1.msra.mxu0 0.0
    %3877 = vmatprep.subr.mxu0 0.0
    %3878 = vmatpush1.msra.mxu0 0.0
    %3879 = vmatprep.subr.mxu0 0.0
    %3880 = vmatpush1.msra.mxu0 0.0
    %3881 = vmatprep.subr.mxu0 0.0
    %3882 = vmatpush1.msra.mxu0 0.0
    %3883 = vmatprep.subr.mxu0 0.0
    %3884 = vmatpush1.msra.mxu0 0.0
    %3885 = vmatprep.subr.mxu0 0.0
    %3886 = vmatpush1.msra.mxu0 0.0
    %3887 = vmatprep.subr.mxu0 0.0
    %3888 = vmatpush1.msra.mxu0 0.0
    %3889 = vmatprep.subr.mxu0 0.0
    %3890 = vmatpush1.msra.mxu0 0.0
    %3891 = vmatprep.subr.mxu0 0.0
    %3892 = vmatpush1.msra.mxu0 0.0
    %3893 = vmatprep.mubr.f32.mxu0 0.0
    %v3894 = vand.u32 %v3705, 4294901760
    %3895 = vmatmul.mubr.f32.gmra.mrb[0].mxu0 %v3894
    %v3896 = vpop.f32.mrb[0].mxu0
    %v3897 = vadd.f32 %v3791, %v3896
    %v3898 = vpop.f32.mrb[0].mxu0
    %3899 = vmatprep.mubr.f32.mxu0 0.0
    %v3900 = vand.u32 %v3708, 4294901760
    %3901 = vmatmul.mubr.f32.gmra.mrb[0].mxu0 %v3900
    %v3902 = vpop.f32.mrb[0].mxu0
    %v3903 = vadd.f32 %v3801, %v3902
    %v3904 = vpop.f32.mrb[0].mxu0
    %3905 = vdwg.mxu0
    %3906 = vmatprep.subr.mxu0 0.0
    %v3907 = vand.u32 %v3696, 4294901760
    %v3908 = vsub.f32 %v3696, %v3907
    %3909 = vmatpush1.msra.mxu0 %v3908
    %3910 = vmatprep.subr.mxu0 0.0
    %v3911 = vand.u32 %v3697, 4294901760
    %v3912 = vsub.f32 %v3697, %v3911
    %3913 = vmatpush1.msra.mxu0 %v3912
    %3914 = vmatprep.subr.mxu0 0.0
    %v3915 = vand.u32 %v3698, 4294901760
    %v3916 = vsub.f32 %v3698, %v3915
    %3917 = vmatpush1.msra.mxu0 %v3916
    %3918 = vmatprep.subr.mxu0 0.0
    %v3919 = vand.u32 %v3699, 4294901760
    %v3920 = vsub.f32 %v3699, %v3919
    %3921 = vmatpush1.msra.mxu0 %v3920
    %3922 = vmatprep.subr.mxu0 0.0
    %v3923 = vand.u32 %v3712, 4294901760
    %v3924 = vsub.f32 %v3712, %v3923
    %3925 = vmatpush1.msra.mxu0 %v3924
    %3926 = vmatprep.subr.mxu0 0.0
    %3927 = vmatpush1.msra.mxu0 0.0
    %3928 = vmatprep.subr.mxu0 0.0
    %3929 = vmatpush1.msra.mxu0 0.0
    %3930 = vmatprep.subr.mxu0 0.0
    %3931 = vmatpush1.msra.mxu0 0.0
    %3932 = vmatprep.subr.mxu0 0.0
    %3933 = vmatpush1.msra.mxu0 0.0
    %3934 = vmatprep.subr.mxu0 0.0
    %3935 = vmatpush1.msra.mxu0 0.0
    %3936 = vmatprep.subr.mxu0 0.0
    %3937 = vmatpush1.msra.mxu0 0.0
    %3938 = vmatprep.subr.mxu0 0.0
    %3939 = vmatpush1.msra.mxu0 0.0
    %3940 = vmatprep.subr.mxu0 0.0
    %3941 = vmatpush1.msra.mxu0 0.0
    %3942 = vmatprep.subr.mxu0 0.0
    %3943 = vmatpush1.msra.mxu0 0.0
    %3944 = vmatprep.subr.mxu0 0.0
    %3945 = vmatpush1.msra.mxu0 0.0
    %3946 = vmatprep.subr.mxu0 0.0
    %3947 = vmatpush1.msra.mxu0 0.0
    %3948 = vmatprep.subr.mxu0 0.0
    %3949 = vmatpush1.msra.mxu0 0.0
    %3950 = vmatprep.subr.mxu0 0.0
    %3951 = vmatpush1.msra.mxu0 0.0
    %3952 = vmatprep.subr.mxu0 0.0
    %3953 = vmatpush1.msra.mxu0 0.0
    %3954 = vmatprep.subr.mxu0 0.0
    %3955 = vmatpush1.msra.mxu0 0.0
    %3956 = vmatprep.subr.mxu0 0.0
    %3957 = vmatpush1.msra.mxu0 0.0
    %3958 = vmatprep.subr.mxu0 0.0
    %3959 = vmatpush1.msra.mxu0 0.0
    %3960 = vmatprep.subr.mxu0 0.0
    %3961 = vmatpush1.msra.mxu0 0.0
    %3962 = vmatprep.subr.mxu0 0.0
    %3963 = vmatpush1.msra.mxu0 0.0
    %3964 = vmatprep.subr.mxu0 0.0
    %3965 = vmatpush1.msra.mxu0 0.0
    %3966 = vmatprep.subr.mxu0 0.0
    %3967 = vmatpush1.msra.mxu0 0.0
    %3968 = vmatprep.subr.mxu0 0.0
    %3969 = vmatpush1.msra.mxu0 0.0
    %3970 = vmatprep.subr.mxu0 0.0
    %3971 = vmatpush1.msra.mxu0 0.0
    %3972 = vmatprep.subr.mxu0 0.0
    %3973 = vmatpush1.msra.mxu0 0.0
    %3974 = vmatprep.subr.mxu0 0.0
    %3975 = vmatpush1.msra.mxu0 0.0
    %3976 = vmatprep.subr.mxu0 0.0
    %3977 = vmatpush1.msra.mxu0 0.0
    %3978 = vmatprep.subr.mxu0 0.0
    %3979 = vmatpush1.msra.mxu0 0.0
    %3980 = vmatprep.mubr.f32.mxu0 0.0
    %v3981 = vand.u32 %v3705, 4294901760
    %v3982 = vsub.f32 %v3705, %v3981
    %3983 = vmatmul.mubr.f32.gmra.mrb[0].mxu0 %v3982
    %v3984 = vpop.f32.mrb[0].mxu0
    %v3985 = vadd.f32 %v3897, %v3984
    %v3986 = vpop.f32.mrb[0].mxu0
    %3987 = vmatprep.mubr.f32.mxu0 0.0
    %v3988 = vand.u32 %v3708, 4294901760
    %v3989 = vsub.f32 %v3708, %v3988
    %3990 = vmatmul.mubr.f32.gmra.mrb[0].mxu0 %v3989
    %v3991 = vpop.f32.mrb[0].mxu0
    %v3992 = vadd.f32 %v3903, %v3991
    %v3993 = vpop.f32.mrb[0].mxu0
    %3994 = vdwg.mxu0
    %3995 = vmatprep.subr.mxu0 0.0
    %v3996 = vand.u32 %v3696, 4294901760
    %3997 = vmatpush1.msra.mxu0 %v3996
    %3998 = vmatprep.subr.mxu0 0.0
    %v3999 = vand.u32 %v3697, 4294901760
    %4000 = vmatpush1.msra.mxu0 %v3999
    %4001 = vmatprep.subr.mxu0 0.0
    %v4002 = vand.u32 %v3698, 4294901760
    %4003 = vmatpush1.msra.mxu0 %v4002
    %4004 = vmatprep.subr.mxu0 0.0
    %v4005 = vand.u32 %v3699, 4294901760
    %4006 = vmatpush1.msra.mxu0 %v4005
    %4007 = vmatprep.subr.mxu0 0.0
    %v4008 = vand.u32 %v3712, 4294901760
    %4009 = vmatpush1.msra.mxu0 %v4008
    %4010 = vmatprep.subr.mxu0 0.0
    %4011 = vmatpush1.msra.mxu0 0.0
    %4012 = vmatprep.subr.mxu0 0.0
    %4013 = vmatpush1.msra.mxu0 0.0
    %4014 = vmatprep.subr.mxu0 0.0
    %4015 = vmatpush1.msra.mxu0 0.0
    %4016 = vmatprep.subr.mxu0 0.0
    %4017 = vmatpush1.msra.mxu0 0.0
    %4018 = vmatprep.subr.mxu0 0.0
    %4019 = vmatpush1.msra.mxu0 0.0
    %4020 = vmatprep.subr.mxu0 0.0
    %4021 = vmatpush1.msra.mxu0 0.0
    %4022 = vmatprep.subr.mxu0 0.0
    %4023 = vmatpush1.msra.mxu0 0.0
    %4024 = vmatprep.subr.mxu0 0.0
    %4025 = vmatpush1.msra.mxu0 0.0
    %4026 = vmatprep.subr.mxu0 0.0
    %4027 = vmatpush1.msra.mxu0 0.0
    %4028 = vmatprep.subr.mxu0 0.0
    %4029 = vmatpush1.msra.mxu0 0.0
    %4030 = vmatprep.subr.mxu0 0.0
    %4031 = vmatpush1.msra.mxu0 0.0
    %4032 = vmatprep.subr.mxu0 0.0
    %4033 = vmatpush1.msra.mxu0 0.0
    %4034 = vmatprep.subr.mxu0 0.0
    %4035 = vmatpush1.msra.mxu0 0.0
    %4036 = vmatprep.subr.mxu0 0.0
    %4037 = vmatpush1.msra.mxu0 0.0
    %4038 = vmatprep.subr.mxu0 0.0
    %4039 = vmatpush1.msra.mxu0 0.0
    %4040 = vmatprep.subr.mxu0 0.0
    %4041 = vmatpush1.msra.mxu0 0.0
    %4042 = vmatprep.subr.mxu0 0.0
    %4043 = vmatpush1.msra.mxu0 0.0
    %4044 = vmatprep.subr.mxu0 0.0
    %4045 = vmatpush1.msra.mxu0 0.0
    %4046 = vmatprep.subr.mxu0 0.0
    %4047 = vmatpush1.msra.mxu0 0.0
    %4048 = vmatprep.subr.mxu0 0.0
    %4049 = vmatpush1.msra.mxu0 0.0
    %4050 = vmatprep.subr.mxu0 0.0
    %4051 = vmatpush1.msra.mxu0 0.0
    %4052 = vmatprep.subr.mxu0 0.0
    %4053 = vmatpush1.msra.mxu0 0.0
    %4054 = vmatprep.subr.mxu0 0.0
    %4055 = vmatpush1.msra.mxu0 0.0
    %4056 = vmatprep.subr.mxu0 0.0
    %4057 = vmatpush1.msra.mxu0 0.0
    %4058 = vmatprep.subr.mxu0 0.0
    %4059 = vmatpush1.msra.mxu0 0.0
    %4060 = vmatprep.subr.mxu0 0.0
    %4061 = vmatpush1.msra.mxu0 0.0
    %4062 = vmatprep.subr.mxu0 0.0
    %4063 = vmatpush1.msra.mxu0 0.0
    %4064 = vmatprep.mubr.f32.mxu0 0.0
    %v4065 = vand.u32 %v3705, 4294901760
    %v4066 = vsub.f32 %v3705, %v4065
    %v4067 = vand.u32 %v4066, 4294901760
    %4068 = vmatmul.mubr.f32.gmra.mrb[0].mxu0 %v4067
    %v4069 = vpop.f32.mrb[0].mxu0
    %v4070 = vadd.f32 %v3985, %v4069
    %v4071 = vpop.f32.mrb[0].mxu0
    %4072 = vmatprep.mubr.f32.mxu0 0.0
    %v4073 = vand.u32 %v3708, 4294901760
    %v4074 = vsub.f32 %v3708, %v4073
    %v4075 = vand.u32 %v4074, 4294901760
    %4076 = vmatmul.mubr.f32.gmra.mrb[0].mxu0 %v4075
    %v4077 = vpop.f32.mrb[0].mxu0
    %v4078 = vadd.f32 %v3992, %v4077
    %v4079 = vpop.f32.mrb[0].mxu0
    %4080 = vdwg.mxu0
    %4081 = vmatprep.subr.mxu0 0.0
    %v4082 = vand.u32 %v3696, 4294901760
    %v4083 = vsub.f32 %v3696, %v4082
    %v4084 = vand.u32 %v4083, 4294901760
    %4085 = vmatpush1.msra.mxu0 %v4084
    %4086 = vmatprep.subr.mxu0 0.0
    %v4087 = vand.u32 %v3697, 4294901760
    %v4088 = vsub.f32 %v3697, %v4087
    %v4089 = vand.u32 %v4088, 4294901760
    %4090 = vmatpush1.msra.mxu0 %v4089
    %4091 = vmatprep.subr.mxu0 0.0
    %v4092 = vand.u32 %v3698, 4294901760
    %v4093 = vsub.f32 %v3698, %v4092
    %v4094 = vand.u32 %v4093, 4294901760
    %4095 = vmatpush1.msra.mxu0 %v4094
    %4096 = vmatprep.subr.mxu0 0.0
    %v4097 = vand.u32 %v3699, 4294901760
    %v4098 = vsub.f32 %v3699, %v4097
    %v4099 = vand.u32 %v4098, 4294901760
    %4100 = vmatpush1.msra.mxu0 %v4099
    %4101 = vmatprep.subr.mxu0 0.0
    %v4102 = vand.u32 %v3712, 4294901760
    %v4103 = vsub.f32 %v3712, %v4102
    %v4104 = vand.u32 %v4103, 4294901760
    %4105 = vmatpush1.msra.mxu0 %v4104
    %4106 = vmatprep.subr.mxu0 0.0
    %4107 = vmatpush1.msra.mxu0 0.0
    %4108 = vmatprep.subr.mxu0 0.0
    %4109 = vmatpush1.msra.mxu0 0.0
    %4110 = vmatprep.subr.mxu0 0.0
    %4111 = vmatpush1.msra.mxu0 0.0
    %4112 = vmatprep.subr.mxu0 0.0
    %4113 = vmatpush1.msra.mxu0 0.0
    %4114 = vmatprep.subr.mxu0 0.0
    %4115 = vmatpush1.msra.mxu0 0.0
    %4116 = vmatprep.subr.mxu0 0.0
    %4117 = vmatpush1.msra.mxu0 0.0
    %4118 = vmatprep.subr.mxu0 0.0
    %4119 = vmatpush1.msra.mxu0 0.0
    %4120 = vmatprep.subr.mxu0 0.0
    %4121 = vmatpush1.msra.mxu0 0.0
    %4122 = vmatprep.subr.mxu0 0.0
    %4123 = vmatpush1.msra.mxu0 0.0
    %4124 = vmatprep.subr.mxu0 0.0
    %4125 = vmatpush1.msra.mxu0 0.0
    %4126 = vmatprep.subr.mxu0 0.0
    %4127 = vmatpush1.msra.mxu0 0.0
    %4128 = vmatprep.subr.mxu0 0.0
    %4129 = vmatpush1.msra.mxu0 0.0
    %4130 = vmatprep.subr.mxu0 0.0
    %4131 = vmatpush1.msra.mxu0 0.0
    %4132 = vmatprep.subr.mxu0 0.0
    %4133 = vmatpush1.msra.mxu0 0.0
    %4134 = vmatprep.subr.mxu0 0.0
    %4135 = vmatpush1.msra.mxu0 0.0
    %4136 = vmatprep.subr.mxu0 0.0
    %4137 = vmatpush1.msra.mxu0 0.0
    %4138 = vmatprep.subr.mxu0 0.0
    %4139 = vmatpush1.msra.mxu0 0.0
    %4140 = vmatprep.subr.mxu0 0.0
    %4141 = vmatpush1.msra.mxu0 0.0
    %4142 = vmatprep.subr.mxu0 0.0
    %4143 = vmatpush1.msra.mxu0 0.0
    %4144 = vmatprep.subr.mxu0 0.0
    %4145 = vmatpush1.msra.mxu0 0.0
    %4146 = vmatprep.subr.mxu0 0.0
    %4147 = vmatpush1.msra.mxu0 0.0
    %4148 = vmatprep.subr.mxu0 0.0
    %4149 = vmatpush1.msra.mxu0 0.0
    %4150 = vmatprep.subr.mxu0 0.0
    %4151 = vmatpush1.msra.mxu0 0.0
    %4152 = vmatprep.subr.mxu0 0.0
    %4153 = vmatpush1.msra.mxu0 0.0
    %4154 = vmatprep.subr.mxu0 0.0
    %4155 = vmatpush1.msra.mxu0 0.0
    %4156 = vmatprep.subr.mxu0 0.0
    %4157 = vmatpush1.msra.mxu0 0.0
    %4158 = vmatprep.subr.mxu0 0.0
    %4159 = vmatpush1.msra.mxu0 0.0
    %4160 = vmatprep.mubr.f32.mxu0 0.0
    %v4161 = vand.u32 %v3705, 4294901760
    %4162 = vmatmul.mubr.f32.gmra.mrb[0].mxu0 %v4161
    %v4163 = vpop.f32.mrb[0].mxu0
    %v4164 = vadd.f32 %v4070, %v4163
    %v4165 = vpop.f32.mrb[0].mxu0
    %4166 = vmatprep.mubr.f32.mxu0 0.0
    %v4167 = vand.u32 %v3708, 4294901760
    %4168 = vmatmul.mubr.f32.gmra.mrb[0].mxu0 %v4167
    %v4169 = vpop.f32.mrb[0].mxu0
    %v4170 = vadd.f32 %v4078, %v4169
    %v4171 = vpop.f32.mrb[0].mxu0
    %4172 = vdwg.mxu0
    %4173 = vmatprep.subr.mxu0 0.0
    %v4174 = vand.u32 %v3696, 4294901760
    %4175 = vmatpush1.msra.mxu0 %v4174
    %4176 = vmatprep.subr.mxu0 0.0
    %v4177 = vand.u32 %v3697, 4294901760
    %4178 = vmatpush1.msra.mxu0 %v4177
    %4179 = vmatprep.subr.mxu0 0.0
    %v4180 = vand.u32 %v3698, 4294901760
    %4181 = vmatpush1.msra.mxu0 %v4180
    %4182 = vmatprep.subr.mxu0 0.0
    %v4183 = vand.u32 %v3699, 4294901760
    %4184 = vmatpush1.msra.mxu0 %v4183
    %4185 = vmatprep.subr.mxu0 0.0
    %v4186 = vand.u32 %v3712, 4294901760
    %4187 = vmatpush1.msra.mxu0 %v4186
    %4188 = vmatprep.subr.mxu0 0.0
    %4189 = vmatpush1.msra.mxu0 0.0
    %4190 = vmatprep.subr.mxu0 0.0
    %4191 = vmatpush1.msra.mxu0 0.0
    %4192 = vmatprep.subr.mxu0 0.0
    %4193 = vmatpush1.msra.mxu0 0.0
    %4194 = vmatprep.subr.mxu0 0.0
    %4195 = vmatpush1.msra.mxu0 0.0
    %4196 = vmatprep.subr.mxu0 0.0
    %4197 = vmatpush1.msra.mxu0 0.0
    %4198 = vmatprep.subr.mxu0 0.0
    %4199 = vmatpush1.msra.mxu0 0.0
    %4200 = vmatprep.subr.mxu0 0.0
    %4201 = vmatpush1.msra.mxu0 0.0
    %4202 = vmatprep.subr.mxu0 0.0
    %4203 = vmatpush1.msra.mxu0 0.0
    %4204 = vmatprep.subr.mxu0 0.0
    %4205 = vmatpush1.msra.mxu0 0.0
    %4206 = vmatprep.subr.mxu0 0.0
    %4207 = vmatpush1.msra.mxu0 0.0
    %4208 = vmatprep.subr.mxu0 0.0
    %4209 = vmatpush1.msra.mxu0 0.0
    %4210 = vmatprep.subr.mxu0 0.0
    %4211 = vmatpush1.msra.mxu0 0.0
    %4212 = vmatprep.subr.mxu0 0.0
    %4213 = vmatpush1.msra.mxu0 0.0
    %4214 = vmatprep.subr.mxu0 0.0
    %4215 = vmatpush1.msra.mxu0 0.0
    %4216 = vmatprep.subr.mxu0 0.0
    %4217 = vmatpush1.msra.mxu0 0.0
    %4218 = vmatprep.subr.mxu0 0.0
    %4219 = vmatpush1.msra.mxu0 0.0
    %4220 = vmatprep.subr.mxu0 0.0
    %4221 = vmatpush1.msra.mxu0 0.0
    %4222 = vmatprep.subr.mxu0 0.0
    %4223 = vmatpush1.msra.mxu0 0.0
    %4224 = vmatprep.subr.mxu0 0.0
    %4225 = vmatpush1.msra.mxu0 0.0
    %4226 = vmatprep.subr.mxu0 0.0
    %4227 = vmatpush1.msra.mxu0 0.0
    %4228 = vmatprep.subr.mxu0 0.0
    %4229 = vmatpush1.msra.mxu0 0.0
    %4230 = vmatprep.subr.mxu0 0.0
    %4231 = vmatpush1.msra.mxu0 0.0
    %4232 = vmatprep.subr.mxu0 0.0
    %4233 = vmatpush1.msra.mxu0 0.0
    %4234 = vmatprep.subr.mxu0 0.0
    %4235 = vmatpush1.msra.mxu0 0.0
    %4236 = vmatprep.subr.mxu0 0.0
    %4237 = vmatpush1.msra.mxu0 0.0
    %4238 = vmatprep.subr.mxu0 0.0
    %4239 = vmatpush1.msra.mxu0 0.0
    %4240 = vmatprep.subr.mxu0 0.0
    %4241 = vmatpush1.msra.mxu0 0.0
    %4242 = vmatprep.mubr.f32.mxu0 0.0
    %v4243 = vand.u32 %v3705, 4294901760
    %4244 = vmatmul.mubr.f32.gmra.mrb[0].mxu0 %v4243
    %v4245 = vpop.f32.mrb[0].mxu0
    %v4246 = vadd.f32 %v4164, %v4245
    %v4247 = vpop.f32.mrb[0].mxu0
    %4248 = vmatprep.mubr.f32.mxu0 0.0
    %v4249 = vand.u32 %v3708, 4294901760
    %4250 = vmatmul.mubr.f32.gmra.mrb[0].mxu0 %v4249
    %v4251 = vpop.f32.mrb[0].mxu0
    %v4252 = vadd.f32 %v4170, %v4251
    %v4253 = vpop.f32.mrb[0].mxu0
    %4254 = vdwg.mxu0
    %v4255 = vld [vmem:[%s10] sm:$0xff]
    %v4256 = vld [vmem:[%s10 + $0x8] sm:$0xff]
    %v4258 = vsel %vm3703, %v4255, 0
    %v4261 = vsel %vm3703, %v4256, 0
    %4263 = vmatprep.subr.mxu0 0.0
    %v4264 = vand.u32 %v3696, 4294901760
    %4265 = vmatpush1.msra.mxu0 %v4264
    %4266 = vmatprep.subr.mxu0 0.0
    %v4267 = vand.u32 %v3697, 4294901760
    %4268 = vmatpush1.msra.mxu0 %v4267
    %4269 = vmatprep.subr.mxu0 0.0
    %v4270 = vand.u32 %v3698, 4294901760
    %4271 = vmatpush1.msra.mxu0 %v4270
    %4272 = vmatprep.subr.mxu0 0.0
    %v4273 = vand.u32 %v3699, 4294901760
    %4274 = vmatpush1.msra.mxu0 %v4273
    %4275 = vmatprep.subr.mxu0 0.0
    %v4276 = vand.u32 %v3712, 4294901760
    %4277 = vmatpush1.msra.mxu0 %v4276
    %4278 = vmatprep.subr.mxu0 0.0
    %4279 = vmatpush1.msra.mxu0 0.0
    %4280 = vmatprep.subr.mxu0 0.0
    %4281 = vmatpush1.msra.mxu0 0.0
    %4282 = vmatprep.subr.mxu0 0.0
    %4283 = vmatpush1.msra.mxu0 0.0
    %4284 = vmatprep.subr.mxu0 0.0
    %4285 = vmatpush1.msra.mxu0 0.0
    %4286 = vmatprep.subr.mxu0 0.0
    %4287 = vmatpush1.msra.mxu0 0.0
    %4288 = vmatprep.subr.mxu0 0.0
    %4289 = vmatpush1.msra.mxu0 0.0
    %4290 = vmatprep.subr.mxu0 0.0
    %4291 = vmatpush1.msra.mxu0 0.0
    %4292 = vmatprep.subr.mxu0 0.0
    %4293 = vmatpush1.msra.mxu0 0.0
    %4294 = vmatprep.subr.mxu0 0.0
    %4295 = vmatpush1.msra.mxu0 0.0
    %4296 = vmatprep.subr.mxu0 0.0
    %4297 = vmatpush1.msra.mxu0 0.0
    %4298 = vmatprep.subr.mxu0 0.0
    %4299 = vmatpush1.msra.mxu0 0.0
    %4300 = vmatprep.subr.mxu0 0.0
    %4301 = vmatpush1.msra.mxu0 0.0
    %4302 = vmatprep.subr.mxu0 0.0
    %4303 = vmatpush1.msra.mxu0 0.0
    %4304 = vmatprep.subr.mxu0 0.0
    %4305 = vmatpush1.msra.mxu0 0.0
    %4306 = vmatprep.subr.mxu0 0.0
    %4307 = vmatpush1.msra.mxu0 0.0
    %4308 = vmatprep.subr.mxu0 0.0
    %4309 = vmatpush1.msra.mxu0 0.0
    %4310 = vmatprep.subr.mxu0 0.0
    %4311 = vmatpush1.msra.mxu0 0.0
    %4312 = vmatprep.subr.mxu0 0.0
    %4313 = vmatpush1.msra.mxu0 0.0
    %4314 = vmatprep.subr.mxu0 0.0
    %4315 = vmatpush1.msra.mxu0 0.0
    %4316 = vmatprep.subr.mxu0 0.0
    %4317 = vmatpush1.msra.mxu0 0.0
    %4318 = vmatprep.subr.mxu0 0.0
    %4319 = vmatpush1.msra.mxu0 0.0
    %4320 = vmatprep.subr.mxu0 0.0
    %4321 = vmatpush1.msra.mxu0 0.0
    %4322 = vmatprep.subr.mxu0 0.0
    %4323 = vmatpush1.msra.mxu0 0.0
    %4324 = vmatprep.subr.mxu0 0.0
    %4325 = vmatpush1.msra.mxu0 0.0
    %4326 = vmatprep.subr.mxu0 0.0
    %4327 = vmatpush1.msra.mxu0 0.0
    %4328 = vmatprep.subr.mxu0 0.0
    %4329 = vmatpush1.msra.mxu0 0.0
    %4330 = vmatprep.subr.mxu0 0.0
    %4331 = vmatpush1.msra.mxu0 0.0
    %4332 = vmatprep.mubr.f32.mxu0 0.0
    %v4333 = vand.u32 %v4258, 4294901760
    %v4334 = vsub.f32 %v4258, %v4333
    %v4335 = vand.u32 %v4334, 4294901760
    %v4336 = vsub.f32 %v4334, %v4335
    %v4337 = vand.u32 %v4336, 4294901760
    %4338 = vmatmul.mubr.f32.gmra.mrb[0].mxu0 %v4337
    %v4339 = vpop.f32.mrb[0].mxu0
    %v4340 = vadd.f32 0.0, %v4339
    %v4341 = vpop.f32.mrb[0].mxu0
    %4342 = vmatprep.mubr.f32.mxu0 0.0
    %v4343 = vand.u32 %v4261, 4294901760
    %v4344 = vsub.f32 %v4261, %v4343
    %v4345 = vand.u32 %v4344, 4294901760
    %v4346 = vsub.f32 %v4344, %v4345
    %v4347 = vand.u32 %v4346, 4294901760
    %4348 = vmatmul.mubr.f32.gmra.mrb[0].mxu0 %v4347
    %v4349 = vpop.f32.mrb[0].mxu0
    %v4350 = vadd.f32 0.0, %v4349
    %v4351 = vpop.f32.mrb[0].mxu0
    %4352 = vdwg.mxu0
    %4353 = vmatprep.subr.mxu0 0.0
    %v4354 = vand.u32 %v3696, 4294901760
    %v4355 = vsub.f32 %v3696, %v4354
    %v4356 = vand.u32 %v4355, 4294901760
    %v4357 = vsub.f32 %v4355, %v4356
    %v4358 = vand.u32 %v4357, 4294901760
    %4359 = vmatpush1.msra.mxu0 %v4358
    %4360 = vmatprep.subr.mxu0 0.0
    %v4361 = vand.u32 %v3697, 4294901760
    %v4362 = vsub.f32 %v3697, %v4361
    %v4363 = vand.u32 %v4362, 4294901760
    %v4364 = vsub.f32 %v4362, %v4363
    %v4365 = vand.u32 %v4364, 4294901760
    %4366 = vmatpush1.msra.mxu0 %v4365
    %4367 = vmatprep.subr.mxu0 0.0
    %v4368 = vand.u32 %v3698, 4294901760
    %v4369 = vsub.f32 %v3698, %v4368
    %v4370 = vand.u32 %v4369, 4294901760
    %v4371 = vsub.f32 %v4369, %v4370
    %v4372 = vand.u32 %v4371, 4294901760
    %4373 = vmatpush1.msra.mxu0 %v4372
    %4374 = vmatprep.subr.mxu0 0.0
    %v4375 = vand.u32 %v3699, 4294901760
    %v4376 = vsub.f32 %v3699, %v4375
    %v4377 = vand.u32 %v4376, 4294901760
    %v4378 = vsub.f32 %v4376, %v4377
    %v4379 = vand.u32 %v4378, 4294901760
    %4380 = vmatpush1.msra.mxu0 %v4379
    %4381 = vmatprep.subr.mxu0 0.0
    %v4382 = vand.u32 %v3712, 4294901760
    %v4383 = vsub.f32 %v3712, %v4382
    %v4384 = vand.u32 %v4383, 4294901760
    %v4385 = vsub.f32 %v4383, %v4384
    %v4386 = vand.u32 %v4385, 4294901760
    %4387 = vmatpush1.msra.mxu0 %v4386
    %4388 = vmatprep.subr.mxu0 0.0
    %4389 = vmatpush1.msra.mxu0 0.0
    %4390 = vmatprep.subr.mxu0 0.0
    %4391 = vmatpush1.msra.mxu0 0.0
    %4392 = vmatprep.subr.mxu0 0.0
    %4393 = vmatpush1.msra.mxu0 0.0
    %4394 = vmatprep.subr.mxu0 0.0
    %4395 = vmatpush1.msra.mxu0 0.0
    %4396 = vmatprep.subr.mxu0 0.0
    %4397 = vmatpush1.msra.mxu0 0.0
    %4398 = vmatprep.subr.mxu0 0.0
    %4399 = vmatpush1.msra.mxu0 0.0
    %4400 = vmatprep.subr.mxu0 0.0
    %4401 = vmatpush1.msra.mxu0 0.0
    %4402 = vmatprep.subr.mxu0 0.0
    %4403 = vmatpush1.msra.mxu0 0.0
    %4404 = vmatprep.subr.mxu0 0.0
    %4405 = vmatpush1.msra.mxu0 0.0
    %4406 = vmatprep.subr.mxu0 0.0
    %4407 = vmatpush1.msra.mxu0 0.0
    %4408 = vmatprep.subr.mxu0 0.0
    %4409 = vmatpush1.msra.mxu0 0.0
    %4410 = vmatprep.subr.mxu0 0.0
    %4411 = vmatpush1.msra.mxu0 0.0
    %4412 = vmatprep.subr.mxu0 0.0
    %4413 = vmatpush1.msra.mxu0 0.0
    %4414 = vmatprep.subr.mxu0 0.0
    %4415 = vmatpush1.msra.mxu0 0.0
    %4416 = vmatprep.subr.mxu0 0.0
    %4417 = vmatpush1.msra.mxu0 0.0
    %4418 = vmatprep.subr.mxu0 0.0
    %4419 = vmatpush1.msra.mxu0 0.0
    %4420 = vmatprep.subr.mxu0 0.0
    %4421 = vmatpush1.msra.mxu0 0.0
    %4422 = vmatprep.subr.mxu0 0.0
    %4423 = vmatpush1.msra.mxu0 0.0
    %4424 = vmatprep.subr.mxu0 0.0
    %4425 = vmatpush1.msra.mxu0 0.0
    %4426 = vmatprep.subr.mxu0 0.0
    %4427 = vmatpush1.msra.mxu0 0.0
    %4428 = vmatprep.subr.mxu0 0.0
    %4429 = vmatpush1.msra.mxu0 0.0
    %4430 = vmatprep.subr.mxu0 0.0
    %4431 = vmatpush1.msra.mxu0 0.0
    %4432 = vmatprep.subr.mxu0 0.0
    %4433 = vmatpush1.msra.mxu0 0.0
    %4434 = vmatprep.subr.mxu0 0.0
    %4435 = vmatpush1.msra.mxu0 0.0
    %4436 = vmatprep.subr.mxu0 0.0
    %4437 = vmatpush1.msra.mxu0 0.0
    %4438 = vmatprep.subr.mxu0 0.0
    %4439 = vmatpush1.msra.mxu0 0.0
    %4440 = vmatprep.subr.mxu0 0.0
    %4441 = vmatpush1.msra.mxu0 0.0
    %4442 = vmatprep.mubr.f32.mxu0 0.0
    %v4443 = vand.u32 %v4258, 4294901760
    %4444 = vmatmul.mubr.f32.gmra.mrb[0].mxu0 %v4443
    %v4445 = vpop.f32.mrb[0].mxu0
    %v4446 = vadd.f32 %v4340, %v4445
    %v4447 = vpop.f32.mrb[0].mxu0
    %4448 = vmatprep.mubr.f32.mxu0 0.0
    %v4449 = vand.u32 %v4261, 4294901760
    %4450 = vmatmul.mubr.f32.gmra.mrb[0].mxu0 %v4449
    %v4451 = vpop.f32.mrb[0].mxu0
    %v4452 = vadd.f32 %v4350, %v4451
    %v4453 = vpop.f32.mrb[0].mxu0
    %4454 = vdwg.mxu0
    %4455 = vmatprep.subr.mxu0 0.0
    %v4456 = vand.u32 %v3696, 4294901760
    %v4457 = vsub.f32 %v3696, %v4456
    %4458 = vmatpush1.msra.mxu0 %v4457
    %4459 = vmatprep.subr.mxu0 0.0
    %v4460 = vand.u32 %v3697, 4294901760
    %v4461 = vsub.f32 %v3697, %v4460
    %4462 = vmatpush1.msra.mxu0 %v4461
    %4463 = vmatprep.subr.mxu0 0.0
    %v4464 = vand.u32 %v3698, 4294901760
    %v4465 = vsub.f32 %v3698, %v4464
    %4466 = vmatpush1.msra.mxu0 %v4465
    %4467 = vmatprep.subr.mxu0 0.0
    %v4468 = vand.u32 %v3699, 4294901760
    %v4469 = vsub.f32 %v3699, %v4468
    %4470 = vmatpush1.msra.mxu0 %v4469
    %4471 = vmatprep.subr.mxu0 0.0
    %v4472 = vand.u32 %v3712, 4294901760
    %v4473 = vsub.f32 %v3712, %v4472
    %4474 = vmatpush1.msra.mxu0 %v4473
    %4475 = vmatprep.subr.mxu0 0.0
    %4476 = vmatpush1.msra.mxu0 0.0
    %4477 = vmatprep.subr.mxu0 0.0
    %4478 = vmatpush1.msra.mxu0 0.0
    %4479 = vmatprep.subr.mxu0 0.0
    %4480 = vmatpush1.msra.mxu0 0.0
    %4481 = vmatprep.subr.mxu0 0.0
    %4482 = vmatpush1.msra.mxu0 0.0
    %4483 = vmatprep.subr.mxu0 0.0
    %4484 = vmatpush1.msra.mxu0 0.0
    %4485 = vmatprep.subr.mxu0 0.0
    %4486 = vmatpush1.msra.mxu0 0.0
    %4487 = vmatprep.subr.mxu0 0.0
    %4488 = vmatpush1.msra.mxu0 0.0
    %4489 = vmatprep.subr.mxu0 0.0
    %4490 = vmatpush1.msra.mxu0 0.0
    %4491 = vmatprep.subr.mxu0 0.0
    %4492 = vmatpush1.msra.mxu0 0.0
    %4493 = vmatprep.subr.mxu0 0.0
    %4494 = vmatpush1.msra.mxu0 0.0
    %4495 = vmatprep.subr.mxu0 0.0
    %4496 = vmatpush1.msra.mxu0 0.0
    %4497 = vmatprep.subr.mxu0 0.0
    %4498 = vmatpush1.msra.mxu0 0.0
    %4499 = vmatprep.subr.mxu0 0.0
    %4500 = vmatpush1.msra.mxu0 0.0
    %4501 = vmatprep.subr.mxu0 0.0
    %4502 = vmatpush1.msra.mxu0 0.0
    %4503 = vmatprep.subr.mxu0 0.0
    %4504 = vmatpush1.msra.mxu0 0.0
    %4505 = vmatprep.subr.mxu0 0.0
    %4506 = vmatpush1.msra.mxu0 0.0
    %4507 = vmatprep.subr.mxu0 0.0
    %4508 = vmatpush1.msra.mxu0 0.0
    %4509 = vmatprep.subr.mxu0 0.0
    %4510 = vmatpush1.msra.mxu0 0.0
    %4511 = vmatprep.subr.mxu0 0.0
    %4512 = vmatpush1.msra.mxu0 0.0
    %4513 = vmatprep.subr.mxu0 0.0
    %4514 = vmatpush1.msra.mxu0 0.0
    %4515 = vmatprep.subr.mxu0 0.0
    %4516 = vmatpush1.msra.mxu0 0.0
    %4517 = vmatprep.subr.mxu0 0.0
    %4518 = vmatpush1.msra.mxu0 0.0
    %4519 = vmatprep.subr.mxu0 0.0
    %4520 = vmatpush1.msra.mxu0 0.0
    %4521 = vmatprep.subr.mxu0 0.0
    %4522 = vmatpush1.msra.mxu0 0.0
    %4523 = vmatprep.subr.mxu0 0.0
    %4524 = vmatpush1.msra.mxu0 0.0
    %4525 = vmatprep.subr.mxu0 0.0
    %4526 = vmatpush1.msra.mxu0 0.0
    %4527 = vmatprep.subr.mxu0 0.0
    %4528 = vmatpush1.msra.mxu0 0.0
    %4529 = vmatprep.mubr.f32.mxu0 0.0
    %v4530 = vand.u32 %v4258, 4294901760
    %v4531 = vsub.f32 %v4258, %v4530
    %4532 = vmatmul.mubr.f32.gmra.mrb[0].mxu0 %v4531
    %v4533 = vpop.f32.mrb[0].mxu0
    %v4534 = vadd.f32 %v4446, %v4533
    %v4535 = vpop.f32.mrb[0].mxu0
    %4536 = vmatprep.mubr.f32.mxu0 0.0
    %v4537 = vand.u32 %v4261, 4294901760
    %v4538 = vsub.f32 %v4261, %v4537
    %4539 = vmatmul.mubr.f32.gmra.mrb[0].mxu0 %v4538
    %v4540 = vpop.f32.mrb[0].mxu0
    %v4541 = vadd.f32 %v4452, %v4540
    %v4542 = vpop.f32.mrb[0].mxu0
    %4543 = vdwg.mxu0
    %4544 = vmatprep.subr.mxu0 0.0
    %v4545 = vand.u32 %v3696, 4294901760
    %4546 = vmatpush1.msra.mxu0 %v4545
    %4547 = vmatprep.subr.mxu0 0.0
    %v4548 = vand.u32 %v3697, 4294901760
    %4549 = vmatpush1.msra.mxu0 %v4548
    %4550 = vmatprep.subr.mxu0 0.0
    %v4551 = vand.u32 %v3698, 4294901760
    %4552 = vmatpush1.msra.mxu0 %v4551
    %4553 = vmatprep.subr.mxu0 0.0
    %v4554 = vand.u32 %v3699, 4294901760
    %4555 = vmatpush1.msra.mxu0 %v4554
    %4556 = vmatprep.subr.mxu0 0.0
    %v4557 = vand.u32 %v3712, 4294901760
    %4558 = vmatpush1.msra.mxu0 %v4557
    %4559 = vmatprep.subr.mxu0 0.0
    %4560 = vmatpush1.msra.mxu0 0.0
    %4561 = vmatprep.subr.mxu0 0.0
    %4562 = vmatpush1.msra.mxu0 0.0
    %4563 = vmatprep.subr.mxu0 0.0
    %4564 = vmatpush1.msra.mxu0 0.0
    %4565 = vmatprep.subr.mxu0 0.0
    %4566 = vmatpush1.msra.mxu0 0.0
    %4567 = vmatprep.subr.mxu0 0.0
    %4568 = vmatpush1.msra.mxu0 0.0
    %4569 = vmatprep.subr.mxu0 0.0
    %4570 = vmatpush1.msra.mxu0 0.0
    %4571 = vmatprep.subr.mxu0 0.0
    %4572 = vmatpush1.msra.mxu0 0.0
    %4573 = vmatprep.subr.mxu0 0.0
    %4574 = vmatpush1.msra.mxu0 0.0
    %4575 = vmatprep.subr.mxu0 0.0
    %4576 = vmatpush1.msra.mxu0 0.0
    %4577 = vmatprep.subr.mxu0 0.0
    %4578 = vmatpush1.msra.mxu0 0.0
    %4579 = vmatprep.subr.mxu0 0.0
    %4580 = vmatpush1.msra.mxu0 0.0
    %4581 = vmatprep.subr.mxu0 0.0
    %4582 = vmatpush1.msra.mxu0 0.0
    %4583 = vmatprep.subr.mxu0 0.0
    %4584 = vmatpush1.msra.mxu0 0.0
    %4585 = vmatprep.subr.mxu0 0.0
    %4586 = vmatpush1.msra.mxu0 0.0
    %4587 = vmatprep.subr.mxu0 0.0
    %4588 = vmatpush1.msra.mxu0 0.0
    %4589 = vmatprep.subr.mxu0 0.0
    %4590 = vmatpush1.msra.mxu0 0.0
    %4591 = vmatprep.subr.mxu0 0.0
    %4592 = vmatpush1.msra.mxu0 0.0
    %4593 = vmatprep.subr.mxu0 0.0
    %4594 = vmatpush1.msra.mxu0 0.0
    %4595 = vmatprep.subr.mxu0 0.0
    %4596 = vmatpush1.msra.mxu0 0.0
    %4597 = vmatprep.subr.mxu0 0.0
    %4598 = vmatpush1.msra.mxu0 0.0
    %4599 = vmatprep.subr.mxu0 0.0
    %4600 = vmatpush1.msra.mxu0 0.0
    %4601 = vmatprep.subr.mxu0 0.0
    %4602 = vmatpush1.msra.mxu0 0.0
    %4603 = vmatprep.subr.mxu0 0.0
    %4604 = vmatpush1.msra.mxu0 0.0
    %4605 = vmatprep.subr.mxu0 0.0
    %4606 = vmatpush1.msra.mxu0 0.0
    %4607 = vmatprep.subr.mxu0 0.0
    %4608 = vmatpush1.msra.mxu0 0.0
    %4609 = vmatprep.subr.mxu0 0.0
    %4610 = vmatpush1.msra.mxu0 0.0
    %4611 = vmatprep.subr.mxu0 0.0
    %4612 = vmatpush1.msra.mxu0 0.0
    %4613 = vmatprep.mubr.f32.mxu0 0.0
    %v4614 = vand.u32 %v4258, 4294901760
    %v4615 = vsub.f32 %v4258, %v4614
    %v4616 = vand.u32 %v4615, 4294901760
    %4617 = vmatmul.mubr.f32.gmra.mrb[0].mxu0 %v4616
    %v4618 = vpop.f32.mrb[0].mxu0
    %v4619 = vadd.f32 %v4534, %v4618
    %v4620 = vpop.f32.mrb[0].mxu0
    %4621 = vmatprep.mubr.f32.mxu0 0.0
    %v4622 = vand.u32 %v4261, 4294901760
    %v4623 = vsub.f32 %v4261, %v4622
    %v4624 = vand.u32 %v4623, 4294901760
    %4625 = vmatmul.mubr.f32.gmra.mrb[0].mxu0 %v4624
    %v4626 = vpop.f32.mrb[0].mxu0
    %v4627 = vadd.f32 %v4541, %v4626
    %v4628 = vpop.f32.mrb[0].mxu0
    %4629 = vdwg.mxu0
    %4630 = vmatprep.subr.mxu0 0.0
    %v4631 = vand.u32 %v3696, 4294901760
    %v4632 = vsub.f32 %v3696, %v4631
    %v4633 = vand.u32 %v4632, 4294901760
    %4634 = vmatpush1.msra.mxu0 %v4633
    %4635 = vmatprep.subr.mxu0 0.0
    %v4636 = vand.u32 %v3697, 4294901760
    %v4637 = vsub.f32 %v3697, %v4636
    %v4638 = vand.u32 %v4637, 4294901760
    %4639 = vmatpush1.msra.mxu0 %v4638
    %4640 = vmatprep.subr.mxu0 0.0
    %v4641 = vand.u32 %v3698, 4294901760
    %v4642 = vsub.f32 %v3698, %v4641
    %v4643 = vand.u32 %v4642, 4294901760
    %4644 = vmatpush1.msra.mxu0 %v4643
    %4645 = vmatprep.subr.mxu0 0.0
    %v4646 = vand.u32 %v3699, 4294901760
    %v4647 = vsub.f32 %v3699, %v4646
    %v4648 = vand.u32 %v4647, 4294901760
    %4649 = vmatpush1.msra.mxu0 %v4648
    %4650 = vmatprep.subr.mxu0 0.0
    %v4651 = vand.u32 %v3712, 4294901760
    %v4652 = vsub.f32 %v3712, %v4651
    %v4653 = vand.u32 %v4652, 4294901760
    %4654 = vmatpush1.msra.mxu0 %v4653
    %4655 = vmatprep.subr.mxu0 0.0
    %4656 = vmatpush1.msra.mxu0 0.0
    %4657 = vmatprep.subr.mxu0 0.0
    %4658 = vmatpush1.msra.mxu0 0.0
    %4659 = vmatprep.subr.mxu0 0.0
    %4660 = vmatpush1.msra.mxu0 0.0
    %4661 = vmatprep.subr.mxu0 0.0
    %4662 = vmatpush1.msra.mxu0 0.0
    %4663 = vmatprep.subr.mxu0 0.0
    %4664 = vmatpush1.msra.mxu0 0.0
    %4665 = vmatprep.subr.mxu0 0.0
    %4666 = vmatpush1.msra.mxu0 0.0
    %4667 = vmatprep.subr.mxu0 0.0
    %4668 = vmatpush1.msra.mxu0 0.0
    %4669 = vmatprep.subr.mxu0 0.0
    %4670 = vmatpush1.msra.mxu0 0.0
    %4671 = vmatprep.subr.mxu0 0.0
    %4672 = vmatpush1.msra.mxu0 0.0
    %4673 = vmatprep.subr.mxu0 0.0
    %4674 = vmatpush1.msra.mxu0 0.0
    %4675 = vmatprep.subr.mxu0 0.0
    %4676 = vmatpush1.msra.mxu0 0.0
    %4677 = vmatprep.subr.mxu0 0.0
    %4678 = vmatpush1.msra.mxu0 0.0
    %4679 = vmatprep.subr.mxu0 0.0
    %4680 = vmatpush1.msra.mxu0 0.0
    %4681 = vmatprep.subr.mxu0 0.0
    %4682 = vmatpush1.msra.mxu0 0.0
    %4683 = vmatprep.subr.mxu0 0.0
    %4684 = vmatpush1.msra.mxu0 0.0
    %4685 = vmatprep.subr.mxu0 0.0
    %4686 = vmatpush1.msra.mxu0 0.0
    %4687 = vmatprep.subr.mxu0 0.0
    %4688 = vmatpush1.msra.mxu0 0.0
    %4689 = vmatprep.subr.mxu0 0.0
    %4690 = vmatpush1.msra.mxu0 0.0
    %4691 = vmatprep.subr.mxu0 0.0
    %4692 = vmatpush1.msra.mxu0 0.0
    %4693 = vmatprep.subr.mxu0 0.0
    %4694 = vmatpush1.msra.mxu0 0.0
    %4695 = vmatprep.subr.mxu0 0.0
    %4696 = vmatpush1.msra.mxu0 0.0
    %4697 = vmatprep.subr.mxu0 0.0
    %4698 = vmatpush1.msra.mxu0 0.0
    %4699 = vmatprep.subr.mxu0 0.0
    %4700 = vmatpush1.msra.mxu0 0.0
    %4701 = vmatprep.subr.mxu0 0.0
    %4702 = vmatpush1.msra.mxu0 0.0
    %4703 = vmatprep.subr.mxu0 0.0
    %4704 = vmatpush1.msra.mxu0 0.0
    %4705 = vmatprep.subr.mxu0 0.0
    %4706 = vmatpush1.msra.mxu0 0.0
    %4707 = vmatprep.subr.mxu0 0.0
    %4708 = vmatpush1.msra.mxu0 0.0
    %4709 = vmatprep.mubr.f32.mxu0 0.0
    %v4710 = vand.u32 %v4258, 4294901760
    %4711 = vmatmul.mubr.f32.gmra.mrb[0].mxu0 %v4710
    %v4712 = vpop.f32.mrb[0].mxu0
    %v4713 = vadd.f32 %v4619, %v4712
    %v4714 = vpop.f32.mrb[0].mxu0
    %4715 = vmatprep.mubr.f32.mxu0 0.0
    %v4716 = vand.u32 %v4261, 4294901760
    %4717 = vmatmul.mubr.f32.gmra.mrb[0].mxu0 %v4716
    %v4718 = vpop.f32.mrb[0].mxu0
    %v4719 = vadd.f32 %v4627, %v4718
    %v4720 = vpop.f32.mrb[0].mxu0
    %4721 = vdwg.mxu0
    %4722 = vmatprep.subr.mxu0 0.0
    %v4723 = vand.u32 %v3696, 4294901760
    %4724 = vmatpush1.msra.mxu0 %v4723
    %4725 = vmatprep.subr.mxu0 0.0
    %v4726 = vand.u32 %v3697, 4294901760
    %4727 = vmatpush1.msra.mxu0 %v4726
    %4728 = vmatprep.subr.mxu0 0.0
    %v4729 = vand.u32 %v3698, 4294901760
    %4730 = vmatpush1.msra.mxu0 %v4729
    %4731 = vmatprep.subr.mxu0 0.0
    %v4732 = vand.u32 %v3699, 4294901760
    %4733 = vmatpush1.msra.mxu0 %v4732
    %4734 = vmatprep.subr.mxu0 0.0
    %v4735 = vand.u32 %v3712, 4294901760
    %4736 = vmatpush1.msra.mxu0 %v4735
    %4737 = vmatprep.subr.mxu0 0.0
    %4738 = vmatpush1.msra.mxu0 0.0
    %4739 = vmatprep.subr.mxu0 0.0
    %4740 = vmatpush1.msra.mxu0 0.0
    %4741 = vmatprep.subr.mxu0 0.0
    %4742 = vmatpush1.msra.mxu0 0.0
    %4743 = vmatprep.subr.mxu0 0.0
    %4744 = vmatpush1.msra.mxu0 0.0
    %4745 = vmatprep.subr.mxu0 0.0
    %4746 = vmatpush1.msra.mxu0 0.0
    %4747 = vmatprep.subr.mxu0 0.0
    %4748 = vmatpush1.msra.mxu0 0.0
    %4749 = vmatprep.subr.mxu0 0.0
    %4750 = vmatpush1.msra.mxu0 0.0
    %4751 = vmatprep.subr.mxu0 0.0
    %4752 = vmatpush1.msra.mxu0 0.0
    %4753 = vmatprep.subr.mxu0 0.0
    %4754 = vmatpush1.msra.mxu0 0.0
    %4755 = vmatprep.subr.mxu0 0.0
    %4756 = vmatpush1.msra.mxu0 0.0
    %4757 = vmatprep.subr.mxu0 0.0
    %4758 = vmatpush1.msra.mxu0 0.0
    %4759 = vmatprep.subr.mxu0 0.0
    %4760 = vmatpush1.msra.mxu0 0.0
    %4761 = vmatprep.subr.mxu0 0.0
    %4762 = vmatpush1.msra.mxu0 0.0
    %4763 = vmatprep.subr.mxu0 0.0
    %4764 = vmatpush1.msra.mxu0 0.0
    %4765 = vmatprep.subr.mxu0 0.0
    %4766 = vmatpush1.msra.mxu0 0.0
    %4767 = vmatprep.subr.mxu0 0.0
    %4768 = vmatpush1.msra.mxu0 0.0
    %4769 = vmatprep.subr.mxu0 0.0
    %4770 = vmatpush1.msra.mxu0 0.0
    %4771 = vmatprep.subr.mxu0 0.0
    %4772 = vmatpush1.msra.mxu0 0.0
    %4773 = vmatprep.subr.mxu0 0.0
    %4774 = vmatpush1.msra.mxu0 0.0
    %4775 = vmatprep.subr.mxu0 0.0
    %4776 = vmatpush1.msra.mxu0 0.0
    %4777 = vmatprep.subr.mxu0 0.0
    %4778 = vmatpush1.msra.mxu0 0.0
    %4779 = vmatprep.subr.mxu0 0.0
    %4780 = vmatpush1.msra.mxu0 0.0
    %4781 = vmatprep.subr.mxu0 0.0
    %4782 = vmatpush1.msra.mxu0 0.0
    %4783 = vmatprep.subr.mxu0 0.0
    %4784 = vmatpush1.msra.mxu0 0.0
    %4785 = vmatprep.subr.mxu0 0.0
    %4786 = vmatpush1.msra.mxu0 0.0
    %4787 = vmatprep.subr.mxu0 0.0
    %4788 = vmatpush1.msra.mxu0 0.0
    %4789 = vmatprep.subr.mxu0 0.0
    %4790 = vmatpush1.msra.mxu0 0.0
    %4791 = vmatprep.mubr.f32.mxu0 0.0
    %v4792 = vand.u32 %v4258, 4294901760
    %4793 = vmatmul.mubr.f32.gmra.mrb[0].mxu0 %v4792
    %v4794 = vpop.f32.mrb[0].mxu0
    %v4795 = vadd.f32 %v4713, %v4794
    %v4796 = vpop.f32.mrb[0].mxu0
    %4797 = vmatprep.mubr.f32.mxu0 0.0
    %v4798 = vand.u32 %v4261, 4294901760
    %4799 = vmatmul.mubr.f32.gmra.mrb[0].mxu0 %v4798
    %v4800 = vpop.f32.mrb[0].mxu0
    %v4801 = vadd.f32 %v4719, %v4800
    %v4802 = vpop.f32.mrb[0].mxu0
    %4803 = vdwg.mxu0
    %v4804 = vmax.f32 %v4246, %v4795
    %v4805 = vmax.f32 %v4252, %v4801
    %v4806 = vld [vmem:[%s11] sm:$0xff]
    %v4807 = vld [vmem:[%s11 + $0x8] sm:$0x1]
    %vm4808 = vcmask 72704
    %v4810 = vsel %vm4808, %v4804, 0
    %v4813 = vsel %vm4808, %v4805, 0
    %vm4815 = vcmask 1040384
    %v4817 = vsel %vm4815, %v4807, 0
    %4819 = vmatprep.subr.mxu0 0.0
    %v4820 = vand.u32 %v4806, 4294901760
    %4821 = vmatpush1.msra.mxu0 %v4820
    %4822 = vmatprep.subr.mxu0 0.0
    %v4823 = vand.u32 %v4817, 4294901760
    %4824 = vmatpush1.msra.mxu0 %v4823
    %4825 = vmatprep.subr.mxu0 0.0
    %4826 = vmatpush1.msra.mxu0 0.0
    %4827 = vmatprep.subr.mxu0 0.0
    %4828 = vmatpush1.msra.mxu0 0.0
    %4829 = vmatprep.subr.mxu0 0.0
    %4830 = vmatpush1.msra.mxu0 0.0
    %4831 = vmatprep.subr.mxu0 0.0
    %4832 = vmatpush1.msra.mxu0 0.0
    %4833 = vmatprep.subr.mxu0 0.0
    %4834 = vmatpush1.msra.mxu0 0.0
    %4835 = vmatprep.subr.mxu0 0.0
    %4836 = vmatpush1.msra.mxu0 0.0
    %4837 = vmatprep.subr.mxu0 0.0
    %4838 = vmatpush1.msra.mxu0 0.0
    %4839 = vmatprep.subr.mxu0 0.0
    %4840 = vmatpush1.msra.mxu0 0.0
    %4841 = vmatprep.subr.mxu0 0.0
    %4842 = vmatpush1.msra.mxu0 0.0
    %4843 = vmatprep.subr.mxu0 0.0
    %4844 = vmatpush1.msra.mxu0 0.0
    %4845 = vmatprep.subr.mxu0 0.0
    %4846 = vmatpush1.msra.mxu0 0.0
    %4847 = vmatprep.subr.mxu0 0.0
    %4848 = vmatpush1.msra.mxu0 0.0
    %4849 = vmatprep.subr.mxu0 0.0
    %4850 = vmatpush1.msra.mxu0 0.0
    %4851 = vmatprep.subr.mxu0 0.0
    %4852 = vmatpush1.msra.mxu0 0.0
    %4853 = vmatprep.subr.mxu0 0.0
    %4854 = vmatpush1.msra.mxu0 0.0
    %4855 = vmatprep.subr.mxu0 0.0
    %4856 = vmatpush1.msra.mxu0 0.0
    %4857 = vmatprep.subr.mxu0 0.0
    %4858 = vmatpush1.msra.mxu0 0.0
    %4859 = vmatprep.subr.mxu0 0.0
    %4860 = vmatpush1.msra.mxu0 0.0
    %4861 = vmatprep.subr.mxu0 0.0
    %4862 = vmatpush1.msra.mxu0 0.0
    %4863 = vmatprep.subr.mxu0 0.0
    %4864 = vmatpush1.msra.mxu0 0.0
    %4865 = vmatprep.subr.mxu0 0.0
    %4866 = vmatpush1.msra.mxu0 0.0
    %4867 = vmatprep.subr.mxu0 0.0
    %4868 = vmatpush1.msra.mxu0 0.0
    %4869 = vmatprep.subr.mxu0 0.0
    %4870 = vmatpush1.msra.mxu0 0.0
    %4871 = vmatprep.subr.mxu0 0.0
    %4872 = vmatpush1.msra.mxu0 0.0
    %4873 = vmatprep.subr.mxu0 0.0
    %4874 = vmatpush1.msra.mxu0 0.0
    %4875 = vmatprep.subr.mxu0 0.0
    %4876 = vmatpush1.msra.mxu0 0.0
    %4877 = vmatprep.subr.mxu0 0.0
    %4878 = vmatpush1.msra.mxu0 0.0
    %4879 = vmatprep.subr.mxu0 0.0
    %4880 = vmatpush1.msra.mxu0 0.0
    %4881 = vmatprep.subr.mxu0 0.0
    %4882 = vmatpush1.msra.mxu0 0.0
    %4883 = vmatprep.subr.mxu0 0.0
    %4884 = vmatpush1.msra.mxu0 0.0
    %4885 = vmatprep.mubr.f32.mxu0 0.0
    %v4886 = vand.u32 %v4810, 4294901760
    %v4887 = vsub.f32 %v4810, %v4886
    %v4888 = vand.u32 %v4887, 4294901760
    %v4889 = vsub.f32 %v4887, %v4888
    %v4890 = vand.u32 %v4889, 4294901760
    %4891 = vmatmul.mubr.f32.gmra.mrb[0].mxu0 %v4890
    %v4892 = vpop.f32.mrb[0].mxu0
    %v4893 = vadd.f32 0.0, %v4892
    %v4894 = vpop.f32.mrb[0].mxu0
    %4895 = vmatprep.mubr.f32.mxu0 0.0
    %v4896 = vand.u32 %v4813, 4294901760
    %v4897 = vsub.f32 %v4813, %v4896
    %v4898 = vand.u32 %v4897, 4294901760
    %v4899 = vsub.f32 %v4897, %v4898
    %v4900 = vand.u32 %v4899, 4294901760
    %4901 = vmatmul.mubr.f32.gmra.mrb[0].mxu0 %v4900
    %v4902 = vpop.f32.mrb[0].mxu0
    %v4903 = vadd.f32 0.0, %v4902
    %v4904 = vpop.f32.mrb[0].mxu0
    %4905 = vdwg.mxu0
    %4906 = vmatprep.subr.mxu0 0.0
    %v4907 = vand.u32 %v4806, 4294901760
    %v4908 = vsub.f32 %v4806, %v4907
    %v4909 = vand.u32 %v4908, 4294901760
    %v4910 = vsub.f32 %v4908, %v4909
    %v4911 = vand.u32 %v4910, 4294901760
    %4912 = vmatpush1.msra.mxu0 %v4911
    %4913 = vmatprep.subr.mxu0 0.0
    %v4914 = vand.u32 %v4817, 4294901760
    %v4915 = vsub.f32 %v4817, %v4914
    %v4916 = vand.u32 %v4915, 4294901760
    %v4917 = vsub.f32 %v4915, %v4916
    %v4918 = vand.u32 %v4917, 4294901760
    %4919 = vmatpush1.msra.mxu0 %v4918
    %4920 = vmatprep.subr.mxu0 0.0
    %4921 = vmatpush1.msra.mxu0 0.0
    %4922 = vmatprep.subr.mxu0 0.0
    %4923 = vmatpush1.msra.mxu0 0.0
    %4924 = vmatprep.subr.mxu0 0.0
    %4925 = vmatpush1.msra.mxu0 0.0
    %4926 = vmatprep.subr.mxu0 0.0
    %4927 = vmatpush1.msra.mxu0 0.0
    %4928 = vmatprep.subr.mxu0 0.0
    %4929 = vmatpush1.msra.mxu0 0.0
    %4930 = vmatprep.subr.mxu0 0.0
    %4931 = vmatpush1.msra.mxu0 0.0
    %4932 = vmatprep.subr.mxu0 0.0
    %4933 = vmatpush1.msra.mxu0 0.0
    %4934 = vmatprep.subr.mxu0 0.0
    %4935 = vmatpush1.msra.mxu0 0.0
    %4936 = vmatprep.subr.mxu0 0.0
    %4937 = vmatpush1.msra.mxu0 0.0
    %4938 = vmatprep.subr.mxu0 0.0
    %4939 = vmatpush1.msra.mxu0 0.0
    %4940 = vmatprep.subr.mxu0 0.0
    %4941 = vmatpush1.msra.mxu0 0.0
    %4942 = vmatprep.subr.mxu0 0.0
    %4943 = vmatpush1.msra.mxu0 0.0
    %4944 = vmatprep.subr.mxu0 0.0
    %4945 = vmatpush1.msra.mxu0 0.0
    %4946 = vmatprep.subr.mxu0 0.0
    %4947 = vmatpush1.msra.mxu0 0.0
    %4948 = vmatprep.subr.mxu0 0.0
    %4949 = vmatpush1.msra.mxu0 0.0
    %4950 = vmatprep.subr.mxu0 0.0
    %4951 = vmatpush1.msra.mxu0 0.0
    %4952 = vmatprep.subr.mxu0 0.0
    %4953 = vmatpush1.msra.mxu0 0.0
    %4954 = vmatprep.subr.mxu0 0.0
    %4955 = vmatpush1.msra.mxu0 0.0
    %4956 = vmatprep.subr.mxu0 0.0
    %4957 = vmatpush1.msra.mxu0 0.0
    %4958 = vmatprep.subr.mxu0 0.0
    %4959 = vmatpush1.msra.mxu0 0.0
    %4960 = vmatprep.subr.mxu0 0.0
    %4961 = vmatpush1.msra.mxu0 0.0
    %4962 = vmatprep.subr.mxu0 0.0
    %4963 = vmatpush1.msra.mxu0 0.0
    %4964 = vmatprep.subr.mxu0 0.0
    %4965 = vmatpush1.msra.mxu0 0.0
    %4966 = vmatprep.subr.mxu0 0.0
    %4967 = vmatpush1.msra.mxu0 0.0
    %4968 = vmatprep.subr.mxu0 0.0
    %4969 = vmatpush1.msra.mxu0 0.0
    %4970 = vmatprep.subr.mxu0 0.0
    %4971 = vmatpush1.msra.mxu0 0.0
    %4972 = vmatprep.subr.mxu0 0.0
    %4973 = vmatpush1.msra.mxu0 0.0
    %4974 = vmatprep.subr.mxu0 0.0
    %4975 = vmatpush1.msra.mxu0 0.0
    %4976 = vmatprep.subr.mxu0 0.0
    %4977 = vmatpush1.msra.mxu0 0.0
    %4978 = vmatprep.subr.mxu0 0.0
    %4979 = vmatpush1.msra.mxu0 0.0
    %4980 = vmatprep.mubr.f32.mxu0 0.0
    %v4981 = vand.u32 %v4810, 4294901760
    %4982 = vmatmul.mubr.f32.gmra.mrb[0].mxu0 %v4981
    %v4983 = vpop.f32.mrb[0].mxu0
    %v4984 = vadd.f32 %v4893, %v4983
    %v4985 = vpop.f32.mrb[0].mxu0
    %4986 = vmatprep.mubr.f32.mxu0 0.0
    %v4987 = vand.u32 %v4813, 4294901760
    %4988 = vmatmul.mubr.f32.gmra.mrb[0].mxu0 %v4987
    %v4989 = vpop.f32.mrb[0].mxu0
    %v4990 = vadd.f32 %v4903, %v4989
    %v4991 = vpop.f32.mrb[0].mxu0
    %4992 = vdwg.mxu0
    %4993 = vmatprep.subr.mxu0 0.0
    %v4994 = vand.u32 %v4806, 4294901760
    %v4995 = vsub.f32 %v4806, %v4994
    %4996 = vmatpush1.msra.mxu0 %v4995
    %4997 = vmatprep.subr.mxu0 0.0
    %v4998 = vand.u32 %v4817, 4294901760
    %v4999 = vsub.f32 %v4817, %v4998
    %5000 = vmatpush1.msra.mxu0 %v4999
    %5001 = vmatprep.subr.mxu0 0.0
    %5002 = vmatpush1.msra.mxu0 0.0
    %5003 = vmatprep.subr.mxu0 0.0
    %5004 = vmatpush1.msra.mxu0 0.0
    %5005 = vmatprep.subr.mxu0 0.0
    %5006 = vmatpush1.msra.mxu0 0.0
    %5007 = vmatprep.subr.mxu0 0.0
    %5008 = vmatpush1.msra.mxu0 0.0
    %5009 = vmatprep.subr.mxu0 0.0
    %5010 = vmatpush1.msra.mxu0 0.0
    %5011 = vmatprep.subr.mxu0 0.0
    %5012 = vmatpush1.msra.mxu0 0.0
    %5013 = vmatprep.subr.mxu0 0.0
    %5014 = vmatpush1.msra.mxu0 0.0
    %5015 = vmatprep.subr.mxu0 0.0
    %5016 = vmatpush1.msra.mxu0 0.0
    %5017 = vmatprep.subr.mxu0 0.0
    %5018 = vmatpush1.msra.mxu0 0.0
    %5019 = vmatprep.subr.mxu0 0.0
    %5020 = vmatpush1.msra.mxu0 0.0
    %5021 = vmatprep.subr.mxu0 0.0
    %5022 = vmatpush1.msra.mxu0 0.0
    %5023 = vmatprep.subr.mxu0 0.0
    %5024 = vmatpush1.msra.mxu0 0.0
    %5025 = vmatprep.subr.mxu0 0.0
    %5026 = vmatpush1.msra.mxu0 0.0
    %5027 = vmatprep.subr.mxu0 0.0
    %5028 = vmatpush1.msra.mxu0 0.0
    %5029 = vmatprep.subr.mxu0 0.0
    %5030 = vmatpush1.msra.mxu0 0.0
    %5031 = vmatprep.subr.mxu0 0.0
    %5032 = vmatpush1.msra.mxu0 0.0
    %5033 = vmatprep.subr.mxu0 0.0
    %5034 = vmatpush1.msra.mxu0 0.0
    %5035 = vmatprep.subr.mxu0 0.0
    %5036 = vmatpush1.msra.mxu0 0.0
    %5037 = vmatprep.subr.mxu0 0.0
    %5038 = vmatpush1.msra.mxu0 0.0
    %5039 = vmatprep.subr.mxu0 0.0
    %5040 = vmatpush1.msra.mxu0 0.0
    %5041 = vmatprep.subr.mxu0 0.0
    %5042 = vmatpush1.msra.mxu0 0.0
    %5043 = vmatprep.subr.mxu0 0.0
    %5044 = vmatpush1.msra.mxu0 0.0
    %5045 = vmatprep.subr.mxu0 0.0
    %5046 = vmatpush1.msra.mxu0 0.0
    %5047 = vmatprep.subr.mxu0 0.0
    %5048 = vmatpush1.msra.mxu0 0.0
    %5049 = vmatprep.subr.mxu0 0.0
    %5050 = vmatpush1.msra.mxu0 0.0
    %5051 = vmatprep.subr.mxu0 0.0
    %5052 = vmatpush1.msra.mxu0 0.0
    %5053 = vmatprep.subr.mxu0 0.0
    %5054 = vmatpush1.msra.mxu0 0.0
    %5055 = vmatprep.subr.mxu0 0.0
    %5056 = vmatpush1.msra.mxu0 0.0
    %5057 = vmatprep.subr.mxu0 0.0
    %5058 = vmatpush1.msra.mxu0 0.0
    %5059 = vmatprep.subr.mxu0 0.0
    %5060 = vmatpush1.msra.mxu0 0.0
    %5061 = vmatprep.mubr.f32.mxu0 0.0
    %v5062 = vand.u32 %v4810, 4294901760
    %v5063 = vsub.f32 %v4810, %v5062
    %5064 = vmatmul.mubr.f32.gmra.mrb[0].mxu0 %v5063
    %v5065 = vpop.f32.mrb[0].mxu0
    %v5066 = vadd.f32 %v4984, %v5065
    %v5067 = vpop.f32.mrb[0].mxu0
    %5068 = vmatprep.mubr.f32.mxu0 0.0
    %v5069 = vand.u32 %v4813, 4294901760
    %v5070 = vsub.f32 %v4813, %v5069
    %5071 = vmatmul.mubr.f32.gmra.mrb[0].mxu0 %v5070
    %v5072 = vpop.f32.mrb[0].mxu0
    %v5073 = vadd.f32 %v4990, %v5072
    %v5074 = vpop.f32.mrb[0].mxu0
    %5075 = vdwg.mxu0
    %5076 = vmatprep.subr.mxu0 0.0
    %v5077 = vand.u32 %v4806, 4294901760
    %5078 = vmatpush1.msra.mxu0 %v5077
    %5079 = vmatprep.subr.mxu0 0.0
    %v5080 = vand.u32 %v4817, 4294901760
    %5081 = vmatpush1.msra.mxu0 %v5080
    %5082 = vmatprep.subr.mxu0 0.0
    %5083 = vmatpush1.msra.mxu0 0.0
    %5084 = vmatprep.subr.mxu0 0.0
    %5085 = vmatpush1.msra.mxu0 0.0
    %5086 = vmatprep.subr.mxu0 0.0
    %5087 = vmatpush1.msra.mxu0 0.0
    %5088 = vmatprep.subr.mxu0 0.0
    %5089 = vmatpush1.msra.mxu0 0.0
    %5090 = vmatprep.subr.mxu0 0.0
    %5091 = vmatpush1.msra.mxu0 0.0
    %5092 = vmatprep.subr.mxu0 0.0
    %5093 = vmatpush1.msra.mxu0 0.0
    %5094 = vmatprep.subr.mxu0 0.0
    %5095 = vmatpush1.msra.mxu0 0.0
    %5096 = vmatprep.subr.mxu0 0.0
    %5097 = vmatpush1.msra.mxu0 0.0
    %5098 = vmatprep.subr.mxu0 0.0
    %5099 = vmatpush1.msra.mxu0 0.0
    %5100 = vmatprep.subr.mxu0 0.0
    %5101 = vmatpush1.msra.mxu0 0.0
    %5102 = vmatprep.subr.mxu0 0.0
    %5103 = vmatpush1.msra.mxu0 0.0
    %5104 = vmatprep.subr.mxu0 0.0
    %5105 = vmatpush1.msra.mxu0 0.0
    %5106 = vmatprep.subr.mxu0 0.0
    %5107 = vmatpush1.msra.mxu0 0.0
    %5108 = vmatprep.subr.mxu0 0.0
    %5109 = vmatpush1.msra.mxu0 0.0
    %5110 = vmatprep.subr.mxu0 0.0
    %5111 = vmatpush1.msra.mxu0 0.0
    %5112 = vmatprep.subr.mxu0 0.0
    %5113 = vmatpush1.msra.mxu0 0.0
    %5114 = vmatprep.subr.mxu0 0.0
    %5115 = vmatpush1.msra.mxu0 0.0
    %5116 = vmatprep.subr.mxu0 0.0
    %5117 = vmatpush1.msra.mxu0 0.0
    %5118 = vmatprep.subr.mxu0 0.0
    %5119 = vmatpush1.msra.mxu0 0.0
    %5120 = vmatprep.subr.mxu0 0.0
    %5121 = vmatpush1.msra.mxu0 0.0
    %5122 = vmatprep.subr.mxu0 0.0
    %5123 = vmatpush1.msra.mxu0 0.0
    %5124 = vmatprep.subr.mxu0 0.0
    %5125 = vmatpush1.msra.mxu0 0.0
    %5126 = vmatprep.subr.mxu0 0.0
    %5127 = vmatpush1.msra.mxu0 0.0
    %5128 = vmatprep.subr.mxu0 0.0
    %5129 = vmatpush1.msra.mxu0 0.0
    %5130 = vmatprep.subr.mxu0 0.0
    %5131 = vmatpush1.msra.mxu0 0.0
    %5132 = vmatprep.subr.mxu0 0.0
    %5133 = vmatpush1.msra.mxu0 0.0
    %5134 = vmatprep.subr.mxu0 0.0
    %5135 = vmatpush1.msra.mxu0 0.0
    %5136 = vmatprep.subr.mxu0 0.0
    %5137 = vmatpush1.msra.mxu0 0.0
    %5138 = vmatprep.subr.mxu0 0.0
    %5139 = vmatpush1.msra.mxu0 0.0
    %5140 = vmatprep.subr.mxu0 0.0
    %5141 = vmatpush1.msra.mxu0 0.0
    %5142 = vmatprep.mubr.f32.mxu0 0.0
    %v5143 = vand.u32 %v4810, 4294901760
    %v5144 = vsub.f32 %v4810, %v5143
    %v5145 = vand.u32 %v5144, 4294901760
    %5146 = vmatmul.mubr.f32.gmra.mrb[0].mxu0 %v5145
    %v5147 = vpop.f32.mrb[0].mxu0
    %v5148 = vadd.f32 %v5066, %v5147
    %v5149 = vpop.f32.mrb[0].mxu0
    %5150 = vmatprep.mubr.f32.mxu0 0.0
    %v5151 = vand.u32 %v4813, 4294901760
    %v5152 = vsub.f32 %v4813, %v5151
    %v5153 = vand.u32 %v5152, 4294901760
    %5154 = vmatmul.mubr.f32.gmra.mrb[0].mxu0 %v5153
    %v5155 = vpop.f32.mrb[0].mxu0
    %v5156 = vadd.f32 %v5073, %v5155
    %v5157 = vpop.f32.mrb[0].mxu0
    %5158 = vdwg.mxu0
    %5159 = vmatprep.subr.mxu0 0.0
    %v5160 = vand.u32 %v4806, 4294901760
    %v5161 = vsub.f32 %v4806, %v5160
    %v5162 = vand.u32 %v5161, 4294901760
    %5163 = vmatpush1.msra.mxu0 %v5162
    %5164 = vmatprep.subr.mxu0 0.0
    %v5165 = vand.u32 %v4817, 4294901760
    %v5166 = vsub.f32 %v4817, %v5165
    %v5167 = vand.u32 %v5166, 4294901760
    %5168 = vmatpush1.msra.mxu0 %v5167
    %5169 = vmatprep.subr.mxu0 0.0
    %5170 = vmatpush1.msra.mxu0 0.0
    %5171 = vmatprep.subr.mxu0 0.0
    %5172 = vmatpush1.msra.mxu0 0.0
    %5173 = vmatprep.subr.mxu0 0.0
    %5174 = vmatpush1.msra.mxu0 0.0
    %5175 = vmatprep.subr.mxu0 0.0
    %5176 = vmatpush1.msra.mxu0 0.0
    %5177 = vmatprep.subr.mxu0 0.0
    %5178 = vmatpush1.msra.mxu0 0.0
    %5179 = vmatprep.subr.mxu0 0.0
    %5180 = vmatpush1.msra.mxu0 0.0
    %5181 = vmatprep.subr.mxu0 0.0
    %5182 = vmatpush1.msra.mxu0 0.0
    %5183 = vmatprep.subr.mxu0 0.0
    %5184 = vmatpush1.msra.mxu0 0.0
    %5185 = vmatprep.subr.mxu0 0.0
    %5186 = vmatpush1.msra.mxu0 0.0
    %5187 = vmatprep.subr.mxu0 0.0
    %5188 = vmatpush1.msra.mxu0 0.0
    %5189 = vmatprep.subr.mxu0 0.0
    %5190 = vmatpush1.msra.mxu0 0.0
    %5191 = vmatprep.subr.mxu0 0.0
    %5192 = vmatpush1.msra.mxu0 0.0
    %5193 = vmatprep.subr.mxu0 0.0
    %5194 = vmatpush1.msra.mxu0 0.0
    %5195 = vmatprep.subr.mxu0 0.0
    %5196 = vmatpush1.msra.mxu0 0.0
    %5197 = vmatprep.subr.mxu0 0.0
    %5198 = vmatpush1.msra.mxu0 0.0
    %5199 = vmatprep.subr.mxu0 0.0
    %5200 = vmatpush1.msra.mxu0 0.0
    %5201 = vmatprep.subr.mxu0 0.0
    %5202 = vmatpush1.msra.mxu0 0.0
    %5203 = vmatprep.subr.mxu0 0.0
    %5204 = vmatpush1.msra.mxu0 0.0
    %5205 = vmatprep.subr.mxu0 0.0
    %5206 = vmatpush1.msra.mxu0 0.0
    %5207 = vmatprep.subr.mxu0 0.0
    %5208 = vmatpush1.msra.mxu0 0.0
    %5209 = vmatprep.subr.mxu0 0.0
    %5210 = vmatpush1.msra.mxu0 0.0
    %5211 = vmatprep.subr.mxu0 0.0
    %5212 = vmatpush1.msra.mxu0 0.0
    %5213 = vmatprep.subr.mxu0 0.0
    %5214 = vmatpush1.msra.mxu0 0.0
    %5215 = vmatprep.subr.mxu0 0.0
    %5216 = vmatpush1.msra.mxu0 0.0
    %5217 = vmatprep.subr.mxu0 0.0
    %5218 = vmatpush1.msra.mxu0 0.0
    %5219 = vmatprep.subr.mxu0 0.0
    %5220 = vmatpush1.msra.mxu0 0.0
    %5221 = vmatprep.subr.mxu0 0.0
    %5222 = vmatpush1.msra.mxu0 0.0
    %5223 = vmatprep.subr.mxu0 0.0
    %5224 = vmatpush1.msra.mxu0 0.0
    %5225 = vmatprep.subr.mxu0 0.0
    %5226 = vmatpush1.msra.mxu0 0.0
    %5227 = vmatprep.subr.mxu0 0.0
    %5228 = vmatpush1.msra.mxu0 0.0
    %5229 = vmatprep.mubr.f32.mxu0 0.0
    %v5230 = vand.u32 %v4810, 4294901760
    %5231 = vmatmul.mubr.f32.gmra.mrb[0].mxu0 %v5230
    %v5232 = vpop.f32.mrb[0].mxu0
    %v5233 = vadd.f32 %v5148, %v5232
    %v5234 = vpop.f32.mrb[0].mxu0
    %5235 = vmatprep.mubr.f32.mxu0 0.0
    %v5236 = vand.u32 %v4813, 4294901760
    %5237 = vmatmul.mubr.f32.gmra.mrb[0].mxu0 %v5236
    %v5238 = vpop.f32.mrb[0].mxu0
    %v5239 = vadd.f32 %v5156, %v5238
    %v5240 = vpop.f32.mrb[0].mxu0
    %5241 = vdwg.mxu0
    %5242 = vmatprep.subr.mxu0 0.0
    %v5243 = vand.u32 %v4806, 4294901760
    %5244 = vmatpush1.msra.mxu0 %v5243
    %5245 = vmatprep.subr.mxu0 0.0
    %v5246 = vand.u32 %v4817, 4294901760
    %5247 = vmatpush1.msra.mxu0 %v5246
    %5248 = vmatprep.subr.mxu0 0.0
    %5249 = vmatpush1.msra.mxu0 0.0
    %5250 = vmatprep.subr.mxu0 0.0
    %5251 = vmatpush1.msra.mxu0 0.0
    %5252 = vmatprep.subr.mxu0 0.0
    %5253 = vmatpush1.msra.mxu0 0.0
    %5254 = vmatprep.subr.mxu0 0.0
    %5255 = vmatpush1.msra.mxu0 0.0
    %5256 = vmatprep.subr.mxu0 0.0
    %5257 = vmatpush1.msra.mxu0 0.0
    %5258 = vmatprep.subr.mxu0 0.0
    %5259 = vmatpush1.msra.mxu0 0.0
    %5260 = vmatprep.subr.mxu0 0.0
    %5261 = vmatpush1.msra.mxu0 0.0
    %5262 = vmatprep.subr.mxu0 0.0
    %5263 = vmatpush1.msra.mxu0 0.0
    %5264 = vmatprep.subr.mxu0 0.0
    %5265 = vmatpush1.msra.mxu0 0.0
    %5266 = vmatprep.subr.mxu0 0.0
    %5267 = vmatpush1.msra.mxu0 0.0
    %5268 = vmatprep.subr.mxu0 0.0
    %5269 = vmatpush1.msra.mxu0 0.0
    %5270 = vmatprep.subr.mxu0 0.0
    %5271 = vmatpush1.msra.mxu0 0.0
    %5272 = vmatprep.subr.mxu0 0.0
    %5273 = vmatpush1.msra.mxu0 0.0
    %5274 = vmatprep.subr.mxu0 0.0
    %5275 = vmatpush1.msra.mxu0 0.0
    %5276 = vmatprep.subr.mxu0 0.0
    %5277 = vmatpush1.msra.mxu0 0.0
    %5278 = vmatprep.subr.mxu0 0.0
    %5279 = vmatpush1.msra.mxu0 0.0
    %5280 = vmatprep.subr.mxu0 0.0
    %5281 = vmatpush1.msra.mxu0 0.0
    %5282 = vmatprep.subr.mxu0 0.0
    %5283 = vmatpush1.msra.mxu0 0.0
    %5284 = vmatprep.subr.mxu0 0.0
    %5285 = vmatpush1.msra.mxu0 0.0
    %5286 = vmatprep.subr.mxu0 0.0
    %5287 = vmatpush1.msra.mxu0 0.0
    %5288 = vmatprep.subr.mxu0 0.0
    %5289 = vmatpush1.msra.mxu0 0.0
    %5290 = vmatprep.subr.mxu0 0.0
    %5291 = vmatpush1.msra.mxu0 0.0
    %5292 = vmatprep.subr.mxu0 0.0
    %5293 = vmatpush1.msra.mxu0 0.0
    %5294 = vmatprep.subr.mxu0 0.0
    %5295 = vmatpush1.msra.mxu0 0.0
    %5296 = vmatprep.subr.mxu0 0.0
    %5297 = vmatpush1.msra.mxu0 0.0
    %5298 = vmatprep.subr.mxu0 0.0
    %5299 = vmatpush1.msra.mxu0 0.0
    %5300 = vmatprep.subr.mxu0 0.0
    %5301 = vmatpush1.msra.mxu0 0.0
    %5302 = vmatprep.subr.mxu0 0.0
    %5303 = vmatpush1.msra.mxu0 0.0
    %5304 = vmatprep.subr.mxu0 0.0
    %5305 = vmatpush1.msra.mxu0 0.0
    %5306 = vmatprep.subr.mxu0 0.0
    %5307 = vmatpush1.msra.mxu0 0.0
    %5308 = vmatprep.mubr.f32.mxu0 0.0
    %v5309 = vand.u32 %v4810, 4294901760
    %5310 = vmatmul.mubr.f32.gmra.mrb[0].mxu0 %v5309
    %v5311 = vpop.f32.mrb[0].mxu0
    %v5312 = vadd.f32 %v5233, %v5311
    %v5313 = vpop.f32.mrb[0].mxu0
    %5314 = vmatprep.mubr.f32.mxu0 0.0
    %v5315 = vand.u32 %v4813, 4294901760
    %5316 = vmatmul.mubr.f32.gmra.mrb[0].mxu0 %v5315
    %v5317 = vpop.f32.mrb[0].mxu0
    %v5318 = vadd.f32 %v5239, %v5317
    %v5319 = vpop.f32.mrb[0].mxu0
    %5320 = vdwg.mxu0
    %v5321 = vld [vmem:[%s12] sm:$0xff]
    %v5322 = vld [vmem:[%s12 + $0x8] sm:$0x1]
    %v5324 = vsel %vm4815, %v5322, 0
    %5326 = vmatprep.subr.mxu0 0.0
    %v5327 = vand.u32 %v5321, 4294901760
    %5328 = vmatpush1.msra.mxu0 %v5327
    %5329 = vmatprep.subr.mxu0 0.0
    %v5330 = vand.u32 %v5324, 4294901760
    %5331 = vmatpush1.msra.mxu0 %v5330
    %5332 = vmatprep.subr.mxu0 0.0
    %5333 = vmatpush1.msra.mxu0 0.0
    %5334 = vmatprep.subr.mxu0 0.0
    %5335 = vmatpush1.msra.mxu0 0.0
    %5336 = vmatprep.subr.mxu0 0.0
    %5337 = vmatpush1.msra.mxu0 0.0
    %5338 = vmatprep.subr.mxu0 0.0
    %5339 = vmatpush1.msra.mxu0 0.0
    %5340 = vmatprep.subr.mxu0 0.0
    %5341 = vmatpush1.msra.mxu0 0.0
    %5342 = vmatprep.subr.mxu0 0.0
    %5343 = vmatpush1.msra.mxu0 0.0
    %5344 = vmatprep.subr.mxu0 0.0
    %5345 = vmatpush1.msra.mxu0 0.0
    %5346 = vmatprep.subr.mxu0 0.0
    %5347 = vmatpush1.msra.mxu0 0.0
    %5348 = vmatprep.subr.mxu0 0.0
    %5349 = vmatpush1.msra.mxu0 0.0
    %5350 = vmatprep.subr.mxu0 0.0
    %5351 = vmatpush1.msra.mxu0 0.0
    %5352 = vmatprep.subr.mxu0 0.0
    %5353 = vmatpush1.msra.mxu0 0.0
    %5354 = vmatprep.subr.mxu0 0.0
    %5355 = vmatpush1.msra.mxu0 0.0
    %5356 = vmatprep.subr.mxu0 0.0
    %5357 = vmatpush1.msra.mxu0 0.0
    %5358 = vmatprep.subr.mxu0 0.0
    %5359 = vmatpush1.msra.mxu0 0.0
    %5360 = vmatprep.subr.mxu0 0.0
    %5361 = vmatpush1.msra.mxu0 0.0
    %5362 = vmatprep.subr.mxu0 0.0
    %5363 = vmatpush1.msra.mxu0 0.0
    %5364 = vmatprep.subr.mxu0 0.0
    %5365 = vmatpush1.msra.mxu0 0.0
    %5366 = vmatprep.subr.mxu0 0.0
    %5367 = vmatpush1.msra.mxu0 0.0
    %5368 = vmatprep.subr.mxu0 0.0
    %5369 = vmatpush1.msra.mxu0 0.0
    %5370 = vmatprep.subr.mxu0 0.0
    %5371 = vmatpush1.msra.mxu0 0.0
    %5372 = vmatprep.subr.mxu0 0.0
    %5373 = vmatpush1.msra.mxu0 0.0
    %5374 = vmatprep.subr.mxu0 0.0
    %5375 = vmatpush1.msra.mxu0 0.0
    %5376 = vmatprep.subr.mxu0 0.0
    %5377 = vmatpush1.msra.mxu0 0.0
    %5378 = vmatprep.subr.mxu0 0.0
    %5379 = vmatpush1.msra.mxu0 0.0
    %5380 = vmatprep.subr.mxu0 0.0
    %5381 = vmatpush1.msra.mxu0 0.0
    %5382 = vmatprep.subr.mxu0 0.0
    %5383 = vmatpush1.msra.mxu0 0.0
    %5384 = vmatprep.subr.mxu0 0.0
    %5385 = vmatpush1.msra.mxu0 0.0
    %5386 = vmatprep.subr.mxu0 0.0
    %5387 = vmatpush1.msra.mxu0 0.0
    %5388 = vmatprep.subr.mxu0 0.0
    %5389 = vmatpush1.msra.mxu0 0.0
    %5390 = vmatprep.subr.mxu0 0.0
    %5391 = vmatpush1.msra.mxu0 0.0
    %5392 = vmatprep.mubr.f32.mxu0 0.0
    %v5393 = vand.u32 %v4810, 4294901760
    %v5394 = vsub.f32 %v4810, %v5393
    %v5395 = vand.u32 %v5394, 4294901760
    %v5396 = vsub.f32 %v5394, %v5395
    %v5397 = vand.u32 %v5396, 4294901760
    %5398 = vmatmul.mubr.f32.gmra.mrb[0].mxu0 %v5397
    %v5399 = vpop.f32.mrb[0].mxu0
    %v5400 = vadd.f32 0.0, %v5399
    %v5401 = vpop.f32.mrb[0].mxu0
    %5402 = vmatprep.mubr.f32.mxu0 0.0
    %v5403 = vand.u32 %v4813, 4294901760
    %v5404 = vsub.f32 %v4813, %v5403
    %v5405 = vand.u32 %v5404, 4294901760
    %v5406 = vsub.f32 %v5404, %v5405
    %v5407 = vand.u32 %v5406, 4294901760
    %5408 = vmatmul.mubr.f32.gmra.mrb[0].mxu0 %v5407
    %v5409 = vpop.f32.mrb[0].mxu0
    %v5410 = vadd.f32 0.0, %v5409
    %v5411 = vpop.f32.mrb[0].mxu0
    %5412 = vdwg.mxu0
    %5413 = vmatprep.subr.mxu0 0.0
    %v5414 = vand.u32 %v5321, 4294901760
    %v5415 = vsub.f32 %v5321, %v5414
    %v5416 = vand.u32 %v5415, 4294901760
    %v5417 = vsub.f32 %v5415, %v5416
    %v5418 = vand.u32 %v5417, 4294901760
    %5419 = vmatpush1.msra.mxu0 %v5418
    %5420 = vmatprep.subr.mxu0 0.0
    %v5421 = vand.u32 %v5324, 4294901760
    %v5422 = vsub.f32 %v5324, %v5421
    %v5423 = vand.u32 %v5422, 4294901760
    %v5424 = vsub.f32 %v5422, %v5423
    %v5425 = vand.u32 %v5424, 4294901760
    %5426 = vmatpush1.msra.mxu0 %v5425
    %5427 = vmatprep.subr.mxu0 0.0
    %5428 = vmatpush1.msra.mxu0 0.0
    %5429 = vmatprep.subr.mxu0 0.0
    %5430 = vmatpush1.msra.mxu0 0.0
    %5431 = vmatprep.subr.mxu0 0.0
    %5432 = vmatpush1.msra.mxu0 0.0
    %5433 = vmatprep.subr.mxu0 0.0
    %5434 = vmatpush1.msra.mxu0 0.0
    %5435 = vmatprep.subr.mxu0 0.0
    %5436 = vmatpush1.msra.mxu0 0.0
    %5437 = vmatprep.subr.mxu0 0.0
    %5438 = vmatpush1.msra.mxu0 0.0
    %5439 = vmatprep.subr.mxu0 0.0
    %5440 = vmatpush1.msra.mxu0 0.0
    %5441 = vmatprep.subr.mxu0 0.0
    %5442 = vmatpush1.msra.mxu0 0.0
    %5443 = vmatprep.subr.mxu0 0.0
    %5444 = vmatpush1.msra.mxu0 0.0
    %5445 = vmatprep.subr.mxu0 0.0
    %5446 = vmatpush1.msra.mxu0 0.0
    %5447 = vmatprep.subr.mxu0 0.0
    %5448 = vmatpush1.msra.mxu0 0.0
    %5449 = vmatprep.subr.mxu0 0.0
    %5450 = vmatpush1.msra.mxu0 0.0
    %5451 = vmatprep.subr.mxu0 0.0
    %5452 = vmatpush1.msra.mxu0 0.0
    %5453 = vmatprep.subr.mxu0 0.0
    %5454 = vmatpush1.msra.mxu0 0.0
    %5455 = vmatprep.subr.mxu0 0.0
    %5456 = vmatpush1.msra.mxu0 0.0
    %5457 = vmatprep.subr.mxu0 0.0
    %5458 = vmatpush1.msra.mxu0 0.0
    %5459 = vmatprep.subr.mxu0 0.0
    %5460 = vmatpush1.msra.mxu0 0.0
    %5461 = vmatprep.subr.mxu0 0.0
    %5462 = vmatpush1.msra.mxu0 0.0
    %5463 = vmatprep.subr.mxu0 0.0
    %5464 = vmatpush1.msra.mxu0 0.0
    %5465 = vmatprep.subr.mxu0 0.0
    %5466 = vmatpush1.msra.mxu0 0.0
    %5467 = vmatprep.subr.mxu0 0.0
    %5468 = vmatpush1.msra.mxu0 0.0
    %5469 = vmatprep.subr.mxu0 0.0
    %5470 = vmatpush1.msra.mxu0 0.0
    %5471 = vmatprep.subr.mxu0 0.0
    %5472 = vmatpush1.msra.mxu0 0.0
    %5473 = vmatprep.subr.mxu0 0.0
    %5474 = vmatpush1.msra.mxu0 0.0
    %5475 = vmatprep.subr.mxu0 0.0
    %5476 = vmatpush1.msra.mxu0 0.0
    %5477 = vmatprep.subr.mxu0 0.0
    %5478 = vmatpush1.msra.mxu0 0.0
    %5479 = vmatprep.subr.mxu0 0.0
    %5480 = vmatpush1.msra.mxu0 0.0
    %5481 = vmatprep.subr.mxu0 0.0
    %5482 = vmatpush1.msra.mxu0 0.0
    %5483 = vmatprep.subr.mxu0 0.0
    %5484 = vmatpush1.msra.mxu0 0.0
    %5485 = vmatprep.subr.mxu0 0.0
    %5486 = vmatpush1.msra.mxu0 0.0
    %5487 = vmatprep.mubr.f32.mxu0 0.0
    %v5488 = vand.u32 %v4810, 4294901760
    %5489 = vmatmul.mubr.f32.gmra.mrb[0].mxu0 %v5488
    %v5490 = vpop.f32.mrb[0].mxu0
    %v5491 = vadd.f32 %v5400, %v5490
    %v5492 = vpop.f32.mrb[0].mxu0
    %5493 = vmatprep.mubr.f32.mxu0 0.0
    %v5494 = vand.u32 %v4813, 4294901760
    %5495 = vmatmul.mubr.f32.gmra.mrb[0].mxu0 %v5494
    %v5496 = vpop.f32.mrb[0].mxu0
    %v5497 = vadd.f32 %v5410, %v5496
    %v5498 = vpop.f32.mrb[0].mxu0
    %5499 = vdwg.mxu0
    %5500 = vmatprep.subr.mxu0 0.0
    %v5501 = vand.u32 %v5321, 4294901760
    %v5502 = vsub.f32 %v5321, %v5501
    %5503 = vmatpush1.msra.mxu0 %v5502
    %5504 = vmatprep.subr.mxu0 0.0
    %v5505 = vand.u32 %v5324, 4294901760
    %v5506 = vsub.f32 %v5324, %v5505
    %5507 = vmatpush1.msra.mxu0 %v5506
    %5508 = vmatprep.subr.mxu0 0.0
    %5509 = vmatpush1.msra.mxu0 0.0
    %5510 = vmatprep.subr.mxu0 0.0
    %5511 = vmatpush1.msra.mxu0 0.0
    %5512 = vmatprep.subr.mxu0 0.0
    %5513 = vmatpush1.msra.mxu0 0.0
    %5514 = vmatprep.subr.mxu0 0.0
    %5515 = vmatpush1.msra.mxu0 0.0
    %5516 = vmatprep.subr.mxu0 0.0
    %5517 = vmatpush1.msra.mxu0 0.0
    %5518 = vmatprep.subr.mxu0 0.0
    %5519 = vmatpush1.msra.mxu0 0.0
    %5520 = vmatprep.subr.mxu0 0.0
    %5521 = vmatpush1.msra.mxu0 0.0
    %5522 = vmatprep.subr.mxu0 0.0
    %5523 = vmatpush1.msra.mxu0 0.0
    %5524 = vmatprep.subr.mxu0 0.0
    %5525 = vmatpush1.msra.mxu0 0.0
    %5526 = vmatprep.subr.mxu0 0.0
    %5527 = vmatpush1.msra.mxu0 0.0
    %5528 = vmatprep.subr.mxu0 0.0
    %5529 = vmatpush1.msra.mxu0 0.0
    %5530 = vmatprep.subr.mxu0 0.0
    %5531 = vmatpush1.msra.mxu0 0.0
    %5532 = vmatprep.subr.mxu0 0.0
    %5533 = vmatpush1.msra.mxu0 0.0
    %5534 = vmatprep.subr.mxu0 0.0
    %5535 = vmatpush1.msra.mxu0 0.0
    %5536 = vmatprep.subr.mxu0 0.0
    %5537 = vmatpush1.msra.mxu0 0.0
    %5538 = vmatprep.subr.mxu0 0.0
    %5539 = vmatpush1.msra.mxu0 0.0
    %5540 = vmatprep.subr.mxu0 0.0
    %5541 = vmatpush1.msra.mxu0 0.0
    %5542 = vmatprep.subr.mxu0 0.0
    %5543 = vmatpush1.msra.mxu0 0.0
    %5544 = vmatprep.subr.mxu0 0.0
    %5545 = vmatpush1.msra.mxu0 0.0
    %5546 = vmatprep.subr.mxu0 0.0
    %5547 = vmatpush1.msra.mxu0 0.0
    %5548 = vmatprep.subr.mxu0 0.0
    %5549 = vmatpush1.msra.mxu0 0.0
    %5550 = vmatprep.subr.mxu0 0.0
    %5551 = vmatpush1.msra.mxu0 0.0
    %5552 = vmatprep.subr.mxu0 0.0
    %5553 = vmatpush1.msra.mxu0 0.0
    %5554 = vmatprep.subr.mxu0 0.0
    %5555 = vmatpush1.msra.mxu0 0.0
    %5556 = vmatprep.subr.mxu0 0.0
    %5557 = vmatpush1.msra.mxu0 0.0
    %5558 = vmatprep.subr.mxu0 0.0
    %5559 = vmatpush1.msra.mxu0 0.0
    %5560 = vmatprep.subr.mxu0 0.0
    %5561 = vmatpush1.msra.mxu0 0.0
    %5562 = vmatprep.subr.mxu0 0.0
    %5563 = vmatpush1.msra.mxu0 0.0
    %5564 = vmatprep.subr.mxu0 0.0
    %5565 = vmatpush1.msra.mxu0 0.0
    %5566 = vmatprep.subr.mxu0 0.0
    %5567 = vmatpush1.msra.mxu0 0.0
    %5568 = vmatprep.mubr.f32.mxu0 0.0
    %v5569 = vand.u32 %v4810, 4294901760
    %v5570 = vsub.f32 %v4810, %v5569
    %5571 = vmatmul.mubr.f32.gmra.mrb[0].mxu0 %v5570
    %v5572 = vpop.f32.mrb[0].mxu0
    %v5573 = vadd.f32 %v5491, %v5572
    %v5574 = vpop.f32.mrb[0].mxu0
    %5575 = vmatprep.mubr.f32.mxu0 0.0
    %v5576 = vand.u32 %v4813, 4294901760
    %v5577 = vsub.f32 %v4813, %v5576
    %5578 = vmatmul.mubr.f32.gmra.mrb[0].mxu0 %v5577
    %v5579 = vpop.f32.mrb[0].mxu0
    %v5580 = vadd.f32 %v5497, %v5579
    %v5581 = vpop.f32.mrb[0].mxu0
    %5582 = vdwg.mxu0
    %5583 = vmatprep.subr.mxu0 0.0
    %v5584 = vand.u32 %v5321, 4294901760
    %5585 = vmatpush1.msra.mxu0 %v5584
    %5586 = vmatprep.subr.mxu0 0.0
    %v5587 = vand.u32 %v5324, 4294901760
    %5588 = vmatpush1.msra.mxu0 %v5587
    %5589 = vmatprep.subr.mxu0 0.0
    %5590 = vmatpush1.msra.mxu0 0.0
    %5591 = vmatprep.subr.mxu0 0.0
    %5592 = vmatpush1.msra.mxu0 0.0
    %5593 = vmatprep.subr.mxu0 0.0
    %5594 = vmatpush1.msra.mxu0 0.0
    %5595 = vmatprep.subr.mxu0 0.0
    %5596 = vmatpush1.msra.mxu0 0.0
    %5597 = vmatprep.subr.mxu0 0.0
    %5598 = vmatpush1.msra.mxu0 0.0
    %5599 = vmatprep.subr.mxu0 0.0
    %5600 = vmatpush1.msra.mxu0 0.0
    %5601 = vmatprep.subr.mxu0 0.0
    %5602 = vmatpush1.msra.mxu0 0.0
    %5603 = vmatprep.subr.mxu0 0.0
    %5604 = vmatpush1.msra.mxu0 0.0
    %5605 = vmatprep.subr.mxu0 0.0
    %5606 = vmatpush1.msra.mxu0 0.0
    %5607 = vmatprep.subr.mxu0 0.0
    %5608 = vmatpush1.msra.mxu0 0.0
    %5609 = vmatprep.subr.mxu0 0.0
    %5610 = vmatpush1.msra.mxu0 0.0
    %5611 = vmatprep.subr.mxu0 0.0
    %5612 = vmatpush1.msra.mxu0 0.0
    %5613 = vmatprep.subr.mxu0 0.0
    %5614 = vmatpush1.msra.mxu0 0.0
    %5615 = vmatprep.subr.mxu0 0.0
    %5616 = vmatpush1.msra.mxu0 0.0
    %5617 = vmatprep.subr.mxu0 0.0
    %5618 = vmatpush1.msra.mxu0 0.0
    %5619 = vmatprep.subr.mxu0 0.0
    %5620 = vmatpush1.msra.mxu0 0.0
    %5621 = vmatprep.subr.mxu0 0.0
    %5622 = vmatpush1.msra.mxu0 0.0
    %5623 = vmatprep.subr.mxu0 0.0
    %5624 = vmatpush1.msra.mxu0 0.0
    %5625 = vmatprep.subr.mxu0 0.0
    %5626 = vmatpush1.msra.mxu0 0.0
    %5627 = vmatprep.subr.mxu0 0.0
    %5628 = vmatpush1.msra.mxu0 0.0
    %5629 = vmatprep.subr.mxu0 0.0
    %5630 = vmatpush1.msra.mxu0 0.0
    %5631 = vmatprep.subr.mxu0 0.0
    %5632 = vmatpush1.msra.mxu0 0.0
    %5633 = vmatprep.subr.mxu0 0.0
    %5634 = vmatpush1.msra.mxu0 0.0
    %5635 = vmatprep.subr.mxu0 0.0
    %5636 = vmatpush1.msra.mxu0 0.0
    %5637 = vmatprep.subr.mxu0 0.0
    %5638 = vmatpush1.msra.mxu0 0.0
    %5639 = vmatprep.subr.mxu0 0.0
    %5640 = vmatpush1.msra.mxu0 0.0
    %5641 = vmatprep.subr.mxu0 0.0
    %5642 = vmatpush1.msra.mxu0 0.0
    %5643 = vmatprep.subr.mxu0 0.0
    %5644 = vmatpush1.msra.mxu0 0.0
    %5645 = vmatprep.subr.mxu0 0.0
    %5646 = vmatpush1.msra.mxu0 0.0
    %5647 = vmatprep.subr.mxu0 0.0
    %5648 = vmatpush1.msra.mxu0 0.0
    %5649 = vmatprep.mubr.f32.mxu0 0.0
    %v5650 = vand.u32 %v4810, 4294901760
    %v5651 = vsub.f32 %v4810, %v5650
    %v5652 = vand.u32 %v5651, 4294901760
    %5653 = vmatmul.mubr.f32.gmra.mrb[0].mxu0 %v5652
    %v5654 = vpop.f32.mrb[0].mxu0
    %v5655 = vadd.f32 %v5573, %v5654
    %v5656 = vpop.f32.mrb[0].mxu0
    %5657 = vmatprep.mubr.f32.mxu0 0.0
    %v5658 = vand.u32 %v4813, 4294901760
    %v5659 = vsub.f32 %v4813, %v5658
    %v5660 = vand.u32 %v5659, 4294901760
    %5661 = vmatmul.mubr.f32.gmra.mrb[0].mxu0 %v5660
    %v5662 = vpop.f32.mrb[0].mxu0
    %v5663 = vadd.f32 %v5580, %v5662
    %v5664 = vpop.f32.mrb[0].mxu0
    %5665 = vdwg.mxu0
    %5666 = vmatprep.subr.mxu0 0.0
    %v5667 = vand.u32 %v5321, 4294901760
    %v5668 = vsub.f32 %v5321, %v5667
    %v5669 = vand.u32 %v5668, 4294901760
    %5670 = vmatpush1.msra.mxu0 %v5669
    %5671 = vmatprep.subr.mxu0 0.0
    %v5672 = vand.u32 %v5324, 4294901760
    %v5673 = vsub.f32 %v5324, %v5672
    %v5674 = vand.u32 %v5673, 4294901760
    %5675 = vmatpush1.msra.mxu0 %v5674
    %5676 = vmatprep.subr.mxu0 0.0
    %5677 = vmatpush1.msra.mxu0 0.0
    %5678 = vmatprep.subr.mxu0 0.0
    %5679 = vmatpush1.msra.mxu0 0.0
    %5680 = vmatprep.subr.mxu0 0.0
    %5681 = vmatpush1.msra.mxu0 0.0
    %5682 = vmatprep.subr.mxu0 0.0
    %5683 = vmatpush1.msra.mxu0 0.0
    %5684 = vmatprep.subr.mxu0 0.0
    %5685 = vmatpush1.msra.mxu0 0.0
    %5686 = vmatprep.subr.mxu0 0.0
    %5687 = vmatpush1.msra.mxu0 0.0
    %5688 = vmatprep.subr.mxu0 0.0
    %5689 = vmatpush1.msra.mxu0 0.0
    %5690 = vmatprep.subr.mxu0 0.0
    %5691 = vmatpush1.msra.mxu0 0.0
    %5692 = vmatprep.subr.mxu0 0.0
    %5693 = vmatpush1.msra.mxu0 0.0
    %5694 = vmatprep.subr.mxu0 0.0
    %5695 = vmatpush1.msra.mxu0 0.0
    %5696 = vmatprep.subr.mxu0 0.0
    %5697 = vmatpush1.msra.mxu0 0.0
    %5698 = vmatprep.subr.mxu0 0.0
    %5699 = vmatpush1.msra.mxu0 0.0
    %5700 = vmatprep.subr.mxu0 0.0
    %5701 = vmatpush1.msra.mxu0 0.0
    %5702 = vmatprep.subr.mxu0 0.0
    %5703 = vmatpush1.msra.mxu0 0.0
    %5704 = vmatprep.subr.mxu0 0.0
    %5705 = vmatpush1.msra.mxu0 0.0
    %5706 = vmatprep.subr.mxu0 0.0
    %5707 = vmatpush1.msra.mxu0 0.0
    %5708 = vmatprep.subr.mxu0 0.0
    %5709 = vmatpush1.msra.mxu0 0.0
    %5710 = vmatprep.subr.mxu0 0.0
    %5711 = vmatpush1.msra.mxu0 0.0
    %5712 = vmatprep.subr.mxu0 0.0
    %5713 = vmatpush1.msra.mxu0 0.0
    %5714 = vmatprep.subr.mxu0 0.0
    %5715 = vmatpush1.msra.mxu0 0.0
    %5716 = vmatprep.subr.mxu0 0.0
    %5717 = vmatpush1.msra.mxu0 0.0
    %5718 = vmatprep.subr.mxu0 0.0
    %5719 = vmatpush1.msra.mxu0 0.0
    %5720 = vmatprep.subr.mxu0 0.0
    %5721 = vmatpush1.msra.mxu0 0.0
    %5722 = vmatprep.subr.mxu0 0.0
    %5723 = vmatpush1.msra.mxu0 0.0
    %5724 = vmatprep.subr.mxu0 0.0
    %5725 = vmatpush1.msra.mxu0 0.0
    %5726 = vmatprep.subr.mxu0 0.0
    %5727 = vmatpush1.msra.mxu0 0.0
    %5728 = vmatprep.subr.mxu0 0.0
    %5729 = vmatpush1.msra.mxu0 0.0
    %5730 = vmatprep.subr.mxu0 0.0
    %5731 = vmatpush1.msra.mxu0 0.0
    %5732 = vmatprep.subr.mxu0 0.0
    %5733 = vmatpush1.msra.mxu0 0.0
    %5734 = vmatprep.subr.mxu0 0.0
    %5735 = vmatpush1.msra.mxu0 0.0
    %5736 = vmatprep.mubr.f32.mxu0 0.0
    %v5737 = vand.u32 %v4810, 4294901760
    %5738 = vmatmul.mubr.f32.gmra.mrb[0].mxu0 %v5737
    %v5739 = vpop.f32.mrb[0].mxu0
    %v5740 = vadd.f32 %v5655, %v5739
    %v5741 = vpop.f32.mrb[0].mxu0
    %5742 = vmatprep.mubr.f32.mxu0 0.0
    %v5743 = vand.u32 %v4813, 4294901760
    %5744 = vmatmul.mubr.f32.gmra.mrb[0].mxu0 %v5743
    %v5745 = vpop.f32.mrb[0].mxu0
    %v5746 = vadd.f32 %v5663, %v5745
    %v5747 = vpop.f32.mrb[0].mxu0
    %5748 = vdwg.mxu0
    %5749 = vmatprep.subr.mxu0 0.0
    %v5750 = vand.u32 %v5321, 4294901760
    %5751 = vmatpush1.msra.mxu0 %v5750
    %5752 = vmatprep.subr.mxu0 0.0
    %v5753 = vand.u32 %v5324, 4294901760
    %5754 = vmatpush1.msra.mxu0 %v5753
    %5755 = vmatprep.subr.mxu0 0.0
    %5756 = vmatpush1.msra.mxu0 0.0
    %5757 = vmatprep.subr.mxu0 0.0
    %5758 = vmatpush1.msra.mxu0 0.0
    %5759 = vmatprep.subr.mxu0 0.0
    %5760 = vmatpush1.msra.mxu0 0.0
    %5761 = vmatprep.subr.mxu0 0.0
    %5762 = vmatpush1.msra.mxu0 0.0
    %5763 = vmatprep.subr.mxu0 0.0
    %5764 = vmatpush1.msra.mxu0 0.0
    %5765 = vmatprep.subr.mxu0 0.0
    %5766 = vmatpush1.msra.mxu0 0.0
    %5767 = vmatprep.subr.mxu0 0.0
    %5768 = vmatpush1.msra.mxu0 0.0
    %5769 = vmatprep.subr.mxu0 0.0
    %5770 = vmatpush1.msra.mxu0 0.0
    %5771 = vmatprep.subr.mxu0 0.0
    %5772 = vmatpush1.msra.mxu0 0.0
    %5773 = vmatprep.subr.mxu0 0.0
    %5774 = vmatpush1.msra.mxu0 0.0
    %5775 = vmatprep.subr.mxu0 0.0
    %5776 = vmatpush1.msra.mxu0 0.0
    %5777 = vmatprep.subr.mxu0 0.0
    %5778 = vmatpush1.msra.mxu0 0.0
    %5779 = vmatprep.subr.mxu0 0.0
    %5780 = vmatpush1.msra.mxu0 0.0
    %5781 = vmatprep.subr.mxu0 0.0
    %5782 = vmatpush1.msra.mxu0 0.0
    %5783 = vmatprep.subr.mxu0 0.0
    %5784 = vmatpush1.msra.mxu0 0.0
    %5785 = vmatprep.subr.mxu0 0.0
    %5786 = vmatpush1.msra.mxu0 0.0
    %5787 = vmatprep.subr.mxu0 0.0
    %5788 = vmatpush1.msra.mxu0 0.0
    %5789 = vmatprep.subr.mxu0 0.0
    %5790 = vmatpush1.msra.mxu0 0.0
    %5791 = vmatprep.subr.mxu0 0.0
    %5792 = vmatpush1.msra.mxu0 0.0
    %5793 = vmatprep.subr.mxu0 0.0
    %5794 = vmatpush1.msra.mxu0 0.0
    %5795 = vmatprep.subr.mxu0 0.0
    %5796 = vmatpush1.msra.mxu0 0.0
    %5797 = vmatprep.subr.mxu0 0.0
    %5798 = vmatpush1.msra.mxu0 0.0
    %5799 = vmatprep.subr.mxu0 0.0
    %5800 = vmatpush1.msra.mxu0 0.0
    %5801 = vmatprep.subr.mxu0 0.0
    %5802 = vmatpush1.msra.mxu0 0.0
    %5803 = vmatprep.subr.mxu0 0.0
    %5804 = vmatpush1.msra.mxu0 0.0
    %5805 = vmatprep.subr.mxu0 0.0
    %5806 = vmatpush1.msra.mxu0 0.0
    %5807 = vmatprep.subr.mxu0 0.0
    %5808 = vmatpush1.msra.mxu0 0.0
    %5809 = vmatprep.subr.mxu0 0.0
    %5810 = vmatpush1.msra.mxu0 0.0
    %5811 = vmatprep.subr.mxu0 0.0
    %5812 = vmatpush1.msra.mxu0 0.0
    %5813 = vmatprep.subr.mxu0 0.0
    %5814 = vmatpush1.msra.mxu0 0.0
    %5815 = vmatprep.mubr.f32.mxu0 0.0
    %v5816 = vand.u32 %v4810, 4294901760
    %5817 = vmatmul.mubr.f32.gmra.mrb[0].mxu0 %v5816
    %v5818 = vpop.f32.mrb[0].mxu0
    %v5819 = vadd.f32 %v5740, %v5818
    %v5820 = vpop.f32.mrb[0].mxu0
    %5821 = vmatprep.mubr.f32.mxu0 0.0
    %v5822 = vand.u32 %v4813, 4294901760
    %5823 = vmatmul.mubr.f32.gmra.mrb[0].mxu0 %v5822
    %v5824 = vpop.f32.mrb[0].mxu0
    %v5825 = vadd.f32 %v5746, %v5824
    %v5826 = vpop.f32.mrb[0].mxu0
    %5827 = vdwg.mxu0
    %v5828 = vmax.f32 %v5312, %v5819
    %v5829 = vmax.f32 %v5318, %v5825
    %vm5830 = vcmask 24576
    %5831 = vst.msk [vmem:[#allocation4] sm:$0x1] %vm5830, %v5828
    %5833 = vrot.lane.b32.xlu0 %v5828, 4
    %v5834 = vpop.permute.xlu0 %5833
    %vm5836 = vcmask 58401
    %5837 = vst.msk [vmem:[#allocation4 - $0x1] sm:$0x2] %vm5836, %v5834
    %5838 = vrot.lane.b32.xlu0 %v5828, 8
    %v5839 = vpop.permute.xlu0 %5838
    %vm5841 = vcmask 92226
    %5842 = vst.msk [vmem:[#allocation4 - $0x2] sm:$0x4] %vm5841, %v5839
    %5843 = vrot.lane.b32.xlu0 %v5828, 12
    %v5844 = vpop.permute.xlu0 %5843
    %vm5846 = vcmask 126051
    %5847 = vst.msk [vmem:[#allocation4 - $0x3] sm:$0x8] %vm5846, %v5844
    %5848 = vrot.lane.b32.xlu0 %v5828, 16
    %v5849 = vpop.permute.xlu0 %5848
    %vm5851 = vcmask 159876
    %5852 = vst.msk [vmem:[#allocation4 - $0x4] sm:$0x10] %vm5851, %v5849
    %5853 = vrot.lane.b32.xlu0 %v5828, 20
    %v5854 = vpop.permute.xlu0 %5853
    %vm5856 = vcmask 193701
    %5857 = vst.msk [vmem:[#allocation4 - $0x5] sm:$0x20] %vm5856, %v5854
    %5858 = vrot.lane.b32.xlu0 %v5828, 24
    %v5859 = vpop.permute.xlu0 %5858
    %vm5861 = vcmask 227526
    %5862 = vst.msk [vmem:[#allocation4 - $0x6] sm:$0x40] %vm5861, %v5859
    %5863 = vrot.lane.b32.xlu0 %v5828, 28
    %v5864 = vpop.permute.xlu0 %5863
    %vm5866 = vcmask 261351
    %5867 = vst.msk [vmem:[#allocation4 - $0x7] sm:$0x80] %vm5866, %v5864
    %5868 = vst.msk [vmem:[#allocation4 + $0x1] sm:$0x1] %vm5830, %v5829
    %5870 = vrot.lane.b32.xlu0 %v5829, 4
    %v5871 = vpop.permute.xlu0 %5870
    %5873 = vst.msk [vmem:[#allocation4] sm:$0x2] %vm5836, %v5871
    %5874 = vrot.lane.b32.xlu0 %v5829, 8
    %v5875 = vpop.permute.xlu0 %5874
    %5877 = vst.msk [vmem:[#allocation4 - $0x1] sm:$0x4] %vm5841, %v5875
    %5878 = vrot.lane.b32.xlu0 %v5829, 12
    %v5879 = vpop.permute.xlu0 %5878
    %5881 = vst.msk [vmem:[#allocation4 - $0x2] sm:$0x8] %vm5846, %v5879
    %5882 = vrot.lane.b32.xlu0 %v5829, 16
    %v5883 = vpop.permute.xlu0 %5882
    %5885 = vst.msk [vmem:[#allocation4 - $0x3] sm:$0x10] %vm5851, %v5883
    %5886 = vrot.lane.b32.xlu0 %v5829, 20
    %v5887 = vpop.permute.xlu0 %5886
    %5889 = vst.msk [vmem:[#allocation4 - $0x4] sm:$0x20] %vm5856, %v5887
    %5890 = vrot.lane.b32.xlu0 %v5829, 24
    %v5891 = vpop.permute.xlu0 %5890
    %5893 = vst.msk [vmem:[#allocation4 - $0x5] sm:$0x40] %vm5861, %v5891
    %5894 = vrot.lane.b32.xlu0 %v5829, 28
    %v5895 = vpop.permute.xlu0 %5894
    %5897 = vst.msk [vmem:[#allocation4 - $0x6] sm:$0x80] %vm5866, %v5895
    %v5898 = vld [vmem:[#allocation4] sm:$0x3]
    %v5899 = vld [vmem:[%s13] sm:$0xff]
    %v5900 = vld [vmem:[%s13 + $0x8] sm:$0xff]
    %v5901 = vld [vmem:[%s13 + $0x10] sm:$0xff]
    %v5902 = vld [vmem:[%s13 + $0x18] sm:$0xff]
    %v5903 = vld [vmem:[%s14] sm:$0x1]
    %v5905 = vlaneseq
    %v5906 = vshrl.u32 %v5905, 7
    %v5907 = vsub.s32 0, %v5906
    %v5908 = vrot.slane %v5903, %v5907
    %vm5910 = vcmask 261120
    %v5912 = vsel %vm5910, %v5898, 0
    %5914 = vmatprep.subr.mxu0 0.0
    %v5915 = vand.u32 %v5899, 4294901760
    %5916 = vmatpush1.msra.mxu0 %v5915
    %5917 = vmatprep.subr.mxu0 0.0
    %v5918 = vand.u32 %v5900, 4294901760
    %5919 = vmatpush1.msra.mxu0 %v5918
    %5920 = vmatprep.subr.mxu0 0.0
    %v5921 = vand.u32 %v5901, 4294901760
    %5922 = vmatpush1.msra.mxu0 %v5921
    %5923 = vmatprep.subr.mxu0 0.0
    %v5924 = vand.u32 %v5902, 4294901760
    %5925 = vmatpush1.msra.mxu0 %v5924
    %5926 = vmatprep.subr.mxu0 0.0
    %5927 = vmatpush1.msra.mxu0 0.0
    %5928 = vmatprep.subr.mxu0 0.0
    %5929 = vmatpush1.msra.mxu0 0.0
    %5930 = vmatprep.subr.mxu0 0.0
    %5931 = vmatpush1.msra.mxu0 0.0
    %5932 = vmatprep.subr.mxu0 0.0
    %5933 = vmatpush1.msra.mxu0 0.0
    %5934 = vmatprep.subr.mxu0 0.0
    %5935 = vmatpush1.msra.mxu0 0.0
    %5936 = vmatprep.subr.mxu0 0.0
    %5937 = vmatpush1.msra.mxu0 0.0
    %5938 = vmatprep.subr.mxu0 0.0
    %5939 = vmatpush1.msra.mxu0 0.0
    %5940 = vmatprep.subr.mxu0 0.0
    %5941 = vmatpush1.msra.mxu0 0.0
    %5942 = vmatprep.subr.mxu0 0.0
    %5943 = vmatpush1.msra.mxu0 0.0
    %5944 = vmatprep.subr.mxu0 0.0
    %5945 = vmatpush1.msra.mxu0 0.0
    %5946 = vmatprep.subr.mxu0 0.0
    %5947 = vmatpush1.msra.mxu0 0.0
    %5948 = vmatprep.subr.mxu0 0.0
    %5949 = vmatpush1.msra.mxu0 0.0
    %5950 = vmatprep.subr.mxu0 0.0
    %5951 = vmatpush1.msra.mxu0 0.0
    %5952 = vmatprep.subr.mxu0 0.0
    %5953 = vmatpush1.msra.mxu0 0.0
    %5954 = vmatprep.subr.mxu0 0.0
    %5955 = vmatpush1.msra.mxu0 0.0
    %5956 = vmatprep.subr.mxu0 0.0
    %5957 = vmatpush1.msra.mxu0 0.0
    %5958 = vmatprep.subr.mxu0 0.0
    %5959 = vmatpush1.msra.mxu0 0.0
    %5960 = vmatprep.subr.mxu0 0.0
    %5961 = vmatpush1.msra.mxu0 0.0
    %5962 = vmatprep.subr.mxu0 0.0
    %5963 = vmatpush1.msra.mxu0 0.0
    %5964 = vmatprep.subr.mxu0 0.0
    %5965 = vmatpush1.msra.mxu0 0.0
    %5966 = vmatprep.subr.mxu0 0.0
    %5967 = vmatpush1.msra.mxu0 0.0
    %5968 = vmatprep.subr.mxu0 0.0
    %5969 = vmatpush1.msra.mxu0 0.0
    %5970 = vmatprep.subr.mxu0 0.0
    %5971 = vmatpush1.msra.mxu0 0.0
    %5972 = vmatprep.subr.mxu0 0.0
    %5973 = vmatpush1.msra.mxu0 0.0
    %5974 = vmatprep.subr.mxu0 0.0
    %5975 = vmatpush1.msra.mxu0 0.0
    %5976 = vmatprep.subr.mxu0 0.0
    %5977 = vmatpush1.msra.mxu0 0.0
    %5978 = vmatprep.subr.mxu0 0.0
    %5979 = vmatpush1.msra.mxu0 0.0
    %5980 = vmatprep.subr.mxu0 0.0
    %5981 = vmatpush1.msra.mxu0 0.0
    %5982 = vmatprep.mubr.f32.mxu0 0.0
    %v5983 = vand.u32 %v5912, 4294901760
    %v5984 = vsub.f32 %v5912, %v5983
    %v5985 = vand.u32 %v5984, 4294901760
    %v5986 = vsub.f32 %v5984, %v5985
    %v5987 = vand.u32 %v5986, 4294901760
    %5988 = vmatmul.mubr.f32.gmra.mrb[0].mxu0 %v5987
    %v5989 = vpop.f32.mrb[0].mxu0
    %v5990 = vadd.f32 %v5908, %v5989
    %v5991 = vpop.f32.mrb[0].mxu0
    %5992 = vdwg.mxu0
    %5993 = vmatprep.subr.mxu0 0.0
    %v5994 = vand.u32 %v5899, 4294901760
    %v5995 = vsub.f32 %v5899, %v5994
    %v5996 = vand.u32 %v5995, 4294901760
    %v5997 = vsub.f32 %v5995, %v5996
    %v5998 = vand.u32 %v5997, 4294901760
    %5999 = vmatpush1.msra.mxu0 %v5998
    %6000 = vmatprep.subr.mxu0 0.0
    %v6001 = vand.u32 %v5900, 4294901760
    %v6002 = vsub.f32 %v5900, %v6001
    %v6003 = vand.u32 %v6002, 4294901760
    %v6004 = vsub.f32 %v6002, %v6003
    %v6005 = vand.u32 %v6004, 4294901760
    %6006 = vmatpush1.msra.mxu0 %v6005
    %6007 = vmatprep.subr.mxu0 0.0
    %v6008 = vand.u32 %v5901, 4294901760
    %v6009 = vsub.f32 %v5901, %v6008
    %v6010 = vand.u32 %v6009, 4294901760
    %v6011 = vsub.f32 %v6009, %v6010
    %v6012 = vand.u32 %v6011, 4294901760
    %6013 = vmatpush1.msra.mxu0 %v6012
    %6014 = vmatprep.subr.mxu0 0.0
    %v6015 = vand.u32 %v5902, 4294901760
    %v6016 = vsub.f32 %v5902, %v6015
    %v6017 = vand.u32 %v6016, 4294901760
    %v6018 = vsub.f32 %v6016, %v6017
    %v6019 = vand.u32 %v6018, 4294901760
    %6020 = vmatpush1.msra.mxu0 %v6019
    %6021 = vmatprep.subr.mxu0 0.0
    %6022 = vmatpush1.msra.mxu0 0.0
    %6023 = vmatprep.subr.mxu0 0.0
    %6024 = vmatpush1.msra.mxu0 0.0
    %6025 = vmatprep.subr.mxu0 0.0
    %6026 = vmatpush1.msra.mxu0 0.0
    %6027 = vmatprep.subr.mxu0 0.0
    %6028 = vmatpush1.msra.mxu0 0.0
    %6029 = vmatprep.subr.mxu0 0.0
    %6030 = vmatpush1.msra.mxu0 0.0
    %6031 = vmatprep.subr.mxu0 0.0
    %6032 = vmatpush1.msra.mxu0 0.0
    %6033 = vmatprep.subr.mxu0 0.0
    %6034 = vmatpush1.msra.mxu0 0.0
    %6035 = vmatprep.subr.mxu0 0.0
    %6036 = vmatpush1.msra.mxu0 0.0
    %6037 = vmatprep.subr.mxu0 0.0
    %6038 = vmatpush1.msra.mxu0 0.0
    %6039 = vmatprep.subr.mxu0 0.0
    %6040 = vmatpush1.msra.mxu0 0.0
    %6041 = vmatprep.subr.mxu0 0.0
    %6042 = vmatpush1.msra.mxu0 0.0
    %6043 = vmatprep.subr.mxu0 0.0
    %6044 = vmatpush1.msra.mxu0 0.0
    %6045 = vmatprep.subr.mxu0 0.0
    %6046 = vmatpush1.msra.mxu0 0.0
    %6047 = vmatprep.subr.mxu0 0.0
    %6048 = vmatpush1.msra.mxu0 0.0
    %6049 = vmatprep.subr.mxu0 0.0
    %6050 = vmatpush1.msra.mxu0 0.0
    %6051 = vmatprep.subr.mxu0 0.0
    %6052 = vmatpush1.msra.mxu0 0.0
    %6053 = vmatprep.subr.mxu0 0.0
    %6054 = vmatpush1.msra.mxu0 0.0
    %6055 = vmatprep.subr.mxu0 0.0
    %6056 = vmatpush1.msra.mxu0 0.0
    %6057 = vmatprep.subr.mxu0 0.0
    %6058 = vmatpush1.msra.mxu0 0.0
    %6059 = vmatprep.subr.mxu0 0.0
    %6060 = vmatpush1.msra.mxu0 0.0
    %6061 = vmatprep.subr.mxu0 0.0
    %6062 = vmatpush1.msra.mxu0 0.0
    %6063 = vmatprep.subr.mxu0 0.0
    %6064 = vmatpush1.msra.mxu0 0.0
    %6065 = vmatprep.subr.mxu0 0.0
    %6066 = vmatpush1.msra.mxu0 0.0
    %6067 = vmatprep.subr.mxu0 0.0
    %6068 = vmatpush1.msra.mxu0 0.0
    %6069 = vmatprep.subr.mxu0 0.0
    %6070 = vmatpush1.msra.mxu0 0.0
    %6071 = vmatprep.subr.mxu0 0.0
    %6072 = vmatpush1.msra.mxu0 0.0
    %6073 = vmatprep.subr.mxu0 0.0
    %6074 = vmatpush1.msra.mxu0 0.0
    %6075 = vmatprep.subr.mxu0 0.0
    %6076 = vmatpush1.msra.mxu0 0.0
    %6077 = vmatprep.mubr.f32.mxu0 0.0
    %v6078 = vand.u32 %v5912, 4294901760
    %6079 = vmatmul.mubr.f32.gmra.mrb[0].mxu0 %v6078
    %v6080 = vpop.f32.mrb[0].mxu0
    %v6081 = vadd.f32 %v5990, %v6080
    %v6082 = vpop.f32.mrb[0].mxu0
    %6083 = vdwg.mxu0
    %6084 = vmatprep.subr.mxu0 0.0
    %v6085 = vand.u32 %v5899, 4294901760
    %v6086 = vsub.f32 %v5899, %v6085
    %6087 = vmatpush1.msra.mxu0 %v6086
    %6088 = vmatprep.subr.mxu0 0.0
    %v6089 = vand.u32 %v5900, 4294901760
    %v6090 = vsub.f32 %v5900, %v6089
    %6091 = vmatpush1.msra.mxu0 %v6090
    %6092 = vmatprep.subr.mxu0 0.0
    %v6093 = vand.u32 %v5901, 4294901760
    %v6094 = vsub.f32 %v5901, %v6093
    %6095 = vmatpush1.msra.mxu0 %v6094
    %6096 = vmatprep.subr.mxu0 0.0
    %v6097 = vand.u32 %v5902, 4294901760
    %v6098 = vsub.f32 %v5902, %v6097
    %6099 = vmatpush1.msra.mxu0 %v6098
    %6100 = vmatprep.subr.mxu0 0.0
    %6101 = vmatpush1.msra.mxu0 0.0
    %6102 = vmatprep.subr.mxu0 0.0
    %6103 = vmatpush1.msra.mxu0 0.0
    %6104 = vmatprep.subr.mxu0 0.0
    %6105 = vmatpush1.msra.mxu0 0.0
    %6106 = vmatprep.subr.mxu0 0.0
    %6107 = vmatpush1.msra.mxu0 0.0
    %6108 = vmatprep.subr.mxu0 0.0
    %6109 = vmatpush1.msra.mxu0 0.0
    %6110 = vmatprep.subr.mxu0 0.0
    %6111 = vmatpush1.msra.mxu0 0.0
    %6112 = vmatprep.subr.mxu0 0.0
    %6113 = vmatpush1.msra.mxu0 0.0
    %6114 = vmatprep.subr.mxu0 0.0
    %6115 = vmatpush1.msra.mxu0 0.0
    %6116 = vmatprep.subr.mxu0 0.0
    %6117 = vmatpush1.msra.mxu0 0.0
    %6118 = vmatprep.subr.mxu0 0.0
    %6119 = vmatpush1.msra.mxu0 0.0
    %6120 = vmatprep.subr.mxu0 0.0
    %6121 = vmatpush1.msra.mxu0 0.0
    %6122 = vmatprep.subr.mxu0 0.0
    %6123 = vmatpush1.msra.mxu0 0.0
    %6124 = vmatprep.subr.mxu0 0.0
    %6125 = vmatpush1.msra.mxu0 0.0
    %6126 = vmatprep.subr.mxu0 0.0
    %6127 = vmatpush1.msra.mxu0 0.0
    %6128 = vmatprep.subr.mxu0 0.0
    %6129 = vmatpush1.msra.mxu0 0.0
    %6130 = vmatprep.subr.mxu0 0.0
    %6131 = vmatpush1.msra.mxu0 0.0
    %6132 = vmatprep.subr.mxu0 0.0
    %6133 = vmatpush1.msra.mxu0 0.0
    %6134 = vmatprep.subr.mxu0 0.0
    %6135 = vmatpush1.msra.mxu0 0.0
    %6136 = vmatprep.subr.mxu0 0.0
    %6137 = vmatpush1.msra.mxu0 0.0
    %6138 = vmatprep.subr.mxu0 0.0
    %6139 = vmatpush1.msra.mxu0 0.0
    %6140 = vmatprep.subr.mxu0 0.0
    %6141 = vmatpush1.msra.mxu0 0.0
    %6142 = vmatprep.subr.mxu0 0.0
    %6143 = vmatpush1.msra.mxu0 0.0
    %6144 = vmatprep.subr.mxu0 0.0
    %6145 = vmatpush1.msra.mxu0 0.0
    %6146 = vmatprep.subr.mxu0 0.0
    %6147 = vmatpush1.msra.mxu0 0.0
    %6148 = vmatprep.subr.mxu0 0.0
    %6149 = vmatpush1.msra.mxu0 0.0
    %6150 = vmatprep.subr.mxu0 0.0
    %6151 = vmatpush1.msra.mxu0 0.0
    %6152 = vmatprep.subr.mxu0 0.0
    %6153 = vmatpush1.msra.mxu0 0.0
    %6154 = vmatprep.subr.mxu0 0.0
    %6155 = vmatpush1.msra.mxu0 0.0
    %6156 = vmatprep.mubr.f32.mxu0 0.0
    %v6157 = vand.u32 %v5912, 4294901760
    %v6158 = vsub.f32 %v5912, %v6157
    %6159 = vmatmul.mubr.f32.gmra.mrb[0].mxu0 %v6158
    %v6160 = vpop.f32.mrb[0].mxu0
    %v6161 = vadd.f32 %v6081, %v6160
    %v6162 = vpop.f32.mrb[0].mxu0
    %6163 = vdwg.mxu0
    %6164 = vmatprep.subr.mxu0 0.0
    %v6165 = vand.u32 %v5899, 4294901760
    %6166 = vmatpush1.msra.mxu0 %v6165
    %6167 = vmatprep.subr.mxu0 0.0
    %v6168 = vand.u32 %v5900, 4294901760
    %6169 = vmatpush1.msra.mxu0 %v6168
    %6170 = vmatprep.subr.mxu0 0.0
    %v6171 = vand.u32 %v5901, 4294901760
    %6172 = vmatpush1.msra.mxu0 %v6171
    %6173 = vmatprep.subr.mxu0 0.0
    %v6174 = vand.u32 %v5902, 4294901760
    %6175 = vmatpush1.msra.mxu0 %v6174
    %6176 = vmatprep.subr.mxu0 0.0
    %6177 = vmatpush1.msra.mxu0 0.0
    %6178 = vmatprep.subr.mxu0 0.0
    %6179 = vmatpush1.msra.mxu0 0.0
    %6180 = vmatprep.subr.mxu0 0.0
    %6181 = vmatpush1.msra.mxu0 0.0
    %6182 = vmatprep.subr.mxu0 0.0
    %6183 = vmatpush1.msra.mxu0 0.0
    %6184 = vmatprep.subr.mxu0 0.0
    %6185 = vmatpush1.msra.mxu0 0.0
    %6186 = vmatprep.subr.mxu0 0.0
    %6187 = vmatpush1.msra.mxu0 0.0
    %6188 = vmatprep.subr.mxu0 0.0
    %6189 = vmatpush1.msra.mxu0 0.0
    %6190 = vmatprep.subr.mxu0 0.0
    %6191 = vmatpush1.msra.mxu0 0.0
    %6192 = vmatprep.subr.mxu0 0.0
    %6193 = vmatpush1.msra.mxu0 0.0
    %6194 = vmatprep.subr.mxu0 0.0
    %6195 = vmatpush1.msra.mxu0 0.0
    %6196 = vmatprep.subr.mxu0 0.0
    %6197 = vmatpush1.msra.mxu0 0.0
    %6198 = vmatprep.subr.mxu0 0.0
    %6199 = vmatpush1.msra.mxu0 0.0
    %6200 = vmatprep.subr.mxu0 0.0
    %6201 = vmatpush1.msra.mxu0 0.0
    %6202 = vmatprep.subr.mxu0 0.0
    %6203 = vmatpush1.msra.mxu0 0.0
    %6204 = vmatprep.subr.mxu0 0.0
    %6205 = vmatpush1.msra.mxu0 0.0
    %6206 = vmatprep.subr.mxu0 0.0
    %6207 = vmatpush1.msra.mxu0 0.0
    %6208 = vmatprep.subr.mxu0 0.0
    %6209 = vmatpush1.msra.mxu0 0.0
    %6210 = vmatprep.subr.mxu0 0.0
    %6211 = vmatpush1.msra.mxu0 0.0
    %6212 = vmatprep.subr.mxu0 0.0
    %6213 = vmatpush1.msra.mxu0 0.0
    %6214 = vmatprep.subr.mxu0 0.0
    %6215 = vmatpush1.msra.mxu0 0.0
    %6216 = vmatprep.subr.mxu0 0.0
    %6217 = vmatpush1.msra.mxu0 0.0
    %6218 = vmatprep.subr.mxu0 0.0
    %6219 = vmatpush1.msra.mxu0 0.0
    %6220 = vmatprep.subr.mxu0 0.0
    %6221 = vmatpush1.msra.mxu0 0.0
    %6222 = vmatprep.subr.mxu0 0.0
    %6223 = vmatpush1.msra.mxu0 0.0
    %6224 = vmatprep.subr.mxu0 0.0
    %6225 = vmatpush1.msra.mxu0 0.0
    %6226 = vmatprep.subr.mxu0 0.0
    %6227 = vmatpush1.msra.mxu0 0.0
    %6228 = vmatprep.subr.mxu0 0.0
    %6229 = vmatpush1.msra.mxu0 0.0
    %6230 = vmatprep.subr.mxu0 0.0
    %6231 = vmatpush1.msra.mxu0 0.0
    %6232 = vmatprep.mubr.f32.mxu0 0.0
    %v6233 = vand.u32 %v5912, 4294901760
    %v6234 = vsub.f32 %v5912, %v6233
    %v6235 = vand.u32 %v6234, 4294901760
    %6236 = vmatmul.mubr.f32.gmra.mrb[0].mxu0 %v6235
    %v6237 = vpop.f32.mrb[0].mxu0
    %v6238 = vadd.f32 %v6161, %v6237
    %v6239 = vpop.f32.mrb[0].mxu0
    %6240 = vdwg.mxu0
    %6241 = vmatprep.subr.mxu0 0.0
    %v6242 = vand.u32 %v5899, 4294901760
    %v6243 = vsub.f32 %v5899, %v6242
    %v6244 = vand.u32 %v6243, 4294901760
    %6245 = vmatpush1.msra.mxu0 %v6244
    %6246 = vmatprep.subr.mxu0 0.0
    %v6247 = vand.u32 %v5900, 4294901760
    %v6248 = vsub.f32 %v5900, %v6247
    %v6249 = vand.u32 %v6248, 4294901760
    %6250 = vmatpush1.msra.mxu0 %v6249
    %6251 = vmatprep.subr.mxu0 0.0
    %v6252 = vand.u32 %v5901, 4294901760
    %v6253 = vsub.f32 %v5901, %v6252
    %v6254 = vand.u32 %v6253, 4294901760
    %6255 = vmatpush1.msra.mxu0 %v6254
    %6256 = vmatprep.subr.mxu0 0.0
    %v6257 = vand.u32 %v5902, 4294901760
    %v6258 = vsub.f32 %v5902, %v6257
    %v6259 = vand.u32 %v6258, 4294901760
    %6260 = vmatpush1.msra.mxu0 %v6259
    %6261 = vmatprep.subr.mxu0 0.0
    %6262 = vmatpush1.msra.mxu0 0.0
    %6263 = vmatprep.subr.mxu0 0.0
    %6264 = vmatpush1.msra.mxu0 0.0
    %6265 = vmatprep.subr.mxu0 0.0
    %6266 = vmatpush1.msra.mxu0 0.0
    %6267 = vmatprep.subr.mxu0 0.0
    %6268 = vmatpush1.msra.mxu0 0.0
    %6269 = vmatprep.subr.mxu0 0.0
    %6270 = vmatpush1.msra.mxu0 0.0
    %6271 = vmatprep.subr.mxu0 0.0
    %6272 = vmatpush1.msra.mxu0 0.0
    %6273 = vmatprep.subr.mxu0 0.0
    %6274 = vmatpush1.msra.mxu0 0.0
    %6275 = vmatprep.subr.mxu0 0.0
    %6276 = vmatpush1.msra.mxu0 0.0
    %6277 = vmatprep.subr.mxu0 0.0
    %6278 = vmatpush1.msra.mxu0 0.0
    %6279 = vmatprep.subr.mxu0 0.0
    %6280 = vmatpush1.msra.mxu0 0.0
    %6281 = vmatprep.subr.mxu0 0.0
    %6282 = vmatpush1.msra.mxu0 0.0
    %6283 = vmatprep.subr.mxu0 0.0
    %6284 = vmatpush1.msra.mxu0 0.0
    %6285 = vmatprep.subr.mxu0 0.0
    %6286 = vmatpush1.msra.mxu0 0.0
    %6287 = vmatprep.subr.mxu0 0.0
    %6288 = vmatpush1.msra.mxu0 0.0
    %6289 = vmatprep.subr.mxu0 0.0
    %6290 = vmatpush1.msra.mxu0 0.0
    %6291 = vmatprep.subr.mxu0 0.0
    %6292 = vmatpush1.msra.mxu0 0.0
    %6293 = vmatprep.subr.mxu0 0.0
    %6294 = vmatpush1.msra.mxu0 0.0
    %6295 = vmatprep.subr.mxu0 0.0
    %6296 = vmatpush1.msra.mxu0 0.0
    %6297 = vmatprep.subr.mxu0 0.0
    %6298 = vmatpush1.msra.mxu0 0.0
    %6299 = vmatprep.subr.mxu0 0.0
    %6300 = vmatpush1.msra.mxu0 0.0
    %6301 = vmatprep.subr.mxu0 0.0
    %6302 = vmatpush1.msra.mxu0 0.0
    %6303 = vmatprep.subr.mxu0 0.0
    %6304 = vmatpush1.msra.mxu0 0.0
    %6305 = vmatprep.subr.mxu0 0.0
    %6306 = vmatpush1.msra.mxu0 0.0
    %6307 = vmatprep.subr.mxu0 0.0
    %6308 = vmatpush1.msra.mxu0 0.0
    %6309 = vmatprep.subr.mxu0 0.0
    %6310 = vmatpush1.msra.mxu0 0.0
    %6311 = vmatprep.subr.mxu0 0.0
    %6312 = vmatpush1.msra.mxu0 0.0
    %6313 = vmatprep.subr.mxu0 0.0
    %6314 = vmatpush1.msra.mxu0 0.0
    %6315 = vmatprep.subr.mxu0 0.0
    %6316 = vmatpush1.msra.mxu0 0.0
    %6317 = vmatprep.mubr.f32.mxu0 0.0
    %v6318 = vand.u32 %v5912, 4294901760
    %6319 = vmatmul.mubr.f32.gmra.mrb[0].mxu0 %v6318
    %v6320 = vpop.f32.mrb[0].mxu0
    %v6321 = vadd.f32 %v6238, %v6320
    %v6322 = vpop.f32.mrb[0].mxu0
    %6323 = vdwg.mxu0
    %6324 = vmatprep.subr.mxu0 0.0
    %v6325 = vand.u32 %v5899, 4294901760
    %6326 = vmatpush1.msra.mxu0 %v6325
    %6327 = vmatprep.subr.mxu0 0.0
    %v6328 = vand.u32 %v5900, 4294901760
    %6329 = vmatpush1.msra.mxu0 %v6328
    %6330 = vmatprep.subr.mxu0 0.0
    %v6331 = vand.u32 %v5901, 4294901760
    %6332 = vmatpush1.msra.mxu0 %v6331
    %6333 = vmatprep.subr.mxu0 0.0
    %v6334 = vand.u32 %v5902, 4294901760
    %6335 = vmatpush1.msra.mxu0 %v6334
    %6336 = vmatprep.subr.mxu0 0.0
    %6337 = vmatpush1.msra.mxu0 0.0
    %6338 = vmatprep.subr.mxu0 0.0
    %6339 = vmatpush1.msra.mxu0 0.0
    %6340 = vmatprep.subr.mxu0 0.0
    %6341 = vmatpush1.msra.mxu0 0.0
    %6342 = vmatprep.subr.mxu0 0.0
    %6343 = vmatpush1.msra.mxu0 0.0
    %6344 = vmatprep.subr.mxu0 0.0
    %6345 = vmatpush1.msra.mxu0 0.0
    %6346 = vmatprep.subr.mxu0 0.0
    %6347 = vmatpush1.msra.mxu0 0.0
    %6348 = vmatprep.subr.mxu0 0.0
    %6349 = vmatpush1.msra.mxu0 0.0
    %6350 = vmatprep.subr.mxu0 0.0
    %6351 = vmatpush1.msra.mxu0 0.0
    %6352 = vmatprep.subr.mxu0 0.0
    %6353 = vmatpush1.msra.mxu0 0.0
    %6354 = vmatprep.subr.mxu0 0.0
    %6355 = vmatpush1.msra.mxu0 0.0
    %6356 = vmatprep.subr.mxu0 0.0
    %6357 = vmatpush1.msra.mxu0 0.0
    %6358 = vmatprep.subr.mxu0 0.0
    %6359 = vmatpush1.msra.mxu0 0.0
    %6360 = vmatprep.subr.mxu0 0.0
    %6361 = vmatpush1.msra.mxu0 0.0
    %6362 = vmatprep.subr.mxu0 0.0
    %6363 = vmatpush1.msra.mxu0 0.0
    %6364 = vmatprep.subr.mxu0 0.0
    %6365 = vmatpush1.msra.mxu0 0.0
    %6366 = vmatprep.subr.mxu0 0.0
    %6367 = vmatpush1.msra.mxu0 0.0
    %6368 = vmatprep.subr.mxu0 0.0
    %6369 = vmatpush1.msra.mxu0 0.0
    %6370 = vmatprep.subr.mxu0 0.0
    %6371 = vmatpush1.msra.mxu0 0.0
    %6372 = vmatprep.subr.mxu0 0.0
    %6373 = vmatpush1.msra.mxu0 0.0
    %6374 = vmatprep.subr.mxu0 0.0
    %6375 = vmatpush1.msra.mxu0 0.0
    %6376 = vmatprep.subr.mxu0 0.0
    %6377 = vmatpush1.msra.mxu0 0.0
    %6378 = vmatprep.subr.mxu0 0.0
    %6379 = vmatpush1.msra.mxu0 0.0
    %6380 = vmatprep.subr.mxu0 0.0
    %6381 = vmatpush1.msra.mxu0 0.0
    %6382 = vmatprep.subr.mxu0 0.0
    %6383 = vmatpush1.msra.mxu0 0.0
    %6384 = vmatprep.subr.mxu0 0.0
    %6385 = vmatpush1.msra.mxu0 0.0
    %6386 = vmatprep.subr.mxu0 0.0
    %6387 = vmatpush1.msra.mxu0 0.0
    %6388 = vmatprep.subr.mxu0 0.0
    %6389 = vmatpush1.msra.mxu0 0.0
    %6390 = vmatprep.subr.mxu0 0.0
    %6391 = vmatpush1.msra.mxu0 0.0
    %6392 = vmatprep.mubr.f32.mxu0 0.0
    %v6393 = vand.u32 %v5912, 4294901760
    %6394 = vmatmul.mubr.f32.gmra.mrb[0].mxu0 %v6393
    %v6395 = vpop.f32.mrb[0].mxu0
    %v6396 = vadd.f32 %v6321, %v6395
    %v6397 = vpop.f32.mrb[0].mxu0
    %6398 = vdwg.mxu0
    %v6399 = vmax.f32 %v6396, 0.0
    %v6400 = vld [vmem:[%s15] sm:$0xff]
    %v6401 = vld [vmem:[%s15 + $0x8] sm:$0xff]
    %v6402 = vld [vmem:[%s15 + $0x10] sm:$0xff]
    %v6403 = vld [vmem:[%s15 + $0x18] sm:$0xff]
    %v6404 = vld [vmem:[%s15 + $0x20] sm:$0xff]
    %v6405 = vld [vmem:[%s15 + $0x28] sm:$0xff]
    %v6406 = vld [vmem:[%s15 + $0x30] sm:$0xff]
    %v6407 = vld [vmem:[%s15 + $0x38] sm:$0xff]
    %v6408 = vld [vmem:[%s15 + $0x40] sm:$0xff]
    %v6409 = vld [vmem:[%s15 + $0x48] sm:$0xff]
    %v6410 = vld [vmem:[%s15 + $0x50] sm:$0xff]
    %v6411 = vld [vmem:[%s15 + $0x58] sm:$0xff]
    %v6412 = vld [vmem:[%s15 + $0x60] sm:$0xff]
    %v6413 = vld [vmem:[%s15 + $0x68] sm:$0xff]
    %v6414 = vld [vmem:[%s15 + $0x70] sm:$0xff]
    %v6415 = vld [vmem:[%s15 + $0x78] sm:$0xff]
    %v6416 = vld [vmem:[%s16] sm:$0x1]
    %v6418 = vlaneseq
    %v6419 = vshrl.u32 %v6418, 7
    %v6420 = vsub.s32 0, %v6419
    %v6421 = vrot.slane %v6416, %v6420
    %6423 = vmatprep.subr.mxu0 0.0
    %v6424 = vand.u32 %v6400, 4294901760
    %6425 = vmatpush1.msra.mxu0 %v6424
    %6426 = vmatprep.subr.mxu0 0.0
    %v6427 = vand.u32 %v6401, 4294901760
    %6428 = vmatpush1.msra.mxu0 %v6427
    %6429 = vmatprep.subr.mxu0 0.0
    %v6430 = vand.u32 %v6402, 4294901760
    %6431 = vmatpush1.msra.mxu0 %v6430
    %6432 = vmatprep.subr.mxu0 0.0
    %v6433 = vand.u32 %v6403, 4294901760
    %6434 = vmatpush1.msra.mxu0 %v6433
    %6435 = vmatprep.subr.mxu0 0.0
    %v6436 = vand.u32 %v6404, 4294901760
    %6437 = vmatpush1.msra.mxu0 %v6436
    %6438 = vmatprep.subr.mxu0 0.0
    %v6439 = vand.u32 %v6405, 4294901760
    %6440 = vmatpush1.msra.mxu0 %v6439
    %6441 = vmatprep.subr.mxu0 0.0
    %v6442 = vand.u32 %v6406, 4294901760
    %6443 = vmatpush1.msra.mxu0 %v6442
    %6444 = vmatprep.subr.mxu0 0.0
    %v6445 = vand.u32 %v6407, 4294901760
    %6446 = vmatpush1.msra.mxu0 %v6445
    %6447 = vmatprep.subr.mxu0 0.0
    %v6448 = vand.u32 %v6408, 4294901760
    %6449 = vmatpush1.msra.mxu0 %v6448
    %6450 = vmatprep.subr.mxu0 0.0
    %v6451 = vand.u32 %v6409, 4294901760
    %6452 = vmatpush1.msra.mxu0 %v6451
    %6453 = vmatprep.subr.mxu0 0.0
    %v6454 = vand.u32 %v6410, 4294901760
    %6455 = vmatpush1.msra.mxu0 %v6454
    %6456 = vmatprep.subr.mxu0 0.0
    %v6457 = vand.u32 %v6411, 4294901760
    %6458 = vmatpush1.msra.mxu0 %v6457
    %6459 = vmatprep.subr.mxu0 0.0
    %v6460 = vand.u32 %v6412, 4294901760
    %6461 = vmatpush1.msra.mxu0 %v6460
    %6462 = vmatprep.subr.mxu0 0.0
    %v6463 = vand.u32 %v6413, 4294901760
    %6464 = vmatpush1.msra.mxu0 %v6463
    %6465 = vmatprep.subr.mxu0 0.0
    %v6466 = vand.u32 %v6414, 4294901760
    %6467 = vmatpush1.msra.mxu0 %v6466
    %6468 = vmatprep.subr.mxu0 0.0
    %v6469 = vand.u32 %v6415, 4294901760
    %6470 = vmatpush1.msra.mxu0 %v6469
    %6471 = vmatprep.subr.mxu0 0.0
    %6472 = vmatpush1.msra.mxu0 0.0
    %6473 = vmatprep.subr.mxu0 0.0
    %6474 = vmatpush1.msra.mxu0 0.0
    %6475 = vmatprep.subr.mxu0 0.0
    %6476 = vmatpush1.msra.mxu0 0.0
    %6477 = vmatprep.subr.mxu0 0.0
    %6478 = vmatpush1.msra.mxu0 0.0
    %6479 = vmatprep.subr.mxu0 0.0
    %6480 = vmatpush1.msra.mxu0 0.0
    %6481 = vmatprep.subr.mxu0 0.0
    %6482 = vmatpush1.msra.mxu0 0.0
    %6483 = vmatprep.subr.mxu0 0.0
    %6484 = vmatpush1.msra.mxu0 0.0
    %6485 = vmatprep.subr.mxu0 0.0
    %6486 = vmatpush1.msra.mxu0 0.0
    %6487 = vmatprep.subr.mxu0 0.0
    %6488 = vmatpush1.msra.mxu0 0.0
    %6489 = vmatprep.subr.mxu0 0.0
    %6490 = vmatpush1.msra.mxu0 0.0
    %6491 = vmatprep.subr.mxu0 0.0
    %6492 = vmatpush1.msra.mxu0 0.0
    %6493 = vmatprep.subr.mxu0 0.0
    %6494 = vmatpush1.msra.mxu0 0.0
    %6495 = vmatprep.subr.mxu0 0.0
    %6496 = vmatpush1.msra.mxu0 0.0
    %6497 = vmatprep.subr.mxu0 0.0
    %6498 = vmatpush1.msra.mxu0 0.0
    %6499 = vmatprep.subr.mxu0 0.0
    %6500 = vmatpush1.msra.mxu0 0.0
    %6501 = vmatprep.subr.mxu0 0.0
    %6502 = vmatpush1.msra.mxu0 0.0
    %6503 = vmatprep.mubr.f32.mxu0 0.0
    %v6504 = vand.u32 %v6399, 4294901760
    %v6505 = vsub.f32 %v6399, %v6504
    %v6506 = vand.u32 %v6505, 4294901760
    %v6507 = vsub.f32 %v6505, %v6506
    %v6508 = vand.u32 %v6507, 4294901760
    %6509 = vmatmul.mubr.f32.gmra.mrb[0].mxu0 %v6508
    %v6510 = vpop.f32.mrb[0].mxu0
    %v6511 = vadd.f32 %v6421, %v6510
    %v6512 = vpop.f32.mrb[0].mxu0
    %6513 = vdwg.mxu0
    %6514 = vmatprep.subr.mxu0 0.0
    %v6515 = vand.u32 %v6400, 4294901760
    %v6516 = vsub.f32 %v6400, %v6515
    %v6517 = vand.u32 %v6516, 4294901760
    %v6518 = vsub.f32 %v6516, %v6517
    %v6519 = vand.u32 %v6518, 4294901760
    %6520 = vmatpush1.msra.mxu0 %v6519
    %6521 = vmatprep.subr.mxu0 0.0
    %v6522 = vand.u32 %v6401, 4294901760
    %v6523 = vsub.f32 %v6401, %v6522
    %v6524 = vand.u32 %v6523, 4294901760
    %v6525 = vsub.f32 %v6523, %v6524
    %v6526 = vand.u32 %v6525, 4294901760
    %6527 = vmatpush1.msra.mxu0 %v6526
    %6528 = vmatprep.subr.mxu0 0.0
    %v6529 = vand.u32 %v6402, 4294901760
    %v6530 = vsub.f32 %v6402, %v6529
    %v6531 = vand.u32 %v6530, 4294901760
    %v6532 = vsub.f32 %v6530, %v6531
    %v6533 = vand.u32 %v6532, 4294901760
    %6534 = vmatpush1.msra.mxu0 %v6533
    %6535 = vmatprep.subr.mxu0 0.0
    %v6536 = vand.u32 %v6403, 4294901760
    %v6537 = vsub.f32 %v6403, %v6536
    %v6538 = vand.u32 %v6537, 4294901760
    %v6539 = vsub.f32 %v6537, %v6538
    %v6540 = vand.u32 %v6539, 4294901760
    %6541 = vmatpush1.msra.mxu0 %v6540
    %6542 = vmatprep.subr.mxu0 0.0
    %v6543 = vand.u32 %v6404, 4294901760
    %v6544 = vsub.f32 %v6404, %v6543
    %v6545 = vand.u32 %v6544, 4294901760
    %v6546 = vsub.f32 %v6544, %v6545
    %v6547 = vand.u32 %v6546, 4294901760
    %6548 = vmatpush1.msra.mxu0 %v6547
    %6549 = vmatprep.subr.mxu0 0.0
    %v6550 = vand.u32 %v6405, 4294901760
    %v6551 = vsub.f32 %v6405, %v6550
    %v6552 = vand.u32 %v6551, 4294901760
    %v6553 = vsub.f32 %v6551, %v6552
    %v6554 = vand.u32 %v6553, 4294901760
    %6555 = vmatpush1.msra.mxu0 %v6554
    %6556 = vmatprep.subr.mxu0 0.0
    %v6557 = vand.u32 %v6406, 4294901760
    %v6558 = vsub.f32 %v6406, %v6557
    %v6559 = vand.u32 %v6558, 4294901760
    %v6560 = vsub.f32 %v6558, %v6559
    %v6561 = vand.u32 %v6560, 4294901760
    %6562 = vmatpush1.msra.mxu0 %v6561
    %6563 = vmatprep.subr.mxu0 0.0
    %v6564 = vand.u32 %v6407, 4294901760
    %v6565 = vsub.f32 %v6407, %v6564
    %v6566 = vand.u32 %v6565, 4294901760
    %v6567 = vsub.f32 %v6565, %v6566
    %v6568 = vand.u32 %v6567, 4294901760
    %6569 = vmatpush1.msra.mxu0 %v6568
    %6570 = vmatprep.subr.mxu0 0.0
    %v6571 = vand.u32 %v6408, 4294901760
    %v6572 = vsub.f32 %v6408, %v6571
    %v6573 = vand.u32 %v6572, 4294901760
    %v6574 = vsub.f32 %v6572, %v6573
    %v6575 = vand.u32 %v6574, 4294901760
    %6576 = vmatpush1.msra.mxu0 %v6575
    %6577 = vmatprep.subr.mxu0 0.0
    %v6578 = vand.u32 %v6409, 4294901760
    %v6579 = vsub.f32 %v6409, %v6578
    %v6580 = vand.u32 %v6579, 4294901760
    %v6581 = vsub.f32 %v6579, %v6580
    %v6582 = vand.u32 %v6581, 4294901760
    %6583 = vmatpush1.msra.mxu0 %v6582
    %6584 = vmatprep.subr.mxu0 0.0
    %v6585 = vand.u32 %v6410, 4294901760
    %v6586 = vsub.f32 %v6410, %v6585
    %v6587 = vand.u32 %v6586, 4294901760
    %v6588 = vsub.f32 %v6586, %v6587
    %v6589 = vand.u32 %v6588, 4294901760
    %6590 = vmatpush1.msra.mxu0 %v6589
    %6591 = vmatprep.subr.mxu0 0.0
    %v6592 = vand.u32 %v6411, 4294901760
    %v6593 = vsub.f32 %v6411, %v6592
    %v6594 = vand.u32 %v6593, 4294901760
    %v6595 = vsub.f32 %v6593, %v6594
    %v6596 = vand.u32 %v6595, 4294901760
    %6597 = vmatpush1.msra.mxu0 %v6596
    %6598 = vmatprep.subr.mxu0 0.0
    %v6599 = vand.u32 %v6412, 4294901760
    %v6600 = vsub.f32 %v6412, %v6599
    %v6601 = vand.u32 %v6600, 4294901760
    %v6602 = vsub.f32 %v6600, %v6601
    %v6603 = vand.u32 %v6602, 4294901760
    %6604 = vmatpush1.msra.mxu0 %v6603
    %6605 = vmatprep.subr.mxu0 0.0
    %v6606 = vand.u32 %v6413, 4294901760
    %v6607 = vsub.f32 %v6413, %v6606
    %v6608 = vand.u32 %v6607, 4294901760
    %v6609 = vsub.f32 %v6607, %v6608
    %v6610 = vand.u32 %v6609, 4294901760
    %6611 = vmatpush1.msra.mxu0 %v6610
    %6612 = vmatprep.subr.mxu0 0.0
    %v6613 = vand.u32 %v6414, 4294901760
    %v6614 = vsub.f32 %v6414, %v6613
    %v6615 = vand.u32 %v6614, 4294901760
    %v6616 = vsub.f32 %v6614, %v6615
    %v6617 = vand.u32 %v6616, 4294901760
    %6618 = vmatpush1.msra.mxu0 %v6617
    %6619 = vmatprep.subr.mxu0 0.0
    %v6620 = vand.u32 %v6415, 4294901760
    %v6621 = vsub.f32 %v6415, %v6620
    %v6622 = vand.u32 %v6621, 4294901760
    %v6623 = vsub.f32 %v6621, %v6622
    %v6624 = vand.u32 %v6623, 4294901760
    %6625 = vmatpush1.msra.mxu0 %v6624
    %6626 = vmatprep.subr.mxu0 0.0
    %6627 = vmatpush1.msra.mxu0 0.0
    %6628 = vmatprep.subr.mxu0 0.0
    %6629 = vmatpush1.msra.mxu0 0.0
    %6630 = vmatprep.subr.mxu0 0.0
    %6631 = vmatpush1.msra.mxu0 0.0
    %6632 = vmatprep.subr.mxu0 0.0
    %6633 = vmatpush1.msra.mxu0 0.0
    %6634 = vmatprep.subr.mxu0 0.0
    %6635 = vmatpush1.msra.mxu0 0.0
    %6636 = vmatprep.subr.mxu0 0.0
    %6637 = vmatpush1.msra.mxu0 0.0
    %6638 = vmatprep.subr.mxu0 0.0
    %6639 = vmatpush1.msra.mxu0 0.0
    %6640 = vmatprep.subr.mxu0 0.0
    %6641 = vmatpush1.msra.mxu0 0.0
    %6642 = vmatprep.subr.mxu0 0.0
    %6643 = vmatpush1.msra.mxu0 0.0
    %6644 = vmatprep.subr.mxu0 0.0
    %6645 = vmatpush1.msra.mxu0 0.0
    %6646 = vmatprep.subr.mxu0 0.0
    %6647 = vmatpush1.msra.mxu0 0.0
    %6648 = vmatprep.subr.mxu0 0.0
    %6649 = vmatpush1.msra.mxu0 0.0
    %6650 = vmatprep.subr.mxu0 0.0
    %6651 = vmatpush1.msra.mxu0 0.0
    %6652 = vmatprep.subr.mxu0 0.0
    %6653 = vmatpush1.msra.mxu0 0.0
    %6654 = vmatprep.subr.mxu0 0.0
    %6655 = vmatpush1.msra.mxu0 0.0
    %6656 = vmatprep.subr.mxu0 0.0
    %6657 = vmatpush1.msra.mxu0 0.0
    %6658 = vmatprep.mubr.f32.mxu0 0.0
    %v6659 = vand.u32 %v6399, 4294901760
    %6660 = vmatmul.mubr.f32.gmra.mrb[0].mxu0 %v6659
    %v6661 = vpop.f32.mrb[0].mxu0
    %v6662 = vadd.f32 %v6511, %v6661
    %v6663 = vpop.f32.mrb[0].mxu0
    %6664 = vdwg.mxu0
    %6665 = vmatprep.subr.mxu0 0.0
    %v6666 = vand.u32 %v6400, 4294901760
    %v6667 = vsub.f32 %v6400, %v6666
    %6668 = vmatpush1.msra.mxu0 %v6667
    %6669 = vmatprep.subr.mxu0 0.0
    %v6670 = vand.u32 %v6401, 4294901760
    %v6671 = vsub.f32 %v6401, %v6670
    %6672 = vmatpush1.msra.mxu0 %v6671
    %6673 = vmatprep.subr.mxu0 0.0
    %v6674 = vand.u32 %v6402, 4294901760
    %v6675 = vsub.f32 %v6402, %v6674
    %6676 = vmatpush1.msra.mxu0 %v6675
    %6677 = vmatprep.subr.mxu0 0.0
    %v6678 = vand.u32 %v6403, 4294901760
    %v6679 = vsub.f32 %v6403, %v6678
    %6680 = vmatpush1.msra.mxu0 %v6679
    %6681 = vmatprep.subr.mxu0 0.0
    %v6682 = vand.u32 %v6404, 4294901760
    %v6683 = vsub.f32 %v6404, %v6682
    %6684 = vmatpush1.msra.mxu0 %v6683
    %6685 = vmatprep.subr.mxu0 0.0
    %v6686 = vand.u32 %v6405, 4294901760
    %v6687 = vsub.f32 %v6405, %v6686
    %6688 = vmatpush1.msra.mxu0 %v6687
    %6689 = vmatprep.subr.mxu0 0.0
    %v6690 = vand.u32 %v6406, 4294901760
    %v6691 = vsub.f32 %v6406, %v6690
    %6692 = vmatpush1.msra.mxu0 %v6691
    %6693 = vmatprep.subr.mxu0 0.0
    %v6694 = vand.u32 %v6407, 4294901760
    %v6695 = vsub.f32 %v6407, %v6694
    %6696 = vmatpush1.msra.mxu0 %v6695
    %6697 = vmatprep.subr.mxu0 0.0
    %v6698 = vand.u32 %v6408, 4294901760
    %v6699 = vsub.f32 %v6408, %v6698
    %6700 = vmatpush1.msra.mxu0 %v6699
    %6701 = vmatprep.subr.mxu0 0.0
    %v6702 = vand.u32 %v6409, 4294901760
    %v6703 = vsub.f32 %v6409, %v6702
    %6704 = vmatpush1.msra.mxu0 %v6703
    %6705 = vmatprep.subr.mxu0 0.0
    %v6706 = vand.u32 %v6410, 4294901760
    %v6707 = vsub.f32 %v6410, %v6706
    %6708 = vmatpush1.msra.mxu0 %v6707
    %6709 = vmatprep.subr.mxu0 0.0
    %v6710 = vand.u32 %v6411, 4294901760
    %v6711 = vsub.f32 %v6411, %v6710
    %6712 = vmatpush1.msra.mxu0 %v6711
    %6713 = vmatprep.subr.mxu0 0.0
    %v6714 = vand.u32 %v6412, 4294901760
    %v6715 = vsub.f32 %v6412, %v6714
    %6716 = vmatpush1.msra.mxu0 %v6715
    %6717 = vmatprep.subr.mxu0 0.0
    %v6718 = vand.u32 %v6413, 4294901760
    %v6719 = vsub.f32 %v6413, %v6718
    %6720 = vmatpush1.msra.mxu0 %v6719
    %6721 = vmatprep.subr.mxu0 0.0
    %v6722 = vand.u32 %v6414, 4294901760
    %v6723 = vsub.f32 %v6414, %v6722
    %6724 = vmatpush1.msra.mxu0 %v6723
    %6725 = vmatprep.subr.mxu0 0.0
    %v6726 = vand.u32 %v6415, 4294901760
    %v6727 = vsub.f32 %v6415, %v6726
    %6728 = vmatpush1.msra.mxu0 %v6727
    %6729 = vmatprep.subr.mxu0 0.0
    %6730 = vmatpush1.msra.mxu0 0.0
    %6731 = vmatprep.subr.mxu0 0.0
    %6732 = vmatpush1.msra.mxu0 0.0
    %6733 = vmatprep.subr.mxu0 0.0
    %6734 = vmatpush1.msra.mxu0 0.0
    %6735 = vmatprep.subr.mxu0 0.0
    %6736 = vmatpush1.msra.mxu0 0.0
    %6737 = vmatprep.subr.mxu0 0.0
    %6738 = vmatpush1.msra.mxu0 0.0
    %6739 = vmatprep.subr.mxu0 0.0
    %6740 = vmatpush1.msra.mxu0 0.0
    %6741 = vmatprep.subr.mxu0 0.0
    %6742 = vmatpush1.msra.mxu0 0.0
    %6743 = vmatprep.subr.mxu0 0.0
    %6744 = vmatpush1.msra.mxu0 0.0
    %6745 = vmatprep.subr.mxu0 0.0
    %6746 = vmatpush1.msra.mxu0 0.0
    %6747 = vmatprep.subr.mxu0 0.0
    %6748 = vmatpush1.msra.mxu0 0.0
    %6749 = vmatprep.subr.mxu0 0.0
    %6750 = vmatpush1.msra.mxu0 0.0
    %6751 = vmatprep.subr.mxu0 0.0
    %6752 = vmatpush1.msra.mxu0 0.0
    %6753 = vmatprep.subr.mxu0 0.0
    %6754 = vmatpush1.msra.mxu0 0.0
    %6755 = vmatprep.subr.mxu0 0.0
    %6756 = vmatpush1.msra.mxu0 0.0
    %6757 = vmatprep.subr.mxu0 0.0
    %6758 = vmatpush1.msra.mxu0 0.0
    %6759 = vmatprep.subr.mxu0 0.0
    %6760 = vmatpush1.msra.mxu0 0.0
    %6761 = vmatprep.mubr.f32.mxu0 0.0
    %v6762 = vand.u32 %v6399, 4294901760
    %v6763 = vsub.f32 %v6399, %v6762
    %6764 = vmatmul.mubr.f32.gmra.mrb[0].mxu0 %v6763
    %v6765 = vpop.f32.mrb[0].mxu0
    %v6766 = vadd.f32 %v6662, %v6765
    %v6767 = vpop.f32.mrb[0].mxu0
    %6768 = vdwg.mxu0
    %6769 = vmatprep.subr.mxu0 0.0
    %v6770 = vand.u32 %v6400, 4294901760
    %6771 = vmatpush1.msra.mxu0 %v6770
    %6772 = vmatprep.subr.mxu0 0.0
    %v6773 = vand.u32 %v6401, 4294901760
    %6774 = vmatpush1.msra.mxu0 %v6773
    %6775 = vmatprep.subr.mxu0 0.0
    %v6776 = vand.u32 %v6402, 4294901760
    %6777 = vmatpush1.msra.mxu0 %v6776
    %6778 = vmatprep.subr.mxu0 0.0
    %v6779 = vand.u32 %v6403, 4294901760
    %6780 = vmatpush1.msra.mxu0 %v6779
    %6781 = vmatprep.subr.mxu0 0.0
    %v6782 = vand.u32 %v6404, 4294901760
    %6783 = vmatpush1.msra.mxu0 %v6782
    %6784 = vmatprep.subr.mxu0 0.0
    %v6785 = vand.u32 %v6405, 4294901760
    %6786 = vmatpush1.msra.mxu0 %v6785
    %6787 = vmatprep.subr.mxu0 0.0
    %v6788 = vand.u32 %v6406, 4294901760
    %6789 = vmatpush1.msra.mxu0 %v6788
    %6790 = vmatprep.subr.mxu0 0.0
    %v6791 = vand.u32 %v6407, 4294901760
    %6792 = vmatpush1.msra.mxu0 %v6791
    %6793 = vmatprep.subr.mxu0 0.0
    %v6794 = vand.u32 %v6408, 4294901760
    %6795 = vmatpush1.msra.mxu0 %v6794
    %6796 = vmatprep.subr.mxu0 0.0
    %v6797 = vand.u32 %v6409, 4294901760
    %6798 = vmatpush1.msra.mxu0 %v6797
    %6799 = vmatprep.subr.mxu0 0.0
    %v6800 = vand.u32 %v6410, 4294901760
    %6801 = vmatpush1.msra.mxu0 %v6800
    %6802 = vmatprep.subr.mxu0 0.0
    %v6803 = vand.u32 %v6411, 4294901760
    %6804 = vmatpush1.msra.mxu0 %v6803
    %6805 = vmatprep.subr.mxu0 0.0
    %v6806 = vand.u32 %v6412, 4294901760
    %6807 = vmatpush1.msra.mxu0 %v6806
    %6808 = vmatprep.subr.mxu0 0.0
    %v6809 = vand.u32 %v6413, 4294901760
    %6810 = vmatpush1.msra.mxu0 %v6809
    %6811 = vmatprep.subr.mxu0 0.0
    %v6812 = vand.u32 %v6414, 4294901760
    %6813 = vmatpush1.msra.mxu0 %v6812
    %6814 = vmatprep.subr.mxu0 0.0
    %v6815 = vand.u32 %v6415, 4294901760
    %6816 = vmatpush1.msra.mxu0 %v6815
    %6817 = vmatprep.subr.mxu0 0.0
    %6818 = vmatpush1.msra.mxu0 0.0
    %6819 = vmatprep.subr.mxu0 0.0
    %6820 = vmatpush1.msra.mxu0 0.0
    %6821 = vmatprep.subr.mxu0 0.0
    %6822 = vmatpush1.msra.mxu0 0.0
    %6823 = vmatprep.subr.mxu0 0.0
    %6824 = vmatpush1.msra.mxu0 0.0
    %6825 = vmatprep.subr.mxu0 0.0
    %6826 = vmatpush1.msra.mxu0 0.0
    %6827 = vmatprep.subr.mxu0 0.0
    %6828 = vmatpush1.msra.mxu0 0.0
    %6829 = vmatprep.subr.mxu0 0.0
    %6830 = vmatpush1.msra.mxu0 0.0
    %6831 = vmatprep.subr.mxu0 0.0
    %6832 = vmatpush1.msra.mxu0 0.0
    %6833 = vmatprep.subr.mxu0 0.0
    %6834 = vmatpush1.msra.mxu0 0.0
    %6835 = vmatprep.subr.mxu0 0.0
    %6836 = vmatpush1.msra.mxu0 0.0
    %6837 = vmatprep.subr.mxu0 0.0
    %6838 = vmatpush1.msra.mxu0 0.0
    %6839 = vmatprep.subr.mxu0 0.0
    %6840 = vmatpush1.msra.mxu0 0.0
    %6841 = vmatprep.subr.mxu0 0.0
    %6842 = vmatpush1.msra.mxu0 0.0
    %6843 = vmatprep.subr.mxu0 0.0
    %6844 = vmatpush1.msra.mxu0 0.0
    %6845 = vmatprep.subr.mxu0 0.0
    %6846 = vmatpush1.msra.mxu0 0.0
    %6847 = vmatprep.subr.mxu0 0.0
    %6848 = vmatpush1.msra.mxu0 0.0
    %6849 = vmatprep.mubr.f32.mxu0 0.0
    %v6850 = vand.u32 %v6399, 4294901760
    %v6851 = vsub.f32 %v6399, %v6850
    %v6852 = vand.u32 %v6851, 4294901760
    %6853 = vmatmul.mubr.f32.gmra.mrb[0].mxu0 %v6852
    %v6854 = vpop.f32.mrb[0].mxu0
    %v6855 = vadd.f32 %v6766, %v6854
    %v6856 = vpop.f32.mrb[0].mxu0
    %6857 = vdwg.mxu0
    %6858 = vmatprep.subr.mxu0 0.0
    %v6859 = vand.u32 %v6400, 4294901760
    %v6860 = vsub.f32 %v6400, %v6859
    %v6861 = vand.u32 %v6860, 4294901760
    %6862 = vmatpush1.msra.mxu0 %v6861
    %6863 = vmatprep.subr.mxu0 0.0
    %v6864 = vand.u32 %v6401, 4294901760
    %v6865 = vsub.f32 %v6401, %v6864
    %v6866 = vand.u32 %v6865, 4294901760
    %6867 = vmatpush1.msra.mxu0 %v6866
    %6868 = vmatprep.subr.mxu0 0.0
    %v6869 = vand.u32 %v6402, 4294901760
    %v6870 = vsub.f32 %v6402, %v6869
    %v6871 = vand.u32 %v6870, 4294901760
    %6872 = vmatpush1.msra.mxu0 %v6871
    %6873 = vmatprep.subr.mxu0 0.0
    %v6874 = vand.u32 %v6403, 4294901760
    %v6875 = vsub.f32 %v6403, %v6874
    %v6876 = vand.u32 %v6875, 4294901760
    %6877 = vmatpush1.msra.mxu0 %v6876
    %6878 = vmatprep.subr.mxu0 0.0
    %v6879 = vand.u32 %v6404, 4294901760
    %v6880 = vsub.f32 %v6404, %v6879
    %v6881 = vand.u32 %v6880, 4294901760
    %6882 = vmatpush1.msra.mxu0 %v6881
    %6883 = vmatprep.subr.mxu0 0.0
    %v6884 = vand.u32 %v6405, 4294901760
    %v6885 = vsub.f32 %v6405, %v6884
    %v6886 = vand.u32 %v6885, 4294901760
    %6887 = vmatpush1.msra.mxu0 %v6886
    %6888 = vmatprep.subr.mxu0 0.0
    %v6889 = vand.u32 %v6406, 4294901760
    %v6890 = vsub.f32 %v6406, %v6889
    %v6891 = vand.u32 %v6890, 4294901760
    %6892 = vmatpush1.msra.mxu0 %v6891
    %6893 = vmatprep.subr.mxu0 0.0
    %v6894 = vand.u32 %v6407, 4294901760
    %v6895 = vsub.f32 %v6407, %v6894
    %v6896 = vand.u32 %v6895, 4294901760
    %6897 = vmatpush1.msra.mxu0 %v6896
    %6898 = vmatprep.subr.mxu0 0.0
    %v6899 = vand.u32 %v6408, 4294901760
    %v6900 = vsub.f32 %v6408, %v6899
    %v6901 = vand.u32 %v6900, 4294901760
    %6902 = vmatpush1.msra.mxu0 %v6901
    %6903 = vmatprep.subr.mxu0 0.0
    %v6904 = vand.u32 %v6409, 4294901760
    %v6905 = vsub.f32 %v6409, %v6904
    %v6906 = vand.u32 %v6905, 4294901760
    %6907 = vmatpush1.msra.mxu0 %v6906
    %6908 = vmatprep.subr.mxu0 0.0
    %v6909 = vand.u32 %v6410, 4294901760
    %v6910 = vsub.f32 %v6410, %v6909
    %v6911 = vand.u32 %v6910, 4294901760
    %6912 = vmatpush1.msra.mxu0 %v6911
    %6913 = vmatprep.subr.mxu0 0.0
    %v6914 = vand.u32 %v6411, 4294901760
    %v6915 = vsub.f32 %v6411, %v6914
    %v6916 = vand.u32 %v6915, 4294901760
    %6917 = vmatpush1.msra.mxu0 %v6916
    %6918 = vmatprep.subr.mxu0 0.0
    %v6919 = vand.u32 %v6412, 4294901760
    %v6920 = vsub.f32 %v6412, %v6919
    %v6921 = vand.u32 %v6920, 4294901760
    %6922 = vmatpush1.msra.mxu0 %v6921
    %6923 = vmatprep.subr.mxu0 0.0
    %v6924 = vand.u32 %v6413, 4294901760
    %v6925 = vsub.f32 %v6413, %v6924
    %v6926 = vand.u32 %v6925, 4294901760
    %6927 = vmatpush1.msra.mxu0 %v6926
    %6928 = vmatprep.subr.mxu0 0.0
    %v6929 = vand.u32 %v6414, 4294901760
    %v6930 = vsub.f32 %v6414, %v6929
    %v6931 = vand.u32 %v6930, 4294901760
    %6932 = vmatpush1.msra.mxu0 %v6931
    %6933 = vmatprep.subr.mxu0 0.0
    %v6934 = vand.u32 %v6415, 4294901760
    %v6935 = vsub.f32 %v6415, %v6934
    %v6936 = vand.u32 %v6935, 4294901760
    %6937 = vmatpush1.msra.mxu0 %v6936
    %6938 = vmatprep.subr.mxu0 0.0
    %6939 = vmatpush1.msra.mxu0 0.0
    %6940 = vmatprep.subr.mxu0 0.0
    %6941 = vmatpush1.msra.mxu0 0.0
    %6942 = vmatprep.subr.mxu0 0.0
    %6943 = vmatpush1.msra.mxu0 0.0
    %6944 = vmatprep.subr.mxu0 0.0
    %6945 = vmatpush1.msra.mxu0 0.0
    %6946 = vmatprep.subr.mxu0 0.0
    %6947 = vmatpush1.msra.mxu0 0.0
    %6948 = vmatprep.subr.mxu0 0.0
    %6949 = vmatpush1.msra.mxu0 0.0
    %6950 = vmatprep.subr.mxu0 0.0
    %6951 = vmatpush1.msra.mxu0 0.0
    %6952 = vmatprep.subr.mxu0 0.0
    %6953 = vmatpush1.msra.mxu0 0.0
    %6954 = vmatprep.subr.mxu0 0.0
    %6955 = vmatpush1.msra.mxu0 0.0
    %6956 = vmatprep.subr.mxu0 0.0
    %6957 = vmatpush1.msra.mxu0 0.0
    %6958 = vmatprep.subr.mxu0 0.0
    %6959 = vmatpush1.msra.mxu0 0.0
    %6960 = vmatprep.subr.mxu0 0.0
    %6961 = vmatpush1.msra.mxu0 0.0
    %6962 = vmatprep.subr.mxu0 0.0
    %6963 = vmatpush1.msra.mxu0 0.0
    %6964 = vmatprep.subr.mxu0 0.0
    %6965 = vmatpush1.msra.mxu0 0.0
    %6966 = vmatprep.subr.mxu0 0.0
    %6967 = vmatpush1.msra.mxu0 0.0
    %6968 = vmatprep.subr.mxu0 0.0
    %6969 = vmatpush1.msra.mxu0 0.0
    %6970 = vmatprep.mubr.f32.mxu0 0.0
    %v6971 = vand.u32 %v6399, 4294901760
    %6972 = vmatmul.mubr.f32.gmra.mrb[0].mxu0 %v6971
    %v6973 = vpop.f32.mrb[0].mxu0
    %v6974 = vadd.f32 %v6855, %v6973
    %v6975 = vpop.f32.mrb[0].mxu0
    %6976 = vdwg.mxu0
    %6977 = vmatprep.subr.mxu0 0.0
    %v6978 = vand.u32 %v6400, 4294901760
    %6979 = vmatpush1.msra.mxu0 %v6978
    %6980 = vmatprep.subr.mxu0 0.0
    %v6981 = vand.u32 %v6401, 4294901760
    %6982 = vmatpush1.msra.mxu0 %v6981
    %6983 = vmatprep.subr.mxu0 0.0
    %v6984 = vand.u32 %v6402, 4294901760
    %6985 = vmatpush1.msra.mxu0 %v6984
    %6986 = vmatprep.subr.mxu0 0.0
    %v6987 = vand.u32 %v6403, 4294901760
    %6988 = vmatpush1.msra.mxu0 %v6987
    %6989 = vmatprep.subr.mxu0 0.0
    %v6990 = vand.u32 %v6404, 4294901760
    %6991 = vmatpush1.msra.mxu0 %v6990
    %6992 = vmatprep.subr.mxu0 0.0
    %v6993 = vand.u32 %v6405, 4294901760
    %6994 = vmatpush1.msra.mxu0 %v6993
    %6995 = vmatprep.subr.mxu0 0.0
    %v6996 = vand.u32 %v6406, 4294901760
    %6997 = vmatpush1.msra.mxu0 %v6996
    %6998 = vmatprep.subr.mxu0 0.0
    %v6999 = vand.u32 %v6407, 4294901760
    %7000 = vmatpush1.msra.mxu0 %v6999
    %7001 = vmatprep.subr.mxu0 0.0
    %v7002 = vand.u32 %v6408, 4294901760
    %7003 = vmatpush1.msra.mxu0 %v7002
    %7004 = vmatprep.subr.mxu0 0.0
    %v7005 = vand.u32 %v6409, 4294901760
    %7006 = vmatpush1.msra.mxu0 %v7005
    %7007 = vmatprep.subr.mxu0 0.0
    %v7008 = vand.u32 %v6410, 4294901760
    %7009 = vmatpush1.msra.mxu0 %v7008
    %7010 = vmatprep.subr.mxu0 0.0
    %v7011 = vand.u32 %v6411, 4294901760
    %7012 = vmatpush1.msra.mxu0 %v7011
    %7013 = vmatprep.subr.mxu0 0.0
    %v7014 = vand.u32 %v6412, 4294901760
    %7015 = vmatpush1.msra.mxu0 %v7014
    %7016 = vmatprep.subr.mxu0 0.0
    %v7017 = vand.u32 %v6413, 4294901760
    %7018 = vmatpush1.msra.mxu0 %v7017
    %7019 = vmatprep.subr.mxu0 0.0
    %v7020 = vand.u32 %v6414, 4294901760
    %7021 = vmatpush1.msra.mxu0 %v7020
    %7022 = vmatprep.subr.mxu0 0.0
    %v7023 = vand.u32 %v6415, 4294901760
    %7024 = vmatpush1.msra.mxu0 %v7023
    %7025 = vmatprep.subr.mxu0 0.0
    %7026 = vmatpush1.msra.mxu0 0.0
    %7027 = vmatprep.subr.mxu0 0.0
    %7028 = vmatpush1.msra.mxu0 0.0
    %7029 = vmatprep.subr.mxu0 0.0
    %7030 = vmatpush1.msra.mxu0 0.0
    %7031 = vmatprep.subr.mxu0 0.0
    %7032 = vmatpush1.msra.mxu0 0.0
    %7033 = vmatprep.subr.mxu0 0.0
    %7034 = vmatpush1.msra.mxu0 0.0
    %7035 = vmatprep.subr.mxu0 0.0
    %7036 = vmatpush1.msra.mxu0 0.0
    %7037 = vmatprep.subr.mxu0 0.0
    %7038 = vmatpush1.msra.mxu0 0.0
    %7039 = vmatprep.subr.mxu0 0.0
    %7040 = vmatpush1.msra.mxu0 0.0
    %7041 = vmatprep.subr.mxu0 0.0
    %7042 = vmatpush1.msra.mxu0 0.0
    %7043 = vmatprep.subr.mxu0 0.0
    %7044 = vmatpush1.msra.mxu0 0.0
    %7045 = vmatprep.subr.mxu0 0.0
    %7046 = vmatpush1.msra.mxu0 0.0
    %7047 = vmatprep.subr.mxu0 0.0
    %7048 = vmatpush1.msra.mxu0 0.0
    %7049 = vmatprep.subr.mxu0 0.0
    %7050 = vmatpush1.msra.mxu0 0.0
    %7051 = vmatprep.subr.mxu0 0.0
    %7052 = vmatpush1.msra.mxu0 0.0
    %7053 = vmatprep.subr.mxu0 0.0
    %7054 = vmatpush1.msra.mxu0 0.0
    %7055 = vmatprep.subr.mxu0 0.0
    %7056 = vmatpush1.msra.mxu0 0.0
    %7057 = vmatprep.mubr.f32.mxu0 0.0
    %v7058 = vand.u32 %v6399, 4294901760
    %7059 = vmatmul.mubr.f32.gmra.mrb[0].mxu0 %v7058
    %v7060 = vpop.f32.mrb[0].mxu0
    %v7061 = vadd.f32 %v6974, %v7060
    %v7062 = vpop.f32.mrb[0].mxu0
    %7063 = vdwg.mxu0
    %vm7064 = vcmask 9216
    %7065 = vst.msk [vmem:[#allocation12] sm:$0x3] %vm7064, %v7061
    // Predicated region
    $region78: #{forward.1} parent=1 // pred_check
      _
    $region79: #{forward.1} parent=1 // pred_check_branch
      %7067 = sbr.rel (0) target = $region81
    $region80: #{forward.1} parent=1 // pred_region
      %s7069 = ssub.s32 32, 32
      %7070 = vsyncadd [#allocation8], %s7069
      %s7072 = sshll.u32 [#allocation12], 4
      %s7073 = int_to_ptr.vmem [resolvable:$true] %s7072
      %7075 = dma.vmem_to_hbm [thread:$0]  %s7073, 32, %s17, [#allocation8]
    $region81: #{forward.1} parent=1 // pred_fallthru
      _
    // Predicated region
    $region82: #{forward.1} parent=1 // pred_check
      _
    $region83: #{forward.1} parent=1 // pred_check_branch
      %7077 = sbr.rel (0) target = $region85
    $region84: #{forward.1} parent=1 // pred_region
      %7078 = dma.done [#allocation8], 32
    $region85: #{forward.1} parent=1 // pred_fallthru
      _
    %7079 = vsyncpa [#allocation8], 1
    %7080 = vsyncpa [#allocation9], 1
    %7081 = vsyncpa [#allocation11], 1

</llo_original>
